<compile_context>
chip_gen: v6e
topology: v6e:2x2x1
jax: 0.10.0
libtpu: 0.0.40
codegen_flags: <defaults>
</compile_context>

<pallas_src>
import jax
import jax.numpy as jnp
import numpy as np
from jax import lax
from jax.experimental import pallas as pl
from jax.experimental.pallas import tpu as pltpu

LEAKY_SLOPE = 0.01   # F.leaky_relu default negative_slope
BN_EPS = 1e-5        # nn.BatchNorm2d default eps
LEFT = 8             # left halo width -> interior starts at a sublane-aligned offset


def _make_decoder_kernel(N, H, W, C, D, Wq):
    """Entire DenseDecoder forward: conv1..conv4 + leaky_relu + train-mode BN."""
    NHW = N * H * W
    Hp = H + 2
    inv_n = 1.0 / float(NHW)

    def lrelu_bn(y, g, bt):
        # leaky_relu as mul+max, then two-pass (centered) batch statistics.
        y = jnp.maximum(y, LEAKY_SLOPE * y)
        mean = jnp.sum(y, axis=0, keepdims=True) * inv_n
        yc = y - mean
        var = jnp.sum(yc * yc, axis=0, keepdims=True) * inv_n
        return yc * (g * lax.rsqrt(var + BN_EPS)) + bt

    def conv(pad_ref, cin, w_ref, cout):
        # dx taps: one lane-concat of 3 shifted loads (only 2 are misaligned).
        p = jnp.concatenate(
            [pad_ref[:, :, LEFT - 1 + dx: LEFT - 1 + dx + W, :] for dx in range(3)],
            axis=-1)                                        # (N, Hp, W, 3*cin)
        # dy taps: three matmuls whose operands differ only by an H (free-dim) offset.
        acc = jnp.zeros((NHW, cout), jnp.float32)
        for dy in range(3):
            acc = acc + jnp.dot(p[:, dy:dy + H].reshape(NHW, 3 * cin), w_ref[dy],
                                preferred_element_type=jnp.float32)
        return acc

    def kernel(x_ref,
               w1_ref, b1_ref, g1_ref, bt1_ref,
               w2_ref, b2_ref, g2_ref, bt2_ref,
               w3_ref, b3_ref, g3_ref, bt3_ref,
               w4_ref, b4_ref,
               out_ref,
               xp_ref, act_ref):
        f32 = jnp.float32

        # ---- halo-only zeroing (interiors are fully overwritten every stage) ----
        xp_ref[:, 0:1, :, :] = jnp.zeros((N, 1, Wq, 3), f32)
        xp_ref[:, H + 1:H + 2, :, :] = jnp.zeros((N, 1, Wq, 3), f32)
        xp_ref[:, :, LEFT - 1:LEFT, :] = jnp.zeros((N, Hp, 1, 3), f32)
        xp_ref[:, :, LEFT + W:LEFT + W + 1, :] = jnp.zeros((N, Hp, 1, 3), f32)
        act_ref[:, 0:1, :, :] = jnp.zeros((N, 1, Wq, C), f32)
        act_ref[:, H + 1:H + 2, :, :] = jnp.zeros((N, 1, Wq, C), f32)
        act_ref[:, :, LEFT - 1:LEFT, :] = jnp.zeros((N, Hp, 1, C), f32)
        act_ref[:, :, LEFT + W:LEFT + W + 1, :] = jnp.zeros((N, Hp, 1, C), f32)

        # Sublane-aligned interior write (W offset == LEFT == 8).
        xp_ref[:, 1:H + 1, LEFT:LEFT + W, :] = x_ref[...]

        # ---- stage 1: conv1(3->C) + leaky_relu + bn1 ----
        y1 = lrelu_bn(conv(xp_ref, 3, w1_ref, C) + b1_ref[...],
                      g1_ref[...], bt1_ref[...])
        act_ref[:, 1:H + 1, LEFT:LEFT + W, :] = y1.reshape(N, H, W, C)

        # ---- stage 2: fused [conv2 | conv3-partial(x1) | conv4-partial(x1)] ----
        z2 = conv(act_ref, C, w2_ref, 2 * C + D)
        y2 = lrelu_bn(z2[:, :C] + b2_ref[...], g2_ref[...], bt2_ref[...])
        z3_x1 = z2[:, C:2 * C]            # conv3 partial from x1
        out_acc = z2[:, 2 * C:]           # conv4 partial from x1
        act_ref[:, 1:H + 1, LEFT:LEFT + W, :] = y2.reshape(N, H, W, C)

        # ---- stage 3: fused [conv3-partial(x2) | conv4-partial(x2)] ----
        z3 = conv(act_ref, C, w3_ref, C + D)
        y3 = lrelu_bn(z3_x1 + z3[:, :C] + b3_ref[...], g3_ref[...], bt3_ref[...])
        out_acc = out_acc + z3[:, C:]
        act_ref[:, 1:H + 1, LEFT:LEFT + W, :] = y3.reshape(N, H, W, C)

        # ---- stage 4: conv4-partial(x3) + accumulated partials + bias ----
        y4 = out_acc + conv(act_ref, C, w4_ref, D) + b4_ref[...]
        out_ref[...] = y4.reshape(N, H, W, D)

    return kernel


def _prep_weights(p, C, D):
    """Per-dy weight slabs, fused along the output dim (replaces torch.cat on acts)."""
    f32 = jnp.float32

    def per_dy(w):  # (3, 3, Ci, Co) -> (3, 3*Ci, Co), rows ordered (dx, ci)
        return w.astype(f32).reshape(3, 3 * w.shape[2], w.shape[3])

    w3 = p['w3'].astype(f32)
    w4 = p['w4'].astype(f32)
    w3a, w3b = w3[:, :, :C, :], w3[:, :, C:, :]
    w4a, w4b, w4c = w4[:, :, :C, :], w4[:, :, C:2 * C, :], w4[:, :, 2 * C:, :]

    w1f = per_dy(p['w1'])                                                 # (3,  9, C)
    w2f = jnp.concatenate([per_dy(p['w2']), per_dy(w3a), per_dy(w4a)], -1)  # (3, 9C, 2C+D)
    w3f = jnp.concatenate([per_dy(w3b), per_dy(w4b)], -1)                   # (3, 9C, C+D)
    w4f = per_dy(w4c)                                                       # (3, 9C, D)
    return w1f, w2f, w3f, w4f


def dense_decoder_forward(x_nchw, p):
    """Matches DenseDecoder.forward (module in default training mode)."""
    x = jnp.transpose(x_nchw, (0, 2, 3, 1)).astype(jnp.float32)   # NCHW -> NHWC
    N, H, W, _ = x.shape
    C = p['w1'].shape[-1]                                         # 32
    D = p['w4'].shape[-1]                                         # data_depth
    Hp = H + 2
    Wq = ((LEFT + W + 1 + 7) // 8) * 8                            # padded width (8-multiple)

    w1f, w2f, w3f, w4f = _prep_weights(p, C, D)
    row = lambda v: v.reshape(1, -1).astype(jnp.float32)

    args = (x,
            w1f, row(p['b1']), row(p['g1']), row(p['bt1']),
            w2f, row(p['b2']), row(p['g2']), row(p['bt2']),
            w3f, row(p['b3']), row(p['g3']), row(p['bt3']),
            w4f, row(p['b4']))

    vmem = lambda: pl.BlockSpec(memory_space=pltpu.MemorySpace.VMEM)
    out_nhwc = pl.pallas_call(
        _make_decoder_kernel(N, H, W, C, D, Wq),
        out_shape=jax.ShapeDtypeStruct((N, H, W, D), jnp.float32),
        in_specs=[vmem() for _ in args],
        out_specs=vmem(),
        scratch_shapes=[
            pltpu.VMEM((N, Hp, Wq, 3), jnp.float32),   # padded input
            pltpu.VMEM((N, Hp, Wq, C), jnp.float32),   # shared padded x1/x2/x3
        ],
        compiler_params=pltpu.CompilerParams(vmem_limit_bytes=32 * 1024 * 1024),
    )(*args)
    return jnp.transpose(out_nhwc, (0, 3, 1, 2))                   # NHWC -> NCHW


# ---------------- deterministic synthetic parameters ----------------
def init_params(key, data_depth):
    ks = jax.random.split(key, 20)

    def wconv(k, cin, cout):
        return 0.1 * jax.random.normal(k, (3, 3, cin, cout), jnp.float32)

    def vec(k, c, scale=0.1, offset=0.0):
        return offset + scale * jax.random.normal(k, (c,), jnp.float32)

    p = {}
    p['w1'], p['b1'] = wconv(ks[0], 3, 32), vec(ks[1], 32)
    p['g1'], p['bt1'] = vec(ks[2], 32, offset=1.0), vec(ks[3], 32)
    p['w2'], p['b2'] = wconv(ks[4], 32, 32), vec(ks[5], 32)
    p['g2'], p['bt2'] = vec(ks[6], 32, offset=1.0), vec(ks[7], 32)
    p['w3'], p['b3'] = wconv(ks[8], 64, 32), vec(ks[9], 32)
    p['g3'], p['bt3'] = vec(ks[10], 32, offset=1.0), vec(ks[11], 32)
    p['w4'], p['b4'] = wconv(ks[12], 96, data_depth), vec(ks[13], data_depth)
    return p


# ---------------- pure-JAX reference for verification ----------------
def _ref_conv(x, w, b):
    y = lax.conv_general_dilated(
        x, w, window_strides=(1, 1), padding='SAME',
        dimension_numbers=('NHWC', 'HWIO', 'NHWC'),
        precision=lax.Precision.HIGHEST)
    return y + b


def _ref_bn(y, g, bt):
    m = jnp.mean(y, axis=(0, 1, 2), keepdims=True)
    v = jnp.mean((y - m) ** 2, axis=(0, 1, 2), keepdims=True)
    return (y - m) / jnp.sqrt(v + BN_EPS) * g + bt


def ref_forward(x_nchw, p):
    x = jnp.transpose(x_nchw, (0, 2, 3, 1)).astype(jnp.float32)
    lrelu = lambda t: jnp.where(t > 0, t, LEAKY_SLOPE * t)
    x1 = _ref_bn(lrelu(_ref_conv(x, p['w1'], p['b1'])), p['g1'], p['bt1'])
    x2 = _ref_bn(lrelu(_ref_conv(x1, p['w2'], p['b2'])), p['g2'], p['bt2'])
    x3 = _ref_bn(lrelu(_ref_conv(jnp.concatenate([x1, x2], -1), p['w3'], p['b3'])),
                 p['g3'], p['bt3'])
    out = _ref_conv(jnp.concatenate([x1, x2, x3], -1), p['w4'], p['b4'])
    return jnp.transpose(out, (0, 3, 1, 2))


if __name__ == "__main__":
    key = jax.random.PRNGKey(0)
    kx, kp = jax.random.split(key)

    N, H, W = 2, 16, 16
    data_depth = 4
    x = jax.random.normal(kx, (N, 3, H, W), jnp.float32)   # NCHW like PyTorch
    params = init_params(kp, data_depth)

    out = dense_decoder_forward(x, params)
    out = jax.block_until_ready(out)
    assert out.shape == (N, data_depth, H, W)

    ref = ref_forward(x, params)
    np.testing.assert_allclose(np.asarray(out), np.asarray(ref), rtol=2e-3, atol=2e-3)

    print("KERNEL_OK")
</pallas_src>

<mosaic_0001>
module attributes {stable_mosaic.version = 11 : i64} {
  func.func @kernel(%arg0: memref<2x16x16x3xf32, #tpu.memory_space<vmem>>, %arg1: memref<3x9x32xf32, #tpu.memory_space<vmem>>, %arg2: memref<1x32xf32, #tpu.memory_space<vmem>>, %arg3: memref<1x32xf32, #tpu.memory_space<vmem>>, %arg4: memref<1x32xf32, #tpu.memory_space<vmem>>, %arg5: memref<3x96x68xf32, #tpu.memory_space<vmem>>, %arg6: memref<1x32xf32, #tpu.memory_space<vmem>>, %arg7: memref<1x32xf32, #tpu.memory_space<vmem>>, %arg8: memref<1x32xf32, #tpu.memory_space<vmem>>, %arg9: memref<3x96x36xf32, #tpu.memory_space<vmem>>, %arg10: memref<1x32xf32, #tpu.memory_space<vmem>>, %arg11: memref<1x32xf32, #tpu.memory_space<vmem>>, %arg12: memref<1x32xf32, #tpu.memory_space<vmem>>, %arg13: memref<3x96x4xf32, #tpu.memory_space<vmem>>, %arg14: memref<1x4xf32, #tpu.memory_space<vmem>>, %arg15: memref<2x16x16x4xf32, #tpu.memory_space<vmem>>, %arg16: memref<2x18x32x3xf32, #tpu.memory_space<vmem>>, %arg17: memref<2x18x32x32xf32, #tpu.memory_space<vmem>>) attributes {dimension_semantics = [], scalar_prefetch = 0 : i64, scratch_operands = 2 : i64, tpu.core_type = #tpu.core_type<tc>} {
    %cst = arith.constant 0.000000e+00 : f32
    %0 = vector.broadcast %cst : f32 to vector<2x1x32x3xf32>
    %c0 = arith.constant 0 : index
    %c0_0 = arith.constant 0 : index
    %c0_1 = arith.constant 0 : index
    %c0_2 = arith.constant 0 : index
    %1 = vector.load %arg16[%c0, %c0_0, %c0_1, %c0_2] : memref<2x18x32x3xf32, #tpu.memory_space<vmem>>, vector<2x1x32x3xf32>
    tpu.vector_store %arg16[%c0, %c0_0, %c0_1, %c0_2], %0 {strides = array<i32>} : memref<2x18x32x3xf32, #tpu.memory_space<vmem>>, vector<2x1x32x3xf32>,
    %cst_3 = arith.constant 0.000000e+00 : f32
    %2 = vector.broadcast %cst_3 : f32 to vector<2x1x32x3xf32>
    %c0_4 = arith.constant 0 : index
    %c17 = arith.constant 17 : index
    %c0_5 = arith.constant 0 : index
    %c0_6 = arith.constant 0 : index
    %3 = vector.load %arg16[%c0_4, %c17, %c0_5, %c0_6] : memref<2x18x32x3xf32, #tpu.memory_space<vmem>>, vector<2x1x32x3xf32>
    tpu.vector_store %arg16[%c0_4, %c17, %c0_5, %c0_6], %2 {strides = array<i32>} : memref<2x18x32x3xf32, #tpu.memory_space<vmem>>, vector<2x1x32x3xf32>,
    %cst_7 = arith.constant 0.000000e+00 : f32
    %4 = vector.broadcast %cst_7 : f32 to vector<2x18x1x3xf32>
    %c0_8 = arith.constant 0 : index
    %c0_9 = arith.constant 0 : index
    %c7 = arith.constant 7 : index
    %c0_10 = arith.constant 0 : index
    %5 = vector.load %arg16[%c0_8, %c0_9, %c7, %c0_10] : memref<2x18x32x3xf32, #tpu.memory_space<vmem>>, vector<2x18x1x3xf32>
    tpu.vector_store %arg16[%c0_8, %c0_9, %c7, %c0_10], %4 {strides = array<i32>} : memref<2x18x32x3xf32, #tpu.memory_space<vmem>>, vector<2x18x1x3xf32>,
    %cst_11 = arith.constant 0.000000e+00 : f32
    %6 = vector.broadcast %cst_11 : f32 to vector<2x18x1x3xf32>
    %c0_12 = arith.constant 0 : index
    %c0_13 = arith.constant 0 : index
    %c24 = arith.constant 24 : index
    %c0_14 = arith.constant 0 : index
    %7 = vector.load %arg16[%c0_12, %c0_13, %c24, %c0_14] : memref<2x18x32x3xf32, #tpu.memory_space<vmem>>, vector<2x18x1x3xf32>
    tpu.vector_store %arg16[%c0_12, %c0_13, %c24, %c0_14], %6 {strides = array<i32>} : memref<2x18x32x3xf32, #tpu.memory_space<vmem>>, vector<2x18x1x3xf32>,
    %cst_15 = arith.constant 0.000000e+00 : f32
    %8 = vector.broadcast %cst_15 : f32 to vector<2x1x32x32xf32>
    %c0_16 = arith.constant 0 : index
    %c0_17 = arith.constant 0 : index
    %c0_18 = arith.constant 0 : index
    %c0_19 = arith.constant 0 : index
    %9 = vector.load %arg17[%c0_16, %c0_17, %c0_18, %c0_19] : memref<2x18x32x32xf32, #tpu.memory_space<vmem>>, vector<2x1x32x32xf32>
    tpu.vector_store %arg17[%c0_16, %c0_17, %c0_18, %c0_19], %8 {strides = array<i32>} : memref<2x18x32x32xf32, #tpu.memory_space<vmem>>, vector<2x1x32x32xf32>,
    %cst_20 = arith.constant 0.000000e+00 : f32
    %10 = vector.broadcast %cst_20 : f32 to vector<2x1x32x32xf32>
    %c0_21 = arith.constant 0 : index
    %c17_22 = arith.constant 17 : index
    %c0_23 = arith.constant 0 : index
    %c0_24 = arith.constant 0 : index
    %11 = vector.load %arg17[%c0_21, %c17_22, %c0_23, %c0_24] : memref<2x18x32x32xf32, #tpu.memory_space<vmem>>, vector<2x1x32x32xf32>
    tpu.vector_store %arg17[%c0_21, %c17_22, %c0_23, %c0_24], %10 {strides = array<i32>} : memref<2x18x32x32xf32, #tpu.memory_space<vmem>>, vector<2x1x32x32xf32>,
    %cst_25 = arith.constant 0.000000e+00 : f32
    %12 = vector.broadcast %cst_25 : f32 to vector<2x18x1x32xf32>
    %c0_26 = arith.constant 0 : index
    %c0_27 = arith.constant 0 : index
    %c7_28 = arith.constant 7 : index
    %c0_29 = arith.constant 0 : index
    %13 = vector.load %arg17[%c0_26, %c0_27, %c7_28, %c0_29] : memref<2x18x32x32xf32, #tpu.memory_space<vmem>>, vector<2x18x1x32xf32>
    tpu.vector_store %arg17[%c0_26, %c0_27, %c7_28, %c0_29], %12 {strides = array<i32>} : memref<2x18x32x32xf32, #tpu.memory_space<vmem>>, vector<2x18x1x32xf32>,
    %cst_30 = arith.constant 0.000000e+00 : f32
    %14 = vector.broadcast %cst_30 : f32 to vector<2x18x1x32xf32>
    %c0_31 = arith.constant 0 : index
    %c0_32 = arith.constant 0 : index
    %c24_33 = arith.constant 24 : index
    %c0_34 = arith.constant 0 : index
    %15 = vector.load %arg17[%c0_31, %c0_32, %c24_33, %c0_34] : memref<2x18x32x32xf32, #tpu.memory_space<vmem>>, vector<2x18x1x32xf32>
    tpu.vector_store %arg17[%c0_31, %c0_32, %c24_33, %c0_34], %14 {strides = array<i32>} : memref<2x18x32x32xf32, #tpu.memory_space<vmem>>, vector<2x18x1x32xf32>,
    %c0_35 = arith.constant 0 : index
    %c0_36 = arith.constant 0 : index
    %c0_37 = arith.constant 0 : index
    %c0_38 = arith.constant 0 : index
    %16 = vector.load %arg0[%c0_35, %c0_36, %c0_37, %c0_38] : memref<2x16x16x3xf32, #tpu.memory_space<vmem>>, vector<2x16x16x3xf32>
    %c0_39 = arith.constant 0 : index
    %c1 = arith.constant 1 : index
    %c8 = arith.constant 8 : index
    %c0_40 = arith.constant 0 : index
    %17 = vector.load %arg16[%c0_39, %c1, %c8, %c0_40] : memref<2x18x32x3xf32, #tpu.memory_space<vmem>>, vector<2x16x16x3xf32>
    tpu.vector_store %arg16[%c0_39, %c1, %c8, %c0_40], %16 {strides = array<i32>} : memref<2x18x32x3xf32, #tpu.memory_space<vmem>>, vector<2x16x16x3xf32>,
    %c0_41 = arith.constant 0 : index
    %c0_42 = arith.constant 0 : index
    %c7_43 = arith.constant 7 : index
    %c0_44 = arith.constant 0 : index
    %18 = vector.load %arg16[%c0_41, %c0_42, %c7_43, %c0_44] : memref<2x18x32x3xf32, #tpu.memory_space<vmem>>, vector<2x18x16x3xf32>
    %c0_45 = arith.constant 0 : index
    %c0_46 = arith.constant 0 : index
    %c8_47 = arith.constant 8 : index
    %c0_48 = arith.constant 0 : index
    %19 = vector.load %arg16[%c0_45, %c0_46, %c8_47, %c0_48] : memref<2x18x32x3xf32, #tpu.memory_space<vmem>>, vector<2x18x16x3xf32>
    %c0_49 = arith.constant 0 : index
    %c0_50 = arith.constant 0 : index
    %c9 = arith.constant 9 : index
    %c0_51 = arith.constant 0 : index
    %20 = vector.load %arg16[%c0_49, %c0_50, %c9, %c0_51] : memref<2x18x32x3xf32, #tpu.memory_space<vmem>>, vector<2x18x16x3xf32>
    %21 = tpu.concatenate %18, %19, %20 in 3 : vector<2x18x16x3xf32>, vector<2x18x16x3xf32>, vector<2x18x16x3xf32> -> vector<2x18x16x9xf32>
    %cst_52 = arith.constant 0.000000e+00 : f32
    %22 = vector.broadcast %cst_52 : f32 to vector<512x32xf32>
    %23 = vector.extract_strided_slice %21 {offsets = [0, 0, 0, 0], sizes = [2, 16, 16, 9], strides = [1, 1, 1, 1]} : vector<2x18x16x9xf32> to vector<2x16x16x9xf32>
    %24 = vector.shape_cast %23 : vector<2x16x16x9xf32> to vector<512x9xf32>
    %c0_53 = arith.constant 0 : index
    %c0_54 = arith.constant 0 : index
    %c0_55 = arith.constant 0 : index
    %25 = vector.load %arg1[%c0_53, %c0_54, %c0_55] : memref<3x9x32xf32, #tpu.memory_space<vmem>>, vector<1x9x32xf32>
    %26 = vector.shape_cast %25 : vector<1x9x32xf32> to vector<9x32xf32>
    %cst_56 = arith.constant dense<0.000000e+00> : vector<512x32xf32>
    %27 = tpu.matmul %24, %26, %cst_56 {dimension_numbers = #tpu.dot_dimension_numbers<[1], [0], [0], [1], [0, 0, 1, 1], [], []>} : vector<512x9xf32>, vector<9x32xf32>, vector<512x32xf32> -> vector<512x32xf32>
    %28 = arith.addf %22, %27 : vector<512x32xf32>
    %29 = vector.extract_strided_slice %21 {offsets = [0, 1, 0, 0], sizes = [2, 16, 16, 9], strides = [1, 1, 1, 1]} : vector<2x18x16x9xf32> to vector<2x16x16x9xf32>
    %30 = vector.shape_cast %29 : vector<2x16x16x9xf32> to vector<512x9xf32>
    %c1_57 = arith.constant 1 : index
    %c0_58 = arith.constant 0 : index
    %c0_59 = arith.constant 0 : index
    %31 = vector.load %arg1[%c1_57, %c0_58, %c0_59] : memref<3x9x32xf32, #tpu.memory_space<vmem>>, vector<1x9x32xf32>
    %32 = vector.shape_cast %31 : vector<1x9x32xf32> to vector<9x32xf32>
    %cst_60 = arith.constant dense<0.000000e+00> : vector<512x32xf32>
    %33 = tpu.matmul %30, %32, %cst_60 {dimension_numbers = #tpu.dot_dimension_numbers<[1], [0], [0], [1], [0, 0, 1, 1], [], []>} : vector<512x9xf32>, vector<9x32xf32>, vector<512x32xf32> -> vector<512x32xf32>
    %34 = arith.addf %28, %33 : vector<512x32xf32>
    %35 = vector.extract_strided_slice %21 {offsets = [0, 2, 0, 0], sizes = [2, 16, 16, 9], strides = [1, 1, 1, 1]} : vector<2x18x16x9xf32> to vector<2x16x16x9xf32>
    %36 = vector.shape_cast %35 : vector<2x16x16x9xf32> to vector<512x9xf32>
    %c2 = arith.constant 2 : index
    %c0_61 = arith.constant 0 : index
    %c0_62 = arith.constant 0 : index
    %37 = vector.load %arg1[%c2, %c0_61, %c0_62] : memref<3x9x32xf32, #tpu.memory_space<vmem>>, vector<1x9x32xf32>
    %38 = vector.shape_cast %37 : vector<1x9x32xf32> to vector<9x32xf32>
    %cst_63 = arith.constant dense<0.000000e+00> : vector<512x32xf32>
    %39 = tpu.matmul %36, %38, %cst_63 {dimension_numbers = #tpu.dot_dimension_numbers<[1], [0], [0], [1], [0, 0, 1, 1], [], []>} : vector<512x9xf32>, vector<9x32xf32>, vector<512x32xf32> -> vector<512x32xf32>
    %40 = arith.addf %34, %39 : vector<512x32xf32>
    %c0_64 = arith.constant 0 : index
    %c0_65 = arith.constant 0 : index
    %41 = vector.load %arg2[%c0_64, %c0_65] : memref<1x32xf32, #tpu.memory_space<vmem>>, vector<1x32xf32>
    %42 = vector.broadcast %41 : vector<1x32xf32> to vector<512x32xf32>
    %43 = arith.addf %40, %42 : vector<512x32xf32>
    %c0_66 = arith.constant 0 : index
    %c0_67 = arith.constant 0 : index
    %44 = vector.load %arg3[%c0_66, %c0_67] : memref<1x32xf32, #tpu.memory_space<vmem>>, vector<1x32xf32>
    %c0_68 = arith.constant 0 : index
    %c0_69 = arith.constant 0 : index
    %45 = vector.load %arg4[%c0_68, %c0_69] : memref<1x32xf32, #tpu.memory_space<vmem>>, vector<1x32xf32>
    %cst_70 = arith.constant 0.00999999977 : f32
    %46 = vector.broadcast %cst_70 : f32 to vector<512x32xf32>
    %47 = arith.mulf %46, %43 : vector<512x32xf32>
    %48 = arith.maximumf %43, %47 : vector<512x32xf32>
    %cst_71 = arith.constant dense<0.000000e+00> : vector<32xf32>
    %49 = vector.multi_reduction <add>, %48, %cst_71 [0] : vector<512x32xf32> to vector<32xf32>
    %50 = vector.shape_cast %49 : vector<32xf32> to vector<1x32xf32>
    %cst_72 = arith.constant 0.001953125 : f32
    %51 = vector.broadcast %cst_72 : f32 to vector<1x32xf32>
    %52 = arith.mulf %50, %51 : vector<1x32xf32>
    %53 = vector.broadcast %52 : vector<1x32xf32> to vector<512x32xf32>
    %54 = arith.subf %48, %53 : vector<512x32xf32>
    %55 = arith.mulf %54, %54 : vector<512x32xf32>
    %cst_73 = arith.constant dense<0.000000e+00> : vector<32xf32>
    %56 = vector.multi_reduction <add>, %55, %cst_73 [0] : vector<512x32xf32> to vector<32xf32>
    %57 = vector.shape_cast %56 : vector<32xf32> to vector<1x32xf32>
    %cst_74 = arith.constant 0.001953125 : f32
    %58 = vector.broadcast %cst_74 : f32 to vector<1x32xf32>
    %59 = arith.mulf %57, %58 : vector<1x32xf32>
    %cst_75 = arith.constant 9.99999974E-6 : f32
    %60 = vector.broadcast %cst_75 : f32 to vector<1x32xf32>
    %61 = arith.addf %59, %60 : vector<1x32xf32>
    %62 = math.rsqrt %61 : vector<1x32xf32>
    %63 = arith.mulf %44, %62 : vector<1x32xf32>
    %64 = vector.broadcast %63 : vector<1x32xf32> to vector<512x32xf32>
    %65 = arith.mulf %54, %64 : vector<512x32xf32>
    %66 = vector.broadcast %45 : vector<1x32xf32> to vector<512x32xf32>
    %67 = arith.addf %65, %66 : vector<512x32xf32>
    %68 = vector.shape_cast %67 : vector<512x32xf32> to vector<2x16x16x32xf32>
    %c0_76 = arith.constant 0 : index
    %c1_77 = arith.constant 1 : index
    %c8_78 = arith.constant 8 : index
    %c0_79 = arith.constant 0 : index
    %69 = vector.load %arg17[%c0_76, %c1_77, %c8_78, %c0_79] : memref<2x18x32x32xf32, #tpu.memory_space<vmem>>, vector<2x16x16x32xf32>
    tpu.vector_store %arg17[%c0_76, %c1_77, %c8_78, %c0_79], %68 {strides = array<i32>} : memref<2x18x32x32xf32, #tpu.memory_space<vmem>>, vector<2x16x16x32xf32>,
    %c0_80 = arith.constant 0 : index
    %c0_81 = arith.constant 0 : index
    %c7_82 = arith.constant 7 : index
    %c0_83 = arith.constant 0 : index
    %70 = vector.load %arg17[%c0_80, %c0_81, %c7_82, %c0_83] : memref<2x18x32x32xf32, #tpu.memory_space<vmem>>, vector<2x18x16x32xf32>
    %c0_84 = arith.constant 0 : index
    %c0_85 = arith.constant 0 : index
    %c8_86 = arith.constant 8 : index
    %c0_87 = arith.constant 0 : index
    %71 = vector.load %arg17[%c0_84, %c0_85, %c8_86, %c0_87] : memref<2x18x32x32xf32, #tpu.memory_space<vmem>>, vector<2x18x16x32xf32>
    %c0_88 = arith.constant 0 : index
    %c0_89 = arith.constant 0 : index
    %c9_90 = arith.constant 9 : index
    %c0_91 = arith.constant 0 : index
    %72 = vector.load %arg17[%c0_88, %c0_89, %c9_90, %c0_91] : memref<2x18x32x32xf32, #tpu.memory_space<vmem>>, vector<2x18x16x32xf32>
    %73 = tpu.concatenate %70, %71, %72 in 3 : vector<2x18x16x32xf32>, vector<2x18x16x32xf32>, vector<2x18x16x32xf32> -> vector<2x18x16x96xf32>
    %cst_92 = arith.constant 0.000000e+00 : f32
    %74 = vector.broadcast %cst_92 : f32 to vector<512x68xf32>
    %75 = vector.extract_strided_slice %73 {offsets = [0, 0, 0, 0], sizes = [2, 16, 16, 96], strides = [1, 1, 1, 1]} : vector<2x18x16x96xf32> to vector<2x16x16x96xf32>
    %76 = vector.shape_cast %75 : vector<2x16x16x96xf32> to vector<512x96xf32>
    %c0_93 = arith.constant 0 : index
    %c0_94 = arith.constant 0 : index
    %c0_95 = arith.constant 0 : index
    %77 = vector.load %arg5[%c0_93, %c0_94, %c0_95] : memref<3x96x68xf32, #tpu.memory_space<vmem>>, vector<1x96x68xf32>
    %78 = vector.shape_cast %77 : vector<1x96x68xf32> to vector<96x68xf32>
    %cst_96 = arith.constant dense<0.000000e+00> : vector<512x68xf32>
    %79 = tpu.matmul %76, %78, %cst_96 {dimension_numbers = #tpu.dot_dimension_numbers<[1], [0], [0], [1], [0, 0, 1, 1], [], []>} : vector<512x96xf32>, vector<96x68xf32>, vector<512x68xf32> -> vector<512x68xf32>
    %80 = arith.addf %74, %79 : vector<512x68xf32>
    %81 = vector.extract_strided_slice %73 {offsets = [0, 1, 0, 0], sizes = [2, 16, 16, 96], strides = [1, 1, 1, 1]} : vector<2x18x16x96xf32> to vector<2x16x16x96xf32>
    %82 = vector.shape_cast %81 : vector<2x16x16x96xf32> to vector<512x96xf32>
    %c1_97 = arith.constant 1 : index
    %c0_98 = arith.constant 0 : index
    %c0_99 = arith.constant 0 : index
    %83 = vector.load %arg5[%c1_97, %c0_98, %c0_99] : memref<3x96x68xf32, #tpu.memory_space<vmem>>, vector<1x96x68xf32>
    %84 = vector.shape_cast %83 : vector<1x96x68xf32> to vector<96x68xf32>
    %cst_100 = arith.constant dense<0.000000e+00> : vector<512x68xf32>
    %85 = tpu.matmul %82, %84, %cst_100 {dimension_numbers = #tpu.dot_dimension_numbers<[1], [0], [0], [1], [0, 0, 1, 1], [], []>} : vector<512x96xf32>, vector<96x68xf32>, vector<512x68xf32> -> vector<512x68xf32>
    %86 = arith.addf %80, %85 : vector<512x68xf32>
    %87 = vector.extract_strided_slice %73 {offsets = [0, 2, 0, 0], sizes = [2, 16, 16, 96], strides = [1, 1, 1, 1]} : vector<2x18x16x96xf32> to vector<2x16x16x96xf32>
    %88 = vector.shape_cast %87 : vector<2x16x16x96xf32> to vector<512x96xf32>
    %c2_101 = arith.constant 2 : index
    %c0_102 = arith.constant 0 : index
    %c0_103 = arith.constant 0 : index
    %89 = vector.load %arg5[%c2_101, %c0_102, %c0_103] : memref<3x96x68xf32, #tpu.memory_space<vmem>>, vector<1x96x68xf32>
    %90 = vector.shape_cast %89 : vector<1x96x68xf32> to vector<96x68xf32>
    %cst_104 = arith.constant dense<0.000000e+00> : vector<512x68xf32>
    %91 = tpu.matmul %88, %90, %cst_104 {dimension_numbers = #tpu.dot_dimension_numbers<[1], [0], [0], [1], [0, 0, 1, 1], [], []>} : vector<512x96xf32>, vector<96x68xf32>, vector<512x68xf32> -> vector<512x68xf32>
    %92 = arith.addf %86, %91 : vector<512x68xf32>
    %93 = vector.extract_strided_slice %92 {offsets = [0, 0], sizes = [512, 32], strides = [1, 1]} : vector<512x68xf32> to vector<512x32xf32>
    %c0_105 = arith.constant 0 : index
    %c0_106 = arith.constant 0 : index
    %94 = vector.load %arg6[%c0_105, %c0_106] : memref<1x32xf32, #tpu.memory_space<vmem>>, vector<1x32xf32>
    %95 = vector.broadcast %94 : vector<1x32xf32> to vector<512x32xf32>
    %96 = arith.addf %93, %95 : vector<512x32xf32>
    %c0_107 = arith.constant 0 : index
    %c0_108 = arith.constant 0 : index
    %97 = vector.load %arg7[%c0_107, %c0_108] : memref<1x32xf32, #tpu.memory_space<vmem>>, vector<1x32xf32>
    %c0_109 = arith.constant 0 : index
    %c0_110 = arith.constant 0 : index
    %98 = vector.load %arg8[%c0_109, %c0_110] : memref<1x32xf32, #tpu.memory_space<vmem>>, vector<1x32xf32>
    %cst_111 = arith.constant 0.00999999977 : f32
    %99 = vector.broadcast %cst_111 : f32 to vector<512x32xf32>
    %100 = arith.mulf %99, %96 : vector<512x32xf32>
    %101 = arith.maximumf %96, %100 : vector<512x32xf32>
    %cst_112 = arith.constant dense<0.000000e+00> : vector<32xf32>
    %102 = vector.multi_reduction <add>, %101, %cst_112 [0] : vector<512x32xf32> to vector<32xf32>
    %103 = vector.shape_cast %102 : vector<32xf32> to vector<1x32xf32>
    %cst_113 = arith.constant 0.001953125 : f32
    %104 = vector.broadcast %cst_113 : f32 to vector<1x32xf32>
    %105 = arith.mulf %103, %104 : vector<1x32xf32>
    %106 = vector.broadcast %105 : vector<1x32xf32> to vector<512x32xf32>
    %107 = arith.subf %101, %106 : vector<512x32xf32>
    %108 = arith.mulf %107, %107 : vector<512x32xf32>
    %cst_114 = arith.constant dense<0.000000e+00> : vector<32xf32>
    %109 = vector.multi_reduction <add>, %108, %cst_114 [0] : vector<512x32xf32> to vector<32xf32>
    %110 = vector.shape_cast %109 : vector<32xf32> to vector<1x32xf32>
    %cst_115 = arith.constant 0.001953125 : f32
    %111 = vector.broadcast %cst_115 : f32 to vector<1x32xf32>
    %112 = arith.mulf %110, %111 : vector<1x32xf32>
    %cst_116 = arith.constant 9.99999974E-6 : f32
    %113 = vector.broadcast %cst_116 : f32 to vector<1x32xf32>
    %114 = arith.addf %112, %113 : vector<1x32xf32>
    %115 = math.rsqrt %114 : vector<1x32xf32>
    %116 = arith.mulf %97, %115 : vector<1x32xf32>
    %117 = vector.broadcast %116 : vector<1x32xf32> to vector<512x32xf32>
    %118 = arith.mulf %107, %117 : vector<512x32xf32>
    %119 = vector.broadcast %98 : vector<1x32xf32> to vector<512x32xf32>
    %120 = arith.addf %118, %119 : vector<512x32xf32>
    %121 = vector.extract_strided_slice %92 {offsets = [0, 32], sizes = [512, 32], strides = [1, 1]} : vector<512x68xf32> to vector<512x32xf32>
    %122 = vector.extract_strided_slice %92 {offsets = [0, 64], sizes = [512, 4], strides = [1, 1]} : vector<512x68xf32> to vector<512x4xf32>
    %123 = vector.shape_cast %120 : vector<512x32xf32> to vector<2x16x16x32xf32>
    %c0_117 = arith.constant 0 : index
    %c1_118 = arith.constant 1 : index
    %c8_119 = arith.constant 8 : index
    %c0_120 = arith.constant 0 : index
    %124 = vector.load %arg17[%c0_117, %c1_118, %c8_119, %c0_120] : memref<2x18x32x32xf32, #tpu.memory_space<vmem>>, vector<2x16x16x32xf32>
    tpu.vector_store %arg17[%c0_117, %c1_118, %c8_119, %c0_120], %123 {strides = array<i32>} : memref<2x18x32x32xf32, #tpu.memory_space<vmem>>, vector<2x16x16x32xf32>,
    %c0_121 = arith.constant 0 : index
    %c0_122 = arith.constant 0 : index
    %c7_123 = arith.constant 7 : index
    %c0_124 = arith.constant 0 : index
    %125 = vector.load %arg17[%c0_121, %c0_122, %c7_123, %c0_124] : memref<2x18x32x32xf32, #tpu.memory_space<vmem>>, vector<2x18x16x32xf32>
    %c0_125 = arith.constant 0 : index
    %c0_126 = arith.constant 0 : index
    %c8_127 = arith.constant 8 : index
    %c0_128 = arith.constant 0 : index
    %126 = vector.load %arg17[%c0_125, %c0_126, %c8_127, %c0_128] : memref<2x18x32x32xf32, #tpu.memory_space<vmem>>, vector<2x18x16x32xf32>
    %c0_129 = arith.constant 0 : index
    %c0_130 = arith.constant 0 : index
    %c9_131 = arith.constant 9 : index
    %c0_132 = arith.constant 0 : index
    %127 = vector.load %arg17[%c0_129, %c0_130, %c9_131, %c0_132] : memref<2x18x32x32xf32, #tpu.memory_space<vmem>>, vector<2x18x16x32xf32>
    %128 = tpu.concatenate %125, %126, %127 in 3 : vector<2x18x16x32xf32>, vector<2x18x16x32xf32>, vector<2x18x16x32xf32> -> vector<2x18x16x96xf32>
    %cst_133 = arith.constant 0.000000e+00 : f32
    %129 = vector.broadcast %cst_133 : f32 to vector<512x36xf32>
    %130 = vector.extract_strided_slice %128 {offsets = [0, 0, 0, 0], sizes = [2, 16, 16, 96], strides = [1, 1, 1, 1]} : vector<2x18x16x96xf32> to vector<2x16x16x96xf32>
    %131 = vector.shape_cast %130 : vector<2x16x16x96xf32> to vector<512x96xf32>
    %c0_134 = arith.constant 0 : index
    %c0_135 = arith.constant 0 : index
    %c0_136 = arith.constant 0 : index
    %132 = vector.load %arg9[%c0_134, %c0_135, %c0_136] : memref<3x96x36xf32, #tpu.memory_space<vmem>>, vector<1x96x36xf32>
    %133 = vector.shape_cast %132 : vector<1x96x36xf32> to vector<96x36xf32>
    %cst_137 = arith.constant dense<0.000000e+00> : vector<512x36xf32>
    %134 = tpu.matmul %131, %133, %cst_137 {dimension_numbers = #tpu.dot_dimension_numbers<[1], [0], [0], [1], [0, 0, 1, 1], [], []>} : vector<512x96xf32>, vector<96x36xf32>, vector<512x36xf32> -> vector<512x36xf32>
    %135 = arith.addf %129, %134 : vector<512x36xf32>
    %136 = vector.extract_strided_slice %128 {offsets = [0, 1, 0, 0], sizes = [2, 16, 16, 96], strides = [1, 1, 1, 1]} : vector<2x18x16x96xf32> to vector<2x16x16x96xf32>
    %137 = vector.shape_cast %136 : vector<2x16x16x96xf32> to vector<512x96xf32>
    %c1_138 = arith.constant 1 : index
    %c0_139 = arith.constant 0 : index
    %c0_140 = arith.constant 0 : index
    %138 = vector.load %arg9[%c1_138, %c0_139, %c0_140] : memref<3x96x36xf32, #tpu.memory_space<vmem>>, vector<1x96x36xf32>
    %139 = vector.shape_cast %138 : vector<1x96x36xf32> to vector<96x36xf32>
    %cst_141 = arith.constant dense<0.000000e+00> : vector<512x36xf32>
    %140 = tpu.matmul %137, %139, %cst_141 {dimension_numbers = #tpu.dot_dimension_numbers<[1], [0], [0], [1], [0, 0, 1, 1], [], []>} : vector<512x96xf32>, vector<96x36xf32>, vector<512x36xf32> -> vector<512x36xf32>
    %141 = arith.addf %135, %140 : vector<512x36xf32>
    %142 = vector.extract_strided_slice %128 {offsets = [0, 2, 0, 0], sizes = [2, 16, 16, 96], strides = [1, 1, 1, 1]} : vector<2x18x16x96xf32> to vector<2x16x16x96xf32>
    %143 = vector.shape_cast %142 : vector<2x16x16x96xf32> to vector<512x96xf32>
    %c2_142 = arith.constant 2 : index
    %c0_143 = arith.constant 0 : index
    %c0_144 = arith.constant 0 : index
    %144 = vector.load %arg9[%c2_142, %c0_143, %c0_144] : memref<3x96x36xf32, #tpu.memory_space<vmem>>, vector<1x96x36xf32>
    %145 = vector.shape_cast %144 : vector<1x96x36xf32> to vector<96x36xf32>
    %cst_145 = arith.constant dense<0.000000e+00> : vector<512x36xf32>
    %146 = tpu.matmul %143, %145, %cst_145 {dimension_numbers = #tpu.dot_dimension_numbers<[1], [0], [0], [1], [0, 0, 1, 1], [], []>} : vector<512x96xf32>, vector<96x36xf32>, vector<512x36xf32> -> vector<512x36xf32>
    %147 = arith.addf %141, %146 : vector<512x36xf32>
    %148 = vector.extract_strided_slice %147 {offsets = [0, 0], sizes = [512, 32], strides = [1, 1]} : vector<512x36xf32> to vector<512x32xf32>
    %149 = arith.addf %121, %148 : vector<512x32xf32>
    %c0_146 = arith.constant 0 : index
    %c0_147 = arith.constant 0 : index
    %150 = vector.load %arg10[%c0_146, %c0_147] : memref<1x32xf32, #tpu.memory_space<vmem>>, vector<1x32xf32>
    %151 = vector.broadcast %150 : vector<1x32xf32> to vector<512x32xf32>
    %152 = arith.addf %149, %151 : vector<512x32xf32>
    %c0_148 = arith.constant 0 : index
    %c0_149 = arith.constant 0 : index
    %153 = vector.load %arg11[%c0_148, %c0_149] : memref<1x32xf32, #tpu.memory_space<vmem>>, vector<1x32xf32>
    %c0_150 = arith.constant 0 : index
    %c0_151 = arith.constant 0 : index
    %154 = vector.load %arg12[%c0_150, %c0_151] : memref<1x32xf32, #tpu.memory_space<vmem>>, vector<1x32xf32>
    %cst_152 = arith.constant 0.00999999977 : f32
    %155 = vector.broadcast %cst_152 : f32 to vector<512x32xf32>
    %156 = arith.mulf %155, %152 : vector<512x32xf32>
    %157 = arith.maximumf %152, %156 : vector<512x32xf32>
    %cst_153 = arith.constant dense<0.000000e+00> : vector<32xf32>
    %158 = vector.multi_reduction <add>, %157, %cst_153 [0] : vector<512x32xf32> to vector<32xf32>
    %159 = vector.shape_cast %158 : vector<32xf32> to vector<1x32xf32>
    %cst_154 = arith.constant 0.001953125 : f32
    %160 = vector.broadcast %cst_154 : f32 to vector<1x32xf32>
    %161 = arith.mulf %159, %160 : vector<1x32xf32>
    %162 = vector.broadcast %161 : vector<1x32xf32> to vector<512x32xf32>
    %163 = arith.subf %157, %162 : vector<512x32xf32>
    %164 = arith.mulf %163, %163 : vector<512x32xf32>
    %cst_155 = arith.constant dense<0.000000e+00> : vector<32xf32>
    %165 = vector.multi_reduction <add>, %164, %cst_155 [0] : vector<512x32xf32> to vector<32xf32>
    %166 = vector.shape_cast %165 : vector<32xf32> to vector<1x32xf32>
    %cst_156 = arith.constant 0.001953125 : f32
    %167 = vector.broadcast %cst_156 : f32 to vector<1x32xf32>
    %168 = arith.mulf %166, %167 : vector<1x32xf32>
    %cst_157 = arith.constant 9.99999974E-6 : f32
    %169 = vector.broadcast %cst_157 : f32 to vector<1x32xf32>
    %170 = arith.addf %168, %169 : vector<1x32xf32>
    %171 = math.rsqrt %170 : vector<1x32xf32>
    %172 = arith.mulf %153, %171 : vector<1x32xf32>
    %173 = vector.broadcast %172 : vector<1x32xf32> to vector<512x32xf32>
    %174 = arith.mulf %163, %173 : vector<512x32xf32>
    %175 = vector.broadcast %154 : vector<1x32xf32> to vector<512x32xf32>
    %176 = arith.addf %174, %175 : vector<512x32xf32>
    %177 = vector.extract_strided_slice %147 {offsets = [0, 32], sizes = [512, 4], strides = [1, 1]} : vector<512x36xf32> to vector<512x4xf32>
    %178 = arith.addf %122, %177 : vector<512x4xf32>
    %179 = vector.shape_cast %176 : vector<512x32xf32> to vector<2x16x16x32xf32>
    %c0_158 = arith.constant 0 : index
    %c1_159 = arith.constant 1 : index
    %c8_160 = arith.constant 8 : index
    %c0_161 = arith.constant 0 : index
    %180 = vector.load %arg17[%c0_158, %c1_159, %c8_160, %c0_161] : memref<2x18x32x32xf32, #tpu.memory_space<vmem>>, vector<2x16x16x32xf32>
    tpu.vector_store %arg17[%c0_158, %c1_159, %c8_160, %c0_161], %179 {strides = array<i32>} : memref<2x18x32x32xf32, #tpu.memory_space<vmem>>, vector<2x16x16x32xf32>,
    %c0_162 = arith.constant 0 : index
    %c0_163 = arith.constant 0 : index
    %c7_164 = arith.constant 7 : index
    %c0_165 = arith.constant 0 : index
    %181 = vector.load %arg17[%c0_162, %c0_163, %c7_164, %c0_165] : memref<2x18x32x32xf32, #tpu.memory_space<vmem>>, vector<2x18x16x32xf32>
    %c0_166 = arith.constant 0 : index
    %c0_167 = arith.constant 0 : index
    %c8_168 = arith.constant 8 : index
    %c0_169 = arith.constant 0 : index
    %182 = vector.load %arg17[%c0_166, %c0_167, %c8_168, %c0_169] : memref<2x18x32x32xf32, #tpu.memory_space<vmem>>, vector<2x18x16x32xf32>
    %c0_170 = arith.constant 0 : index
    %c0_171 = arith.constant 0 : index
    %c9_172 = arith.constant 9 : index
    %c0_173 = arith.constant 0 : index
    %183 = vector.load %arg17[%c0_170, %c0_171, %c9_172, %c0_173] : memref<2x18x32x32xf32, #tpu.memory_space<vmem>>, vector<2x18x16x32xf32>
    %184 = tpu.concatenate %181, %182, %183 in 3 : vector<2x18x16x32xf32>, vector<2x18x16x32xf32>, vector<2x18x16x32xf32> -> vector<2x18x16x96xf32>
    %cst_174 = arith.constant 0.000000e+00 : f32
    %185 = vector.broadcast %cst_174 : f32 to vector<512x4xf32>
    %186 = vector.extract_strided_slice %184 {offsets = [0, 0, 0, 0], sizes = [2, 16, 16, 96], strides = [1, 1, 1, 1]} : vector<2x18x16x96xf32> to vector<2x16x16x96xf32>
    %187 = vector.shape_cast %186 : vector<2x16x16x96xf32> to vector<512x96xf32>
    %c0_175 = arith.constant 0 : index
    %c0_176 = arith.constant 0 : index
    %c0_177 = arith.constant 0 : index
    %188 = vector.load %arg13[%c0_175, %c0_176, %c0_177] : memref<3x96x4xf32, #tpu.memory_space<vmem>>, vector<1x96x4xf32>
    %189 = vector.shape_cast %188 : vector<1x96x4xf32> to vector<96x4xf32>
    %cst_178 = arith.constant dense<0.000000e+00> : vector<512x4xf32>
    %190 = tpu.matmul %187, %189, %cst_178 {dimension_numbers = #tpu.dot_dimension_numbers<[1], [0], [0], [1], [0, 0, 1, 1], [], []>} : vector<512x96xf32>, vector<96x4xf32>, vector<512x4xf32> -> vector<512x4xf32>
    %191 = arith.addf %185, %190 : vector<512x4xf32>
    %192 = vector.extract_strided_slice %184 {offsets = [0, 1, 0, 0], sizes = [2, 16, 16, 96], strides = [1, 1, 1, 1]} : vector<2x18x16x96xf32> to vector<2x16x16x96xf32>
    %193 = vector.shape_cast %192 : vector<2x16x16x96xf32> to vector<512x96xf32>
    %c1_179 = arith.constant 1 : index
    %c0_180 = arith.constant 0 : index
    %c0_181 = arith.constant 0 : index
    %194 = vector.load %arg13[%c1_179, %c0_180, %c0_181] : memref<3x96x4xf32, #tpu.memory_space<vmem>>, vector<1x96x4xf32>
    %195 = vector.shape_cast %194 : vector<1x96x4xf32> to vector<96x4xf32>
    %cst_182 = arith.constant dense<0.000000e+00> : vector<512x4xf32>
    %196 = tpu.matmul %193, %195, %cst_182 {dimension_numbers = #tpu.dot_dimension_numbers<[1], [0], [0], [1], [0, 0, 1, 1], [], []>} : vector<512x96xf32>, vector<96x4xf32>, vector<512x4xf32> -> vector<512x4xf32>
    %197 = arith.addf %191, %196 : vector<512x4xf32>
    %198 = vector.extract_strided_slice %184 {offsets = [0, 2, 0, 0], sizes = [2, 16, 16, 96], strides = [1, 1, 1, 1]} : vector<2x18x16x96xf32> to vector<2x16x16x96xf32>
    %199 = vector.shape_cast %198 : vector<2x16x16x96xf32> to vector<512x96xf32>
    %c2_183 = arith.constant 2 : index
    %c0_184 = arith.constant 0 : index
    %c0_185 = arith.constant 0 : index
    %200 = vector.load %arg13[%c2_183, %c0_184, %c0_185] : memref<3x96x4xf32, #tpu.memory_space<vmem>>, vector<1x96x4xf32>
    %201 = vector.shape_cast %200 : vector<1x96x4xf32> to vector<96x4xf32>
    %cst_186 = arith.constant dense<0.000000e+00> : vector<512x4xf32>
    %202 = tpu.matmul %199, %201, %cst_186 {dimension_numbers = #tpu.dot_dimension_numbers<[1], [0], [0], [1], [0, 0, 1, 1], [], []>} : vector<512x96xf32>, vector<96x4xf32>, vector<512x4xf32> -> vector<512x4xf32>
    %203 = arith.addf %197, %202 : vector<512x4xf32>
    %204 = arith.addf %178, %203 : vector<512x4xf32>
    %c0_187 = arith.constant 0 : index
    %c0_188 = arith.constant 0 : index
    %205 = vector.load %arg14[%c0_187, %c0_188] : memref<1x4xf32, #tpu.memory_space<vmem>>, vector<1x4xf32>
    %206 = vector.broadcast %205 : vector<1x4xf32> to vector<512x4xf32>
    %207 = arith.addf %204, %206 : vector<512x4xf32>
    %208 = vector.shape_cast %207 : vector<512x4xf32> to vector<2x16x16x4xf32>
    %c0_189 = arith.constant 0 : index
    %c0_190 = arith.constant 0 : index
    %c0_191 = arith.constant 0 : index
    %c0_192 = arith.constant 0 : index
    %209 = vector.load %arg15[%c0_189, %c0_190, %c0_191, %c0_192] : memref<2x16x16x4xf32, #tpu.memory_space<vmem>>, vector<2x16x16x4xf32>
    tpu.vector_store %arg15[%c0_189, %c0_190, %c0_191, %c0_192], %208 {strides = array<i32>} : memref<2x16x16x4xf32, #tpu.memory_space<vmem>>, vector<2x16x16x4xf32>,
    return
  }
}

</mosaic_0001>

<llo_original>
// kernel: tpu_custom_call.1
$region0: #{tpu_custom_call.1}
  #allocation0 [shape = 'u32[]', space=smem, size = 0x4, offset = 0x4, fixed_abs, tag = 'smem constant byte address 0x4 - core index']
  #allocation1 [shape = 'u32[144,128]{1,0:T(1,128)}', space=vmem, size = 0x12000, scoped, tag = 'internal scratch']
  #allocation2 [shape = 'f32[2,18,32,3]{3,2,1,0:T(8,128)}', space=vmem, size = 0x90000, scoped, tag = 'scratch operand']
  #allocation3 [shape = 'f32[2,18,32,32]{3,2,1,0:T(8,128)}', space=vmem, size = 0x90000, scoped, tag = 'scratch operand']
  %s0 = inlined_call_operand.vmem [shape: f32[2,16,16,3], index: 0, kind: input, shape index: {}]
  %s1 = inlined_call_operand.vmem [shape: f32[3,9,32], index: 1, kind: input, shape index: {}]
  %s2 = inlined_call_operand.vmem [shape: f32[1,32], index: 2, kind: input, shape index: {}]
  %s3 = inlined_call_operand.vmem [shape: f32[1,32], index: 3, kind: input, shape index: {}]
  %s4 = inlined_call_operand.vmem [shape: f32[1,32], index: 4, kind: input, shape index: {}]
  %s5 = inlined_call_operand.vmem [shape: f32[3,96,68], index: 5, kind: input, shape index: {}]
  %s6 = inlined_call_operand.vmem [shape: f32[1,32], index: 6, kind: input, shape index: {}]
  %s7 = inlined_call_operand.vmem [shape: f32[1,32], index: 7, kind: input, shape index: {}]
  %s8 = inlined_call_operand.vmem [shape: f32[1,32], index: 8, kind: input, shape index: {}]
  %s9 = inlined_call_operand.vmem [shape: f32[3,96,36], index: 9, kind: input, shape index: {}]
  %s10 = inlined_call_operand.vmem [shape: f32[1,32], index: 10, kind: input, shape index: {}]
  %s11 = inlined_call_operand.vmem [shape: f32[1,32], index: 11, kind: input, shape index: {}]
  %s12 = inlined_call_operand.vmem [shape: f32[1,32], index: 12, kind: input, shape index: {}]
  %s13 = inlined_call_operand.vmem [shape: f32[3,96,4], index: 13, kind: input, shape index: {}]
  %s14 = inlined_call_operand.vmem [shape: f32[1,4], index: 14, kind: input, shape index: {}]
  %s15 = inlined_call_operand.vmem [shape: f32[2,16,16,4], index: 15, kind: output, shape index: {}]
  %s16 = sld [smem:[#allocation0]]
  $region70: #{tpu_custom_call.1} parent=0
    _
  %s18 = ssub.s32 1, %s16
  %s19 = scalar_select 0, %s18, %s16
  // Predicated region
  $region2: #{tpu_custom_call.1} parent=0 // pred_check
    _
  $region3: #{tpu_custom_call.1} parent=0 // pred_check_branch
    %21 = sbr.rel (0) target = $region5
  $region4: #{tpu_custom_call.1} parent=0 // pred_region
    _
  $region5: #{tpu_custom_call.1} parent=0 // pred_fallthru
    _
  // Predicated region
  $region6: #{tpu_custom_call.1} parent=0 // pred_check
    _
  $region7: #{tpu_custom_call.1} parent=0 // pred_check_branch
    %23 = sbr.rel (0) target = $region9
  $region8: #{tpu_custom_call.1} parent=0 // pred_region
    _
  $region9: #{tpu_custom_call.1} parent=0 // pred_fallthru
    _
  // Predicated region
  $region10: #{tpu_custom_call.1} parent=0 // pred_check
    _
  $region11: #{tpu_custom_call.1} parent=0 // pred_check_branch
    %25 = sbr.rel (0) target = $region13
  $region12: #{tpu_custom_call.1} parent=0 // pred_region
    _
  $region13: #{tpu_custom_call.1} parent=0 // pred_fallthru
    _
  // Predicated region
  $region14: #{tpu_custom_call.1} parent=0 // pred_check
    _
  $region15: #{tpu_custom_call.1} parent=0 // pred_check_branch
    %27 = sbr.rel (0) target = $region17
  $region16: #{tpu_custom_call.1} parent=0 // pred_region
    _
  $region17: #{tpu_custom_call.1} parent=0 // pred_fallthru
    _
  // Predicated region
  $region18: #{tpu_custom_call.1} parent=0 // pred_check
    _
  $region19: #{tpu_custom_call.1} parent=0 // pred_check_branch
    %29 = sbr.rel (0) target = $region21
  $region20: #{tpu_custom_call.1} parent=0 // pred_region
    _
  $region21: #{tpu_custom_call.1} parent=0 // pred_fallthru
    _
  // Predicated region
  $region22: #{tpu_custom_call.1} parent=0 // pred_check
    _
  $region23: #{tpu_custom_call.1} parent=0 // pred_check_branch
    %31 = sbr.rel (0) target = $region25
  $region24: #{tpu_custom_call.1} parent=0 // pred_region
    _
  $region25: #{tpu_custom_call.1} parent=0 // pred_fallthru
    _
  // Predicated region
  $region26: #{tpu_custom_call.1} parent=0 // pred_check
    _
  $region27: #{tpu_custom_call.1} parent=0 // pred_check_branch
    %33 = sbr.rel (0) target = $region29
  $region28: #{tpu_custom_call.1} parent=0 // pred_region
    _
  $region29: #{tpu_custom_call.1} parent=0 // pred_fallthru
    _
  // Predicated region
  $region30: #{tpu_custom_call.1} parent=0 // pred_check
    _
  $region31: #{tpu_custom_call.1} parent=0 // pred_check_branch
    %35 = sbr.rel (0) target = $region33
  $region32: #{tpu_custom_call.1} parent=0 // pred_region
    _
  $region33: #{tpu_custom_call.1} parent=0 // pred_fallthru
    _
  // Predicated region
  $region34: #{tpu_custom_call.1} parent=0 // pred_check
    _
  $region35: #{tpu_custom_call.1} parent=0 // pred_check_branch
    %37 = sbr.rel (0) target = $region37
  $region36: #{tpu_custom_call.1} parent=0 // pred_region
    _
  $region37: #{tpu_custom_call.1} parent=0 // pred_fallthru
    _
  // Predicated region
  $region38: #{tpu_custom_call.1} parent=0 // pred_check
    _
  $region39: #{tpu_custom_call.1} parent=0 // pred_check_branch
    %39 = sbr.rel (0) target = $region41
  $region40: #{tpu_custom_call.1} parent=0 // pred_region
    _
  $region41: #{tpu_custom_call.1} parent=0 // pred_fallthru
    _
  // Predicated region
  $region42: #{tpu_custom_call.1} parent=0 // pred_check
    _
  $region43: #{tpu_custom_call.1} parent=0 // pred_check_branch
    %41 = sbr.rel (0) target = $region45
  $region44: #{tpu_custom_call.1} parent=0 // pred_region
    _
  $region45: #{tpu_custom_call.1} parent=0 // pred_fallthru
    _
  // Predicated region
  $region46: #{tpu_custom_call.1} parent=0 // pred_check
    _
  $region47: #{tpu_custom_call.1} parent=0 // pred_check_branch
    %43 = sbr.rel (0) target = $region49
  $region48: #{tpu_custom_call.1} parent=0 // pred_region
    _
  $region49: #{tpu_custom_call.1} parent=0 // pred_fallthru
    _
  // Predicated region
  $region50: #{tpu_custom_call.1} parent=0 // pred_check
    _
  $region51: #{tpu_custom_call.1} parent=0 // pred_check_branch
    %45 = sbr.rel (0) target = $region53
  $region52: #{tpu_custom_call.1} parent=0 // pred_region
    _
  $region53: #{tpu_custom_call.1} parent=0 // pred_fallthru
    _
  // Predicated region
  $region54: #{tpu_custom_call.1} parent=0 // pred_check
    _
  $region55: #{tpu_custom_call.1} parent=0 // pred_check_branch
    %47 = sbr.rel (0) target = $region57
  $region56: #{tpu_custom_call.1} parent=0 // pred_region
    _
  $region57: #{tpu_custom_call.1} parent=0 // pred_fallthru
    _
  // Predicated region
  $region58: #{tpu_custom_call.1} parent=0 // pred_check
    _
  $region59: #{tpu_custom_call.1} parent=0 // pred_check_branch
    %49 = sbr.rel (0) target = $region61
  $region60: #{tpu_custom_call.1} parent=0 // pred_region
    _
  $region61: #{tpu_custom_call.1} parent=0 // pred_fallthru
    _
  %vm50 = vcmask 23552
  %51 = vst.msk [vmem:[#allocation2] sm:$0xff] %vm50, 0.0
  %52 = vst.msk [vmem:[#allocation2 + $0x8] sm:$0xff] %vm50, 0.0
  %53 = vst.msk [vmem:[#allocation2 + $0x10] sm:$0xff] %vm50, 0.0
  %54 = vst.msk [vmem:[#allocation2 + $0x18] sm:$0xff] %vm50, 0.0
  %55 = vst.msk [vmem:[#allocation2 + $0x240] sm:$0xff] %vm50, 0.0
  %56 = vst.msk [vmem:[#allocation2 + $0x248] sm:$0xff] %vm50, 0.0
  %57 = vst.msk [vmem:[#allocation2 + $0x250] sm:$0xff] %vm50, 0.0
  %58 = vst.msk [vmem:[#allocation2 + $0x258] sm:$0xff] %vm50, 0.0
  %s59 = scalar_lea.vmem [#allocation2], 544
  %60 = vst.msk [vmem:[%s59] sm:$0xff] %vm50, 0.0
  %61 = vst.msk [vmem:[%s59 + $0x8] sm:$0xff] %vm50, 0.0
  %62 = vst.msk [vmem:[%s59 + $0x10] sm:$0xff] %vm50, 0.0
  %63 = vst.msk [vmem:[%s59 + $0x18] sm:$0xff] %vm50, 0.0
  %64 = vst.msk [vmem:[%s59 + $0x240] sm:$0xff] %vm50, 0.0
  %65 = vst.msk [vmem:[%s59 + $0x248] sm:$0xff] %vm50, 0.0
  %66 = vst.msk [vmem:[%s59 + $0x250] sm:$0xff] %vm50, 0.0
  %67 = vst.msk [vmem:[%s59 + $0x258] sm:$0xff] %vm50, 0.0
  %vm68 = vcmask 16384
  %69 = vst.msk [vmem:[#allocation2 + $0x7] sm:$0x1] %vm68, 0.0
  %70 = vst.msk [vmem:[#allocation2 + $0x27] sm:$0x1] %vm68, 0.0
  %71 = vst.msk [vmem:[#allocation2 + $0x47] sm:$0x1] %vm68, 0.0
  %72 = vst.msk [vmem:[#allocation2 + $0x67] sm:$0x1] %vm68, 0.0
  %73 = vst.msk [vmem:[#allocation2 + $0x87] sm:$0x1] %vm68, 0.0
  %74 = vst.msk [vmem:[#allocation2 + $0xa7] sm:$0x1] %vm68, 0.0
  %75 = vst.msk [vmem:[#allocation2 + $0xc7] sm:$0x1] %vm68, 0.0
  %76 = vst.msk [vmem:[#allocation2 + $0xe7] sm:$0x1] %vm68, 0.0
  %77 = vst.msk [vmem:[#allocation2 + $0x107] sm:$0x1] %vm68, 0.0
  %78 = vst.msk [vmem:[#allocation2 + $0x127] sm:$0x1] %vm68, 0.0
  %79 = vst.msk [vmem:[#allocation2 + $0x147] sm:$0x1] %vm68, 0.0
  %80 = vst.msk [vmem:[#allocation2 + $0x167] sm:$0x1] %vm68, 0.0
  %81 = vst.msk [vmem:[#allocation2 + $0x187] sm:$0x1] %vm68, 0.0
  %82 = vst.msk [vmem:[#allocation2 + $0x1a7] sm:$0x1] %vm68, 0.0
  %83 = vst.msk [vmem:[#allocation2 + $0x1c7] sm:$0x1] %vm68, 0.0
  %84 = vst.msk [vmem:[#allocation2 + $0x1e7] sm:$0x1] %vm68, 0.0
  %85 = vst.msk [vmem:[#allocation2 + $0x207] sm:$0x1] %vm68, 0.0
  %86 = vst.msk [vmem:[#allocation2 + $0x227] sm:$0x1] %vm68, 0.0
  %87 = vst.msk [vmem:[#allocation2 + $0x247] sm:$0x1] %vm68, 0.0
  %88 = vst.msk [vmem:[#allocation2 + $0x267] sm:$0x1] %vm68, 0.0
  %89 = vst.msk [vmem:[#allocation2 + $0x287] sm:$0x1] %vm68, 0.0
  %90 = vst.msk [vmem:[#allocation2 + $0x2a7] sm:$0x1] %vm68, 0.0
  %91 = vst.msk [vmem:[#allocation2 + $0x2c7] sm:$0x1] %vm68, 0.0
  %92 = vst.msk [vmem:[#allocation2 + $0x2e7] sm:$0x1] %vm68, 0.0
  %93 = vst.msk [vmem:[#allocation2 + $0x307] sm:$0x1] %vm68, 0.0
  %94 = vst.msk [vmem:[#allocation2 + $0x327] sm:$0x1] %vm68, 0.0
  %95 = vst.msk [vmem:[#allocation2 + $0x347] sm:$0x1] %vm68, 0.0
  %96 = vst.msk [vmem:[#allocation2 + $0x367] sm:$0x1] %vm68, 0.0
  %97 = vst.msk [vmem:[#allocation2 + $0x387] sm:$0x1] %vm68, 0.0
  %98 = vst.msk [vmem:[#allocation2 + $0x3a7] sm:$0x1] %vm68, 0.0
  %99 = vst.msk [vmem:[#allocation2 + $0x3c7] sm:$0x1] %vm68, 0.0
  %100 = vst.msk [vmem:[#allocation2 + $0x3e7] sm:$0x1] %vm68, 0.0
  %101 = vst.msk [vmem:[#allocation2 + $0x407] sm:$0x1] %vm68, 0.0
  %102 = vst.msk [vmem:[#allocation2 + $0x427] sm:$0x1] %vm68, 0.0
  %103 = vst.msk [vmem:[#allocation2 + $0x447] sm:$0x1] %vm68, 0.0
  %104 = vst.msk [vmem:[#allocation2 + $0x467] sm:$0x1] %vm68, 0.0
  %105 = vst.msk [vmem:[#allocation2 + $0x18] sm:$0x1] %vm68, 0.0
  %106 = vst.msk [vmem:[#allocation2 + $0x38] sm:$0x1] %vm68, 0.0
  %107 = vst.msk [vmem:[#allocation2 + $0x58] sm:$0x1] %vm68, 0.0
  %108 = vst.msk [vmem:[#allocation2 + $0x78] sm:$0x1] %vm68, 0.0
  %109 = vst.msk [vmem:[#allocation2 + $0x98] sm:$0x1] %vm68, 0.0
  %110 = vst.msk [vmem:[#allocation2 + $0xb8] sm:$0x1] %vm68, 0.0
  %111 = vst.msk [vmem:[#allocation2 + $0xd8] sm:$0x1] %vm68, 0.0
  %112 = vst.msk [vmem:[#allocation2 + $0xf8] sm:$0x1] %vm68, 0.0
  %113 = vst.msk [vmem:[#allocation2 + $0x118] sm:$0x1] %vm68, 0.0
  %114 = vst.msk [vmem:[#allocation2 + $0x138] sm:$0x1] %vm68, 0.0
  %115 = vst.msk [vmem:[#allocation2 + $0x158] sm:$0x1] %vm68, 0.0
  %116 = vst.msk [vmem:[#allocation2 + $0x178] sm:$0x1] %vm68, 0.0
  %117 = vst.msk [vmem:[#allocation2 + $0x198] sm:$0x1] %vm68, 0.0
  %118 = vst.msk [vmem:[#allocation2 + $0x1b8] sm:$0x1] %vm68, 0.0
  %119 = vst.msk [vmem:[#allocation2 + $0x1d8] sm:$0x1] %vm68, 0.0
  %120 = vst.msk [vmem:[#allocation2 + $0x1f8] sm:$0x1] %vm68, 0.0
  %121 = vst.msk [vmem:[#allocation2 + $0x218] sm:$0x1] %vm68, 0.0
  %122 = vst.msk [vmem:[#allocation2 + $0x238] sm:$0x1] %vm68, 0.0
  %123 = vst.msk [vmem:[#allocation2 + $0x258] sm:$0x1] %vm68, 0.0
  %124 = vst.msk [vmem:[#allocation2 + $0x278] sm:$0x1] %vm68, 0.0
  %125 = vst.msk [vmem:[#allocation2 + $0x298] sm:$0x1] %vm68, 0.0
  %126 = vst.msk [vmem:[#allocation2 + $0x2b8] sm:$0x1] %vm68, 0.0
  %127 = vst.msk [vmem:[#allocation2 + $0x2d8] sm:$0x1] %vm68, 0.0
  %128 = vst.msk [vmem:[#allocation2 + $0x2f8] sm:$0x1] %vm68, 0.0
  %129 = vst.msk [vmem:[#allocation2 + $0x318] sm:$0x1] %vm68, 0.0
  %130 = vst.msk [vmem:[#allocation2 + $0x338] sm:$0x1] %vm68, 0.0
  %131 = vst.msk [vmem:[#allocation2 + $0x358] sm:$0x1] %vm68, 0.0
  %132 = vst.msk [vmem:[#allocation2 + $0x378] sm:$0x1] %vm68, 0.0
  %133 = vst.msk [vmem:[#allocation2 + $0x398] sm:$0x1] %vm68, 0.0
  %134 = vst.msk [vmem:[#allocation2 + $0x3b8] sm:$0x1] %vm68, 0.0
  %135 = vst.msk [vmem:[#allocation2 + $0x3d8] sm:$0x1] %vm68, 0.0
  %136 = vst.msk [vmem:[#allocation2 + $0x3f8] sm:$0x1] %vm68, 0.0
  %137 = vst.msk [vmem:[#allocation2 + $0x418] sm:$0x1] %vm68, 0.0
  %138 = vst.msk [vmem:[#allocation2 + $0x438] sm:$0x1] %vm68, 0.0
  %139 = vst.msk [vmem:[#allocation2 + $0x458] sm:$0x1] %vm68, 0.0
  %140 = vst.msk [vmem:[#allocation2 + $0x478] sm:$0x1] %vm68, 0.0
  %vm141 = vcmask 261120
  %142 = vst.msk [vmem:[#allocation3] sm:$0xff] %vm141, 0.0
  %143 = vst.msk [vmem:[#allocation3 + $0x8] sm:$0xff] %vm141, 0.0
  %144 = vst.msk [vmem:[#allocation3 + $0x10] sm:$0xff] %vm141, 0.0
  %145 = vst.msk [vmem:[#allocation3 + $0x18] sm:$0xff] %vm141, 0.0
  %146 = vst.msk [vmem:[#allocation3 + $0x240] sm:$0xff] %vm141, 0.0
  %147 = vst.msk [vmem:[#allocation3 + $0x248] sm:$0xff] %vm141, 0.0
  %148 = vst.msk [vmem:[#allocation3 + $0x250] sm:$0xff] %vm141, 0.0
  %149 = vst.msk [vmem:[#allocation3 + $0x258] sm:$0xff] %vm141, 0.0
  %s150 = scalar_lea.vmem [#allocation3], 544
  %151 = vst.msk [vmem:[%s150] sm:$0xff] %vm141, 0.0
  %152 = vst.msk [vmem:[%s150 + $0x8] sm:$0xff] %vm141, 0.0
  %153 = vst.msk [vmem:[%s150 + $0x10] sm:$0xff] %vm141, 0.0
  %154 = vst.msk [vmem:[%s150 + $0x18] sm:$0xff] %vm141, 0.0
  %155 = vst.msk [vmem:[%s150 + $0x240] sm:$0xff] %vm141, 0.0
  %156 = vst.msk [vmem:[%s150 + $0x248] sm:$0xff] %vm141, 0.0
  %157 = vst.msk [vmem:[%s150 + $0x250] sm:$0xff] %vm141, 0.0
  %158 = vst.msk [vmem:[%s150 + $0x258] sm:$0xff] %vm141, 0.0
  %vm159 = vcmask 253952
  %160 = vst.msk [vmem:[#allocation3 + $0x7] sm:$0x1] %vm159, 0.0
  %161 = vst.msk [vmem:[#allocation3 + $0x27] sm:$0x1] %vm159, 0.0
  %162 = vst.msk [vmem:[#allocation3 + $0x47] sm:$0x1] %vm159, 0.0
  %163 = vst.msk [vmem:[#allocation3 + $0x67] sm:$0x1] %vm159, 0.0
  %164 = vst.msk [vmem:[#allocation3 + $0x87] sm:$0x1] %vm159, 0.0
  %165 = vst.msk [vmem:[#allocation3 + $0xa7] sm:$0x1] %vm159, 0.0
  %166 = vst.msk [vmem:[#allocation3 + $0xc7] sm:$0x1] %vm159, 0.0
  %167 = vst.msk [vmem:[#allocation3 + $0xe7] sm:$0x1] %vm159, 0.0
  %168 = vst.msk [vmem:[#allocation3 + $0x107] sm:$0x1] %vm159, 0.0
  %169 = vst.msk [vmem:[#allocation3 + $0x127] sm:$0x1] %vm159, 0.0
  %170 = vst.msk [vmem:[#allocation3 + $0x147] sm:$0x1] %vm159, 0.0
  %171 = vst.msk [vmem:[#allocation3 + $0x167] sm:$0x1] %vm159, 0.0
  %172 = vst.msk [vmem:[#allocation3 + $0x187] sm:$0x1] %vm159, 0.0
  %173 = vst.msk [vmem:[#allocation3 + $0x1a7] sm:$0x1] %vm159, 0.0
  %174 = vst.msk [vmem:[#allocation3 + $0x1c7] sm:$0x1] %vm159, 0.0
  %175 = vst.msk [vmem:[#allocation3 + $0x1e7] sm:$0x1] %vm159, 0.0
  %176 = vst.msk [vmem:[#allocation3 + $0x207] sm:$0x1] %vm159, 0.0
  %177 = vst.msk [vmem:[#allocation3 + $0x227] sm:$0x1] %vm159, 0.0
  %178 = vst.msk [vmem:[#allocation3 + $0x247] sm:$0x1] %vm159, 0.0
  %179 = vst.msk [vmem:[#allocation3 + $0x267] sm:$0x1] %vm159, 0.0
  %180 = vst.msk [vmem:[#allocation3 + $0x287] sm:$0x1] %vm159, 0.0
  %181 = vst.msk [vmem:[#allocation3 + $0x2a7] sm:$0x1] %vm159, 0.0
  %182 = vst.msk [vmem:[#allocation3 + $0x2c7] sm:$0x1] %vm159, 0.0
  %183 = vst.msk [vmem:[#allocation3 + $0x2e7] sm:$0x1] %vm159, 0.0
  %184 = vst.msk [vmem:[#allocation3 + $0x307] sm:$0x1] %vm159, 0.0
  %185 = vst.msk [vmem:[#allocation3 + $0x327] sm:$0x1] %vm159, 0.0
  %186 = vst.msk [vmem:[#allocation3 + $0x347] sm:$0x1] %vm159, 0.0
  %187 = vst.msk [vmem:[#allocation3 + $0x367] sm:$0x1] %vm159, 0.0
  %188 = vst.msk [vmem:[#allocation3 + $0x387] sm:$0x1] %vm159, 0.0
  %189 = vst.msk [vmem:[#allocation3 + $0x3a7] sm:$0x1] %vm159, 0.0
  %190 = vst.msk [vmem:[#allocation3 + $0x3c7] sm:$0x1] %vm159, 0.0
  %191 = vst.msk [vmem:[#allocation3 + $0x3e7] sm:$0x1] %vm159, 0.0
  %192 = vst.msk [vmem:[#allocation3 + $0x407] sm:$0x1] %vm159, 0.0
  %193 = vst.msk [vmem:[#allocation3 + $0x427] sm:$0x1] %vm159, 0.0
  %194 = vst.msk [vmem:[#allocation3 + $0x447] sm:$0x1] %vm159, 0.0
  %195 = vst.msk [vmem:[#allocation3 + $0x467] sm:$0x1] %vm159, 0.0
  %196 = vst.msk [vmem:[#allocation3 + $0x18] sm:$0x1] %vm159, 0.0
  %197 = vst.msk [vmem:[#allocation3 + $0x38] sm:$0x1] %vm159, 0.0
  %198 = vst.msk [vmem:[#allocation3 + $0x58] sm:$0x1] %vm159, 0.0
  %199 = vst.msk [vmem:[#allocation3 + $0x78] sm:$0x1] %vm159, 0.0
  %200 = vst.msk [vmem:[#allocation3 + $0x98] sm:$0x1] %vm159, 0.0
  %201 = vst.msk [vmem:[#allocation3 + $0xb8] sm:$0x1] %vm159, 0.0
  %202 = vst.msk [vmem:[#allocation3 + $0xd8] sm:$0x1] %vm159, 0.0
  %203 = vst.msk [vmem:[#allocation3 + $0xf8] sm:$0x1] %vm159, 0.0
  %204 = vst.msk [vmem:[#allocation3 + $0x118] sm:$0x1] %vm159, 0.0
  %205 = vst.msk [vmem:[#allocation3 + $0x138] sm:$0x1] %vm159, 0.0
  %206 = vst.msk [vmem:[#allocation3 + $0x158] sm:$0x1] %vm159, 0.0
  %207 = vst.msk [vmem:[#allocation3 + $0x178] sm:$0x1] %vm159, 0.0
  %208 = vst.msk [vmem:[#allocation3 + $0x198] sm:$0x1] %vm159, 0.0
  %209 = vst.msk [vmem:[#allocation3 + $0x1b8] sm:$0x1] %vm159, 0.0
  %210 = vst.msk [vmem:[#allocation3 + $0x1d8] sm:$0x1] %vm159, 0.0
  %211 = vst.msk [vmem:[#allocation3 + $0x1f8] sm:$0x1] %vm159, 0.0
  %212 = vst.msk [vmem:[#allocation3 + $0x218] sm:$0x1] %vm159, 0.0
  %213 = vst.msk [vmem:[#allocation3 + $0x238] sm:$0x1] %vm159, 0.0
  %214 = vst.msk [vmem:[#allocation3 + $0x258] sm:$0x1] %vm159, 0.0
  %215 = vst.msk [vmem:[#allocation3 + $0x278] sm:$0x1] %vm159, 0.0
  %216 = vst.msk [vmem:[#allocation3 + $0x298] sm:$0x1] %vm159, 0.0
  %217 = vst.msk [vmem:[#allocation3 + $0x2b8] sm:$0x1] %vm159, 0.0
  %218 = vst.msk [vmem:[#allocation3 + $0x2d8] sm:$0x1] %vm159, 0.0
  %219 = vst.msk [vmem:[#allocation3 + $0x2f8] sm:$0x1] %vm159, 0.0
  %220 = vst.msk [vmem:[#allocation3 + $0x318] sm:$0x1] %vm159, 0.0
  %221 = vst.msk [vmem:[#allocation3 + $0x338] sm:$0x1] %vm159, 0.0
  %222 = vst.msk [vmem:[#allocation3 + $0x358] sm:$0x1] %vm159, 0.0
  %223 = vst.msk [vmem:[#allocation3 + $0x378] sm:$0x1] %vm159, 0.0
  %224 = vst.msk [vmem:[#allocation3 + $0x398] sm:$0x1] %vm159, 0.0
  %225 = vst.msk [vmem:[#allocation3 + $0x3b8] sm:$0x1] %vm159, 0.0
  %226 = vst.msk [vmem:[#allocation3 + $0x3d8] sm:$0x1] %vm159, 0.0
  %227 = vst.msk [vmem:[#allocation3 + $0x3f8] sm:$0x1] %vm159, 0.0
  %228 = vst.msk [vmem:[#allocation3 + $0x418] sm:$0x1] %vm159, 0.0
  %229 = vst.msk [vmem:[#allocation3 + $0x438] sm:$0x1] %vm159, 0.0
  %230 = vst.msk [vmem:[#allocation3 + $0x458] sm:$0x1] %vm159, 0.0
  %231 = vst.msk [vmem:[#allocation3 + $0x478] sm:$0x1] %vm159, 0.0
  %v232 = vld [vmem:[%s0] sm:$0xff]
  %v233 = vld [vmem:[%s0 + $0x8] sm:$0xff]
  %v234 = vld [vmem:[%s0 + $0x10] sm:$0xff]
  %v235 = vld [vmem:[%s0 + $0x18] sm:$0xff]
  %v236 = vld [vmem:[%s0 + $0x20] sm:$0xff]
  %v237 = vld [vmem:[%s0 + $0x28] sm:$0xff]
  %v238 = vld [vmem:[%s0 + $0x30] sm:$0xff]
  %v239 = vld [vmem:[%s0 + $0x38] sm:$0xff]
  %v240 = vld [vmem:[%s0 + $0x40] sm:$0xff]
  %v241 = vld [vmem:[%s0 + $0x48] sm:$0xff]
  %v242 = vld [vmem:[%s0 + $0x50] sm:$0xff]
  %v243 = vld [vmem:[%s0 + $0x58] sm:$0xff]
  %v244 = vld [vmem:[%s0 + $0x60] sm:$0xff]
  %v245 = vld [vmem:[%s0 + $0x68] sm:$0xff]
  %v246 = vld [vmem:[%s0 + $0x70] sm:$0xff]
  %v247 = vld [vmem:[%s0 + $0x78] sm:$0xff]
  %v248 = vld [vmem:[%s0 + $0x80] sm:$0xff]
  %v249 = vld [vmem:[%s0 + $0x88] sm:$0xff]
  %v250 = vld [vmem:[%s0 + $0x90] sm:$0xff]
  %v251 = vld [vmem:[%s0 + $0x98] sm:$0xff]
  %v252 = vld [vmem:[%s0 + $0xa0] sm:$0xff]
  %v253 = vld [vmem:[%s0 + $0xa8] sm:$0xff]
  %v254 = vld [vmem:[%s0 + $0xb0] sm:$0xff]
  %v255 = vld [vmem:[%s0 + $0xb8] sm:$0xff]
  %v256 = vld [vmem:[%s0 + $0xc0] sm:$0xff]
  %v257 = vld [vmem:[%s0 + $0xc8] sm:$0xff]
  %v258 = vld [vmem:[%s0 + $0xd0] sm:$0xff]
  %v259 = vld [vmem:[%s0 + $0xd8] sm:$0xff]
  %v260 = vld [vmem:[%s0 + $0xe0] sm:$0xff]
  %v261 = vld [vmem:[%s0 + $0xe8] sm:$0xff]
  %v262 = vld [vmem:[%s0 + $0xf0] sm:$0xff]
  %v263 = vld [vmem:[%s0 + $0xf8] sm:$0xff]
  %v264 = vld [vmem:[%s0 + $0x100] sm:$0xff]
  %v265 = vld [vmem:[%s0 + $0x108] sm:$0xff]
  %v266 = vld [vmem:[%s0 + $0x110] sm:$0xff]
  %v267 = vld [vmem:[%s0 + $0x118] sm:$0xff]
  %v268 = vld [vmem:[%s0 + $0x120] sm:$0xff]
  %v269 = vld [vmem:[%s0 + $0x128] sm:$0xff]
  %v270 = vld [vmem:[%s0 + $0x130] sm:$0xff]
  %v271 = vld [vmem:[%s0 + $0x138] sm:$0xff]
  %v272 = vld [vmem:[%s0 + $0x140] sm:$0xff]
  %v273 = vld [vmem:[%s0 + $0x148] sm:$0xff]
  %v274 = vld [vmem:[%s0 + $0x150] sm:$0xff]
  %v275 = vld [vmem:[%s0 + $0x158] sm:$0xff]
  %v276 = vld [vmem:[%s0 + $0x160] sm:$0xff]
  %v277 = vld [vmem:[%s0 + $0x168] sm:$0xff]
  %v278 = vld [vmem:[%s0 + $0x170] sm:$0xff]
  %v279 = vld [vmem:[%s0 + $0x178] sm:$0xff]
  %v280 = vld [vmem:[%s0 + $0x180] sm:$0xff]
  %v281 = vld [vmem:[%s0 + $0x188] sm:$0xff]
  %v282 = vld [vmem:[%s0 + $0x190] sm:$0xff]
  %v283 = vld [vmem:[%s0 + $0x198] sm:$0xff]
  %v284 = vld [vmem:[%s0 + $0x1a0] sm:$0xff]
  %v285 = vld [vmem:[%s0 + $0x1a8] sm:$0xff]
  %v286 = vld [vmem:[%s0 + $0x1b0] sm:$0xff]
  %v287 = vld [vmem:[%s0 + $0x1b8] sm:$0xff]
  %v288 = vld [vmem:[%s0 + $0x1c0] sm:$0xff]
  %v289 = vld [vmem:[%s0 + $0x1c8] sm:$0xff]
  %v290 = vld [vmem:[%s0 + $0x1d0] sm:$0xff]
  %v291 = vld [vmem:[%s0 + $0x1d8] sm:$0xff]
  %v292 = vld [vmem:[%s0 + $0x1e0] sm:$0xff]
  %v293 = vld [vmem:[%s0 + $0x1e8] sm:$0xff]
  %v294 = vld [vmem:[%s0 + $0x1f0] sm:$0xff]
  %v295 = vld [vmem:[%s0 + $0x1f8] sm:$0xff]
  %s296 = scalar_lea.vmem [#allocation2], 32
  %297 = vst.msk [vmem:[%s296 + $0x8] sm:$0xff] %vm50, %v232
  %298 = vst.msk [vmem:[%s296 + $0x10] sm:$0xff] %vm50, %v233
  %299 = vst.msk [vmem:[%s296 + $0x28] sm:$0xff] %vm50, %v234
  %300 = vst.msk [vmem:[%s296 + $0x30] sm:$0xff] %vm50, %v235
  %301 = vst.msk [vmem:[%s296 + $0x48] sm:$0xff] %vm50, %v236
  %302 = vst.msk [vmem:[%s296 + $0x50] sm:$0xff] %vm50, %v237
  %303 = vst.msk [vmem:[%s296 + $0x68] sm:$0xff] %vm50, %v238
  %304 = vst.msk [vmem:[%s296 + $0x70] sm:$0xff] %vm50, %v239
  %305 = vst.msk [vmem:[%s296 + $0x88] sm:$0xff] %vm50, %v240
  %306 = vst.msk [vmem:[%s296 + $0x90] sm:$0xff] %vm50, %v241
  %307 = vst.msk [vmem:[%s296 + $0xa8] sm:$0xff] %vm50, %v242
  %308 = vst.msk [vmem:[%s296 + $0xb0] sm:$0xff] %vm50, %v243
  %309 = vst.msk [vmem:[%s296 + $0xc8] sm:$0xff] %vm50, %v244
  %310 = vst.msk [vmem:[%s296 + $0xd0] sm:$0xff] %vm50, %v245
  %311 = vst.msk [vmem:[%s296 + $0xe8] sm:$0xff] %vm50, %v246
  %312 = vst.msk [vmem:[%s296 + $0xf0] sm:$0xff] %vm50, %v247
  %313 = vst.msk [vmem:[%s296 + $0x108] sm:$0xff] %vm50, %v248
  %314 = vst.msk [vmem:[%s296 + $0x110] sm:$0xff] %vm50, %v249
  %315 = vst.msk [vmem:[%s296 + $0x128] sm:$0xff] %vm50, %v250
  %316 = vst.msk [vmem:[%s296 + $0x130] sm:$0xff] %vm50, %v251
  %317 = vst.msk [vmem:[%s296 + $0x148] sm:$0xff] %vm50, %v252
  %318 = vst.msk [vmem:[%s296 + $0x150] sm:$0xff] %vm50, %v253
  %319 = vst.msk [vmem:[%s296 + $0x168] sm:$0xff] %vm50, %v254
  %320 = vst.msk [vmem:[%s296 + $0x170] sm:$0xff] %vm50, %v255
  %321 = vst.msk [vmem:[%s296 + $0x188] sm:$0xff] %vm50, %v256
  %322 = vst.msk [vmem:[%s296 + $0x190] sm:$0xff] %vm50, %v257
  %323 = vst.msk [vmem:[%s296 + $0x1a8] sm:$0xff] %vm50, %v258
  %324 = vst.msk [vmem:[%s296 + $0x1b0] sm:$0xff] %vm50, %v259
  %325 = vst.msk [vmem:[%s296 + $0x1c8] sm:$0xff] %vm50, %v260
  %326 = vst.msk [vmem:[%s296 + $0x1d0] sm:$0xff] %vm50, %v261
  %327 = vst.msk [vmem:[%s296 + $0x1e8] sm:$0xff] %vm50, %v262
  %328 = vst.msk [vmem:[%s296 + $0x1f0] sm:$0xff] %vm50, %v263
  %329 = vst.msk [vmem:[%s296 + $0x248] sm:$0xff] %vm50, %v264
  %330 = vst.msk [vmem:[%s296 + $0x250] sm:$0xff] %vm50, %v265
  %331 = vst.msk [vmem:[%s296 + $0x268] sm:$0xff] %vm50, %v266
  %332 = vst.msk [vmem:[%s296 + $0x270] sm:$0xff] %vm50, %v267
  %333 = vst.msk [vmem:[%s296 + $0x288] sm:$0xff] %vm50, %v268
  %334 = vst.msk [vmem:[%s296 + $0x290] sm:$0xff] %vm50, %v269
  %335 = vst.msk [vmem:[%s296 + $0x2a8] sm:$0xff] %vm50, %v270
  %336 = vst.msk [vmem:[%s296 + $0x2b0] sm:$0xff] %vm50, %v271
  %337 = vst.msk [vmem:[%s296 + $0x2c8] sm:$0xff] %vm50, %v272
  %338 = vst.msk [vmem:[%s296 + $0x2d0] sm:$0xff] %vm50, %v273
  %339 = vst.msk [vmem:[%s296 + $0x2e8] sm:$0xff] %vm50, %v274
  %340 = vst.msk [vmem:[%s296 + $0x2f0] sm:$0xff] %vm50, %v275
  %341 = vst.msk [vmem:[%s296 + $0x308] sm:$0xff] %vm50, %v276
  %342 = vst.msk [vmem:[%s296 + $0x310] sm:$0xff] %vm50, %v277
  %343 = vst.msk [vmem:[%s296 + $0x328] sm:$0xff] %vm50, %v278
  %344 = vst.msk [vmem:[%s296 + $0x330] sm:$0xff] %vm50, %v279
  %345 = vst.msk [vmem:[%s296 + $0x348] sm:$0xff] %vm50, %v280
  %346 = vst.msk [vmem:[%s296 + $0x350] sm:$0xff] %vm50, %v281
  %347 = vst.msk [vmem:[%s296 + $0x368] sm:$0xff] %vm50, %v282
  %348 = vst.msk [vmem:[%s296 + $0x370] sm:$0xff] %vm50, %v283
  %349 = vst.msk [vmem:[%s296 + $0x388] sm:$0xff] %vm50, %v284
  %350 = vst.msk [vmem:[%s296 + $0x390] sm:$0xff] %vm50, %v285
  %351 = vst.msk [vmem:[%s296 + $0x3a8] sm:$0xff] %vm50, %v286
  %352 = vst.msk [vmem:[%s296 + $0x3b0] sm:$0xff] %vm50, %v287
  %353 = vst.msk [vmem:[%s296 + $0x3c8] sm:$0xff] %vm50, %v288
  %354 = vst.msk [vmem:[%s296 + $0x3d0] sm:$0xff] %vm50, %v289
  %355 = vst.msk [vmem:[%s296 + $0x3e8] sm:$0xff] %vm50, %v290
  %356 = vst.msk [vmem:[%s296 + $0x3f0] sm:$0xff] %vm50, %v291
  %357 = vst.msk [vmem:[%s296 + $0x408] sm:$0xff] %vm50, %v292
  %358 = vst.msk [vmem:[%s296 + $0x410] sm:$0xff] %vm50, %v293
  %359 = vst.msk [vmem:[%s296 + $0x428] sm:$0xff] %vm50, %v294
  %360 = vst.msk [vmem:[%s296 + $0x430] sm:$0xff] %vm50, %v295
  %v361 = vld [vmem:[#allocation2 + $0x7] sm:$0xff]
  %v362 = vld [vmem:[#allocation2 + $0xf] sm:$0xff]
  %v363 = vld [vmem:[#allocation2 + $0x27] sm:$0xff]
  %v364 = vld [vmem:[#allocation2 + $0x2f] sm:$0xff]
  %v365 = vld [vmem:[#allocation2 + $0x47] sm:$0xff]
  %v366 = vld [vmem:[#allocation2 + $0x4f] sm:$0xff]
  %v367 = vld [vmem:[#allocation2 + $0x67] sm:$0xff]
  %v368 = vld [vmem:[#allocation2 + $0x6f] sm:$0xff]
  %v369 = vld [vmem:[#allocation2 + $0x87] sm:$0xff]
  %v370 = vld [vmem:[#allocation2 + $0x8f] sm:$0xff]
  %v371 = vld [vmem:[#allocation2 + $0xa7] sm:$0xff]
  %v372 = vld [vmem:[#allocation2 + $0xaf] sm:$0xff]
  %v373 = vld [vmem:[#allocation2 + $0xc7] sm:$0xff]
  %v374 = vld [vmem:[#allocation2 + $0xcf] sm:$0xff]
  %v375 = vld [vmem:[#allocation2 + $0xe7] sm:$0xff]
  %v376 = vld [vmem:[#allocation2 + $0xef] sm:$0xff]
  %v377 = vld [vmem:[#allocation2 + $0x107] sm:$0xff]
  %v378 = vld [vmem:[#allocation2 + $0x10f] sm:$0xff]
  %v379 = vld [vmem:[#allocation2 + $0x127] sm:$0xff]
  %v380 = vld [vmem:[#allocation2 + $0x12f] sm:$0xff]
  %v381 = vld [vmem:[#allocation2 + $0x147] sm:$0xff]
  %v382 = vld [vmem:[#allocation2 + $0x14f] sm:$0xff]
  %v383 = vld [vmem:[#allocation2 + $0x167] sm:$0xff]
  %v384 = vld [vmem:[#allocation2 + $0x16f] sm:$0xff]
  %v385 = vld [vmem:[#allocation2 + $0x187] sm:$0xff]
  %v386 = vld [vmem:[#allocation2 + $0x18f] sm:$0xff]
  %v387 = vld [vmem:[#allocation2 + $0x1a7] sm:$0xff]
  %v388 = vld [vmem:[#allocation2 + $0x1af] sm:$0xff]
  %v389 = vld [vmem:[#allocation2 + $0x1c7] sm:$0xff]
  %v390 = vld [vmem:[#allocation2 + $0x1cf] sm:$0xff]
  %v391 = vld [vmem:[#allocation2 + $0x1e7] sm:$0xff]
  %v392 = vld [vmem:[#allocation2 + $0x1ef] sm:$0xff]
  %v393 = vld [vmem:[#allocation2 + $0x207] sm:$0xff]
  %v394 = vld [vmem:[#allocation2 + $0x20f] sm:$0xff]
  %v395 = vld [vmem:[#allocation2 + $0x227] sm:$0xff]
  %v396 = vld [vmem:[#allocation2 + $0x22f] sm:$0xff]
  %v397 = vld [vmem:[#allocation2 + $0x247] sm:$0xff]
  %v398 = vld [vmem:[#allocation2 + $0x24f] sm:$0xff]
  %v399 = vld [vmem:[#allocation2 + $0x267] sm:$0xff]
  %v400 = vld [vmem:[#allocation2 + $0x26f] sm:$0xff]
  %v401 = vld [vmem:[#allocation2 + $0x287] sm:$0xff]
  %v402 = vld [vmem:[#allocation2 + $0x28f] sm:$0xff]
  %v403 = vld [vmem:[#allocation2 + $0x2a7] sm:$0xff]
  %v404 = vld [vmem:[#allocation2 + $0x2af] sm:$0xff]
  %v405 = vld [vmem:[#allocation2 + $0x2c7] sm:$0xff]
  %v406 = vld [vmem:[#allocation2 + $0x2cf] sm:$0xff]
  %v407 = vld [vmem:[#allocation2 + $0x2e7] sm:$0xff]
  %v408 = vld [vmem:[#allocation2 + $0x2ef] sm:$0xff]
  %v409 = vld [vmem:[#allocation2 + $0x307] sm:$0xff]
  %v410 = vld [vmem:[#allocation2 + $0x30f] sm:$0xff]
  %v411 = vld [vmem:[#allocation2 + $0x327] sm:$0xff]
  %v412 = vld [vmem:[#allocation2 + $0x32f] sm:$0xff]
  %v413 = vld [vmem:[#allocation2 + $0x347] sm:$0xff]
  %v414 = vld [vmem:[#allocation2 + $0x34f] sm:$0xff]
  %v415 = vld [vmem:[#allocation2 + $0x367] sm:$0xff]
  %v416 = vld [vmem:[#allocation2 + $0x36f] sm:$0xff]
  %v417 = vld [vmem:[#allocation2 + $0x387] sm:$0xff]
  %v418 = vld [vmem:[#allocation2 + $0x38f] sm:$0xff]
  %v419 = vld [vmem:[#allocation2 + $0x3a7] sm:$0xff]
  %v420 = vld [vmem:[#allocation2 + $0x3af] sm:$0xff]
  %v421 = vld [vmem:[#allocation2 + $0x3c7] sm:$0xff]
  %v422 = vld [vmem:[#allocation2 + $0x3cf] sm:$0xff]
  %v423 = vld [vmem:[#allocation2 + $0x3e7] sm:$0xff]
  %v424 = vld [vmem:[#allocation2 + $0x3ef] sm:$0xff]
  %v425 = vld [vmem:[#allocation2 + $0x407] sm:$0xff]
  %v426 = vld [vmem:[#allocation2 + $0x40f] sm:$0xff]
  %v427 = vld [vmem:[#allocation2 + $0x427] sm:$0xff]
  %v428 = vld [vmem:[#allocation2 + $0x42f] sm:$0xff]
  %v429 = vld [vmem:[#allocation2 + $0x447] sm:$0xff]
  %v430 = vld [vmem:[#allocation2 + $0x44f] sm:$0xff]
  %v431 = vld [vmem:[#allocation2 + $0x467] sm:$0xff]
  %v432 = vld [vmem:[#allocation2 + $0x46f] sm:$0xff]
  %v433 = vld [vmem:[#allocation2 + $0x8] sm:$0xff]
  %v434 = vld [vmem:[#allocation2 + $0x10] sm:$0xff]
  %v435 = vld [vmem:[#allocation2 + $0x28] sm:$0xff]
  %v436 = vld [vmem:[#allocation2 + $0x30] sm:$0xff]
  %v437 = vld [vmem:[#allocation2 + $0x48] sm:$0xff]
  %v438 = vld [vmem:[#allocation2 + $0x50] sm:$0xff]
  %v439 = vld [vmem:[#allocation2 + $0x68] sm:$0xff]
  %v440 = vld [vmem:[#allocation2 + $0x70] sm:$0xff]
  %v441 = vld [vmem:[#allocation2 + $0x88] sm:$0xff]
  %v442 = vld [vmem:[#allocation2 + $0x90] sm:$0xff]
  %v443 = vld [vmem:[#allocation2 + $0xa8] sm:$0xff]
  %v444 = vld [vmem:[#allocation2 + $0xb0] sm:$0xff]
  %v445 = vld [vmem:[#allocation2 + $0xc8] sm:$0xff]
  %v446 = vld [vmem:[#allocation2 + $0xd0] sm:$0xff]
  %v447 = vld [vmem:[#allocation2 + $0xe8] sm:$0xff]
  %v448 = vld [vmem:[#allocation2 + $0xf0] sm:$0xff]
  %v449 = vld [vmem:[#allocation2 + $0x108] sm:$0xff]
  %v450 = vld [vmem:[#allocation2 + $0x110] sm:$0xff]
  %v451 = vld [vmem:[#allocation2 + $0x128] sm:$0xff]
  %v452 = vld [vmem:[#allocation2 + $0x130] sm:$0xff]
  %v453 = vld [vmem:[#allocation2 + $0x148] sm:$0xff]
  %v454 = vld [vmem:[#allocation2 + $0x150] sm:$0xff]
  %v455 = vld [vmem:[#allocation2 + $0x168] sm:$0xff]
  %v456 = vld [vmem:[#allocation2 + $0x170] sm:$0xff]
  %v457 = vld [vmem:[#allocation2 + $0x188] sm:$0xff]
  %v458 = vld [vmem:[#allocation2 + $0x190] sm:$0xff]
  %v459 = vld [vmem:[#allocation2 + $0x1a8] sm:$0xff]
  %v460 = vld [vmem:[#allocation2 + $0x1b0] sm:$0xff]
  %v461 = vld [vmem:[#allocation2 + $0x1c8] sm:$0xff]
  %v462 = vld [vmem:[#allocation2 + $0x1d0] sm:$0xff]
  %v463 = vld [vmem:[#allocation2 + $0x1e8] sm:$0xff]
  %v464 = vld [vmem:[#allocation2 + $0x1f0] sm:$0xff]
  %v465 = vld [vmem:[#allocation2 + $0x208] sm:$0xff]
  %v466 = vld [vmem:[#allocation2 + $0x210] sm:$0xff]
  %v467 = vld [vmem:[#allocation2 + $0x228] sm:$0xff]
  %v468 = vld [vmem:[#allocation2 + $0x230] sm:$0xff]
  %v469 = vld [vmem:[#allocation2 + $0x248] sm:$0xff]
  %v470 = vld [vmem:[#allocation2 + $0x250] sm:$0xff]
  %v471 = vld [vmem:[#allocation2 + $0x268] sm:$0xff]
  %v472 = vld [vmem:[#allocation2 + $0x270] sm:$0xff]
  %v473 = vld [vmem:[#allocation2 + $0x288] sm:$0xff]
  %v474 = vld [vmem:[#allocation2 + $0x290] sm:$0xff]
  %v475 = vld [vmem:[#allocation2 + $0x2a8] sm:$0xff]
  %v476 = vld [vmem:[#allocation2 + $0x2b0] sm:$0xff]
  %v477 = vld [vmem:[#allocation2 + $0x2c8] sm:$0xff]
  %v478 = vld [vmem:[#allocation2 + $0x2d0] sm:$0xff]
  %v479 = vld [vmem:[#allocation2 + $0x2e8] sm:$0xff]
  %v480 = vld [vmem:[#allocation2 + $0x2f0] sm:$0xff]
  %v481 = vld [vmem:[#allocation2 + $0x308] sm:$0xff]
  %v482 = vld [vmem:[#allocation2 + $0x310] sm:$0xff]
  %v483 = vld [vmem:[#allocation2 + $0x328] sm:$0xff]
  %v484 = vld [vmem:[#allocation2 + $0x330] sm:$0xff]
  %v485 = vld [vmem:[#allocation2 + $0x348] sm:$0xff]
  %v486 = vld [vmem:[#allocation2 + $0x350] sm:$0xff]
  %v487 = vld [vmem:[#allocation2 + $0x368] sm:$0xff]
  %v488 = vld [vmem:[#allocation2 + $0x370] sm:$0xff]
  %v489 = vld [vmem:[#allocation2 + $0x388] sm:$0xff]
  %v490 = vld [vmem:[#allocation2 + $0x390] sm:$0xff]
  %v491 = vld [vmem:[#allocation2 + $0x3a8] sm:$0xff]
  %v492 = vld [vmem:[#allocation2 + $0x3b0] sm:$0xff]
  %v493 = vld [vmem:[#allocation2 + $0x3c8] sm:$0xff]
  %v494 = vld [vmem:[#allocation2 + $0x3d0] sm:$0xff]
  %v495 = vld [vmem:[#allocation2 + $0x3e8] sm:$0xff]
  %v496 = vld [vmem:[#allocation2 + $0x3f0] sm:$0xff]
  %v497 = vld [vmem:[#allocation2 + $0x408] sm:$0xff]
  %v498 = vld [vmem:[#allocation2 + $0x410] sm:$0xff]
  %v499 = vld [vmem:[#allocation2 + $0x428] sm:$0xff]
  %v500 = vld [vmem:[#allocation2 + $0x430] sm:$0xff]
  %v501 = vld [vmem:[#allocation2 + $0x448] sm:$0xff]
  %v502 = vld [vmem:[#allocation2 + $0x450] sm:$0xff]
  %v503 = vld [vmem:[#allocation2 + $0x468] sm:$0xff]
  %v504 = vld [vmem:[#allocation2 + $0x470] sm:$0xff]
  %v505 = vld [vmem:[#allocation2 + $0x9] sm:$0xff]
  %v506 = vld [vmem:[#allocation2 + $0x11] sm:$0xff]
  %v507 = vld [vmem:[#allocation2 + $0x29] sm:$0xff]
  %v508 = vld [vmem:[#allocation2 + $0x31] sm:$0xff]
  %v509 = vld [vmem:[#allocation2 + $0x49] sm:$0xff]
  %v510 = vld [vmem:[#allocation2 + $0x51] sm:$0xff]
  %v511 = vld [vmem:[#allocation2 + $0x69] sm:$0xff]
  %v512 = vld [vmem:[#allocation2 + $0x71] sm:$0xff]
  %v513 = vld [vmem:[#allocation2 + $0x89] sm:$0xff]
  %v514 = vld [vmem:[#allocation2 + $0x91] sm:$0xff]
  %v515 = vld [vmem:[#allocation2 + $0xa9] sm:$0xff]
  %v516 = vld [vmem:[#allocation2 + $0xb1] sm:$0xff]
  %v517 = vld [vmem:[#allocation2 + $0xc9] sm:$0xff]
  %v518 = vld [vmem:[#allocation2 + $0xd1] sm:$0xff]
  %v519 = vld [vmem:[#allocation2 + $0xe9] sm:$0xff]
  %v520 = vld [vmem:[#allocation2 + $0xf1] sm:$0xff]
  %v521 = vld [vmem:[#allocation2 + $0x109] sm:$0xff]
  %v522 = vld [vmem:[#allocation2 + $0x111] sm:$0xff]
  %v523 = vld [vmem:[#allocation2 + $0x129] sm:$0xff]
  %v524 = vld [vmem:[#allocation2 + $0x131] sm:$0xff]
  %v525 = vld [vmem:[#allocation2 + $0x149] sm:$0xff]
  %v526 = vld [vmem:[#allocation2 + $0x151] sm:$0xff]
  %v527 = vld [vmem:[#allocation2 + $0x169] sm:$0xff]
  %v528 = vld [vmem:[#allocation2 + $0x171] sm:$0xff]
  %v529 = vld [vmem:[#allocation2 + $0x189] sm:$0xff]
  %v530 = vld [vmem:[#allocation2 + $0x191] sm:$0xff]
  %v531 = vld [vmem:[#allocation2 + $0x1a9] sm:$0xff]
  %v532 = vld [vmem:[#allocation2 + $0x1b1] sm:$0xff]
  %v533 = vld [vmem:[#allocation2 + $0x1c9] sm:$0xff]
  %v534 = vld [vmem:[#allocation2 + $0x1d1] sm:$0xff]
  %v535 = vld [vmem:[#allocation2 + $0x1e9] sm:$0xff]
  %v536 = vld [vmem:[#allocation2 + $0x1f1] sm:$0xff]
  %v537 = vld [vmem:[#allocation2 + $0x209] sm:$0xff]
  %v538 = vld [vmem:[#allocation2 + $0x211] sm:$0xff]
  %v539 = vld [vmem:[#allocation2 + $0x229] sm:$0xff]
  %v540 = vld [vmem:[#allocation2 + $0x231] sm:$0xff]
  %v541 = vld [vmem:[#allocation2 + $0x249] sm:$0xff]
  %v542 = vld [vmem:[#allocation2 + $0x251] sm:$0xff]
  %v543 = vld [vmem:[#allocation2 + $0x269] sm:$0xff]
  %v544 = vld [vmem:[#allocation2 + $0x271] sm:$0xff]
  %v545 = vld [vmem:[#allocation2 + $0x289] sm:$0xff]
  %v546 = vld [vmem:[#allocation2 + $0x291] sm:$0xff]
  %v547 = vld [vmem:[#allocation2 + $0x2a9] sm:$0xff]
  %v548 = vld [vmem:[#allocation2 + $0x2b1] sm:$0xff]
  %v549 = vld [vmem:[#allocation2 + $0x2c9] sm:$0xff]
  %v550 = vld [vmem:[#allocation2 + $0x2d1] sm:$0xff]
  %v551 = vld [vmem:[#allocation2 + $0x2e9] sm:$0xff]
  %v552 = vld [vmem:[#allocation2 + $0x2f1] sm:$0xff]
  %v553 = vld [vmem:[#allocation2 + $0x309] sm:$0xff]
  %v554 = vld [vmem:[#allocation2 + $0x311] sm:$0xff]
  %v555 = vld [vmem:[#allocation2 + $0x329] sm:$0xff]
  %v556 = vld [vmem:[#allocation2 + $0x331] sm:$0xff]
  %v557 = vld [vmem:[#allocation2 + $0x349] sm:$0xff]
  %v558 = vld [vmem:[#allocation2 + $0x351] sm:$0xff]
  %v559 = vld [vmem:[#allocation2 + $0x369] sm:$0xff]
  %v560 = vld [vmem:[#allocation2 + $0x371] sm:$0xff]
  %v561 = vld [vmem:[#allocation2 + $0x389] sm:$0xff]
  %v562 = vld [vmem:[#allocation2 + $0x391] sm:$0xff]
  %v563 = vld [vmem:[#allocation2 + $0x3a9] sm:$0xff]
  %v564 = vld [vmem:[#allocation2 + $0x3b1] sm:$0xff]
  %v565 = vld [vmem:[#allocation2 + $0x3c9] sm:$0xff]
  %v566 = vld [vmem:[#allocation2 + $0x3d1] sm:$0xff]
  %v567 = vld [vmem:[#allocation2 + $0x3e9] sm:$0xff]
  %v568 = vld [vmem:[#allocation2 + $0x3f1] sm:$0xff]
  %v569 = vld [vmem:[#allocation2 + $0x409] sm:$0xff]
  %v570 = vld [vmem:[#allocation2 + $0x411] sm:$0xff]
  %v571 = vld [vmem:[#allocation2 + $0x429] sm:$0xff]
  %v572 = vld [vmem:[#allocation2 + $0x431] sm:$0xff]
  %v573 = vld [vmem:[#allocation2 + $0x449] sm:$0xff]
  %v574 = vld [vmem:[#allocation2 + $0x451] sm:$0xff]
  %v575 = vld [vmem:[#allocation2 + $0x469] sm:$0xff]
  %v576 = vld [vmem:[#allocation2 + $0x471] sm:$0xff]
  %649 = vrot.lane.b32.xlu0 %v433, 3
  %v650 = vpop.permute.xlu0 %649
  %651 = vrot.lane.b32.xlu0 %v434, 3
  %v652 = vpop.permute.xlu0 %651
  %653 = vrot.lane.b32.xlu0 %v435, 3
  %v654 = vpop.permute.xlu0 %653
  %655 = vrot.lane.b32.xlu0 %v436, 3
  %v656 = vpop.permute.xlu0 %655
  %657 = vrot.lane.b32.xlu0 %v437, 3
  %v658 = vpop.permute.xlu0 %657
  %659 = vrot.lane.b32.xlu0 %v438, 3
  %v660 = vpop.permute.xlu0 %659
  %661 = vrot.lane.b32.xlu0 %v439, 3
  %v662 = vpop.permute.xlu0 %661
  %663 = vrot.lane.b32.xlu0 %v440, 3
  %v664 = vpop.permute.xlu0 %663
  %665 = vrot.lane.b32.xlu0 %v441, 3
  %v666 = vpop.permute.xlu0 %665
  %667 = vrot.lane.b32.xlu0 %v442, 3
  %v668 = vpop.permute.xlu0 %667
  %669 = vrot.lane.b32.xlu0 %v443, 3
  %v670 = vpop.permute.xlu0 %669
  %671 = vrot.lane.b32.xlu0 %v444, 3
  %v672 = vpop.permute.xlu0 %671
  %673 = vrot.lane.b32.xlu0 %v445, 3
  %v674 = vpop.permute.xlu0 %673
  %675 = vrot.lane.b32.xlu0 %v446, 3
  %v676 = vpop.permute.xlu0 %675
  %677 = vrot.lane.b32.xlu0 %v447, 3
  %v678 = vpop.permute.xlu0 %677
  %679 = vrot.lane.b32.xlu0 %v448, 3
  %v680 = vpop.permute.xlu0 %679
  %681 = vrot.lane.b32.xlu0 %v449, 3
  %v682 = vpop.permute.xlu0 %681
  %683 = vrot.lane.b32.xlu0 %v450, 3
  %v684 = vpop.permute.xlu0 %683
  %685 = vrot.lane.b32.xlu0 %v451, 3
  %v686 = vpop.permute.xlu0 %685
  %687 = vrot.lane.b32.xlu0 %v452, 3
  %v688 = vpop.permute.xlu0 %687
  %689 = vrot.lane.b32.xlu0 %v453, 3
  %v690 = vpop.permute.xlu0 %689
  %691 = vrot.lane.b32.xlu0 %v454, 3
  %v692 = vpop.permute.xlu0 %691
  %693 = vrot.lane.b32.xlu0 %v455, 3
  %v694 = vpop.permute.xlu0 %693
  %695 = vrot.lane.b32.xlu0 %v456, 3
  %v696 = vpop.permute.xlu0 %695
  %697 = vrot.lane.b32.xlu0 %v457, 3
  %v698 = vpop.permute.xlu0 %697
  %699 = vrot.lane.b32.xlu0 %v458, 3
  %v700 = vpop.permute.xlu0 %699
  %701 = vrot.lane.b32.xlu0 %v459, 3
  %v702 = vpop.permute.xlu0 %701
  %703 = vrot.lane.b32.xlu0 %v460, 3
  %v704 = vpop.permute.xlu0 %703
  %705 = vrot.lane.b32.xlu0 %v461, 3
  %v706 = vpop.permute.xlu0 %705
  %707 = vrot.lane.b32.xlu0 %v462, 3
  %v708 = vpop.permute.xlu0 %707
  %709 = vrot.lane.b32.xlu0 %v463, 3
  %v710 = vpop.permute.xlu0 %709
  %711 = vrot.lane.b32.xlu0 %v464, 3
  %v712 = vpop.permute.xlu0 %711
  %713 = vrot.lane.b32.xlu0 %v465, 3
  %v714 = vpop.permute.xlu0 %713
  %715 = vrot.lane.b32.xlu0 %v466, 3
  %v716 = vpop.permute.xlu0 %715
  %717 = vrot.lane.b32.xlu0 %v467, 3
  %v718 = vpop.permute.xlu0 %717
  %719 = vrot.lane.b32.xlu0 %v468, 3
  %v720 = vpop.permute.xlu0 %719
  %721 = vrot.lane.b32.xlu0 %v469, 3
  %v722 = vpop.permute.xlu0 %721
  %723 = vrot.lane.b32.xlu0 %v470, 3
  %v724 = vpop.permute.xlu0 %723
  %725 = vrot.lane.b32.xlu0 %v471, 3
  %v726 = vpop.permute.xlu0 %725
  %727 = vrot.lane.b32.xlu0 %v472, 3
  %v728 = vpop.permute.xlu0 %727
  %729 = vrot.lane.b32.xlu0 %v473, 3
  %v730 = vpop.permute.xlu0 %729
  %731 = vrot.lane.b32.xlu0 %v474, 3
  %v732 = vpop.permute.xlu0 %731
  %733 = vrot.lane.b32.xlu0 %v475, 3
  %v734 = vpop.permute.xlu0 %733
  %735 = vrot.lane.b32.xlu0 %v476, 3
  %v736 = vpop.permute.xlu0 %735
  %737 = vrot.lane.b32.xlu0 %v477, 3
  %v738 = vpop.permute.xlu0 %737
  %739 = vrot.lane.b32.xlu0 %v478, 3
  %v740 = vpop.permute.xlu0 %739
  %741 = vrot.lane.b32.xlu0 %v479, 3
  %v742 = vpop.permute.xlu0 %741
  %743 = vrot.lane.b32.xlu0 %v480, 3
  %v744 = vpop.permute.xlu0 %743
  %745 = vrot.lane.b32.xlu0 %v481, 3
  %v746 = vpop.permute.xlu0 %745
  %747 = vrot.lane.b32.xlu0 %v482, 3
  %v748 = vpop.permute.xlu0 %747
  %749 = vrot.lane.b32.xlu0 %v483, 3
  %v750 = vpop.permute.xlu0 %749
  %751 = vrot.lane.b32.xlu0 %v484, 3
  %v752 = vpop.permute.xlu0 %751
  %753 = vrot.lane.b32.xlu0 %v485, 3
  %v754 = vpop.permute.xlu0 %753
  %755 = vrot.lane.b32.xlu0 %v486, 3
  %v756 = vpop.permute.xlu0 %755
  %757 = vrot.lane.b32.xlu0 %v487, 3
  %v758 = vpop.permute.xlu0 %757
  %759 = vrot.lane.b32.xlu0 %v488, 3
  %v760 = vpop.permute.xlu0 %759
  %761 = vrot.lane.b32.xlu0 %v489, 3
  %v762 = vpop.permute.xlu0 %761
  %763 = vrot.lane.b32.xlu0 %v490, 3
  %v764 = vpop.permute.xlu0 %763
  %765 = vrot.lane.b32.xlu0 %v491, 3
  %v766 = vpop.permute.xlu0 %765
  %767 = vrot.lane.b32.xlu0 %v492, 3
  %v768 = vpop.permute.xlu0 %767
  %769 = vrot.lane.b32.xlu0 %v493, 3
  %v770 = vpop.permute.xlu0 %769
  %771 = vrot.lane.b32.xlu0 %v494, 3
  %v772 = vpop.permute.xlu0 %771
  %773 = vrot.lane.b32.xlu0 %v495, 3
  %v774 = vpop.permute.xlu0 %773
  %775 = vrot.lane.b32.xlu0 %v496, 3
  %v776 = vpop.permute.xlu0 %775
  %777 = vrot.lane.b32.xlu0 %v497, 3
  %v778 = vpop.permute.xlu0 %777
  %779 = vrot.lane.b32.xlu0 %v498, 3
  %v780 = vpop.permute.xlu0 %779
  %781 = vrot.lane.b32.xlu0 %v499, 3
  %v782 = vpop.permute.xlu0 %781
  %783 = vrot.lane.b32.xlu0 %v500, 3
  %v784 = vpop.permute.xlu0 %783
  %785 = vrot.lane.b32.xlu0 %v501, 3
  %v786 = vpop.permute.xlu0 %785
  %787 = vrot.lane.b32.xlu0 %v502, 3
  %v788 = vpop.permute.xlu0 %787
  %789 = vrot.lane.b32.xlu0 %v503, 3
  %v790 = vpop.permute.xlu0 %789
  %791 = vrot.lane.b32.xlu0 %v504, 3
  %v792 = vpop.permute.xlu0 %791
  %937 = vrot.lane.b32.xlu0 %v505, 6
  %v938 = vpop.permute.xlu0 %937
  %939 = vrot.lane.b32.xlu0 %v506, 6
  %v940 = vpop.permute.xlu0 %939
  %941 = vrot.lane.b32.xlu0 %v507, 6
  %v942 = vpop.permute.xlu0 %941
  %943 = vrot.lane.b32.xlu0 %v508, 6
  %v944 = vpop.permute.xlu0 %943
  %945 = vrot.lane.b32.xlu0 %v509, 6
  %v946 = vpop.permute.xlu0 %945
  %947 = vrot.lane.b32.xlu0 %v510, 6
  %v948 = vpop.permute.xlu0 %947
  %949 = vrot.lane.b32.xlu0 %v511, 6
  %v950 = vpop.permute.xlu0 %949
  %951 = vrot.lane.b32.xlu0 %v512, 6
  %v952 = vpop.permute.xlu0 %951
  %953 = vrot.lane.b32.xlu0 %v513, 6
  %v954 = vpop.permute.xlu0 %953
  %955 = vrot.lane.b32.xlu0 %v514, 6
  %v956 = vpop.permute.xlu0 %955
  %957 = vrot.lane.b32.xlu0 %v515, 6
  %v958 = vpop.permute.xlu0 %957
  %959 = vrot.lane.b32.xlu0 %v516, 6
  %v960 = vpop.permute.xlu0 %959
  %961 = vrot.lane.b32.xlu0 %v517, 6
  %v962 = vpop.permute.xlu0 %961
  %963 = vrot.lane.b32.xlu0 %v518, 6
  %v964 = vpop.permute.xlu0 %963
  %965 = vrot.lane.b32.xlu0 %v519, 6
  %v966 = vpop.permute.xlu0 %965
  %967 = vrot.lane.b32.xlu0 %v520, 6
  %v968 = vpop.permute.xlu0 %967
  %969 = vrot.lane.b32.xlu0 %v521, 6
  %v970 = vpop.permute.xlu0 %969
  %971 = vrot.lane.b32.xlu0 %v522, 6
  %v972 = vpop.permute.xlu0 %971
  %973 = vrot.lane.b32.xlu0 %v523, 6
  %v974 = vpop.permute.xlu0 %973
  %975 = vrot.lane.b32.xlu0 %v524, 6
  %v976 = vpop.permute.xlu0 %975
  %977 = vrot.lane.b32.xlu0 %v525, 6
  %v978 = vpop.permute.xlu0 %977
  %979 = vrot.lane.b32.xlu0 %v526, 6
  %v980 = vpop.permute.xlu0 %979
  %981 = vrot.lane.b32.xlu0 %v527, 6
  %v982 = vpop.permute.xlu0 %981
  %983 = vrot.lane.b32.xlu0 %v528, 6
  %v984 = vpop.permute.xlu0 %983
  %985 = vrot.lane.b32.xlu0 %v529, 6
  %v986 = vpop.permute.xlu0 %985
  %987 = vrot.lane.b32.xlu0 %v530, 6
  %v988 = vpop.permute.xlu0 %987
  %989 = vrot.lane.b32.xlu0 %v531, 6
  %v990 = vpop.permute.xlu0 %989
  %991 = vrot.lane.b32.xlu0 %v532, 6
  %v992 = vpop.permute.xlu0 %991
  %993 = vrot.lane.b32.xlu0 %v533, 6
  %v994 = vpop.permute.xlu0 %993
  %995 = vrot.lane.b32.xlu0 %v534, 6
  %v996 = vpop.permute.xlu0 %995
  %997 = vrot.lane.b32.xlu0 %v535, 6
  %v998 = vpop.permute.xlu0 %997
  %999 = vrot.lane.b32.xlu0 %v536, 6
  %v1000 = vpop.permute.xlu0 %999
  %1001 = vrot.lane.b32.xlu0 %v537, 6
  %v1002 = vpop.permute.xlu0 %1001
  %1003 = vrot.lane.b32.xlu0 %v538, 6
  %v1004 = vpop.permute.xlu0 %1003
  %1005 = vrot.lane.b32.xlu0 %v539, 6
  %v1006 = vpop.permute.xlu0 %1005
  %1007 = vrot.lane.b32.xlu0 %v540, 6
  %v1008 = vpop.permute.xlu0 %1007
  %1009 = vrot.lane.b32.xlu0 %v541, 6
  %v1010 = vpop.permute.xlu0 %1009
  %1011 = vrot.lane.b32.xlu0 %v542, 6
  %v1012 = vpop.permute.xlu0 %1011
  %1013 = vrot.lane.b32.xlu0 %v543, 6
  %v1014 = vpop.permute.xlu0 %1013
  %1015 = vrot.lane.b32.xlu0 %v544, 6
  %v1016 = vpop.permute.xlu0 %1015
  %1017 = vrot.lane.b32.xlu0 %v545, 6
  %v1018 = vpop.permute.xlu0 %1017
  %1019 = vrot.lane.b32.xlu0 %v546, 6
  %v1020 = vpop.permute.xlu0 %1019
  %1021 = vrot.lane.b32.xlu0 %v547, 6
  %v1022 = vpop.permute.xlu0 %1021
  %1023 = vrot.lane.b32.xlu0 %v548, 6
  %v1024 = vpop.permute.xlu0 %1023
  %1025 = vrot.lane.b32.xlu0 %v549, 6
  %v1026 = vpop.permute.xlu0 %1025
  %1027 = vrot.lane.b32.xlu0 %v550, 6
  %v1028 = vpop.permute.xlu0 %1027
  %1029 = vrot.lane.b32.xlu0 %v551, 6
  %v1030 = vpop.permute.xlu0 %1029
  %1031 = vrot.lane.b32.xlu0 %v552, 6
  %v1032 = vpop.permute.xlu0 %1031
  %1033 = vrot.lane.b32.xlu0 %v553, 6
  %v1034 = vpop.permute.xlu0 %1033
  %1035 = vrot.lane.b32.xlu0 %v554, 6
  %v1036 = vpop.permute.xlu0 %1035
  %1037 = vrot.lane.b32.xlu0 %v555, 6
  %v1038 = vpop.permute.xlu0 %1037
  %1039 = vrot.lane.b32.xlu0 %v556, 6
  %v1040 = vpop.permute.xlu0 %1039
  %1041 = vrot.lane.b32.xlu0 %v557, 6
  %v1042 = vpop.permute.xlu0 %1041
  %1043 = vrot.lane.b32.xlu0 %v558, 6
  %v1044 = vpop.permute.xlu0 %1043
  %1045 = vrot.lane.b32.xlu0 %v559, 6
  %v1046 = vpop.permute.xlu0 %1045
  %1047 = vrot.lane.b32.xlu0 %v560, 6
  %v1048 = vpop.permute.xlu0 %1047
  %1049 = vrot.lane.b32.xlu0 %v561, 6
  %v1050 = vpop.permute.xlu0 %1049
  %1051 = vrot.lane.b32.xlu0 %v562, 6
  %v1052 = vpop.permute.xlu0 %1051
  %1053 = vrot.lane.b32.xlu0 %v563, 6
  %v1054 = vpop.permute.xlu0 %1053
  %1055 = vrot.lane.b32.xlu0 %v564, 6
  %v1056 = vpop.permute.xlu0 %1055
  %1057 = vrot.lane.b32.xlu0 %v565, 6
  %v1058 = vpop.permute.xlu0 %1057
  %1059 = vrot.lane.b32.xlu0 %v566, 6
  %v1060 = vpop.permute.xlu0 %1059
  %1061 = vrot.lane.b32.xlu0 %v567, 6
  %v1062 = vpop.permute.xlu0 %1061
  %1063 = vrot.lane.b32.xlu0 %v568, 6
  %v1064 = vpop.permute.xlu0 %1063
  %1065 = vrot.lane.b32.xlu0 %v569, 6
  %v1066 = vpop.permute.xlu0 %1065
  %1067 = vrot.lane.b32.xlu0 %v570, 6
  %v1068 = vpop.permute.xlu0 %1067
  %1069 = vrot.lane.b32.xlu0 %v571, 6
  %v1070 = vpop.permute.xlu0 %1069
  %1071 = vrot.lane.b32.xlu0 %v572, 6
  %v1072 = vpop.permute.xlu0 %1071
  %1073 = vrot.lane.b32.xlu0 %v573, 6
  %v1074 = vpop.permute.xlu0 %1073
  %1075 = vrot.lane.b32.xlu0 %v574, 6
  %v1076 = vpop.permute.xlu0 %1075
  %1077 = vrot.lane.b32.xlu0 %v575, 6
  %v1078 = vpop.permute.xlu0 %1077
  %1079 = vrot.lane.b32.xlu0 %v576, 6
  %v1080 = vpop.permute.xlu0 %1079
  %v1153 = vsel %vm50, %v361, %v650
  %v1154 = vsel %vm50, %v362, %v652
  %v1155 = vsel %vm50, %v363, %v654
  %v1156 = vsel %vm50, %v364, %v656
  %v1157 = vsel %vm50, %v365, %v658
  %v1158 = vsel %vm50, %v366, %v660
  %v1159 = vsel %vm50, %v367, %v662
  %v1160 = vsel %vm50, %v368, %v664
  %v1161 = vsel %vm50, %v369, %v666
  %v1162 = vsel %vm50, %v370, %v668
  %v1163 = vsel %vm50, %v371, %v670
  %v1164 = vsel %vm50, %v372, %v672
  %v1165 = vsel %vm50, %v373, %v674
  %v1166 = vsel %vm50, %v374, %v676
  %v1167 = vsel %vm50, %v375, %v678
  %v1168 = vsel %vm50, %v376, %v680
  %v1169 = vsel %vm50, %v377, %v682
  %v1170 = vsel %vm50, %v378, %v684
  %v1171 = vsel %vm50, %v379, %v686
  %v1172 = vsel %vm50, %v380, %v688
  %v1173 = vsel %vm50, %v381, %v690
  %v1174 = vsel %vm50, %v382, %v692
  %v1175 = vsel %vm50, %v383, %v694
  %v1176 = vsel %vm50, %v384, %v696
  %v1177 = vsel %vm50, %v385, %v698
  %v1178 = vsel %vm50, %v386, %v700
  %v1179 = vsel %vm50, %v387, %v702
  %v1180 = vsel %vm50, %v388, %v704
  %v1181 = vsel %vm50, %v389, %v706
  %v1182 = vsel %vm50, %v390, %v708
  %v1183 = vsel %vm50, %v391, %v710
  %v1184 = vsel %vm50, %v392, %v712
  %v1185 = vsel %vm50, %v393, %v714
  %v1186 = vsel %vm50, %v394, %v716
  %v1187 = vsel %vm50, %v395, %v718
  %v1188 = vsel %vm50, %v396, %v720
  %v1189 = vsel %vm50, %v397, %v722
  %v1190 = vsel %vm50, %v398, %v724
  %v1191 = vsel %vm50, %v399, %v726
  %v1192 = vsel %vm50, %v400, %v728
  %v1193 = vsel %vm50, %v401, %v730
  %v1194 = vsel %vm50, %v402, %v732
  %v1195 = vsel %vm50, %v403, %v734
  %v1196 = vsel %vm50, %v404, %v736
  %v1197 = vsel %vm50, %v405, %v738
  %v1198 = vsel %vm50, %v406, %v740
  %v1199 = vsel %vm50, %v407, %v742
  %v1200 = vsel %vm50, %v408, %v744
  %v1201 = vsel %vm50, %v409, %v746
  %v1202 = vsel %vm50, %v410, %v748
  %v1203 = vsel %vm50, %v411, %v750
  %v1204 = vsel %vm50, %v412, %v752
  %v1205 = vsel %vm50, %v413, %v754
  %v1206 = vsel %vm50, %v414, %v756
  %v1207 = vsel %vm50, %v415, %v758
  %v1208 = vsel %vm50, %v416, %v760
  %v1209 = vsel %vm50, %v417, %v762
  %v1210 = vsel %vm50, %v418, %v764
  %v1211 = vsel %vm50, %v419, %v766
  %v1212 = vsel %vm50, %v420, %v768
  %v1213 = vsel %vm50, %v421, %v770
  %v1214 = vsel %vm50, %v422, %v772
  %v1215 = vsel %vm50, %v423, %v774
  %v1216 = vsel %vm50, %v424, %v776
  %v1217 = vsel %vm50, %v425, %v778
  %v1218 = vsel %vm50, %v426, %v780
  %v1219 = vsel %vm50, %v427, %v782
  %v1220 = vsel %vm50, %v428, %v784
  %v1221 = vsel %vm50, %v429, %v786
  %v1222 = vsel %vm50, %v430, %v788
  %v1223 = vsel %vm50, %v431, %v790
  %v1224 = vsel %vm50, %v432, %v792
  %vm1225 = vcmask 48128
  %v1226 = vsel %vm1225, %v1153, %v938
  %v1227 = vsel %vm1225, %v1154, %v940
  %v1228 = vsel %vm1225, %v1155, %v942
  %v1229 = vsel %vm1225, %v1156, %v944
  %v1230 = vsel %vm1225, %v1157, %v946
  %v1231 = vsel %vm1225, %v1158, %v948
  %v1232 = vsel %vm1225, %v1159, %v950
  %v1233 = vsel %vm1225, %v1160, %v952
  %v1234 = vsel %vm1225, %v1161, %v954
  %v1235 = vsel %vm1225, %v1162, %v956
  %v1236 = vsel %vm1225, %v1163, %v958
  %v1237 = vsel %vm1225, %v1164, %v960
  %v1238 = vsel %vm1225, %v1165, %v962
  %v1239 = vsel %vm1225, %v1166, %v964
  %v1240 = vsel %vm1225, %v1167, %v966
  %v1241 = vsel %vm1225, %v1168, %v968
  %v1242 = vsel %vm1225, %v1169, %v970
  %v1243 = vsel %vm1225, %v1170, %v972
  %v1244 = vsel %vm1225, %v1171, %v974
  %v1245 = vsel %vm1225, %v1172, %v976
  %v1246 = vsel %vm1225, %v1173, %v978
  %v1247 = vsel %vm1225, %v1174, %v980
  %v1248 = vsel %vm1225, %v1175, %v982
  %v1249 = vsel %vm1225, %v1176, %v984
  %v1250 = vsel %vm1225, %v1177, %v986
  %v1251 = vsel %vm1225, %v1178, %v988
  %v1252 = vsel %vm1225, %v1179, %v990
  %v1253 = vsel %vm1225, %v1180, %v992
  %v1254 = vsel %vm1225, %v1181, %v994
  %v1255 = vsel %vm1225, %v1182, %v996
  %v1256 = vsel %vm1225, %v1183, %v998
  %v1257 = vsel %vm1225, %v1184, %v1000
  %v1258 = vsel %vm1225, %v1185, %v1002
  %v1259 = vsel %vm1225, %v1186, %v1004
  %v1260 = vsel %vm1225, %v1187, %v1006
  %v1261 = vsel %vm1225, %v1188, %v1008
  %v1262 = vsel %vm1225, %v1189, %v1010
  %v1263 = vsel %vm1225, %v1190, %v1012
  %v1264 = vsel %vm1225, %v1191, %v1014
  %v1265 = vsel %vm1225, %v1192, %v1016
  %v1266 = vsel %vm1225, %v1193, %v1018
  %v1267 = vsel %vm1225, %v1194, %v1020
  %v1268 = vsel %vm1225, %v1195, %v1022
  %v1269 = vsel %vm1225, %v1196, %v1024
  %v1270 = vsel %vm1225, %v1197, %v1026
  %v1271 = vsel %vm1225, %v1198, %v1028
  %v1272 = vsel %vm1225, %v1199, %v1030
  %v1273 = vsel %vm1225, %v1200, %v1032
  %v1274 = vsel %vm1225, %v1201, %v1034
  %v1275 = vsel %vm1225, %v1202, %v1036
  %v1276 = vsel %vm1225, %v1203, %v1038
  %v1277 = vsel %vm1225, %v1204, %v1040
  %v1278 = vsel %vm1225, %v1205, %v1042
  %v1279 = vsel %vm1225, %v1206, %v1044
  %v1280 = vsel %vm1225, %v1207, %v1046
  %v1281 = vsel %vm1225, %v1208, %v1048
  %v1282 = vsel %vm1225, %v1209, %v1050
  %v1283 = vsel %vm1225, %v1210, %v1052
  %v1284 = vsel %vm1225, %v1211, %v1054
  %v1285 = vsel %vm1225, %v1212, %v1056
  %v1286 = vsel %vm1225, %v1213, %v1058
  %v1287 = vsel %vm1225, %v1214, %v1060
  %v1288 = vsel %vm1225, %v1215, %v1062
  %v1289 = vsel %vm1225, %v1216, %v1064
  %v1290 = vsel %vm1225, %v1217, %v1066
  %v1291 = vsel %vm1225, %v1218, %v1068
  %v1292 = vsel %vm1225, %v1219, %v1070
  %v1293 = vsel %vm1225, %v1220, %v1072
  %v1294 = vsel %vm1225, %v1221, %v1074
  %v1295 = vsel %vm1225, %v1222, %v1076
  %v1296 = vsel %vm1225, %v1223, %v1078
  %v1297 = vsel %vm1225, %v1224, %v1080
  %v1298 = vld [vmem:[%s1] sm:$0xff]
  %v1299 = vld [vmem:[%s1 + $0x8] sm:$0x1]
  %s1300 = scalar_lea.vmem %s1, 16
  %v1301 = vld [vmem:[%s1300] sm:$0xff]
  %v1302 = vld [vmem:[%s1300 + $0x8] sm:$0x1]
  %vm1303 = vcmask 72704
  %v1305 = vsel %vm1303, %v1228, 0
  %v1308 = vsel %vm1303, %v1229, 0
  %v1311 = vsel %vm1303, %v1230, 0
  %v1314 = vsel %vm1303, %v1231, 0
  %v1317 = vsel %vm1303, %v1232, 0
  %v1320 = vsel %vm1303, %v1233, 0
  %v1323 = vsel %vm1303, %v1234, 0
  %v1326 = vsel %vm1303, %v1235, 0
  %v1329 = vsel %vm1303, %v1236, 0
  %v1332 = vsel %vm1303, %v1237, 0
  %v1335 = vsel %vm1303, %v1238, 0
  %v1338 = vsel %vm1303, %v1239, 0
  %v1341 = vsel %vm1303, %v1240, 0
  %v1344 = vsel %vm1303, %v1241, 0
  %v1347 = vsel %vm1303, %v1242, 0
  %v1350 = vsel %vm1303, %v1243, 0
  %v1353 = vsel %vm1303, %v1244, 0
  %v1356 = vsel %vm1303, %v1245, 0
  %v1359 = vsel %vm1303, %v1246, 0
  %v1362 = vsel %vm1303, %v1247, 0
  %v1365 = vsel %vm1303, %v1248, 0
  %v1368 = vsel %vm1303, %v1249, 0
  %v1371 = vsel %vm1303, %v1250, 0
  %v1374 = vsel %vm1303, %v1251, 0
  %v1377 = vsel %vm1303, %v1252, 0
  %v1380 = vsel %vm1303, %v1253, 0
  %v1383 = vsel %vm1303, %v1254, 0
  %v1386 = vsel %vm1303, %v1255, 0
  %v1389 = vsel %vm1303, %v1256, 0
  %v1392 = vsel %vm1303, %v1257, 0
  %v1395 = vsel %vm1303, %v1258, 0
  %v1398 = vsel %vm1303, %v1259, 0
  %v1401 = vsel %vm1303, %v1264, 0
  %v1404 = vsel %vm1303, %v1265, 0
  %v1407 = vsel %vm1303, %v1266, 0
  %v1410 = vsel %vm1303, %v1267, 0
  %v1413 = vsel %vm1303, %v1268, 0
  %v1416 = vsel %vm1303, %v1269, 0
  %v1419 = vsel %vm1303, %v1270, 0
  %v1422 = vsel %vm1303, %v1271, 0
  %v1425 = vsel %vm1303, %v1272, 0
  %v1428 = vsel %vm1303, %v1273, 0
  %v1431 = vsel %vm1303, %v1274, 0
  %v1434 = vsel %vm1303, %v1275, 0
  %v1437 = vsel %vm1303, %v1276, 0
  %v1440 = vsel %vm1303, %v1277, 0
  %v1443 = vsel %vm1303, %v1278, 0
  %v1446 = vsel %vm1303, %v1279, 0
  %v1449 = vsel %vm1303, %v1280, 0
  %v1452 = vsel %vm1303, %v1281, 0
  %v1455 = vsel %vm1303, %v1282, 0
  %v1458 = vsel %vm1303, %v1283, 0
  %v1461 = vsel %vm1303, %v1284, 0
  %v1464 = vsel %vm1303, %v1285, 0
  %v1467 = vsel %vm1303, %v1286, 0
  %v1470 = vsel %vm1303, %v1287, 0
  %v1473 = vsel %vm1303, %v1288, 0
  %v1476 = vsel %vm1303, %v1289, 0
  %v1479 = vsel %vm1303, %v1290, 0
  %v1482 = vsel %vm1303, %v1291, 0
  %v1485 = vsel %vm1303, %v1292, 0
  %v1488 = vsel %vm1303, %v1293, 0
  %v1491 = vsel %vm1303, %v1294, 0
  %v1494 = vsel %vm1303, %v1295, 0
  %vm1496 = vcmask 1040384
  %v1498 = vsel %vm1496, %v1302, 0
  %1500 = vmatprep.subr.mxu0 0.0
  %1501 = vmatpush1.msra.mxu0 0.0
  %1502 = vmatprep.subr.mxu0 0.0
  %1503 = vmatpush1.msra.mxu0 0.0
  %1504 = vmatprep.subr.mxu0 0.0
  %1505 = vmatpush1.msra.mxu0 0.0
  %1506 = vmatprep.subr.mxu0 0.0
  %1507 = vmatpush1.msra.mxu0 0.0
  %1508 = vmatprep.subr.mxu0 0.0
  %1509 = vmatpush1.msra.mxu0 0.0
  %1510 = vmatprep.subr.mxu0 0.0
  %1511 = vmatpush1.msra.mxu0 0.0
  %1512 = vmatprep.subr.mxu0 0.0
  %1513 = vmatpush1.msra.mxu0 0.0
  %1514 = vmatprep.subr.mxu0 0.0
  %1515 = vmatpush1.msra.mxu0 0.0
  %1516 = vmatprep.subr.mxu0 0.0
  %1517 = vmatpush1.msra.mxu0 0.0
  %1518 = vmatprep.subr.mxu0 0.0
  %1519 = vmatpush1.msra.mxu0 0.0
  %1520 = vmatprep.subr.mxu0 0.0
  %1521 = vmatpush1.msra.mxu0 0.0
  %1522 = vmatprep.subr.mxu0 0.0
  %1523 = vmatpush1.msra.mxu0 0.0
  %1524 = vmatprep.subr.mxu0 0.0
  %1525 = vmatpush1.msra.mxu0 0.0
  %1526 = vmatprep.subr.mxu0 0.0
  %1527 = vmatpush1.msra.mxu0 0.0
  %1528 = vmatprep.subr.mxu0 0.0
  %1529 = vmatpush1.msra.mxu0 %v1498
  %1530 = vmatprep.subr.mxu0 0.0
  %1531 = vmatpush1.msra.mxu0 %v1301
  %1532 = vmatprep.subr.mxu0 0.0
  %1533 = vmatpush2.msra.mxu0 0.0
  %1534 = vmatprep.subr.mxu0 0.0
  %1535 = vmatpush2.msra.mxu0 0.0
  %1536 = vmatprep.subr.mxu0 0.0
  %1537 = vmatpush2.msra.mxu0 0.0
  %1538 = vmatprep.subr.mxu0 0.0
  %1539 = vmatpush2.msra.mxu0 0.0
  %1540 = vmatprep.subr.mxu0 0.0
  %1541 = vmatpush2.msra.mxu0 0.0
  %1542 = vmatprep.subr.mxu0 0.0
  %1543 = vmatpush2.msra.mxu0 0.0
  %1544 = vmatprep.subr.mxu0 0.0
  %1545 = vmatpush2.msra.mxu0 0.0
  %1546 = vmatprep.subr.mxu0 0.0
  %1547 = vmatpush2.msra.mxu0 0.0
  %1548 = vmatprep.subr.mxu0 0.0
  %1549 = vmatpush2.msra.mxu0 0.0
  %1550 = vmatprep.subr.mxu0 0.0
  %1551 = vmatpush2.msra.mxu0 0.0
  %1552 = vmatprep.subr.mxu0 0.0
  %1553 = vmatpush2.msra.mxu0 0.0
  %1554 = vmatprep.subr.mxu0 0.0
  %1555 = vmatpush2.msra.mxu0 0.0
  %1556 = vmatprep.subr.mxu0 0.0
  %1557 = vmatpush2.msra.mxu0 0.0
  %1558 = vmatprep.subr.mxu0 0.0
  %1559 = vmatpush2.msra.mxu0 0.0
  %1560 = vmatprep.subr.mxu0 0.0
  %1561 = vmatpush2.msra.mxu0 0.0
  %1562 = vmatprep.subr.mxu0 0.0
  %1563 = vmatpush2.msra.mxu0 0.0
  %1564 = vmatprep.mubr.f32.mxu0 0.0
  %1565 = vmatmul.mubr.f32.gmra.mxu0 %v1305
  %v1566 = vpop.f32.mrf.mxu0
  %v1567 = vadd.f32 0.0, %v1566
  %v1568 = vpop.f32.mrf.mxu0
  %1569 = vmatprep.mubr.f32.mxu0 0.0
  %1570 = vmatmul.mubr.f32.gmra.mxu0 %v1308
  %v1571 = vpop.f32.mrf.mxu0
  %v1572 = vadd.f32 0.0, %v1571
  %v1573 = vpop.f32.mrf.mxu0
  %1574 = vmatprep.mubr.f32.mxu0 0.0
  %1575 = vmatmul.mubr.f32.gmra.mxu0 %v1311
  %v1576 = vpop.f32.mrf.mxu0
  %v1577 = vadd.f32 0.0, %v1576
  %v1578 = vpop.f32.mrf.mxu0
  %1579 = vmatprep.mubr.f32.mxu0 0.0
  %1580 = vmatmul.mubr.f32.gmra.mxu0 %v1314
  %v1581 = vpop.f32.mrf.mxu0
  %v1582 = vadd.f32 0.0, %v1581
  %v1583 = vpop.f32.mrf.mxu0
  %1584 = vmatprep.mubr.f32.mxu0 0.0
  %1585 = vmatmul.mubr.f32.gmra.mxu0 %v1317
  %v1586 = vpop.f32.mrf.mxu0
  %v1587 = vadd.f32 0.0, %v1586
  %v1588 = vpop.f32.mrf.mxu0
  %1589 = vmatprep.mubr.f32.mxu0 0.0
  %1590 = vmatmul.mubr.f32.gmra.mxu0 %v1320
  %v1591 = vpop.f32.mrf.mxu0
  %v1592 = vadd.f32 0.0, %v1591
  %v1593 = vpop.f32.mrf.mxu0
  %1594 = vmatprep.mubr.f32.mxu0 0.0
  %1595 = vmatmul.mubr.f32.gmra.mxu0 %v1323
  %v1596 = vpop.f32.mrf.mxu0
  %v1597 = vadd.f32 0.0, %v1596
  %v1598 = vpop.f32.mrf.mxu0
  %1599 = vmatprep.mubr.f32.mxu0 0.0
  %1600 = vmatmul.mubr.f32.gmra.mxu0 %v1326
  %v1601 = vpop.f32.mrf.mxu0
  %v1602 = vadd.f32 0.0, %v1601
  %v1603 = vpop.f32.mrf.mxu0
  %1604 = vmatprep.mubr.f32.mxu0 0.0
  %1605 = vmatmul.mubr.f32.gmra.mxu0 %v1329
  %v1606 = vpop.f32.mrf.mxu0
  %v1607 = vadd.f32 0.0, %v1606
  %v1608 = vpop.f32.mrf.mxu0
  %1609 = vmatprep.mubr.f32.mxu0 0.0
  %1610 = vmatmul.mubr.f32.gmra.mxu0 %v1332
  %v1611 = vpop.f32.mrf.mxu0
  %v1612 = vadd.f32 0.0, %v1611
  %v1613 = vpop.f32.mrf.mxu0
  %1614 = vmatprep.mubr.f32.mxu0 0.0
  %1615 = vmatmul.mubr.f32.gmra.mxu0 %v1335
  %v1616 = vpop.f32.mrf.mxu0
  %v1617 = vadd.f32 0.0, %v1616
  %v1618 = vpop.f32.mrf.mxu0
  %1619 = vmatprep.mubr.f32.mxu0 0.0
  %1620 = vmatmul.mubr.f32.gmra.mxu0 %v1338
  %v1621 = vpop.f32.mrf.mxu0
  %v1622 = vadd.f32 0.0, %v1621
  %v1623 = vpop.f32.mrf.mxu0
  %1624 = vmatprep.mubr.f32.mxu0 0.0
  %1625 = vmatmul.mubr.f32.gmra.mxu0 %v1341
  %v1626 = vpop.f32.mrf.mxu0
  %v1627 = vadd.f32 0.0, %v1626
  %v1628 = vpop.f32.mrf.mxu0
  %1629 = vmatprep.mubr.f32.mxu0 0.0
  %1630 = vmatmul.mubr.f32.gmra.mxu0 %v1344
  %v1631 = vpop.f32.mrf.mxu0
  %v1632 = vadd.f32 0.0, %v1631
  %v1633 = vpop.f32.mrf.mxu0
  %1634 = vmatprep.mubr.f32.mxu0 0.0
  %1635 = vmatmul.mubr.f32.gmra.mxu0 %v1347
  %v1636 = vpop.f32.mrf.mxu0
  %v1637 = vadd.f32 0.0, %v1636
  %v1638 = vpop.f32.mrf.mxu0
  %1639 = vmatprep.mubr.f32.mxu0 0.0
  %1640 = vmatmul.mubr.f32.gmra.mxu0 %v1350
  %v1641 = vpop.f32.mrf.mxu0
  %v1642 = vadd.f32 0.0, %v1641
  %v1643 = vpop.f32.mrf.mxu0
  %1644 = vmatprep.mubr.f32.mxu0 0.0
  %1645 = vmatmul.mubr.f32.gmra.mxu0 %v1353
  %v1646 = vpop.f32.mrf.mxu0
  %v1647 = vadd.f32 0.0, %v1646
  %v1648 = vpop.f32.mrf.mxu0
  %1649 = vmatprep.mubr.f32.mxu0 0.0
  %1650 = vmatmul.mubr.f32.gmra.mxu0 %v1356
  %v1651 = vpop.f32.mrf.mxu0
  %v1652 = vadd.f32 0.0, %v1651
  %v1653 = vpop.f32.mrf.mxu0
  %1654 = vmatprep.mubr.f32.mxu0 0.0
  %1655 = vmatmul.mubr.f32.gmra.mxu0 %v1359
  %v1656 = vpop.f32.mrf.mxu0
  %v1657 = vadd.f32 0.0, %v1656
  %v1658 = vpop.f32.mrf.mxu0
  %1659 = vmatprep.mubr.f32.mxu0 0.0
  %1660 = vmatmul.mubr.f32.gmra.mxu0 %v1362
  %v1661 = vpop.f32.mrf.mxu0
  %v1662 = vadd.f32 0.0, %v1661
  %v1663 = vpop.f32.mrf.mxu0
  %1664 = vmatprep.mubr.f32.mxu0 0.0
  %1665 = vmatmul.mubr.f32.gmra.mxu0 %v1365
  %v1666 = vpop.f32.mrf.mxu0
  %v1667 = vadd.f32 0.0, %v1666
  %v1668 = vpop.f32.mrf.mxu0
  %1669 = vmatprep.mubr.f32.mxu0 0.0
  %1670 = vmatmul.mubr.f32.gmra.mxu0 %v1368
  %v1671 = vpop.f32.mrf.mxu0
  %v1672 = vadd.f32 0.0, %v1671
  %v1673 = vpop.f32.mrf.mxu0
  %1674 = vmatprep.mubr.f32.mxu0 0.0
  %1675 = vmatmul.mubr.f32.gmra.mxu0 %v1371
  %v1676 = vpop.f32.mrf.mxu0
  %v1677 = vadd.f32 0.0, %v1676
  %v1678 = vpop.f32.mrf.mxu0
  %1679 = vmatprep.mubr.f32.mxu0 0.0
  %1680 = vmatmul.mubr.f32.gmra.mxu0 %v1374
  %v1681 = vpop.f32.mrf.mxu0
  %v1682 = vadd.f32 0.0, %v1681
  %v1683 = vpop.f32.mrf.mxu0
  %1684 = vmatprep.mubr.f32.mxu0 0.0
  %1685 = vmatmul.mubr.f32.gmra.mxu0 %v1377
  %v1686 = vpop.f32.mrf.mxu0
  %v1687 = vadd.f32 0.0, %v1686
  %v1688 = vpop.f32.mrf.mxu0
  %1689 = vmatprep.mubr.f32.mxu0 0.0
  %1690 = vmatmul.mubr.f32.gmra.mxu0 %v1380
  %v1691 = vpop.f32.mrf.mxu0
  %v1692 = vadd.f32 0.0, %v1691
  %v1693 = vpop.f32.mrf.mxu0
  %1694 = vmatprep.mubr.f32.mxu0 0.0
  %1695 = vmatmul.mubr.f32.gmra.mxu0 %v1383
  %v1696 = vpop.f32.mrf.mxu0
  %v1697 = vadd.f32 0.0, %v1696
  %v1698 = vpop.f32.mrf.mxu0
  %1699 = vmatprep.mubr.f32.mxu0 0.0
  %1700 = vmatmul.mubr.f32.gmra.mxu0 %v1386
  %v1701 = vpop.f32.mrf.mxu0
  %v1702 = vadd.f32 0.0, %v1701
  %v1703 = vpop.f32.mrf.mxu0
  %1704 = vmatprep.mubr.f32.mxu0 0.0
  %1705 = vmatmul.mubr.f32.gmra.mxu0 %v1389
  %v1706 = vpop.f32.mrf.mxu0
  %v1707 = vadd.f32 0.0, %v1706
  %v1708 = vpop.f32.mrf.mxu0
  %1709 = vmatprep.mubr.f32.mxu0 0.0
  %1710 = vmatmul.mubr.f32.gmra.mxu0 %v1392
  %v1711 = vpop.f32.mrf.mxu0
  %v1712 = vadd.f32 0.0, %v1711
  %v1713 = vpop.f32.mrf.mxu0
  %1714 = vmatprep.mubr.f32.mxu0 0.0
  %1715 = vmatmul.mubr.f32.gmra.mxu0 %v1395
  %v1716 = vpop.f32.mrf.mxu0
  %v1717 = vadd.f32 0.0, %v1716
  %v1718 = vpop.f32.mrf.mxu0
  %1719 = vmatprep.mubr.f32.mxu0 0.0
  %1720 = vmatmul.mubr.f32.gmra.mxu0 %v1398
  %v1721 = vpop.f32.mrf.mxu0
  %v1722 = vadd.f32 0.0, %v1721
  %v1723 = vpop.f32.mrf.mxu0
  %1724 = vmatprep.mubr.f32.mxu0 0.0
  %1725 = vmatmul.mubr.f32.gmra.mxu0 %v1401
  %v1726 = vpop.f32.mrf.mxu0
  %v1727 = vadd.f32 0.0, %v1726
  %v1728 = vpop.f32.mrf.mxu0
  %1729 = vmatprep.mubr.f32.mxu0 0.0
  %1730 = vmatmul.mubr.f32.gmra.mxu0 %v1404
  %v1731 = vpop.f32.mrf.mxu0
  %v1732 = vadd.f32 0.0, %v1731
  %v1733 = vpop.f32.mrf.mxu0
  %1734 = vmatprep.mubr.f32.mxu0 0.0
  %1735 = vmatmul.mubr.f32.gmra.mxu0 %v1407
  %v1736 = vpop.f32.mrf.mxu0
  %v1737 = vadd.f32 0.0, %v1736
  %v1738 = vpop.f32.mrf.mxu0
  %1739 = vmatprep.mubr.f32.mxu0 0.0
  %1740 = vmatmul.mubr.f32.gmra.mxu0 %v1410
  %v1741 = vpop.f32.mrf.mxu0
  %v1742 = vadd.f32 0.0, %v1741
  %v1743 = vpop.f32.mrf.mxu0
  %1744 = vmatprep.mubr.f32.mxu0 0.0
  %1745 = vmatmul.mubr.f32.gmra.mxu0 %v1413
  %v1746 = vpop.f32.mrf.mxu0
  %v1747 = vadd.f32 0.0, %v1746
  %v1748 = vpop.f32.mrf.mxu0
  %1749 = vmatprep.mubr.f32.mxu0 0.0
  %1750 = vmatmul.mubr.f32.gmra.mxu0 %v1416
  %v1751 = vpop.f32.mrf.mxu0
  %v1752 = vadd.f32 0.0, %v1751
  %v1753 = vpop.f32.mrf.mxu0
  %1754 = vmatprep.mubr.f32.mxu0 0.0
  %1755 = vmatmul.mubr.f32.gmra.mxu0 %v1419
  %v1756 = vpop.f32.mrf.mxu0
  %v1757 = vadd.f32 0.0, %v1756
  %v1758 = vpop.f32.mrf.mxu0
  %1759 = vmatprep.mubr.f32.mxu0 0.0
  %1760 = vmatmul.mubr.f32.gmra.mxu0 %v1422
  %v1761 = vpop.f32.mrf.mxu0
  %v1762 = vadd.f32 0.0, %v1761
  %v1763 = vpop.f32.mrf.mxu0
  %1764 = vmatprep.mubr.f32.mxu0 0.0
  %1765 = vmatmul.mubr.f32.gmra.mxu0 %v1425
  %v1766 = vpop.f32.mrf.mxu0
  %v1767 = vadd.f32 0.0, %v1766
  %v1768 = vpop.f32.mrf.mxu0
  %1769 = vmatprep.mubr.f32.mxu0 0.0
  %1770 = vmatmul.mubr.f32.gmra.mxu0 %v1428
  %v1771 = vpop.f32.mrf.mxu0
  %v1772 = vadd.f32 0.0, %v1771
  %v1773 = vpop.f32.mrf.mxu0
  %1774 = vmatprep.mubr.f32.mxu0 0.0
  %1775 = vmatmul.mubr.f32.gmra.mxu0 %v1431
  %v1776 = vpop.f32.mrf.mxu0
  %v1777 = vadd.f32 0.0, %v1776
  %v1778 = vpop.f32.mrf.mxu0
  %1779 = vmatprep.mubr.f32.mxu0 0.0
  %1780 = vmatmul.mubr.f32.gmra.mxu0 %v1434
  %v1781 = vpop.f32.mrf.mxu0
  %v1782 = vadd.f32 0.0, %v1781
  %v1783 = vpop.f32.mrf.mxu0
  %1784 = vmatprep.mubr.f32.mxu0 0.0
  %1785 = vmatmul.mubr.f32.gmra.mxu0 %v1437
  %v1786 = vpop.f32.mrf.mxu0
  %v1787 = vadd.f32 0.0, %v1786
  %v1788 = vpop.f32.mrf.mxu0
  %1789 = vmatprep.mubr.f32.mxu0 0.0
  %1790 = vmatmul.mubr.f32.gmra.mxu0 %v1440
  %v1791 = vpop.f32.mrf.mxu0
  %v1792 = vadd.f32 0.0, %v1791
  %v1793 = vpop.f32.mrf.mxu0
  %1794 = vmatprep.mubr.f32.mxu0 0.0
  %1795 = vmatmul.mubr.f32.gmra.mxu0 %v1443
  %v1796 = vpop.f32.mrf.mxu0
  %v1797 = vadd.f32 0.0, %v1796
  %v1798 = vpop.f32.mrf.mxu0
  %1799 = vmatprep.mubr.f32.mxu0 0.0
  %1800 = vmatmul.mubr.f32.gmra.mxu0 %v1446
  %v1801 = vpop.f32.mrf.mxu0
  %v1802 = vadd.f32 0.0, %v1801
  %v1803 = vpop.f32.mrf.mxu0
  %1804 = vmatprep.mubr.f32.mxu0 0.0
  %1805 = vmatmul.mubr.f32.gmra.mxu0 %v1449
  %v1806 = vpop.f32.mrf.mxu0
  %v1807 = vadd.f32 0.0, %v1806
  %v1808 = vpop.f32.mrf.mxu0
  %1809 = vmatprep.mubr.f32.mxu0 0.0
  %1810 = vmatmul.mubr.f32.gmra.mxu0 %v1452
  %v1811 = vpop.f32.mrf.mxu0
  %v1812 = vadd.f32 0.0, %v1811
  %v1813 = vpop.f32.mrf.mxu0
  %1814 = vmatprep.mubr.f32.mxu0 0.0
  %1815 = vmatmul.mubr.f32.gmra.mxu0 %v1455
  %v1816 = vpop.f32.mrf.mxu0
  %v1817 = vadd.f32 0.0, %v1816
  %v1818 = vpop.f32.mrf.mxu0
  %1819 = vmatprep.mubr.f32.mxu0 0.0
  %1820 = vmatmul.mubr.f32.gmra.mxu0 %v1458
  %v1821 = vpop.f32.mrf.mxu0
  %v1822 = vadd.f32 0.0, %v1821
  %v1823 = vpop.f32.mrf.mxu0
  %1824 = vmatprep.mubr.f32.mxu0 0.0
  %1825 = vmatmul.mubr.f32.gmra.mxu0 %v1461
  %v1826 = vpop.f32.mrf.mxu0
  %v1827 = vadd.f32 0.0, %v1826
  %v1828 = vpop.f32.mrf.mxu0
  %1829 = vmatprep.mubr.f32.mxu0 0.0
  %1830 = vmatmul.mubr.f32.gmra.mxu0 %v1464
  %v1831 = vpop.f32.mrf.mxu0
  %v1832 = vadd.f32 0.0, %v1831
  %v1833 = vpop.f32.mrf.mxu0
  %1834 = vmatprep.mubr.f32.mxu0 0.0
  %1835 = vmatmul.mubr.f32.gmra.mxu0 %v1467
  %v1836 = vpop.f32.mrf.mxu0
  %v1837 = vadd.f32 0.0, %v1836
  %v1838 = vpop.f32.mrf.mxu0
  %1839 = vmatprep.mubr.f32.mxu0 0.0
  %1840 = vmatmul.mubr.f32.gmra.mxu0 %v1470
  %v1841 = vpop.f32.mrf.mxu0
  %v1842 = vadd.f32 0.0, %v1841
  %v1843 = vpop.f32.mrf.mxu0
  %1844 = vmatprep.mubr.f32.mxu0 0.0
  %1845 = vmatmul.mubr.f32.gmra.mxu0 %v1473
  %v1846 = vpop.f32.mrf.mxu0
  %v1847 = vadd.f32 0.0, %v1846
  %v1848 = vpop.f32.mrf.mxu0
  %1849 = vmatprep.mubr.f32.mxu0 0.0
  %1850 = vmatmul.mubr.f32.gmra.mxu0 %v1476
  %v1851 = vpop.f32.mrf.mxu0
  %v1852 = vadd.f32 0.0, %v1851
  %v1853 = vpop.f32.mrf.mxu0
  %1854 = vmatprep.mubr.f32.mxu0 0.0
  %1855 = vmatmul.mubr.f32.gmra.mxu0 %v1479
  %v1856 = vpop.f32.mrf.mxu0
  %v1857 = vadd.f32 0.0, %v1856
  %v1858 = vpop.f32.mrf.mxu0
  %1859 = vmatprep.mubr.f32.mxu0 0.0
  %1860 = vmatmul.mubr.f32.gmra.mxu0 %v1482
  %v1861 = vpop.f32.mrf.mxu0
  %v1862 = vadd.f32 0.0, %v1861
  %v1863 = vpop.f32.mrf.mxu0
  %1864 = vmatprep.mubr.f32.mxu0 0.0
  %1865 = vmatmul.mubr.f32.gmra.mxu0 %v1485
  %v1866 = vpop.f32.mrf.mxu0
  %v1867 = vadd.f32 0.0, %v1866
  %v1868 = vpop.f32.mrf.mxu0
  %1869 = vmatprep.mubr.f32.mxu0 0.0
  %1870 = vmatmul.mubr.f32.gmra.mxu0 %v1488
  %v1871 = vpop.f32.mrf.mxu0
  %v1872 = vadd.f32 0.0, %v1871
  %v1873 = vpop.f32.mrf.mxu0
  %1874 = vmatprep.mubr.f32.mxu0 0.0
  %1875 = vmatmul.mubr.f32.gmra.mxu0 %v1491
  %v1876 = vpop.f32.mrf.mxu0
  %v1877 = vadd.f32 0.0, %v1876
  %v1878 = vpop.f32.mrf.mxu0
  %1879 = vmatprep.mubr.f32.mxu0 0.0
  %1880 = vmatmul.mubr.f32.gmra.mxu0 %v1494
  %v1881 = vpop.f32.mrf.mxu0
  %v1882 = vadd.f32 0.0, %v1881
  %v1883 = vpop.f32.mrf.mxu0
  %1884 = vdwg.mxu0
  %v1886 = vsel %vm1303, %v1226, 0
  %v1889 = vsel %vm1303, %v1227, 0
  %v1892 = vsel %vm1303, %v1262, 0
  %v1895 = vsel %vm1303, %v1263, 0
  %v1898 = vsel %vm1496, %v1299, 0
  %1900 = vmatprep.subr.mxu0 0.0
  %1901 = vmatpush1.msra.mxu0 0.0
  %1902 = vmatprep.subr.mxu0 0.0
  %1903 = vmatpush1.msra.mxu0 0.0
  %1904 = vmatprep.subr.mxu0 0.0
  %1905 = vmatpush1.msra.mxu0 0.0
  %1906 = vmatprep.subr.mxu0 0.0
  %1907 = vmatpush1.msra.mxu0 0.0
  %1908 = vmatprep.subr.mxu0 0.0
  %1909 = vmatpush1.msra.mxu0 0.0
  %1910 = vmatprep.subr.mxu0 0.0
  %1911 = vmatpush1.msra.mxu0 0.0
  %1912 = vmatprep.subr.mxu0 0.0
  %1913 = vmatpush1.msra.mxu0 0.0
  %1914 = vmatprep.subr.mxu0 0.0
  %1915 = vmatpush1.msra.mxu0 0.0
  %1916 = vmatprep.subr.mxu0 0.0
  %1917 = vmatpush1.msra.mxu0 0.0
  %1918 = vmatprep.subr.mxu0 0.0
  %1919 = vmatpush1.msra.mxu0 0.0
  %1920 = vmatprep.subr.mxu0 0.0
  %1921 = vmatpush1.msra.mxu0 0.0
  %1922 = vmatprep.subr.mxu0 0.0
  %1923 = vmatpush1.msra.mxu0 0.0
  %1924 = vmatprep.subr.mxu0 0.0
  %1925 = vmatpush1.msra.mxu0 0.0
  %1926 = vmatprep.subr.mxu0 0.0
  %1927 = vmatpush1.msra.mxu0 0.0
  %1928 = vmatprep.subr.mxu0 0.0
  %1929 = vmatpush1.msra.mxu0 %v1898
  %1930 = vmatprep.subr.mxu0 0.0
  %1931 = vmatpush1.msra.mxu0 %v1298
  %1932 = vmatprep.subr.mxu0 0.0
  %1933 = vmatpush2.msra.mxu0 0.0
  %1934 = vmatprep.subr.mxu0 0.0
  %1935 = vmatpush2.msra.mxu0 0.0
  %1936 = vmatprep.subr.mxu0 0.0
  %1937 = vmatpush2.msra.mxu0 0.0
  %1938 = vmatprep.subr.mxu0 0.0
  %1939 = vmatpush2.msra.mxu0 0.0
  %1940 = vmatprep.subr.mxu0 0.0
  %1941 = vmatpush2.msra.mxu0 0.0
  %1942 = vmatprep.subr.mxu0 0.0
  %1943 = vmatpush2.msra.mxu0 0.0
  %1944 = vmatprep.subr.mxu0 0.0
  %1945 = vmatpush2.msra.mxu0 0.0
  %1946 = vmatprep.subr.mxu0 0.0
  %1947 = vmatpush2.msra.mxu0 0.0
  %1948 = vmatprep.subr.mxu0 0.0
  %1949 = vmatpush2.msra.mxu0 0.0
  %1950 = vmatprep.subr.mxu0 0.0
  %1951 = vmatpush2.msra.mxu0 0.0
  %1952 = vmatprep.subr.mxu0 0.0
  %1953 = vmatpush2.msra.mxu0 0.0
  %1954 = vmatprep.subr.mxu0 0.0
  %1955 = vmatpush2.msra.mxu0 0.0
  %1956 = vmatprep.subr.mxu0 0.0
  %1957 = vmatpush2.msra.mxu0 0.0
  %1958 = vmatprep.subr.mxu0 0.0
  %1959 = vmatpush2.msra.mxu0 0.0
  %1960 = vmatprep.subr.mxu0 0.0
  %1961 = vmatpush2.msra.mxu0 0.0
  %1962 = vmatprep.subr.mxu0 0.0
  %1963 = vmatpush2.msra.mxu0 0.0
  %1964 = vmatprep.mubr.f32.mxu0 0.0
  %1965 = vmatmul.mubr.f32.gmra.mxu0 %v1886
  %v1966 = vpop.f32.mrf.mxu0
  %v1967 = vadd.f32 %v1567, %v1966
  %v1968 = vpop.f32.mrf.mxu0
  %1969 = vmatprep.mubr.f32.mxu0 0.0
  %1970 = vmatmul.mubr.f32.gmra.mxu0 %v1889
  %v1971 = vpop.f32.mrf.mxu0
  %v1972 = vadd.f32 %v1572, %v1971
  %v1973 = vpop.f32.mrf.mxu0
  %1974 = vmatprep.mubr.f32.mxu0 0.0
  %1975 = vmatmul.mubr.f32.gmra.mxu0 %v1305
  %v1976 = vpop.f32.mrf.mxu0
  %v1977 = vadd.f32 %v1577, %v1976
  %v1978 = vpop.f32.mrf.mxu0
  %1979 = vmatprep.mubr.f32.mxu0 0.0
  %1980 = vmatmul.mubr.f32.gmra.mxu0 %v1308
  %v1981 = vpop.f32.mrf.mxu0
  %v1982 = vadd.f32 %v1582, %v1981
  %v1983 = vpop.f32.mrf.mxu0
  %1984 = vmatprep.mubr.f32.mxu0 0.0
  %1985 = vmatmul.mubr.f32.gmra.mxu0 %v1311
  %v1986 = vpop.f32.mrf.mxu0
  %v1987 = vadd.f32 %v1587, %v1986
  %v1988 = vpop.f32.mrf.mxu0
  %1989 = vmatprep.mubr.f32.mxu0 0.0
  %1990 = vmatmul.mubr.f32.gmra.mxu0 %v1314
  %v1991 = vpop.f32.mrf.mxu0
  %v1992 = vadd.f32 %v1592, %v1991
  %v1993 = vpop.f32.mrf.mxu0
  %1994 = vmatprep.mubr.f32.mxu0 0.0
  %1995 = vmatmul.mubr.f32.gmra.mxu0 %v1317
  %v1996 = vpop.f32.mrf.mxu0
  %v1997 = vadd.f32 %v1597, %v1996
  %v1998 = vpop.f32.mrf.mxu0
  %1999 = vmatprep.mubr.f32.mxu0 0.0
  %2000 = vmatmul.mubr.f32.gmra.mxu0 %v1320
  %v2001 = vpop.f32.mrf.mxu0
  %v2002 = vadd.f32 %v1602, %v2001
  %v2003 = vpop.f32.mrf.mxu0
  %2004 = vmatprep.mubr.f32.mxu0 0.0
  %2005 = vmatmul.mubr.f32.gmra.mxu0 %v1323
  %v2006 = vpop.f32.mrf.mxu0
  %v2007 = vadd.f32 %v1607, %v2006
  %v2008 = vpop.f32.mrf.mxu0
  %2009 = vmatprep.mubr.f32.mxu0 0.0
  %2010 = vmatmul.mubr.f32.gmra.mxu0 %v1326
  %v2011 = vpop.f32.mrf.mxu0
  %v2012 = vadd.f32 %v1612, %v2011
  %v2013 = vpop.f32.mrf.mxu0
  %2014 = vmatprep.mubr.f32.mxu0 0.0
  %2015 = vmatmul.mubr.f32.gmra.mxu0 %v1329
  %v2016 = vpop.f32.mrf.mxu0
  %v2017 = vadd.f32 %v1617, %v2016
  %v2018 = vpop.f32.mrf.mxu0
  %2019 = vmatprep.mubr.f32.mxu0 0.0
  %2020 = vmatmul.mubr.f32.gmra.mxu0 %v1332
  %v2021 = vpop.f32.mrf.mxu0
  %v2022 = vadd.f32 %v1622, %v2021
  %v2023 = vpop.f32.mrf.mxu0
  %2024 = vmatprep.mubr.f32.mxu0 0.0
  %2025 = vmatmul.mubr.f32.gmra.mxu0 %v1335
  %v2026 = vpop.f32.mrf.mxu0
  %v2027 = vadd.f32 %v1627, %v2026
  %v2028 = vpop.f32.mrf.mxu0
  %2029 = vmatprep.mubr.f32.mxu0 0.0
  %2030 = vmatmul.mubr.f32.gmra.mxu0 %v1338
  %v2031 = vpop.f32.mrf.mxu0
  %v2032 = vadd.f32 %v1632, %v2031
  %v2033 = vpop.f32.mrf.mxu0
  %2034 = vmatprep.mubr.f32.mxu0 0.0
  %2035 = vmatmul.mubr.f32.gmra.mxu0 %v1341
  %v2036 = vpop.f32.mrf.mxu0
  %v2037 = vadd.f32 %v1637, %v2036
  %v2038 = vpop.f32.mrf.mxu0
  %2039 = vmatprep.mubr.f32.mxu0 0.0
  %2040 = vmatmul.mubr.f32.gmra.mxu0 %v1344
  %v2041 = vpop.f32.mrf.mxu0
  %v2042 = vadd.f32 %v1642, %v2041
  %v2043 = vpop.f32.mrf.mxu0
  %2044 = vmatprep.mubr.f32.mxu0 0.0
  %2045 = vmatmul.mubr.f32.gmra.mxu0 %v1347
  %v2046 = vpop.f32.mrf.mxu0
  %v2047 = vadd.f32 %v1647, %v2046
  %v2048 = vpop.f32.mrf.mxu0
  %2049 = vmatprep.mubr.f32.mxu0 0.0
  %2050 = vmatmul.mubr.f32.gmra.mxu0 %v1350
  %v2051 = vpop.f32.mrf.mxu0
  %v2052 = vadd.f32 %v1652, %v2051
  %v2053 = vpop.f32.mrf.mxu0
  %2054 = vmatprep.mubr.f32.mxu0 0.0
  %2055 = vmatmul.mubr.f32.gmra.mxu0 %v1353
  %v2056 = vpop.f32.mrf.mxu0
  %v2057 = vadd.f32 %v1657, %v2056
  %v2058 = vpop.f32.mrf.mxu0
  %2059 = vmatprep.mubr.f32.mxu0 0.0
  %2060 = vmatmul.mubr.f32.gmra.mxu0 %v1356
  %v2061 = vpop.f32.mrf.mxu0
  %v2062 = vadd.f32 %v1662, %v2061
  %v2063 = vpop.f32.mrf.mxu0
  %2064 = vmatprep.mubr.f32.mxu0 0.0
  %2065 = vmatmul.mubr.f32.gmra.mxu0 %v1359
  %v2066 = vpop.f32.mrf.mxu0
  %v2067 = vadd.f32 %v1667, %v2066
  %v2068 = vpop.f32.mrf.mxu0
  %2069 = vmatprep.mubr.f32.mxu0 0.0
  %2070 = vmatmul.mubr.f32.gmra.mxu0 %v1362
  %v2071 = vpop.f32.mrf.mxu0
  %v2072 = vadd.f32 %v1672, %v2071
  %v2073 = vpop.f32.mrf.mxu0
  %2074 = vmatprep.mubr.f32.mxu0 0.0
  %2075 = vmatmul.mubr.f32.gmra.mxu0 %v1365
  %v2076 = vpop.f32.mrf.mxu0
  %v2077 = vadd.f32 %v1677, %v2076
  %v2078 = vpop.f32.mrf.mxu0
  %2079 = vmatprep.mubr.f32.mxu0 0.0
  %2080 = vmatmul.mubr.f32.gmra.mxu0 %v1368
  %v2081 = vpop.f32.mrf.mxu0
  %v2082 = vadd.f32 %v1682, %v2081
  %v2083 = vpop.f32.mrf.mxu0
  %2084 = vmatprep.mubr.f32.mxu0 0.0
  %2085 = vmatmul.mubr.f32.gmra.mxu0 %v1371
  %v2086 = vpop.f32.mrf.mxu0
  %v2087 = vadd.f32 %v1687, %v2086
  %v2088 = vpop.f32.mrf.mxu0
  %2089 = vmatprep.mubr.f32.mxu0 0.0
  %2090 = vmatmul.mubr.f32.gmra.mxu0 %v1374
  %v2091 = vpop.f32.mrf.mxu0
  %v2092 = vadd.f32 %v1692, %v2091
  %v2093 = vpop.f32.mrf.mxu0
  %2094 = vmatprep.mubr.f32.mxu0 0.0
  %2095 = vmatmul.mubr.f32.gmra.mxu0 %v1377
  %v2096 = vpop.f32.mrf.mxu0
  %v2097 = vadd.f32 %v1697, %v2096
  %v2098 = vpop.f32.mrf.mxu0
  %2099 = vmatprep.mubr.f32.mxu0 0.0
  %2100 = vmatmul.mubr.f32.gmra.mxu0 %v1380
  %v2101 = vpop.f32.mrf.mxu0
  %v2102 = vadd.f32 %v1702, %v2101
  %v2103 = vpop.f32.mrf.mxu0
  %2104 = vmatprep.mubr.f32.mxu0 0.0
  %2105 = vmatmul.mubr.f32.gmra.mxu0 %v1383
  %v2106 = vpop.f32.mrf.mxu0
  %v2107 = vadd.f32 %v1707, %v2106
  %v2108 = vpop.f32.mrf.mxu0
  %2109 = vmatprep.mubr.f32.mxu0 0.0
  %2110 = vmatmul.mubr.f32.gmra.mxu0 %v1386
  %v2111 = vpop.f32.mrf.mxu0
  %v2112 = vadd.f32 %v1712, %v2111
  %v2113 = vpop.f32.mrf.mxu0
  %2114 = vmatprep.mubr.f32.mxu0 0.0
  %2115 = vmatmul.mubr.f32.gmra.mxu0 %v1389
  %v2116 = vpop.f32.mrf.mxu0
  %v2117 = vadd.f32 %v1717, %v2116
  %v2118 = vpop.f32.mrf.mxu0
  %2119 = vmatprep.mubr.f32.mxu0 0.0
  %2120 = vmatmul.mubr.f32.gmra.mxu0 %v1392
  %v2121 = vpop.f32.mrf.mxu0
  %v2122 = vadd.f32 %v1722, %v2121
  %v2123 = vpop.f32.mrf.mxu0
  %2124 = vmatprep.mubr.f32.mxu0 0.0
  %2125 = vmatmul.mubr.f32.gmra.mxu0 %v1892
  %v2126 = vpop.f32.mrf.mxu0
  %v2127 = vadd.f32 %v1727, %v2126
  %v2128 = vpop.f32.mrf.mxu0
  %2129 = vmatprep.mubr.f32.mxu0 0.0
  %2130 = vmatmul.mubr.f32.gmra.mxu0 %v1895
  %v2131 = vpop.f32.mrf.mxu0
  %v2132 = vadd.f32 %v1732, %v2131
  %v2133 = vpop.f32.mrf.mxu0
  %2134 = vmatprep.mubr.f32.mxu0 0.0
  %2135 = vmatmul.mubr.f32.gmra.mxu0 %v1401
  %v2136 = vpop.f32.mrf.mxu0
  %v2137 = vadd.f32 %v1737, %v2136
  %v2138 = vpop.f32.mrf.mxu0
  %2139 = vmatprep.mubr.f32.mxu0 0.0
  %2140 = vmatmul.mubr.f32.gmra.mxu0 %v1404
  %v2141 = vpop.f32.mrf.mxu0
  %v2142 = vadd.f32 %v1742, %v2141
  %v2143 = vpop.f32.mrf.mxu0
  %2144 = vmatprep.mubr.f32.mxu0 0.0
  %2145 = vmatmul.mubr.f32.gmra.mxu0 %v1407
  %v2146 = vpop.f32.mrf.mxu0
  %v2147 = vadd.f32 %v1747, %v2146
  %v2148 = vpop.f32.mrf.mxu0
  %2149 = vmatprep.mubr.f32.mxu0 0.0
  %2150 = vmatmul.mubr.f32.gmra.mxu0 %v1410
  %v2151 = vpop.f32.mrf.mxu0
  %v2152 = vadd.f32 %v1752, %v2151
  %v2153 = vpop.f32.mrf.mxu0
  %2154 = vmatprep.mubr.f32.mxu0 0.0
  %2155 = vmatmul.mubr.f32.gmra.mxu0 %v1413
  %v2156 = vpop.f32.mrf.mxu0
  %v2157 = vadd.f32 %v1757, %v2156
  %v2158 = vpop.f32.mrf.mxu0
  %2159 = vmatprep.mubr.f32.mxu0 0.0
  %2160 = vmatmul.mubr.f32.gmra.mxu0 %v1416
  %v2161 = vpop.f32.mrf.mxu0
  %v2162 = vadd.f32 %v1762, %v2161
  %v2163 = vpop.f32.mrf.mxu0
  %2164 = vmatprep.mubr.f32.mxu0 0.0
  %2165 = vmatmul.mubr.f32.gmra.mxu0 %v1419
  %v2166 = vpop.f32.mrf.mxu0
  %v2167 = vadd.f32 %v1767, %v2166
  %v2168 = vpop.f32.mrf.mxu0
  %2169 = vmatprep.mubr.f32.mxu0 0.0
  %2170 = vmatmul.mubr.f32.gmra.mxu0 %v1422
  %v2171 = vpop.f32.mrf.mxu0
  %v2172 = vadd.f32 %v1772, %v2171
  %v2173 = vpop.f32.mrf.mxu0
  %2174 = vmatprep.mubr.f32.mxu0 0.0
  %2175 = vmatmul.mubr.f32.gmra.mxu0 %v1425
  %v2176 = vpop.f32.mrf.mxu0
  %v2177 = vadd.f32 %v1777, %v2176
  %v2178 = vpop.f32.mrf.mxu0
  %2179 = vmatprep.mubr.f32.mxu0 0.0
  %2180 = vmatmul.mubr.f32.gmra.mxu0 %v1428
  %v2181 = vpop.f32.mrf.mxu0
  %v2182 = vadd.f32 %v1782, %v2181
  %v2183 = vpop.f32.mrf.mxu0
  %2184 = vmatprep.mubr.f32.mxu0 0.0
  %2185 = vmatmul.mubr.f32.gmra.mxu0 %v1431
  %v2186 = vpop.f32.mrf.mxu0
  %v2187 = vadd.f32 %v1787, %v2186
  %v2188 = vpop.f32.mrf.mxu0
  %2189 = vmatprep.mubr.f32.mxu0 0.0
  %2190 = vmatmul.mubr.f32.gmra.mxu0 %v1434
  %v2191 = vpop.f32.mrf.mxu0
  %v2192 = vadd.f32 %v1792, %v2191
  %v2193 = vpop.f32.mrf.mxu0
  %2194 = vmatprep.mubr.f32.mxu0 0.0
  %2195 = vmatmul.mubr.f32.gmra.mxu0 %v1437
  %v2196 = vpop.f32.mrf.mxu0
  %v2197 = vadd.f32 %v1797, %v2196
  %v2198 = vpop.f32.mrf.mxu0
  %2199 = vmatprep.mubr.f32.mxu0 0.0
  %2200 = vmatmul.mubr.f32.gmra.mxu0 %v1440
  %v2201 = vpop.f32.mrf.mxu0
  %v2202 = vadd.f32 %v1802, %v2201
  %v2203 = vpop.f32.mrf.mxu0
  %2204 = vmatprep.mubr.f32.mxu0 0.0
  %2205 = vmatmul.mubr.f32.gmra.mxu0 %v1443
  %v2206 = vpop.f32.mrf.mxu0
  %v2207 = vadd.f32 %v1807, %v2206
  %v2208 = vpop.f32.mrf.mxu0
  %2209 = vmatprep.mubr.f32.mxu0 0.0
  %2210 = vmatmul.mubr.f32.gmra.mxu0 %v1446
  %v2211 = vpop.f32.mrf.mxu0
  %v2212 = vadd.f32 %v1812, %v2211
  %v2213 = vpop.f32.mrf.mxu0
  %2214 = vmatprep.mubr.f32.mxu0 0.0
  %2215 = vmatmul.mubr.f32.gmra.mxu0 %v1449
  %v2216 = vpop.f32.mrf.mxu0
  %v2217 = vadd.f32 %v1817, %v2216
  %v2218 = vpop.f32.mrf.mxu0
  %2219 = vmatprep.mubr.f32.mxu0 0.0
  %2220 = vmatmul.mubr.f32.gmra.mxu0 %v1452
  %v2221 = vpop.f32.mrf.mxu0
  %v2222 = vadd.f32 %v1822, %v2221
  %v2223 = vpop.f32.mrf.mxu0
  %2224 = vmatprep.mubr.f32.mxu0 0.0
  %2225 = vmatmul.mubr.f32.gmra.mxu0 %v1455
  %v2226 = vpop.f32.mrf.mxu0
  %v2227 = vadd.f32 %v1827, %v2226
  %v2228 = vpop.f32.mrf.mxu0
  %2229 = vmatprep.mubr.f32.mxu0 0.0
  %2230 = vmatmul.mubr.f32.gmra.mxu0 %v1458
  %v2231 = vpop.f32.mrf.mxu0
  %v2232 = vadd.f32 %v1832, %v2231
  %v2233 = vpop.f32.mrf.mxu0
  %2234 = vmatprep.mubr.f32.mxu0 0.0
  %2235 = vmatmul.mubr.f32.gmra.mxu0 %v1461
  %v2236 = vpop.f32.mrf.mxu0
  %v2237 = vadd.f32 %v1837, %v2236
  %v2238 = vpop.f32.mrf.mxu0
  %2239 = vmatprep.mubr.f32.mxu0 0.0
  %2240 = vmatmul.mubr.f32.gmra.mxu0 %v1464
  %v2241 = vpop.f32.mrf.mxu0
  %v2242 = vadd.f32 %v1842, %v2241
  %v2243 = vpop.f32.mrf.mxu0
  %2244 = vmatprep.mubr.f32.mxu0 0.0
  %2245 = vmatmul.mubr.f32.gmra.mxu0 %v1467
  %v2246 = vpop.f32.mrf.mxu0
  %v2247 = vadd.f32 %v1847, %v2246
  %v2248 = vpop.f32.mrf.mxu0
  %2249 = vmatprep.mubr.f32.mxu0 0.0
  %2250 = vmatmul.mubr.f32.gmra.mxu0 %v1470
  %v2251 = vpop.f32.mrf.mxu0
  %v2252 = vadd.f32 %v1852, %v2251
  %v2253 = vpop.f32.mrf.mxu0
  %2254 = vmatprep.mubr.f32.mxu0 0.0
  %2255 = vmatmul.mubr.f32.gmra.mxu0 %v1473
  %v2256 = vpop.f32.mrf.mxu0
  %v2257 = vadd.f32 %v1857, %v2256
  %v2258 = vpop.f32.mrf.mxu0
  %2259 = vmatprep.mubr.f32.mxu0 0.0
  %2260 = vmatmul.mubr.f32.gmra.mxu0 %v1476
  %v2261 = vpop.f32.mrf.mxu0
  %v2262 = vadd.f32 %v1862, %v2261
  %v2263 = vpop.f32.mrf.mxu0
  %2264 = vmatprep.mubr.f32.mxu0 0.0
  %2265 = vmatmul.mubr.f32.gmra.mxu0 %v1479
  %v2266 = vpop.f32.mrf.mxu0
  %v2267 = vadd.f32 %v1867, %v2266
  %v2268 = vpop.f32.mrf.mxu0
  %2269 = vmatprep.mubr.f32.mxu0 0.0
  %2270 = vmatmul.mubr.f32.gmra.mxu0 %v1482
  %v2271 = vpop.f32.mrf.mxu0
  %v2272 = vadd.f32 %v1872, %v2271
  %v2273 = vpop.f32.mrf.mxu0
  %2274 = vmatprep.mubr.f32.mxu0 0.0
  %2275 = vmatmul.mubr.f32.gmra.mxu0 %v1485
  %v2276 = vpop.f32.mrf.mxu0
  %v2277 = vadd.f32 %v1877, %v2276
  %v2278 = vpop.f32.mrf.mxu0
  %2279 = vmatprep.mubr.f32.mxu0 0.0
  %2280 = vmatmul.mubr.f32.gmra.mxu0 %v1488
  %v2281 = vpop.f32.mrf.mxu0
  %v2282 = vadd.f32 %v1882, %v2281
  %v2283 = vpop.f32.mrf.mxu0
  %2284 = vdwg.mxu0
  %s2285 = scalar_lea.vmem %s1, 32
  %v2286 = vld [vmem:[%s2285] sm:$0xff]
  %v2287 = vld [vmem:[%s2285 + $0x8] sm:$0x1]
  %v2289 = vsel %vm1303, %v1260, 0
  %v2292 = vsel %vm1303, %v1261, 0
  %v2295 = vsel %vm1303, %v1296, 0
  %v2298 = vsel %vm1303, %v1297, 0
  %v2301 = vsel %vm1496, %v2287, 0
  %2303 = vmatprep.subr.mxu0 0.0
  %2304 = vmatpush1.msra.mxu0 0.0
  %2305 = vmatprep.subr.mxu0 0.0
  %2306 = vmatpush1.msra.mxu0 0.0
  %2307 = vmatprep.subr.mxu0 0.0
  %2308 = vmatpush1.msra.mxu0 0.0
  %2309 = vmatprep.subr.mxu0 0.0
  %2310 = vmatpush1.msra.mxu0 0.0
  %2311 = vmatprep.subr.mxu0 0.0
  %2312 = vmatpush1.msra.mxu0 0.0
  %2313 = vmatprep.subr.mxu0 0.0
  %2314 = vmatpush1.msra.mxu0 0.0
  %2315 = vmatprep.subr.mxu0 0.0
  %2316 = vmatpush1.msra.mxu0 0.0
  %2317 = vmatprep.subr.mxu0 0.0
  %2318 = vmatpush1.msra.mxu0 0.0
  %2319 = vmatprep.subr.mxu0 0.0
  %2320 = vmatpush1.msra.mxu0 0.0
  %2321 = vmatprep.subr.mxu0 0.0
  %2322 = vmatpush1.msra.mxu0 0.0
  %2323 = vmatprep.subr.mxu0 0.0
  %2324 = vmatpush1.msra.mxu0 0.0
  %2325 = vmatprep.subr.mxu0 0.0
  %2326 = vmatpush1.msra.mxu0 0.0
  %2327 = vmatprep.subr.mxu0 0.0
  %2328 = vmatpush1.msra.mxu0 0.0
  %2329 = vmatprep.subr.mxu0 0.0
  %2330 = vmatpush1.msra.mxu0 0.0
  %2331 = vmatprep.subr.mxu0 0.0
  %2332 = vmatpush1.msra.mxu0 %v2301
  %2333 = vmatprep.subr.mxu0 0.0
  %2334 = vmatpush1.msra.mxu0 %v2286
  %2335 = vmatprep.subr.mxu0 0.0
  %2336 = vmatpush2.msra.mxu0 0.0
  %2337 = vmatprep.subr.mxu0 0.0
  %2338 = vmatpush2.msra.mxu0 0.0
  %2339 = vmatprep.subr.mxu0 0.0
  %2340 = vmatpush2.msra.mxu0 0.0
  %2341 = vmatprep.subr.mxu0 0.0
  %2342 = vmatpush2.msra.mxu0 0.0
  %2343 = vmatprep.subr.mxu0 0.0
  %2344 = vmatpush2.msra.mxu0 0.0
  %2345 = vmatprep.subr.mxu0 0.0
  %2346 = vmatpush2.msra.mxu0 0.0
  %2347 = vmatprep.subr.mxu0 0.0
  %2348 = vmatpush2.msra.mxu0 0.0
  %2349 = vmatprep.subr.mxu0 0.0
  %2350 = vmatpush2.msra.mxu0 0.0
  %2351 = vmatprep.subr.mxu0 0.0
  %2352 = vmatpush2.msra.mxu0 0.0
  %2353 = vmatprep.subr.mxu0 0.0
  %2354 = vmatpush2.msra.mxu0 0.0
  %2355 = vmatprep.subr.mxu0 0.0
  %2356 = vmatpush2.msra.mxu0 0.0
  %2357 = vmatprep.subr.mxu0 0.0
  %2358 = vmatpush2.msra.mxu0 0.0
  %2359 = vmatprep.subr.mxu0 0.0
  %2360 = vmatpush2.msra.mxu0 0.0
  %2361 = vmatprep.subr.mxu0 0.0
  %2362 = vmatpush2.msra.mxu0 0.0
  %2363 = vmatprep.subr.mxu0 0.0
  %2364 = vmatpush2.msra.mxu0 0.0
  %2365 = vmatprep.subr.mxu0 0.0
  %2366 = vmatpush2.msra.mxu0 0.0
  %2367 = vmatprep.mubr.f32.mxu0 0.0
  %2368 = vmatmul.mubr.f32.gmra.mxu0 %v1311
  %v2369 = vpop.f32.mrf.mxu0
  %v2370 = vadd.f32 0.0, %v2369
  %v2371 = vpop.f32.mrf.mxu0
  %2372 = vmatprep.mubr.f32.mxu0 0.0
  %2373 = vmatmul.mubr.f32.gmra.mxu0 %v1314
  %v2374 = vpop.f32.mrf.mxu0
  %v2375 = vadd.f32 0.0, %v2374
  %v2376 = vpop.f32.mrf.mxu0
  %2377 = vmatprep.mubr.f32.mxu0 0.0
  %2378 = vmatmul.mubr.f32.gmra.mxu0 %v1317
  %v2379 = vpop.f32.mrf.mxu0
  %v2380 = vadd.f32 0.0, %v2379
  %v2381 = vpop.f32.mrf.mxu0
  %2382 = vmatprep.mubr.f32.mxu0 0.0
  %2383 = vmatmul.mubr.f32.gmra.mxu0 %v1320
  %v2384 = vpop.f32.mrf.mxu0
  %v2385 = vadd.f32 0.0, %v2384
  %v2386 = vpop.f32.mrf.mxu0
  %2387 = vmatprep.mubr.f32.mxu0 0.0
  %2388 = vmatmul.mubr.f32.gmra.mxu0 %v1323
  %v2389 = vpop.f32.mrf.mxu0
  %v2390 = vadd.f32 0.0, %v2389
  %v2391 = vpop.f32.mrf.mxu0
  %2392 = vmatprep.mubr.f32.mxu0 0.0
  %2393 = vmatmul.mubr.f32.gmra.mxu0 %v1326
  %v2394 = vpop.f32.mrf.mxu0
  %v2395 = vadd.f32 0.0, %v2394
  %v2396 = vpop.f32.mrf.mxu0
  %2397 = vmatprep.mubr.f32.mxu0 0.0
  %2398 = vmatmul.mubr.f32.gmra.mxu0 %v1329
  %v2399 = vpop.f32.mrf.mxu0
  %v2400 = vadd.f32 0.0, %v2399
  %v2401 = vpop.f32.mrf.mxu0
  %2402 = vmatprep.mubr.f32.mxu0 0.0
  %2403 = vmatmul.mubr.f32.gmra.mxu0 %v1332
  %v2404 = vpop.f32.mrf.mxu0
  %v2405 = vadd.f32 0.0, %v2404
  %v2406 = vpop.f32.mrf.mxu0
  %2407 = vmatprep.mubr.f32.mxu0 0.0
  %2408 = vmatmul.mubr.f32.gmra.mxu0 %v1335
  %v2409 = vpop.f32.mrf.mxu0
  %v2410 = vadd.f32 0.0, %v2409
  %v2411 = vpop.f32.mrf.mxu0
  %2412 = vmatprep.mubr.f32.mxu0 0.0
  %2413 = vmatmul.mubr.f32.gmra.mxu0 %v1338
  %v2414 = vpop.f32.mrf.mxu0
  %v2415 = vadd.f32 0.0, %v2414
  %v2416 = vpop.f32.mrf.mxu0
  %2417 = vmatprep.mubr.f32.mxu0 0.0
  %2418 = vmatmul.mubr.f32.gmra.mxu0 %v1341
  %v2419 = vpop.f32.mrf.mxu0
  %v2420 = vadd.f32 0.0, %v2419
  %v2421 = vpop.f32.mrf.mxu0
  %2422 = vmatprep.mubr.f32.mxu0 0.0
  %2423 = vmatmul.mubr.f32.gmra.mxu0 %v1344
  %v2424 = vpop.f32.mrf.mxu0
  %v2425 = vadd.f32 0.0, %v2424
  %v2426 = vpop.f32.mrf.mxu0
  %2427 = vmatprep.mubr.f32.mxu0 0.0
  %2428 = vmatmul.mubr.f32.gmra.mxu0 %v1347
  %v2429 = vpop.f32.mrf.mxu0
  %v2430 = vadd.f32 0.0, %v2429
  %v2431 = vpop.f32.mrf.mxu0
  %2432 = vmatprep.mubr.f32.mxu0 0.0
  %2433 = vmatmul.mubr.f32.gmra.mxu0 %v1350
  %v2434 = vpop.f32.mrf.mxu0
  %v2435 = vadd.f32 0.0, %v2434
  %v2436 = vpop.f32.mrf.mxu0
  %2437 = vmatprep.mubr.f32.mxu0 0.0
  %2438 = vmatmul.mubr.f32.gmra.mxu0 %v1353
  %v2439 = vpop.f32.mrf.mxu0
  %v2440 = vadd.f32 0.0, %v2439
  %v2441 = vpop.f32.mrf.mxu0
  %2442 = vmatprep.mubr.f32.mxu0 0.0
  %2443 = vmatmul.mubr.f32.gmra.mxu0 %v1356
  %v2444 = vpop.f32.mrf.mxu0
  %v2445 = vadd.f32 0.0, %v2444
  %v2446 = vpop.f32.mrf.mxu0
  %2447 = vmatprep.mubr.f32.mxu0 0.0
  %2448 = vmatmul.mubr.f32.gmra.mxu0 %v1359
  %v2449 = vpop.f32.mrf.mxu0
  %v2450 = vadd.f32 0.0, %v2449
  %v2451 = vpop.f32.mrf.mxu0
  %2452 = vmatprep.mubr.f32.mxu0 0.0
  %2453 = vmatmul.mubr.f32.gmra.mxu0 %v1362
  %v2454 = vpop.f32.mrf.mxu0
  %v2455 = vadd.f32 0.0, %v2454
  %v2456 = vpop.f32.mrf.mxu0
  %2457 = vmatprep.mubr.f32.mxu0 0.0
  %2458 = vmatmul.mubr.f32.gmra.mxu0 %v1365
  %v2459 = vpop.f32.mrf.mxu0
  %v2460 = vadd.f32 0.0, %v2459
  %v2461 = vpop.f32.mrf.mxu0
  %2462 = vmatprep.mubr.f32.mxu0 0.0
  %2463 = vmatmul.mubr.f32.gmra.mxu0 %v1368
  %v2464 = vpop.f32.mrf.mxu0
  %v2465 = vadd.f32 0.0, %v2464
  %v2466 = vpop.f32.mrf.mxu0
  %2467 = vmatprep.mubr.f32.mxu0 0.0
  %2468 = vmatmul.mubr.f32.gmra.mxu0 %v1371
  %v2469 = vpop.f32.mrf.mxu0
  %v2470 = vadd.f32 0.0, %v2469
  %v2471 = vpop.f32.mrf.mxu0
  %2472 = vmatprep.mubr.f32.mxu0 0.0
  %2473 = vmatmul.mubr.f32.gmra.mxu0 %v1374
  %v2474 = vpop.f32.mrf.mxu0
  %v2475 = vadd.f32 0.0, %v2474
  %v2476 = vpop.f32.mrf.mxu0
  %2477 = vmatprep.mubr.f32.mxu0 0.0
  %2478 = vmatmul.mubr.f32.gmra.mxu0 %v1377
  %v2479 = vpop.f32.mrf.mxu0
  %v2480 = vadd.f32 0.0, %v2479
  %v2481 = vpop.f32.mrf.mxu0
  %2482 = vmatprep.mubr.f32.mxu0 0.0
  %2483 = vmatmul.mubr.f32.gmra.mxu0 %v1380
  %v2484 = vpop.f32.mrf.mxu0
  %v2485 = vadd.f32 0.0, %v2484
  %v2486 = vpop.f32.mrf.mxu0
  %2487 = vmatprep.mubr.f32.mxu0 0.0
  %2488 = vmatmul.mubr.f32.gmra.mxu0 %v1383
  %v2489 = vpop.f32.mrf.mxu0
  %v2490 = vadd.f32 0.0, %v2489
  %v2491 = vpop.f32.mrf.mxu0
  %2492 = vmatprep.mubr.f32.mxu0 0.0
  %2493 = vmatmul.mubr.f32.gmra.mxu0 %v1386
  %v2494 = vpop.f32.mrf.mxu0
  %v2495 = vadd.f32 0.0, %v2494
  %v2496 = vpop.f32.mrf.mxu0
  %2497 = vmatprep.mubr.f32.mxu0 0.0
  %2498 = vmatmul.mubr.f32.gmra.mxu0 %v1389
  %v2499 = vpop.f32.mrf.mxu0
  %v2500 = vadd.f32 0.0, %v2499
  %v2501 = vpop.f32.mrf.mxu0
  %2502 = vmatprep.mubr.f32.mxu0 0.0
  %2503 = vmatmul.mubr.f32.gmra.mxu0 %v1392
  %v2504 = vpop.f32.mrf.mxu0
  %v2505 = vadd.f32 0.0, %v2504
  %v2506 = vpop.f32.mrf.mxu0
  %2507 = vmatprep.mubr.f32.mxu0 0.0
  %2508 = vmatmul.mubr.f32.gmra.mxu0 %v1395
  %v2509 = vpop.f32.mrf.mxu0
  %v2510 = vadd.f32 0.0, %v2509
  %v2511 = vpop.f32.mrf.mxu0
  %2512 = vmatprep.mubr.f32.mxu0 0.0
  %2513 = vmatmul.mubr.f32.gmra.mxu0 %v1398
  %v2514 = vpop.f32.mrf.mxu0
  %v2515 = vadd.f32 0.0, %v2514
  %v2516 = vpop.f32.mrf.mxu0
  %2517 = vmatprep.mubr.f32.mxu0 0.0
  %2518 = vmatmul.mubr.f32.gmra.mxu0 %v2289
  %v2519 = vpop.f32.mrf.mxu0
  %v2520 = vadd.f32 0.0, %v2519
  %v2521 = vpop.f32.mrf.mxu0
  %2522 = vmatprep.mubr.f32.mxu0 0.0
  %2523 = vmatmul.mubr.f32.gmra.mxu0 %v2292
  %v2524 = vpop.f32.mrf.mxu0
  %v2525 = vadd.f32 0.0, %v2524
  %v2526 = vpop.f32.mrf.mxu0
  %2527 = vmatprep.mubr.f32.mxu0 0.0
  %2528 = vmatmul.mubr.f32.gmra.mxu0 %v1407
  %v2529 = vpop.f32.mrf.mxu0
  %v2530 = vadd.f32 0.0, %v2529
  %v2531 = vpop.f32.mrf.mxu0
  %2532 = vmatprep.mubr.f32.mxu0 0.0
  %2533 = vmatmul.mubr.f32.gmra.mxu0 %v1410
  %v2534 = vpop.f32.mrf.mxu0
  %v2535 = vadd.f32 0.0, %v2534
  %v2536 = vpop.f32.mrf.mxu0
  %2537 = vmatprep.mubr.f32.mxu0 0.0
  %2538 = vmatmul.mubr.f32.gmra.mxu0 %v1413
  %v2539 = vpop.f32.mrf.mxu0
  %v2540 = vadd.f32 0.0, %v2539
  %v2541 = vpop.f32.mrf.mxu0
  %2542 = vmatprep.mubr.f32.mxu0 0.0
  %2543 = vmatmul.mubr.f32.gmra.mxu0 %v1416
  %v2544 = vpop.f32.mrf.mxu0
  %v2545 = vadd.f32 0.0, %v2544
  %v2546 = vpop.f32.mrf.mxu0
  %2547 = vmatprep.mubr.f32.mxu0 0.0
  %2548 = vmatmul.mubr.f32.gmra.mxu0 %v1419
  %v2549 = vpop.f32.mrf.mxu0
  %v2550 = vadd.f32 0.0, %v2549
  %v2551 = vpop.f32.mrf.mxu0
  %2552 = vmatprep.mubr.f32.mxu0 0.0
  %2553 = vmatmul.mubr.f32.gmra.mxu0 %v1422
  %v2554 = vpop.f32.mrf.mxu0
  %v2555 = vadd.f32 0.0, %v2554
  %v2556 = vpop.f32.mrf.mxu0
  %2557 = vmatprep.mubr.f32.mxu0 0.0
  %2558 = vmatmul.mubr.f32.gmra.mxu0 %v1425
  %v2559 = vpop.f32.mrf.mxu0
  %v2560 = vadd.f32 0.0, %v2559
  %v2561 = vpop.f32.mrf.mxu0
  %2562 = vmatprep.mubr.f32.mxu0 0.0
  %2563 = vmatmul.mubr.f32.gmra.mxu0 %v1428
  %v2564 = vpop.f32.mrf.mxu0
  %v2565 = vadd.f32 0.0, %v2564
  %v2566 = vpop.f32.mrf.mxu0
  %2567 = vmatprep.mubr.f32.mxu0 0.0
  %2568 = vmatmul.mubr.f32.gmra.mxu0 %v1431
  %v2569 = vpop.f32.mrf.mxu0
  %v2570 = vadd.f32 0.0, %v2569
  %v2571 = vpop.f32.mrf.mxu0
  %2572 = vmatprep.mubr.f32.mxu0 0.0
  %2573 = vmatmul.mubr.f32.gmra.mxu0 %v1434
  %v2574 = vpop.f32.mrf.mxu0
  %v2575 = vadd.f32 0.0, %v2574
  %v2576 = vpop.f32.mrf.mxu0
  %2577 = vmatprep.mubr.f32.mxu0 0.0
  %2578 = vmatmul.mubr.f32.gmra.mxu0 %v1437
  %v2579 = vpop.f32.mrf.mxu0
  %v2580 = vadd.f32 0.0, %v2579
  %v2581 = vpop.f32.mrf.mxu0
  %2582 = vmatprep.mubr.f32.mxu0 0.0
  %2583 = vmatmul.mubr.f32.gmra.mxu0 %v1440
  %v2584 = vpop.f32.mrf.mxu0
  %v2585 = vadd.f32 0.0, %v2584
  %v2586 = vpop.f32.mrf.mxu0
  %2587 = vmatprep.mubr.f32.mxu0 0.0
  %2588 = vmatmul.mubr.f32.gmra.mxu0 %v1443
  %v2589 = vpop.f32.mrf.mxu0
  %v2590 = vadd.f32 0.0, %v2589
  %v2591 = vpop.f32.mrf.mxu0
  %2592 = vmatprep.mubr.f32.mxu0 0.0
  %2593 = vmatmul.mubr.f32.gmra.mxu0 %v1446
  %v2594 = vpop.f32.mrf.mxu0
  %v2595 = vadd.f32 0.0, %v2594
  %v2596 = vpop.f32.mrf.mxu0
  %2597 = vmatprep.mubr.f32.mxu0 0.0
  %2598 = vmatmul.mubr.f32.gmra.mxu0 %v1449
  %v2599 = vpop.f32.mrf.mxu0
  %v2600 = vadd.f32 0.0, %v2599
  %v2601 = vpop.f32.mrf.mxu0
  %2602 = vmatprep.mubr.f32.mxu0 0.0
  %2603 = vmatmul.mubr.f32.gmra.mxu0 %v1452
  %v2604 = vpop.f32.mrf.mxu0
  %v2605 = vadd.f32 0.0, %v2604
  %v2606 = vpop.f32.mrf.mxu0
  %2607 = vmatprep.mubr.f32.mxu0 0.0
  %2608 = vmatmul.mubr.f32.gmra.mxu0 %v1455
  %v2609 = vpop.f32.mrf.mxu0
  %v2610 = vadd.f32 0.0, %v2609
  %v2611 = vpop.f32.mrf.mxu0
  %2612 = vmatprep.mubr.f32.mxu0 0.0
  %2613 = vmatmul.mubr.f32.gmra.mxu0 %v1458
  %v2614 = vpop.f32.mrf.mxu0
  %v2615 = vadd.f32 0.0, %v2614
  %v2616 = vpop.f32.mrf.mxu0
  %2617 = vmatprep.mubr.f32.mxu0 0.0
  %2618 = vmatmul.mubr.f32.gmra.mxu0 %v1461
  %v2619 = vpop.f32.mrf.mxu0
  %v2620 = vadd.f32 0.0, %v2619
  %v2621 = vpop.f32.mrf.mxu0
  %2622 = vmatprep.mubr.f32.mxu0 0.0
  %2623 = vmatmul.mubr.f32.gmra.mxu0 %v1464
  %v2624 = vpop.f32.mrf.mxu0
  %v2625 = vadd.f32 0.0, %v2624
  %v2626 = vpop.f32.mrf.mxu0
  %2627 = vmatprep.mubr.f32.mxu0 0.0
  %2628 = vmatmul.mubr.f32.gmra.mxu0 %v1467
  %v2629 = vpop.f32.mrf.mxu0
  %v2630 = vadd.f32 0.0, %v2629
  %v2631 = vpop.f32.mrf.mxu0
  %2632 = vmatprep.mubr.f32.mxu0 0.0
  %2633 = vmatmul.mubr.f32.gmra.mxu0 %v1470
  %v2634 = vpop.f32.mrf.mxu0
  %v2635 = vadd.f32 0.0, %v2634
  %v2636 = vpop.f32.mrf.mxu0
  %2637 = vmatprep.mubr.f32.mxu0 0.0
  %2638 = vmatmul.mubr.f32.gmra.mxu0 %v1473
  %v2639 = vpop.f32.mrf.mxu0
  %v2640 = vadd.f32 0.0, %v2639
  %v2641 = vpop.f32.mrf.mxu0
  %2642 = vmatprep.mubr.f32.mxu0 0.0
  %2643 = vmatmul.mubr.f32.gmra.mxu0 %v1476
  %v2644 = vpop.f32.mrf.mxu0
  %v2645 = vadd.f32 0.0, %v2644
  %v2646 = vpop.f32.mrf.mxu0
  %2647 = vmatprep.mubr.f32.mxu0 0.0
  %2648 = vmatmul.mubr.f32.gmra.mxu0 %v1479
  %v2649 = vpop.f32.mrf.mxu0
  %v2650 = vadd.f32 0.0, %v2649
  %v2651 = vpop.f32.mrf.mxu0
  %2652 = vmatprep.mubr.f32.mxu0 0.0
  %2653 = vmatmul.mubr.f32.gmra.mxu0 %v1482
  %v2654 = vpop.f32.mrf.mxu0
  %v2655 = vadd.f32 0.0, %v2654
  %v2656 = vpop.f32.mrf.mxu0
  %2657 = vmatprep.mubr.f32.mxu0 0.0
  %2658 = vmatmul.mubr.f32.gmra.mxu0 %v1485
  %v2659 = vpop.f32.mrf.mxu0
  %v2660 = vadd.f32 0.0, %v2659
  %v2661 = vpop.f32.mrf.mxu0
  %2662 = vmatprep.mubr.f32.mxu0 0.0
  %2663 = vmatmul.mubr.f32.gmra.mxu0 %v1488
  %v2664 = vpop.f32.mrf.mxu0
  %v2665 = vadd.f32 0.0, %v2664
  %v2666 = vpop.f32.mrf.mxu0
  %2667 = vmatprep.mubr.f32.mxu0 0.0
  %2668 = vmatmul.mubr.f32.gmra.mxu0 %v1491
  %v2669 = vpop.f32.mrf.mxu0
  %v2670 = vadd.f32 0.0, %v2669
  %v2671 = vpop.f32.mrf.mxu0
  %2672 = vmatprep.mubr.f32.mxu0 0.0
  %2673 = vmatmul.mubr.f32.gmra.mxu0 %v1494
  %v2674 = vpop.f32.mrf.mxu0
  %v2675 = vadd.f32 0.0, %v2674
  %v2676 = vpop.f32.mrf.mxu0
  %2677 = vmatprep.mubr.f32.mxu0 0.0
  %2678 = vmatmul.mubr.f32.gmra.mxu0 %v2295
  %v2679 = vpop.f32.mrf.mxu0
  %v2680 = vadd.f32 0.0, %v2679
  %v2681 = vpop.f32.mrf.mxu0
  %2682 = vmatprep.mubr.f32.mxu0 0.0
  %2683 = vmatmul.mubr.f32.gmra.mxu0 %v2298
  %v2684 = vpop.f32.mrf.mxu0
  %v2685 = vadd.f32 0.0, %v2684
  %v2686 = vpop.f32.mrf.mxu0
  %2687 = vdwg.mxu0
  %v2688 = vadd.f32 %v1967, %v2370
  %v2689 = vadd.f32 %v1972, %v2375
  %v2690 = vadd.f32 %v1977, %v2380
  %v2691 = vadd.f32 %v1982, %v2385
  %v2692 = vadd.f32 %v1987, %v2390
  %v2693 = vadd.f32 %v1992, %v2395
  %v2694 = vadd.f32 %v1997, %v2400
  %v2695 = vadd.f32 %v2002, %v2405
  %v2696 = vadd.f32 %v2007, %v2410
  %v2697 = vadd.f32 %v2012, %v2415
  %v2698 = vadd.f32 %v2017, %v2420
  %v2699 = vadd.f32 %v2022, %v2425
  %v2700 = vadd.f32 %v2027, %v2430
  %v2701 = vadd.f32 %v2032, %v2435
  %v2702 = vadd.f32 %v2037, %v2440
  %v2703 = vadd.f32 %v2042, %v2445
  %v2704 = vadd.f32 %v2047, %v2450
  %v2705 = vadd.f32 %v2052, %v2455
  %v2706 = vadd.f32 %v2057, %v2460
  %v2707 = vadd.f32 %v2062, %v2465
  %v2708 = vadd.f32 %v2067, %v2470
  %v2709 = vadd.f32 %v2072, %v2475
  %v2710 = vadd.f32 %v2077, %v2480
  %v2711 = vadd.f32 %v2082, %v2485
  %v2712 = vadd.f32 %v2087, %v2490
  %v2713 = vadd.f32 %v2092, %v2495
  %v2714 = vadd.f32 %v2097, %v2500
  %v2715 = vadd.f32 %v2102, %v2505
  %v2716 = vadd.f32 %v2107, %v2510
  %v2717 = vadd.f32 %v2112, %v2515
  %v2718 = vadd.f32 %v2117, %v2520
  %v2719 = vadd.f32 %v2122, %v2525
  %v2720 = vadd.f32 %v2127, %v2530
  %v2721 = vadd.f32 %v2132, %v2535
  %v2722 = vadd.f32 %v2137, %v2540
  %v2723 = vadd.f32 %v2142, %v2545
  %v2724 = vadd.f32 %v2147, %v2550
  %v2725 = vadd.f32 %v2152, %v2555
  %v2726 = vadd.f32 %v2157, %v2560
  %v2727 = vadd.f32 %v2162, %v2565
  %v2728 = vadd.f32 %v2167, %v2570
  %v2729 = vadd.f32 %v2172, %v2575
  %v2730 = vadd.f32 %v2177, %v2580
  %v2731 = vadd.f32 %v2182, %v2585
  %v2732 = vadd.f32 %v2187, %v2590
  %v2733 = vadd.f32 %v2192, %v2595
  %v2734 = vadd.f32 %v2197, %v2600
  %v2735 = vadd.f32 %v2202, %v2605
  %v2736 = vadd.f32 %v2207, %v2610
  %v2737 = vadd.f32 %v2212, %v2615
  %v2738 = vadd.f32 %v2217, %v2620
  %v2739 = vadd.f32 %v2222, %v2625
  %v2740 = vadd.f32 %v2227, %v2630
  %v2741 = vadd.f32 %v2232, %v2635
  %v2742 = vadd.f32 %v2237, %v2640
  %v2743 = vadd.f32 %v2242, %v2645
  %v2744 = vadd.f32 %v2247, %v2650
  %v2745 = vadd.f32 %v2252, %v2655
  %v2746 = vadd.f32 %v2257, %v2660
  %v2747 = vadd.f32 %v2262, %v2665
  %v2748 = vadd.f32 %v2267, %v2670
  %v2749 = vadd.f32 %v2272, %v2675
  %v2750 = vadd.f32 %v2277, %v2680
  %v2751 = vadd.f32 %v2282, %v2685
  %v2752 = vld [vmem:[%s2] sm:$0x1]
  %v2754 = vlaneseq
  %v2755 = vshrl.u32 %v2754, 7
  %v2756 = vsub.s32 0, %v2755
  %v2757 = vrot.slane %v2752, %v2756
  %v2759 = vadd.f32 %v2688, %v2757
  %v2760 = vadd.f32 %v2689, %v2757
  %v2761 = vadd.f32 %v2690, %v2757
  %v2762 = vadd.f32 %v2691, %v2757
  %v2763 = vadd.f32 %v2692, %v2757
  %v2764 = vadd.f32 %v2693, %v2757
  %v2765 = vadd.f32 %v2694, %v2757
  %v2766 = vadd.f32 %v2695, %v2757
  %v2767 = vadd.f32 %v2696, %v2757
  %v2768 = vadd.f32 %v2697, %v2757
  %v2769 = vadd.f32 %v2698, %v2757
  %v2770 = vadd.f32 %v2699, %v2757
  %v2771 = vadd.f32 %v2700, %v2757
  %v2772 = vadd.f32 %v2701, %v2757
  %v2773 = vadd.f32 %v2702, %v2757
  %v2774 = vadd.f32 %v2703, %v2757
  %v2775 = vadd.f32 %v2704, %v2757
  %v2776 = vadd.f32 %v2705, %v2757
  %v2777 = vadd.f32 %v2706, %v2757
  %v2778 = vadd.f32 %v2707, %v2757
  %v2779 = vadd.f32 %v2708, %v2757
  %v2780 = vadd.f32 %v2709, %v2757
  %v2781 = vadd.f32 %v2710, %v2757
  %v2782 = vadd.f32 %v2711, %v2757
  %v2783 = vadd.f32 %v2712, %v2757
  %v2784 = vadd.f32 %v2713, %v2757
  %v2785 = vadd.f32 %v2714, %v2757
  %v2786 = vadd.f32 %v2715, %v2757
  %v2787 = vadd.f32 %v2716, %v2757
  %v2788 = vadd.f32 %v2717, %v2757
  %v2789 = vadd.f32 %v2718, %v2757
  %v2790 = vadd.f32 %v2719, %v2757
  %v2791 = vadd.f32 %v2720, %v2757
  %v2792 = vadd.f32 %v2721, %v2757
  %v2793 = vadd.f32 %v2722, %v2757
  %v2794 = vadd.f32 %v2723, %v2757
  %v2795 = vadd.f32 %v2724, %v2757
  %v2796 = vadd.f32 %v2725, %v2757
  %v2797 = vadd.f32 %v2726, %v2757
  %v2798 = vadd.f32 %v2727, %v2757
  %v2799 = vadd.f32 %v2728, %v2757
  %v2800 = vadd.f32 %v2729, %v2757
  %v2801 = vadd.f32 %v2730, %v2757
  %v2802 = vadd.f32 %v2731, %v2757
  %v2803 = vadd.f32 %v2732, %v2757
  %v2804 = vadd.f32 %v2733, %v2757
  %v2805 = vadd.f32 %v2734, %v2757
  %v2806 = vadd.f32 %v2735, %v2757
  %v2807 = vadd.f32 %v2736, %v2757
  %v2808 = vadd.f32 %v2737, %v2757
  %v2809 = vadd.f32 %v2738, %v2757
  %v2810 = vadd.f32 %v2739, %v2757
  %v2811 = vadd.f32 %v2740, %v2757
  %v2812 = vadd.f32 %v2741, %v2757
  %v2813 = vadd.f32 %v2742, %v2757
  %v2814 = vadd.f32 %v2743, %v2757
  %v2815 = vadd.f32 %v2744, %v2757
  %v2816 = vadd.f32 %v2745, %v2757
  %v2817 = vadd.f32 %v2746, %v2757
  %v2818 = vadd.f32 %v2747, %v2757
  %v2819 = vadd.f32 %v2748, %v2757
  %v2820 = vadd.f32 %v2749, %v2757
  %v2821 = vadd.f32 %v2750, %v2757
  %v2822 = vadd.f32 %v2751, %v2757
  %v2823 = vld [vmem:[%s3] sm:$0x1]
  %v2824 = vld [vmem:[%s4] sm:$0x1]
  %v2825 = vmul.f32 %v2759, 0.01
  %v2826 = vmul.f32 %v2760, 0.01
  %v2827 = vmul.f32 %v2761, 0.01
  %v2828 = vmul.f32 %v2762, 0.01
  %v2829 = vmul.f32 %v2763, 0.01
  %v2830 = vmul.f32 %v2764, 0.01
  %v2831 = vmul.f32 %v2765, 0.01
  %v2832 = vmul.f32 %v2766, 0.01
  %v2833 = vmul.f32 %v2767, 0.01
  %v2834 = vmul.f32 %v2768, 0.01
  %v2835 = vmul.f32 %v2769, 0.01
  %v2836 = vmul.f32 %v2770, 0.01
  %v2837 = vmul.f32 %v2771, 0.01
  %v2838 = vmul.f32 %v2772, 0.01
  %v2839 = vmul.f32 %v2773, 0.01
  %v2840 = vmul.f32 %v2774, 0.01
  %v2841 = vmul.f32 %v2775, 0.01
  %v2842 = vmul.f32 %v2776, 0.01
  %v2843 = vmul.f32 %v2777, 0.01
  %v2844 = vmul.f32 %v2778, 0.01
  %v2845 = vmul.f32 %v2779, 0.01
  %v2846 = vmul.f32 %v2780, 0.01
  %v2847 = vmul.f32 %v2781, 0.01
  %v2848 = vmul.f32 %v2782, 0.01
  %v2849 = vmul.f32 %v2783, 0.01
  %v2850 = vmul.f32 %v2784, 0.01
  %v2851 = vmul.f32 %v2785, 0.01
  %v2852 = vmul.f32 %v2786, 0.01
  %v2853 = vmul.f32 %v2787, 0.01
  %v2854 = vmul.f32 %v2788, 0.01
  %v2855 = vmul.f32 %v2789, 0.01
  %v2856 = vmul.f32 %v2790, 0.01
  %v2857 = vmul.f32 %v2791, 0.01
  %v2858 = vmul.f32 %v2792, 0.01
  %v2859 = vmul.f32 %v2793, 0.01
  %v2860 = vmul.f32 %v2794, 0.01
  %v2861 = vmul.f32 %v2795, 0.01
  %v2862 = vmul.f32 %v2796, 0.01
  %v2863 = vmul.f32 %v2797, 0.01
  %v2864 = vmul.f32 %v2798, 0.01
  %v2865 = vmul.f32 %v2799, 0.01
  %v2866 = vmul.f32 %v2800, 0.01
  %v2867 = vmul.f32 %v2801, 0.01
  %v2868 = vmul.f32 %v2802, 0.01
  %v2869 = vmul.f32 %v2803, 0.01
  %v2870 = vmul.f32 %v2804, 0.01
  %v2871 = vmul.f32 %v2805, 0.01
  %v2872 = vmul.f32 %v2806, 0.01
  %v2873 = vmul.f32 %v2807, 0.01
  %v2874 = vmul.f32 %v2808, 0.01
  %v2875 = vmul.f32 %v2809, 0.01
  %v2876 = vmul.f32 %v2810, 0.01
  %v2877 = vmul.f32 %v2811, 0.01
  %v2878 = vmul.f32 %v2812, 0.01
  %v2879 = vmul.f32 %v2813, 0.01
  %v2880 = vmul.f32 %v2814, 0.01
  %v2881 = vmul.f32 %v2815, 0.01
  %v2882 = vmul.f32 %v2816, 0.01
  %v2883 = vmul.f32 %v2817, 0.01
  %v2884 = vmul.f32 %v2818, 0.01
  %v2885 = vmul.f32 %v2819, 0.01
  %v2886 = vmul.f32 %v2820, 0.01
  %v2887 = vmul.f32 %v2821, 0.01
  %v2888 = vmul.f32 %v2822, 0.01
  %v2889 = vmax.f32 %v2759, %v2825
  %v2890 = vmax.f32 %v2760, %v2826
  %v2891 = vmax.f32 %v2761, %v2827
  %v2892 = vmax.f32 %v2762, %v2828
  %v2893 = vmax.f32 %v2763, %v2829
  %v2894 = vmax.f32 %v2764, %v2830
  %v2895 = vmax.f32 %v2765, %v2831
  %v2896 = vmax.f32 %v2766, %v2832
  %v2897 = vmax.f32 %v2767, %v2833
  %v2898 = vmax.f32 %v2768, %v2834
  %v2899 = vmax.f32 %v2769, %v2835
  %v2900 = vmax.f32 %v2770, %v2836
  %v2901 = vmax.f32 %v2771, %v2837
  %v2902 = vmax.f32 %v2772, %v2838
  %v2903 = vmax.f32 %v2773, %v2839
  %v2904 = vmax.f32 %v2774, %v2840
  %v2905 = vmax.f32 %v2775, %v2841
  %v2906 = vmax.f32 %v2776, %v2842
  %v2907 = vmax.f32 %v2777, %v2843
  %v2908 = vmax.f32 %v2778, %v2844
  %v2909 = vmax.f32 %v2779, %v2845
  %v2910 = vmax.f32 %v2780, %v2846
  %v2911 = vmax.f32 %v2781, %v2847
  %v2912 = vmax.f32 %v2782, %v2848
  %v2913 = vmax.f32 %v2783, %v2849
  %v2914 = vmax.f32 %v2784, %v2850
  %v2915 = vmax.f32 %v2785, %v2851
  %v2916 = vmax.f32 %v2786, %v2852
  %v2917 = vmax.f32 %v2787, %v2853
  %v2918 = vmax.f32 %v2788, %v2854
  %v2919 = vmax.f32 %v2789, %v2855
  %v2920 = vmax.f32 %v2790, %v2856
  %v2921 = vmax.f32 %v2791, %v2857
  %v2922 = vmax.f32 %v2792, %v2858
  %v2923 = vmax.f32 %v2793, %v2859
  %v2924 = vmax.f32 %v2794, %v2860
  %v2925 = vmax.f32 %v2795, %v2861
  %v2926 = vmax.f32 %v2796, %v2862
  %v2927 = vmax.f32 %v2797, %v2863
  %v2928 = vmax.f32 %v2798, %v2864
  %v2929 = vmax.f32 %v2799, %v2865
  %v2930 = vmax.f32 %v2800, %v2866
  %v2931 = vmax.f32 %v2801, %v2867
  %v2932 = vmax.f32 %v2802, %v2868
  %v2933 = vmax.f32 %v2803, %v2869
  %v2934 = vmax.f32 %v2804, %v2870
  %v2935 = vmax.f32 %v2805, %v2871
  %v2936 = vmax.f32 %v2806, %v2872
  %v2937 = vmax.f32 %v2807, %v2873
  %v2938 = vmax.f32 %v2808, %v2874
  %v2939 = vmax.f32 %v2809, %v2875
  %v2940 = vmax.f32 %v2810, %v2876
  %v2941 = vmax.f32 %v2811, %v2877
  %v2942 = vmax.f32 %v2812, %v2878
  %v2943 = vmax.f32 %v2813, %v2879
  %v2944 = vmax.f32 %v2814, %v2880
  %v2945 = vmax.f32 %v2815, %v2881
  %v2946 = vmax.f32 %v2816, %v2882
  %v2947 = vmax.f32 %v2817, %v2883
  %v2948 = vmax.f32 %v2818, %v2884
  %v2949 = vmax.f32 %v2819, %v2885
  %v2950 = vmax.f32 %v2820, %v2886
  %v2951 = vmax.f32 %v2821, %v2887
  %v2952 = vmax.f32 %v2822, %v2888
  %v2953 = vsel %vm141, %v2889, 0.0
  %v2954 = vsel %vm141, %v2890, 0.0
  %v2955 = vadd.f32 %v2953, %v2954
  %v2956 = vsel %vm141, %v2891, 0.0
  %v2957 = vadd.f32 %v2955, %v2956
  %v2958 = vsel %vm141, %v2892, 0.0
  %v2959 = vadd.f32 %v2957, %v2958
  %v2960 = vsel %vm141, %v2893, 0.0
  %v2961 = vadd.f32 %v2959, %v2960
  %v2962 = vsel %vm141, %v2894, 0.0
  %v2963 = vadd.f32 %v2961, %v2962
  %v2964 = vsel %vm141, %v2895, 0.0
  %v2965 = vadd.f32 %v2963, %v2964
  %v2966 = vsel %vm141, %v2896, 0.0
  %v2967 = vadd.f32 %v2965, %v2966
  %v2968 = vsel %vm141, %v2897, 0.0
  %v2969 = vadd.f32 %v2967, %v2968
  %v2970 = vsel %vm141, %v2898, 0.0
  %v2971 = vadd.f32 %v2969, %v2970
  %v2972 = vsel %vm141, %v2899, 0.0
  %v2973 = vadd.f32 %v2971, %v2972
  %v2974 = vsel %vm141, %v2900, 0.0
  %v2975 = vadd.f32 %v2973, %v2974
  %v2976 = vsel %vm141, %v2901, 0.0
  %v2977 = vadd.f32 %v2975, %v2976
  %v2978 = vsel %vm141, %v2902, 0.0
  %v2979 = vadd.f32 %v2977, %v2978
  %v2980 = vsel %vm141, %v2903, 0.0
  %v2981 = vadd.f32 %v2979, %v2980
  %v2982 = vsel %vm141, %v2904, 0.0
  %v2983 = vadd.f32 %v2981, %v2982
  %v2984 = vsel %vm141, %v2905, 0.0
  %v2985 = vadd.f32 %v2983, %v2984
  %v2986 = vsel %vm141, %v2906, 0.0
  %v2987 = vadd.f32 %v2985, %v2986
  %v2988 = vsel %vm141, %v2907, 0.0
  %v2989 = vadd.f32 %v2987, %v2988
  %v2990 = vsel %vm141, %v2908, 0.0
  %v2991 = vadd.f32 %v2989, %v2990
  %v2992 = vsel %vm141, %v2909, 0.0
  %v2993 = vadd.f32 %v2991, %v2992
  %v2994 = vsel %vm141, %v2910, 0.0
  %v2995 = vadd.f32 %v2993, %v2994
  %v2996 = vsel %vm141, %v2911, 0.0
  %v2997 = vadd.f32 %v2995, %v2996
  %v2998 = vsel %vm141, %v2912, 0.0
  %v2999 = vadd.f32 %v2997, %v2998
  %v3000 = vsel %vm141, %v2913, 0.0
  %v3001 = vadd.f32 %v2999, %v3000
  %v3002 = vsel %vm141, %v2914, 0.0
  %v3003 = vadd.f32 %v3001, %v3002
  %v3004 = vsel %vm141, %v2915, 0.0
  %v3005 = vadd.f32 %v3003, %v3004
  %v3006 = vsel %vm141, %v2916, 0.0
  %v3007 = vadd.f32 %v3005, %v3006
  %v3008 = vsel %vm141, %v2917, 0.0
  %v3009 = vadd.f32 %v3007, %v3008
  %v3010 = vsel %vm141, %v2918, 0.0
  %v3011 = vadd.f32 %v3009, %v3010
  %v3012 = vsel %vm141, %v2919, 0.0
  %v3013 = vadd.f32 %v3011, %v3012
  %v3014 = vsel %vm141, %v2920, 0.0
  %v3015 = vadd.f32 %v3013, %v3014
  %v3016 = vsel %vm141, %v2921, 0.0
  %v3017 = vadd.f32 %v3015, %v3016
  %v3018 = vsel %vm141, %v2922, 0.0
  %v3019 = vadd.f32 %v3017, %v3018
  %v3020 = vsel %vm141, %v2923, 0.0
  %v3021 = vadd.f32 %v3019, %v3020
  %v3022 = vsel %vm141, %v2924, 0.0
  %v3023 = vadd.f32 %v3021, %v3022
  %v3024 = vsel %vm141, %v2925, 0.0
  %v3025 = vadd.f32 %v3023, %v3024
  %v3026 = vsel %vm141, %v2926, 0.0
  %v3027 = vadd.f32 %v3025, %v3026
  %v3028 = vsel %vm141, %v2927, 0.0
  %v3029 = vadd.f32 %v3027, %v3028
  %v3030 = vsel %vm141, %v2928, 0.0
  %v3031 = vadd.f32 %v3029, %v3030
  %v3032 = vsel %vm141, %v2929, 0.0
  %v3033 = vadd.f32 %v3031, %v3032
  %v3034 = vsel %vm141, %v2930, 0.0
  %v3035 = vadd.f32 %v3033, %v3034
  %v3036 = vsel %vm141, %v2931, 0.0
  %v3037 = vadd.f32 %v3035, %v3036
  %v3038 = vsel %vm141, %v2932, 0.0
  %v3039 = vadd.f32 %v3037, %v3038
  %v3040 = vsel %vm141, %v2933, 0.0
  %v3041 = vadd.f32 %v3039, %v3040
  %v3042 = vsel %vm141, %v2934, 0.0
  %v3043 = vadd.f32 %v3041, %v3042
  %v3044 = vsel %vm141, %v2935, 0.0
  %v3045 = vadd.f32 %v3043, %v3044
  %v3046 = vsel %vm141, %v2936, 0.0
  %v3047 = vadd.f32 %v3045, %v3046
  %v3048 = vsel %vm141, %v2937, 0.0
  %v3049 = vadd.f32 %v3047, %v3048
  %v3050 = vsel %vm141, %v2938, 0.0
  %v3051 = vadd.f32 %v3049, %v3050
  %v3052 = vsel %vm141, %v2939, 0.0
  %v3053 = vadd.f32 %v3051, %v3052
  %v3054 = vsel %vm141, %v2940, 0.0
  %v3055 = vadd.f32 %v3053, %v3054
  %v3056 = vsel %vm141, %v2941, 0.0
  %v3057 = vadd.f32 %v3055, %v3056
  %v3058 = vsel %vm141, %v2942, 0.0
  %v3059 = vadd.f32 %v3057, %v3058
  %v3060 = vsel %vm141, %v2943, 0.0
  %v3061 = vadd.f32 %v3059, %v3060
  %v3062 = vsel %vm141, %v2944, 0.0
  %v3063 = vadd.f32 %v3061, %v3062
  %v3064 = vsel %vm141, %v2945, 0.0
  %v3065 = vadd.f32 %v3063, %v3064
  %v3066 = vsel %vm141, %v2946, 0.0
  %v3067 = vadd.f32 %v3065, %v3066
  %v3068 = vsel %vm141, %v2947, 0.0
  %v3069 = vadd.f32 %v3067, %v3068
  %v3070 = vsel %vm141, %v2948, 0.0
  %v3071 = vadd.f32 %v3069, %v3070
  %v3072 = vsel %vm141, %v2949, 0.0
  %v3073 = vadd.f32 %v3071, %v3072
  %v3074 = vsel %vm141, %v2950, 0.0
  %v3075 = vadd.f32 %v3073, %v3074
  %v3076 = vsel %vm141, %v2951, 0.0
  %v3077 = vadd.f32 %v3075, %v3076
  %v3078 = vsel %vm141, %v2952, 0.0
  %v3079 = vadd.f32 %v3077, %v3078
  %v3080 = vrot.slane %v3079, 4
  %v3081 = vadd.f32 %v3079, %v3080
  %v3082 = vrot.slane %v3081, 2
  %v3083 = vadd.f32 %v3081, %v3082
  %v3084 = vrot.slane %v3083, 1
  %v3085 = vadd.f32 %v3083, %v3084
  %v3086 = vmul.f32 %v3085, 0.001953125
  %v3087 = vsub.f32 %v2889, %v3086
  %v3088 = vsub.f32 %v2890, %v3086
  %v3089 = vsub.f32 %v2891, %v3086
  %v3090 = vsub.f32 %v2892, %v3086
  %v3091 = vsub.f32 %v2893, %v3086
  %v3092 = vsub.f32 %v2894, %v3086
  %v3093 = vsub.f32 %v2895, %v3086
  %v3094 = vsub.f32 %v2896, %v3086
  %v3095 = vsub.f32 %v2897, %v3086
  %v3096 = vsub.f32 %v2898, %v3086
  %v3097 = vsub.f32 %v2899, %v3086
  %v3098 = vsub.f32 %v2900, %v3086
  %v3099 = vsub.f32 %v2901, %v3086
  %v3100 = vsub.f32 %v2902, %v3086
  %v3101 = vsub.f32 %v2903, %v3086
  %v3102 = vsub.f32 %v2904, %v3086
  %v3103 = vsub.f32 %v2905, %v3086
  %v3104 = vsub.f32 %v2906, %v3086
  %v3105 = vsub.f32 %v2907, %v3086
  %v3106 = vsub.f32 %v2908, %v3086
  %v3107 = vsub.f32 %v2909, %v3086
  %v3108 = vsub.f32 %v2910, %v3086
  %v3109 = vsub.f32 %v2911, %v3086
  %v3110 = vsub.f32 %v2912, %v3086
  %v3111 = vsub.f32 %v2913, %v3086
  %v3112 = vsub.f32 %v2914, %v3086
  %v3113 = vsub.f32 %v2915, %v3086
  %v3114 = vsub.f32 %v2916, %v3086
  %v3115 = vsub.f32 %v2917, %v3086
  %v3116 = vsub.f32 %v2918, %v3086
  %v3117 = vsub.f32 %v2919, %v3086
  %v3118 = vsub.f32 %v2920, %v3086
  %v3119 = vsub.f32 %v2921, %v3086
  %v3120 = vsub.f32 %v2922, %v3086
  %v3121 = vsub.f32 %v2923, %v3086
  %v3122 = vsub.f32 %v2924, %v3086
  %v3123 = vsub.f32 %v2925, %v3086
  %v3124 = vsub.f32 %v2926, %v3086
  %v3125 = vsub.f32 %v2927, %v3086
  %v3126 = vsub.f32 %v2928, %v3086
  %v3127 = vsub.f32 %v2929, %v3086
  %v3128 = vsub.f32 %v2930, %v3086
  %v3129 = vsub.f32 %v2931, %v3086
  %v3130 = vsub.f32 %v2932, %v3086
  %v3131 = vsub.f32 %v2933, %v3086
  %v3132 = vsub.f32 %v2934, %v3086
  %v3133 = vsub.f32 %v2935, %v3086
  %v3134 = vsub.f32 %v2936, %v3086
  %v3135 = vsub.f32 %v2937, %v3086
  %v3136 = vsub.f32 %v2938, %v3086
  %v3137 = vsub.f32 %v2939, %v3086
  %v3138 = vsub.f32 %v2940, %v3086
  %v3139 = vsub.f32 %v2941, %v3086
  %v3140 = vsub.f32 %v2942, %v3086
  %v3141 = vsub.f32 %v2943, %v3086
  %v3142 = vsub.f32 %v2944, %v3086
  %v3143 = vsub.f32 %v2945, %v3086
  %v3144 = vsub.f32 %v2946, %v3086
  %v3145 = vsub.f32 %v2947, %v3086
  %v3146 = vsub.f32 %v2948, %v3086
  %v3147 = vsub.f32 %v2949, %v3086
  %v3148 = vsub.f32 %v2950, %v3086
  %v3149 = vsub.f32 %v2951, %v3086
  %v3150 = vsub.f32 %v2952, %v3086
  %v3151 = vmul.f32 %v3087, %v3087
  %v3152 = vmul.f32 %v3088, %v3088
  %v3153 = vmul.f32 %v3089, %v3089
  %v3154 = vmul.f32 %v3090, %v3090
  %v3155 = vmul.f32 %v3091, %v3091
  %v3156 = vmul.f32 %v3092, %v3092
  %v3157 = vmul.f32 %v3093, %v3093
  %v3158 = vmul.f32 %v3094, %v3094
  %v3159 = vmul.f32 %v3095, %v3095
  %v3160 = vmul.f32 %v3096, %v3096
  %v3161 = vmul.f32 %v3097, %v3097
  %v3162 = vmul.f32 %v3098, %v3098
  %v3163 = vmul.f32 %v3099, %v3099
  %v3164 = vmul.f32 %v3100, %v3100
  %v3165 = vmul.f32 %v3101, %v3101
  %v3166 = vmul.f32 %v3102, %v3102
  %v3167 = vmul.f32 %v3103, %v3103
  %v3168 = vmul.f32 %v3104, %v3104
  %v3169 = vmul.f32 %v3105, %v3105
  %v3170 = vmul.f32 %v3106, %v3106
  %v3171 = vmul.f32 %v3107, %v3107
  %v3172 = vmul.f32 %v3108, %v3108
  %v3173 = vmul.f32 %v3109, %v3109
  %v3174 = vmul.f32 %v3110, %v3110
  %v3175 = vmul.f32 %v3111, %v3111
  %v3176 = vmul.f32 %v3112, %v3112
  %v3177 = vmul.f32 %v3113, %v3113
  %v3178 = vmul.f32 %v3114, %v3114
  %v3179 = vmul.f32 %v3115, %v3115
  %v3180 = vmul.f32 %v3116, %v3116
  %v3181 = vmul.f32 %v3117, %v3117
  %v3182 = vmul.f32 %v3118, %v3118
  %v3183 = vmul.f32 %v3119, %v3119
  %v3184 = vmul.f32 %v3120, %v3120
  %v3185 = vmul.f32 %v3121, %v3121
  %v3186 = vmul.f32 %v3122, %v3122
  %v3187 = vmul.f32 %v3123, %v3123
  %v3188 = vmul.f32 %v3124, %v3124
  %v3189 = vmul.f32 %v3125, %v3125
  %v3190 = vmul.f32 %v3126, %v3126
  %v3191 = vmul.f32 %v3127, %v3127
  %v3192 = vmul.f32 %v3128, %v3128
  %v3193 = vmul.f32 %v3129, %v3129
  %v3194 = vmul.f32 %v3130, %v3130
  %v3195 = vmul.f32 %v3131, %v3131
  %v3196 = vmul.f32 %v3132, %v3132
  %v3197 = vmul.f32 %v3133, %v3133
  %v3198 = vmul.f32 %v3134, %v3134
  %v3199 = vmul.f32 %v3135, %v3135
  %v3200 = vmul.f32 %v3136, %v3136
  %v3201 = vmul.f32 %v3137, %v3137
  %v3202 = vmul.f32 %v3138, %v3138
  %v3203 = vmul.f32 %v3139, %v3139
  %v3204 = vmul.f32 %v3140, %v3140
  %v3205 = vmul.f32 %v3141, %v3141
  %v3206 = vmul.f32 %v3142, %v3142
  %v3207 = vmul.f32 %v3143, %v3143
  %v3208 = vmul.f32 %v3144, %v3144
  %v3209 = vmul.f32 %v3145, %v3145
  %v3210 = vmul.f32 %v3146, %v3146
  %v3211 = vmul.f32 %v3147, %v3147
  %v3212 = vmul.f32 %v3148, %v3148
  %v3213 = vmul.f32 %v3149, %v3149
  %v3214 = vmul.f32 %v3150, %v3150
  %v3215 = vsel %vm141, %v3151, 0.0
  %v3216 = vsel %vm141, %v3152, 0.0
  %v3217 = vadd.f32 %v3215, %v3216
  %v3218 = vsel %vm141, %v3153, 0.0
  %v3219 = vadd.f32 %v3217, %v3218
  %v3220 = vsel %vm141, %v3154, 0.0
  %v3221 = vadd.f32 %v3219, %v3220
  %v3222 = vsel %vm141, %v3155, 0.0
  %v3223 = vadd.f32 %v3221, %v3222
  %v3224 = vsel %vm141, %v3156, 0.0
  %v3225 = vadd.f32 %v3223, %v3224
  %v3226 = vsel %vm141, %v3157, 0.0
  %v3227 = vadd.f32 %v3225, %v3226
  %v3228 = vsel %vm141, %v3158, 0.0
  %v3229 = vadd.f32 %v3227, %v3228
  %v3230 = vsel %vm141, %v3159, 0.0
  %v3231 = vadd.f32 %v3229, %v3230
  %v3232 = vsel %vm141, %v3160, 0.0
  %v3233 = vadd.f32 %v3231, %v3232
  %v3234 = vsel %vm141, %v3161, 0.0
  %v3235 = vadd.f32 %v3233, %v3234
  %v3236 = vsel %vm141, %v3162, 0.0
  %v3237 = vadd.f32 %v3235, %v3236
  %v3238 = vsel %vm141, %v3163, 0.0
  %v3239 = vadd.f32 %v3237, %v3238
  %v3240 = vsel %vm141, %v3164, 0.0
  %v3241 = vadd.f32 %v3239, %v3240
  %v3242 = vsel %vm141, %v3165, 0.0
  %v3243 = vadd.f32 %v3241, %v3242
  %v3244 = vsel %vm141, %v3166, 0.0
  %v3245 = vadd.f32 %v3243, %v3244
  %v3246 = vsel %vm141, %v3167, 0.0
  %v3247 = vadd.f32 %v3245, %v3246
  %v3248 = vsel %vm141, %v3168, 0.0
  %v3249 = vadd.f32 %v3247, %v3248
  %v3250 = vsel %vm141, %v3169, 0.0
  %v3251 = vadd.f32 %v3249, %v3250
  %v3252 = vsel %vm141, %v3170, 0.0
  %v3253 = vadd.f32 %v3251, %v3252
  %v3254 = vsel %vm141, %v3171, 0.0
  %v3255 = vadd.f32 %v3253, %v3254
  %v3256 = vsel %vm141, %v3172, 0.0
  %v3257 = vadd.f32 %v3255, %v3256
  %v3258 = vsel %vm141, %v3173, 0.0
  %v3259 = vadd.f32 %v3257, %v3258
  %v3260 = vsel %vm141, %v3174, 0.0
  %v3261 = vadd.f32 %v3259, %v3260
  %v3262 = vsel %vm141, %v3175, 0.0
  %v3263 = vadd.f32 %v3261, %v3262
  %v3264 = vsel %vm141, %v3176, 0.0
  %v3265 = vadd.f32 %v3263, %v3264
  %v3266 = vsel %vm141, %v3177, 0.0
  %v3267 = vadd.f32 %v3265, %v3266
  %v3268 = vsel %vm141, %v3178, 0.0
  %v3269 = vadd.f32 %v3267, %v3268
  %v3270 = vsel %vm141, %v3179, 0.0
  %v3271 = vadd.f32 %v3269, %v3270
  %v3272 = vsel %vm141, %v3180, 0.0
  %v3273 = vadd.f32 %v3271, %v3272
  %v3274 = vsel %vm141, %v3181, 0.0
  %v3275 = vadd.f32 %v3273, %v3274
  %v3276 = vsel %vm141, %v3182, 0.0
  %v3277 = vadd.f32 %v3275, %v3276
  %v3278 = vsel %vm141, %v3183, 0.0
  %v3279 = vadd.f32 %v3277, %v3278
  %v3280 = vsel %vm141, %v3184, 0.0
  %v3281 = vadd.f32 %v3279, %v3280
  %v3282 = vsel %vm141, %v3185, 0.0
  %v3283 = vadd.f32 %v3281, %v3282
  %v3284 = vsel %vm141, %v3186, 0.0
  %v3285 = vadd.f32 %v3283, %v3284
  %v3286 = vsel %vm141, %v3187, 0.0
  %v3287 = vadd.f32 %v3285, %v3286
  %v3288 = vsel %vm141, %v3188, 0.0
  %v3289 = vadd.f32 %v3287, %v3288
  %v3290 = vsel %vm141, %v3189, 0.0
  %v3291 = vadd.f32 %v3289, %v3290
  %v3292 = vsel %vm141, %v3190, 0.0
  %v3293 = vadd.f32 %v3291, %v3292
  %v3294 = vsel %vm141, %v3191, 0.0
  %v3295 = vadd.f32 %v3293, %v3294
  %v3296 = vsel %vm141, %v3192, 0.0
  %v3297 = vadd.f32 %v3295, %v3296
  %v3298 = vsel %vm141, %v3193, 0.0
  %v3299 = vadd.f32 %v3297, %v3298
  %v3300 = vsel %vm141, %v3194, 0.0
  %v3301 = vadd.f32 %v3299, %v3300
  %v3302 = vsel %vm141, %v3195, 0.0
  %v3303 = vadd.f32 %v3301, %v3302
  %v3304 = vsel %vm141, %v3196, 0.0
  %v3305 = vadd.f32 %v3303, %v3304
  %v3306 = vsel %vm141, %v3197, 0.0
  %v3307 = vadd.f32 %v3305, %v3306
  %v3308 = vsel %vm141, %v3198, 0.0
  %v3309 = vadd.f32 %v3307, %v3308
  %v3310 = vsel %vm141, %v3199, 0.0
  %v3311 = vadd.f32 %v3309, %v3310
  %v3312 = vsel %vm141, %v3200, 0.0
  %v3313 = vadd.f32 %v3311, %v3312
  %v3314 = vsel %vm141, %v3201, 0.0
  %v3315 = vadd.f32 %v3313, %v3314
  %v3316 = vsel %vm141, %v3202, 0.0
  %v3317 = vadd.f32 %v3315, %v3316
  %v3318 = vsel %vm141, %v3203, 0.0
  %v3319 = vadd.f32 %v3317, %v3318
  %v3320 = vsel %vm141, %v3204, 0.0
  %v3321 = vadd.f32 %v3319, %v3320
  %v3322 = vsel %vm141, %v3205, 0.0
  %v3323 = vadd.f32 %v3321, %v3322
  %v3324 = vsel %vm141, %v3206, 0.0
  %v3325 = vadd.f32 %v3323, %v3324
  %v3326 = vsel %vm141, %v3207, 0.0
  %v3327 = vadd.f32 %v3325, %v3326
  %v3328 = vsel %vm141, %v3208, 0.0
  %v3329 = vadd.f32 %v3327, %v3328
  %v3330 = vsel %vm141, %v3209, 0.0
  %v3331 = vadd.f32 %v3329, %v3330
  %v3332 = vsel %vm141, %v3210, 0.0
  %v3333 = vadd.f32 %v3331, %v3332
  %v3334 = vsel %vm141, %v3211, 0.0
  %v3335 = vadd.f32 %v3333, %v3334
  %v3336 = vsel %vm141, %v3212, 0.0
  %v3337 = vadd.f32 %v3335, %v3336
  %v3338 = vsel %vm141, %v3213, 0.0
  %v3339 = vadd.f32 %v3337, %v3338
  %v3340 = vsel %vm141, %v3214, 0.0
  %v3341 = vadd.f32 %v3339, %v3340
  %v3342 = vrot.slane %v3341, 4
  %v3343 = vadd.f32 %v3341, %v3342
  %v3344 = vrot.slane %v3343, 2
  %v3345 = vadd.f32 %v3343, %v3344
  %v3346 = vrot.slane %v3345, 1
  %v3347 = vadd.f32 %v3345, %v3346
  %v3348 = vmul.f32 %v3347, 0.001953125
  %v3349 = vadd.f32 %v3348, 1e-05
  %v3350 = vrsqrt.pop %v3349
  %v3351 = vmul.f32 %v2823, %v3350
  %v3353 = vlaneseq
  %v3354 = vshrl.u32 %v3353, 7
  %v3355 = vsub.s32 0, %v3354
  %v3356 = vrot.slane %v3351, %v3355
  %v3358 = vmul.f32 %v3087, %v3356
  %v3359 = vmul.f32 %v3088, %v3356
  %v3360 = vmul.f32 %v3089, %v3356
  %v3361 = vmul.f32 %v3090, %v3356
  %v3362 = vmul.f32 %v3091, %v3356
  %v3363 = vmul.f32 %v3092, %v3356
  %v3364 = vmul.f32 %v3093, %v3356
  %v3365 = vmul.f32 %v3094, %v3356
  %v3366 = vmul.f32 %v3095, %v3356
  %v3367 = vmul.f32 %v3096, %v3356
  %v3368 = vmul.f32 %v3097, %v3356
  %v3369 = vmul.f32 %v3098, %v3356
  %v3370 = vmul.f32 %v3099, %v3356
  %v3371 = vmul.f32 %v3100, %v3356
  %v3372 = vmul.f32 %v3101, %v3356
  %v3373 = vmul.f32 %v3102, %v3356
  %v3374 = vmul.f32 %v3103, %v3356
  %v3375 = vmul.f32 %v3104, %v3356
  %v3376 = vmul.f32 %v3105, %v3356
  %v3377 = vmul.f32 %v3106, %v3356
  %v3378 = vmul.f32 %v3107, %v3356
  %v3379 = vmul.f32 %v3108, %v3356
  %v3380 = vmul.f32 %v3109, %v3356
  %v3381 = vmul.f32 %v3110, %v3356
  %v3382 = vmul.f32 %v3111, %v3356
  %v3383 = vmul.f32 %v3112, %v3356
  %v3384 = vmul.f32 %v3113, %v3356
  %v3385 = vmul.f32 %v3114, %v3356
  %v3386 = vmul.f32 %v3115, %v3356
  %v3387 = vmul.f32 %v3116, %v3356
  %v3388 = vmul.f32 %v3117, %v3356
  %v3389 = vmul.f32 %v3118, %v3356
  %v3390 = vmul.f32 %v3119, %v3356
  %v3391 = vmul.f32 %v3120, %v3356
  %v3392 = vmul.f32 %v3121, %v3356
  %v3393 = vmul.f32 %v3122, %v3356
  %v3394 = vmul.f32 %v3123, %v3356
  %v3395 = vmul.f32 %v3124, %v3356
  %v3396 = vmul.f32 %v3125, %v3356
  %v3397 = vmul.f32 %v3126, %v3356
  %v3398 = vmul.f32 %v3127, %v3356
  %v3399 = vmul.f32 %v3128, %v3356
  %v3400 = vmul.f32 %v3129, %v3356
  %v3401 = vmul.f32 %v3130, %v3356
  %v3402 = vmul.f32 %v3131, %v3356
  %v3403 = vmul.f32 %v3132, %v3356
  %v3404 = vmul.f32 %v3133, %v3356
  %v3405 = vmul.f32 %v3134, %v3356
  %v3406 = vmul.f32 %v3135, %v3356
  %v3407 = vmul.f32 %v3136, %v3356
  %v3408 = vmul.f32 %v3137, %v3356
  %v3409 = vmul.f32 %v3138, %v3356
  %v3410 = vmul.f32 %v3139, %v3356
  %v3411 = vmul.f32 %v3140, %v3356
  %v3412 = vmul.f32 %v3141, %v3356
  %v3413 = vmul.f32 %v3142, %v3356
  %v3414 = vmul.f32 %v3143, %v3356
  %v3415 = vmul.f32 %v3144, %v3356
  %v3416 = vmul.f32 %v3145, %v3356
  %v3417 = vmul.f32 %v3146, %v3356
  %v3418 = vmul.f32 %v3147, %v3356
  %v3419 = vmul.f32 %v3148, %v3356
  %v3420 = vmul.f32 %v3149, %v3356
  %v3421 = vmul.f32 %v3150, %v3356
  %v3423 = vlaneseq
  %v3424 = vshrl.u32 %v3423, 7
  %v3425 = vsub.s32 0, %v3424
  %v3426 = vrot.slane %v2824, %v3425
  %v3428 = vadd.f32 %v3358, %v3426
  %v3429 = vadd.f32 %v3359, %v3426
  %v3430 = vadd.f32 %v3360, %v3426
  %v3431 = vadd.f32 %v3361, %v3426
  %v3432 = vadd.f32 %v3362, %v3426
  %v3433 = vadd.f32 %v3363, %v3426
  %v3434 = vadd.f32 %v3364, %v3426
  %v3435 = vadd.f32 %v3365, %v3426
  %v3436 = vadd.f32 %v3366, %v3426
  %v3437 = vadd.f32 %v3367, %v3426
  %v3438 = vadd.f32 %v3368, %v3426
  %v3439 = vadd.f32 %v3369, %v3426
  %v3440 = vadd.f32 %v3370, %v3426
  %v3441 = vadd.f32 %v3371, %v3426
  %v3442 = vadd.f32 %v3372, %v3426
  %v3443 = vadd.f32 %v3373, %v3426
  %v3444 = vadd.f32 %v3374, %v3426
  %v3445 = vadd.f32 %v3375, %v3426
  %v3446 = vadd.f32 %v3376, %v3426
  %v3447 = vadd.f32 %v3377, %v3426
  %v3448 = vadd.f32 %v3378, %v3426
  %v3449 = vadd.f32 %v3379, %v3426
  %v3450 = vadd.f32 %v3380, %v3426
  %v3451 = vadd.f32 %v3381, %v3426
  %v3452 = vadd.f32 %v3382, %v3426
  %v3453 = vadd.f32 %v3383, %v3426
  %v3454 = vadd.f32 %v3384, %v3426
  %v3455 = vadd.f32 %v3385, %v3426
  %v3456 = vadd.f32 %v3386, %v3426
  %v3457 = vadd.f32 %v3387, %v3426
  %v3458 = vadd.f32 %v3388, %v3426
  %v3459 = vadd.f32 %v3389, %v3426
  %v3460 = vadd.f32 %v3390, %v3426
  %v3461 = vadd.f32 %v3391, %v3426
  %v3462 = vadd.f32 %v3392, %v3426
  %v3463 = vadd.f32 %v3393, %v3426
  %v3464 = vadd.f32 %v3394, %v3426
  %v3465 = vadd.f32 %v3395, %v3426
  %v3466 = vadd.f32 %v3396, %v3426
  %v3467 = vadd.f32 %v3397, %v3426
  %v3468 = vadd.f32 %v3398, %v3426
  %v3469 = vadd.f32 %v3399, %v3426
  %v3470 = vadd.f32 %v3400, %v3426
  %v3471 = vadd.f32 %v3401, %v3426
  %v3472 = vadd.f32 %v3402, %v3426
  %v3473 = vadd.f32 %v3403, %v3426
  %v3474 = vadd.f32 %v3404, %v3426
  %v3475 = vadd.f32 %v3405, %v3426
  %v3476 = vadd.f32 %v3406, %v3426
  %v3477 = vadd.f32 %v3407, %v3426
  %v3478 = vadd.f32 %v3408, %v3426
  %v3479 = vadd.f32 %v3409, %v3426
  %v3480 = vadd.f32 %v3410, %v3426
  %v3481 = vadd.f32 %v3411, %v3426
  %v3482 = vadd.f32 %v3412, %v3426
  %v3483 = vadd.f32 %v3413, %v3426
  %v3484 = vadd.f32 %v3414, %v3426
  %v3485 = vadd.f32 %v3415, %v3426
  %v3486 = vadd.f32 %v3416, %v3426
  %v3487 = vadd.f32 %v3417, %v3426
  %v3488 = vadd.f32 %v3418, %v3426
  %v3489 = vadd.f32 %v3419, %v3426
  %v3490 = vadd.f32 %v3420, %v3426
  %v3491 = vadd.f32 %v3421, %v3426
  %s3492 = scalar_lea.vmem [#allocation3], 32
  %3493 = vst.msk [vmem:[%s3492 + $0x8] sm:$0xff] %vm141, %v3428
  %3494 = vst.msk [vmem:[%s3492 + $0x10] sm:$0xff] %vm141, %v3429
  %3495 = vst.msk [vmem:[%s3492 + $0x28] sm:$0xff] %vm141, %v3430
  %3496 = vst.msk [vmem:[%s3492 + $0x30] sm:$0xff] %vm141, %v3431
  %3497 = vst.msk [vmem:[%s3492 + $0x48] sm:$0xff] %vm141, %v3432
  %3498 = vst.msk [vmem:[%s3492 + $0x50] sm:$0xff] %vm141, %v3433
  %3499 = vst.msk [vmem:[%s3492 + $0x68] sm:$0xff] %vm141, %v3434
  %3500 = vst.msk [vmem:[%s3492 + $0x70] sm:$0xff] %vm141, %v3435
  %3501 = vst.msk [vmem:[%s3492 + $0x88] sm:$0xff] %vm141, %v3436
  %3502 = vst.msk [vmem:[%s3492 + $0x90] sm:$0xff] %vm141, %v3437
  %3503 = vst.msk [vmem:[%s3492 + $0xa8] sm:$0xff] %vm141, %v3438
  %3504 = vst.msk [vmem:[%s3492 + $0xb0] sm:$0xff] %vm141, %v3439
  %3505 = vst.msk [vmem:[%s3492 + $0xc8] sm:$0xff] %vm141, %v3440
  %3506 = vst.msk [vmem:[%s3492 + $0xd0] sm:$0xff] %vm141, %v3441
  %3507 = vst.msk [vmem:[%s3492 + $0xe8] sm:$0xff] %vm141, %v3442
  %3508 = vst.msk [vmem:[%s3492 + $0xf0] sm:$0xff] %vm141, %v3443
  %3509 = vst.msk [vmem:[%s3492 + $0x108] sm:$0xff] %vm141, %v3444
  %3510 = vst.msk [vmem:[%s3492 + $0x110] sm:$0xff] %vm141, %v3445
  %3511 = vst.msk [vmem:[%s3492 + $0x128] sm:$0xff] %vm141, %v3446
  %3512 = vst.msk [vmem:[%s3492 + $0x130] sm:$0xff] %vm141, %v3447
  %3513 = vst.msk [vmem:[%s3492 + $0x148] sm:$0xff] %vm141, %v3448
  %3514 = vst.msk [vmem:[%s3492 + $0x150] sm:$0xff] %vm141, %v3449
  %3515 = vst.msk [vmem:[%s3492 + $0x168] sm:$0xff] %vm141, %v3450
  %3516 = vst.msk [vmem:[%s3492 + $0x170] sm:$0xff] %vm141, %v3451
  %3517 = vst.msk [vmem:[%s3492 + $0x188] sm:$0xff] %vm141, %v3452
  %3518 = vst.msk [vmem:[%s3492 + $0x190] sm:$0xff] %vm141, %v3453
  %3519 = vst.msk [vmem:[%s3492 + $0x1a8] sm:$0xff] %vm141, %v3454
  %3520 = vst.msk [vmem:[%s3492 + $0x1b0] sm:$0xff] %vm141, %v3455
  %3521 = vst.msk [vmem:[%s3492 + $0x1c8] sm:$0xff] %vm141, %v3456
  %3522 = vst.msk [vmem:[%s3492 + $0x1d0] sm:$0xff] %vm141, %v3457
  %3523 = vst.msk [vmem:[%s3492 + $0x1e8] sm:$0xff] %vm141, %v3458
  %3524 = vst.msk [vmem:[%s3492 + $0x1f0] sm:$0xff] %vm141, %v3459
  %3525 = vst.msk [vmem:[%s3492 + $0x248] sm:$0xff] %vm141, %v3460
  %3526 = vst.msk [vmem:[%s3492 + $0x250] sm:$0xff] %vm141, %v3461
  %3527 = vst.msk [vmem:[%s3492 + $0x268] sm:$0xff] %vm141, %v3462
  %3528 = vst.msk [vmem:[%s3492 + $0x270] sm:$0xff] %vm141, %v3463
  %3529 = vst.msk [vmem:[%s3492 + $0x288] sm:$0xff] %vm141, %v3464
  %3530 = vst.msk [vmem:[%s3492 + $0x290] sm:$0xff] %vm141, %v3465
  %3531 = vst.msk [vmem:[%s3492 + $0x2a8] sm:$0xff] %vm141, %v3466
  %3532 = vst.msk [vmem:[%s3492 + $0x2b0] sm:$0xff] %vm141, %v3467
  %3533 = vst.msk [vmem:[%s3492 + $0x2c8] sm:$0xff] %vm141, %v3468
  %3534 = vst.msk [vmem:[%s3492 + $0x2d0] sm:$0xff] %vm141, %v3469
  %3535 = vst.msk [vmem:[%s3492 + $0x2e8] sm:$0xff] %vm141, %v3470
  %3536 = vst.msk [vmem:[%s3492 + $0x2f0] sm:$0xff] %vm141, %v3471
  %3537 = vst.msk [vmem:[%s3492 + $0x308] sm:$0xff] %vm141, %v3472
  %3538 = vst.msk [vmem:[%s3492 + $0x310] sm:$0xff] %vm141, %v3473
  %3539 = vst.msk [vmem:[%s3492 + $0x328] sm:$0xff] %vm141, %v3474
  %3540 = vst.msk [vmem:[%s3492 + $0x330] sm:$0xff] %vm141, %v3475
  %3541 = vst.msk [vmem:[%s3492 + $0x348] sm:$0xff] %vm141, %v3476
  %3542 = vst.msk [vmem:[%s3492 + $0x350] sm:$0xff] %vm141, %v3477
  %3543 = vst.msk [vmem:[%s3492 + $0x368] sm:$0xff] %vm141, %v3478
  %3544 = vst.msk [vmem:[%s3492 + $0x370] sm:$0xff] %vm141, %v3479
  %3545 = vst.msk [vmem:[%s3492 + $0x388] sm:$0xff] %vm141, %v3480
  %3546 = vst.msk [vmem:[%s3492 + $0x390] sm:$0xff] %vm141, %v3481
  %3547 = vst.msk [vmem:[%s3492 + $0x3a8] sm:$0xff] %vm141, %v3482
  %3548 = vst.msk [vmem:[%s3492 + $0x3b0] sm:$0xff] %vm141, %v3483
  %3549 = vst.msk [vmem:[%s3492 + $0x3c8] sm:$0xff] %vm141, %v3484
  %3550 = vst.msk [vmem:[%s3492 + $0x3d0] sm:$0xff] %vm141, %v3485
  %3551 = vst.msk [vmem:[%s3492 + $0x3e8] sm:$0xff] %vm141, %v3486
  %3552 = vst.msk [vmem:[%s3492 + $0x3f0] sm:$0xff] %vm141, %v3487
  %3553 = vst.msk [vmem:[%s3492 + $0x408] sm:$0xff] %vm141, %v3488
  %3554 = vst.msk [vmem:[%s3492 + $0x410] sm:$0xff] %vm141, %v3489
  %3555 = vst.msk [vmem:[%s3492 + $0x428] sm:$0xff] %vm141, %v3490
  %3556 = vst.msk [vmem:[%s3492 + $0x430] sm:$0xff] %vm141, %v3491
  %v3557 = vld [vmem:[#allocation3 + $0x7] sm:$0xff]
  %v3558 = vld [vmem:[#allocation3 + $0xf] sm:$0xff]
  %v3559 = vld [vmem:[#allocation3 + $0x27] sm:$0xff]
  %v3560 = vld [vmem:[#allocation3 + $0x2f] sm:$0xff]
  %v3561 = vld [vmem:[#allocation3 + $0x47] sm:$0xff]
  %v3562 = vld [vmem:[#allocation3 + $0x4f] sm:$0xff]
  %v3563 = vld [vmem:[#allocation3 + $0x67] sm:$0xff]
  %v3564 = vld [vmem:[#allocation3 + $0x6f] sm:$0xff]
  %v3565 = vld [vmem:[#allocation3 + $0x87] sm:$0xff]
  %v3566 = vld [vmem:[#allocation3 + $0x8f] sm:$0xff]
  %v3567 = vld [vmem:[#allocation3 + $0xa7] sm:$0xff]
  %v3568 = vld [vmem:[#allocation3 + $0xaf] sm:$0xff]
  %v3569 = vld [vmem:[#allocation3 + $0xc7] sm:$0xff]
  %v3570 = vld [vmem:[#allocation3 + $0xcf] sm:$0xff]
  %v3571 = vld [vmem:[#allocation3 + $0xe7] sm:$0xff]
  %v3572 = vld [vmem:[#allocation3 + $0xef] sm:$0xff]
  %v3573 = vld [vmem:[#allocation3 + $0x107] sm:$0xff]
  %v3574 = vld [vmem:[#allocation3 + $0x10f] sm:$0xff]
  %v3575 = vld [vmem:[#allocation3 + $0x127] sm:$0xff]
  %v3576 = vld [vmem:[#allocation3 + $0x12f] sm:$0xff]
  %v3577 = vld [vmem:[#allocation3 + $0x147] sm:$0xff]
  %v3578 = vld [vmem:[#allocation3 + $0x14f] sm:$0xff]
  %v3579 = vld [vmem:[#allocation3 + $0x167] sm:$0xff]
  %v3580 = vld [vmem:[#allocation3 + $0x16f] sm:$0xff]
  %v3581 = vld [vmem:[#allocation3 + $0x187] sm:$0xff]
  %v3582 = vld [vmem:[#allocation3 + $0x18f] sm:$0xff]
  %v3583 = vld [vmem:[#allocation3 + $0x1a7] sm:$0xff]
  %v3584 = vld [vmem:[#allocation3 + $0x1af] sm:$0xff]
  %v3585 = vld [vmem:[#allocation3 + $0x1c7] sm:$0xff]
  %v3586 = vld [vmem:[#allocation3 + $0x1cf] sm:$0xff]
  %v3587 = vld [vmem:[#allocation3 + $0x1e7] sm:$0xff]
  %v3588 = vld [vmem:[#allocation3 + $0x1ef] sm:$0xff]
  %v3589 = vld [vmem:[#allocation3 + $0x207] sm:$0xff]
  %v3590 = vld [vmem:[#allocation3 + $0x20f] sm:$0xff]
  %v3591 = vld [vmem:[#allocation3 + $0x227] sm:$0xff]
  %v3592 = vld [vmem:[#allocation3 + $0x22f] sm:$0xff]
  %v3593 = vld [vmem:[#allocation3 + $0x247] sm:$0xff]
  %v3594 = vld [vmem:[#allocation3 + $0x24f] sm:$0xff]
  %v3595 = vld [vmem:[#allocation3 + $0x267] sm:$0xff]
  %v3596 = vld [vmem:[#allocation3 + $0x26f] sm:$0xff]
  %v3597 = vld [vmem:[#allocation3 + $0x287] sm:$0xff]
  %v3598 = vld [vmem:[#allocation3 + $0x28f] sm:$0xff]
  %v3599 = vld [vmem:[#allocation3 + $0x2a7] sm:$0xff]
  %v3600 = vld [vmem:[#allocation3 + $0x2af] sm:$0xff]
  %v3601 = vld [vmem:[#allocation3 + $0x2c7] sm:$0xff]
  %v3602 = vld [vmem:[#allocation3 + $0x2cf] sm:$0xff]
  %v3603 = vld [vmem:[#allocation3 + $0x2e7] sm:$0xff]
  %v3604 = vld [vmem:[#allocation3 + $0x2ef] sm:$0xff]
  %v3605 = vld [vmem:[#allocation3 + $0x307] sm:$0xff]
  %v3606 = vld [vmem:[#allocation3 + $0x30f] sm:$0xff]
  %v3607 = vld [vmem:[#allocation3 + $0x327] sm:$0xff]
  %v3608 = vld [vmem:[#allocation3 + $0x32f] sm:$0xff]
  %v3609 = vld [vmem:[#allocation3 + $0x347] sm:$0xff]
  %v3610 = vld [vmem:[#allocation3 + $0x34f] sm:$0xff]
  %v3611 = vld [vmem:[#allocation3 + $0x367] sm:$0xff]
  %v3612 = vld [vmem:[#allocation3 + $0x36f] sm:$0xff]
  %v3613 = vld [vmem:[#allocation3 + $0x387] sm:$0xff]
  %v3614 = vld [vmem:[#allocation3 + $0x38f] sm:$0xff]
  %v3615 = vld [vmem:[#allocation3 + $0x3a7] sm:$0xff]
  %v3616 = vld [vmem:[#allocation3 + $0x3af] sm:$0xff]
  %v3617 = vld [vmem:[#allocation3 + $0x3c7] sm:$0xff]
  %v3618 = vld [vmem:[#allocation3 + $0x3cf] sm:$0xff]
  %v3619 = vld [vmem:[#allocation3 + $0x3e7] sm:$0xff]
  %v3620 = vld [vmem:[#allocation3 + $0x3ef] sm:$0xff]
  %v3621 = vld [vmem:[#allocation3 + $0x407] sm:$0xff]
  %v3622 = vld [vmem:[#allocation3 + $0x40f] sm:$0xff]
  %v3623 = vld [vmem:[#allocation3 + $0x427] sm:$0xff]
  %v3624 = vld [vmem:[#allocation3 + $0x42f] sm:$0xff]
  %v3625 = vld [vmem:[#allocation3 + $0x447] sm:$0xff]
  %v3626 = vld [vmem:[#allocation3 + $0x44f] sm:$0xff]
  %v3627 = vld [vmem:[#allocation3 + $0x467] sm:$0xff]
  %v3628 = vld [vmem:[#allocation3 + $0x46f] sm:$0xff]
  %v3629 = vld [vmem:[#allocation3 + $0x8] sm:$0xff]
  %v3630 = vld [vmem:[#allocation3 + $0x10] sm:$0xff]
  %v3631 = vld [vmem:[#allocation3 + $0x28] sm:$0xff]
  %v3632 = vld [vmem:[#allocation3 + $0x30] sm:$0xff]
  %v3633 = vld [vmem:[#allocation3 + $0x48] sm:$0xff]
  %v3634 = vld [vmem:[#allocation3 + $0x50] sm:$0xff]
  %v3635 = vld [vmem:[#allocation3 + $0x68] sm:$0xff]
  %v3636 = vld [vmem:[#allocation3 + $0x70] sm:$0xff]
  %v3637 = vld [vmem:[#allocation3 + $0x88] sm:$0xff]
  %v3638 = vld [vmem:[#allocation3 + $0x90] sm:$0xff]
  %v3639 = vld [vmem:[#allocation3 + $0xa8] sm:$0xff]
  %v3640 = vld [vmem:[#allocation3 + $0xb0] sm:$0xff]
  %v3641 = vld [vmem:[#allocation3 + $0xc8] sm:$0xff]
  %v3642 = vld [vmem:[#allocation3 + $0xd0] sm:$0xff]
  %v3643 = vld [vmem:[#allocation3 + $0xe8] sm:$0xff]
  %v3644 = vld [vmem:[#allocation3 + $0xf0] sm:$0xff]
  %v3645 = vld [vmem:[#allocation3 + $0x108] sm:$0xff]
  %v3646 = vld [vmem:[#allocation3 + $0x110] sm:$0xff]
  %v3647 = vld [vmem:[#allocation3 + $0x128] sm:$0xff]
  %v3648 = vld [vmem:[#allocation3 + $0x130] sm:$0xff]
  %v3649 = vld [vmem:[#allocation3 + $0x148] sm:$0xff]
  %v3650 = vld [vmem:[#allocation3 + $0x150] sm:$0xff]
  %v3651 = vld [vmem:[#allocation3 + $0x168] sm:$0xff]
  %v3652 = vld [vmem:[#allocation3 + $0x170] sm:$0xff]
  %v3653 = vld [vmem:[#allocation3 + $0x188] sm:$0xff]
  %v3654 = vld [vmem:[#allocation3 + $0x190] sm:$0xff]
  %v3655 = vld [vmem:[#allocation3 + $0x1a8] sm:$0xff]
  %v3656 = vld [vmem:[#allocation3 + $0x1b0] sm:$0xff]
  %v3657 = vld [vmem:[#allocation3 + $0x1c8] sm:$0xff]
  %v3658 = vld [vmem:[#allocation3 + $0x1d0] sm:$0xff]
  %v3659 = vld [vmem:[#allocation3 + $0x1e8] sm:$0xff]
  %v3660 = vld [vmem:[#allocation3 + $0x1f0] sm:$0xff]
  %v3661 = vld [vmem:[#allocation3 + $0x208] sm:$0xff]
  %v3662 = vld [vmem:[#allocation3 + $0x210] sm:$0xff]
  %v3663 = vld [vmem:[#allocation3 + $0x228] sm:$0xff]
  %v3664 = vld [vmem:[#allocation3 + $0x230] sm:$0xff]
  %v3665 = vld [vmem:[#allocation3 + $0x248] sm:$0xff]
  %v3666 = vld [vmem:[#allocation3 + $0x250] sm:$0xff]
  %v3667 = vld [vmem:[#allocation3 + $0x268] sm:$0xff]
  %v3668 = vld [vmem:[#allocation3 + $0x270] sm:$0xff]
  %v3669 = vld [vmem:[#allocation3 + $0x288] sm:$0xff]
  %v3670 = vld [vmem:[#allocation3 + $0x290] sm:$0xff]
  %v3671 = vld [vmem:[#allocation3 + $0x2a8] sm:$0xff]
  %v3672 = vld [vmem:[#allocation3 + $0x2b0] sm:$0xff]
  %v3673 = vld [vmem:[#allocation3 + $0x2c8] sm:$0xff]
  %v3674 = vld [vmem:[#allocation3 + $0x2d0] sm:$0xff]
  %v3675 = vld [vmem:[#allocation3 + $0x2e8] sm:$0xff]
  %v3676 = vld [vmem:[#allocation3 + $0x2f0] sm:$0xff]
  %v3677 = vld [vmem:[#allocation3 + $0x308] sm:$0xff]
  %v3678 = vld [vmem:[#allocation3 + $0x310] sm:$0xff]
  %v3679 = vld [vmem:[#allocation3 + $0x328] sm:$0xff]
  %v3680 = vld [vmem:[#allocation3 + $0x330] sm:$0xff]
  %v3681 = vld [vmem:[#allocation3 + $0x348] sm:$0xff]
  %v3682 = vld [vmem:[#allocation3 + $0x350] sm:$0xff]
  %v3683 = vld [vmem:[#allocation3 + $0x368] sm:$0xff]
  %v3684 = vld [vmem:[#allocation3 + $0x370] sm:$0xff]
  %v3685 = vld [vmem:[#allocation3 + $0x388] sm:$0xff]
  %v3686 = vld [vmem:[#allocation3 + $0x390] sm:$0xff]
  %v3687 = vld [vmem:[#allocation3 + $0x3a8] sm:$0xff]
  %v3688 = vld [vmem:[#allocation3 + $0x3b0] sm:$0xff]
  %v3689 = vld [vmem:[#allocation3 + $0x3c8] sm:$0xff]
  %v3690 = vld [vmem:[#allocation3 + $0x3d0] sm:$0xff]
  %v3691 = vld [vmem:[#allocation3 + $0x3e8] sm:$0xff]
  %v3692 = vld [vmem:[#allocation3 + $0x3f0] sm:$0xff]
  %v3693 = vld [vmem:[#allocation3 + $0x408] sm:$0xff]
  %v3694 = vld [vmem:[#allocation3 + $0x410] sm:$0xff]
  %v3695 = vld [vmem:[#allocation3 + $0x428] sm:$0xff]
  %v3696 = vld [vmem:[#allocation3 + $0x430] sm:$0xff]
  %v3697 = vld [vmem:[#allocation3 + $0x448] sm:$0xff]
  %v3698 = vld [vmem:[#allocation3 + $0x450] sm:$0xff]
  %v3699 = vld [vmem:[#allocation3 + $0x468] sm:$0xff]
  %v3700 = vld [vmem:[#allocation3 + $0x470] sm:$0xff]
  %v3701 = vld [vmem:[#allocation3 + $0x9] sm:$0xff]
  %v3702 = vld [vmem:[#allocation3 + $0x11] sm:$0xff]
  %v3703 = vld [vmem:[#allocation3 + $0x29] sm:$0xff]
  %v3704 = vld [vmem:[#allocation3 + $0x31] sm:$0xff]
  %v3705 = vld [vmem:[#allocation3 + $0x49] sm:$0xff]
  %v3706 = vld [vmem:[#allocation3 + $0x51] sm:$0xff]
  %v3707 = vld [vmem:[#allocation3 + $0x69] sm:$0xff]
  %v3708 = vld [vmem:[#allocation3 + $0x71] sm:$0xff]
  %v3709 = vld [vmem:[#allocation3 + $0x89] sm:$0xff]
  %v3710 = vld [vmem:[#allocation3 + $0x91] sm:$0xff]
  %v3711 = vld [vmem:[#allocation3 + $0xa9] sm:$0xff]
  %v3712 = vld [vmem:[#allocation3 + $0xb1] sm:$0xff]
  %v3713 = vld [vmem:[#allocation3 + $0xc9] sm:$0xff]
  %v3714 = vld [vmem:[#allocation3 + $0xd1] sm:$0xff]
  %v3715 = vld [vmem:[#allocation3 + $0xe9] sm:$0xff]
  %v3716 = vld [vmem:[#allocation3 + $0xf1] sm:$0xff]
  %v3717 = vld [vmem:[#allocation3 + $0x109] sm:$0xff]
  %v3718 = vld [vmem:[#allocation3 + $0x111] sm:$0xff]
  %v3719 = vld [vmem:[#allocation3 + $0x129] sm:$0xff]
  %v3720 = vld [vmem:[#allocation3 + $0x131] sm:$0xff]
  %v3721 = vld [vmem:[#allocation3 + $0x149] sm:$0xff]
  %v3722 = vld [vmem:[#allocation3 + $0x151] sm:$0xff]
  %v3723 = vld [vmem:[#allocation3 + $0x169] sm:$0xff]
  %v3724 = vld [vmem:[#allocation3 + $0x171] sm:$0xff]
  %v3725 = vld [vmem:[#allocation3 + $0x189] sm:$0xff]
  %v3726 = vld [vmem:[#allocation3 + $0x191] sm:$0xff]
  %v3727 = vld [vmem:[#allocation3 + $0x1a9] sm:$0xff]
  %v3728 = vld [vmem:[#allocation3 + $0x1b1] sm:$0xff]
  %v3729 = vld [vmem:[#allocation3 + $0x1c9] sm:$0xff]
  %v3730 = vld [vmem:[#allocation3 + $0x1d1] sm:$0xff]
  %v3731 = vld [vmem:[#allocation3 + $0x1e9] sm:$0xff]
  %v3732 = vld [vmem:[#allocation3 + $0x1f1] sm:$0xff]
  %v3733 = vld [vmem:[#allocation3 + $0x209] sm:$0xff]
  %v3734 = vld [vmem:[#allocation3 + $0x211] sm:$0xff]
  %v3735 = vld [vmem:[#allocation3 + $0x229] sm:$0xff]
  %v3736 = vld [vmem:[#allocation3 + $0x231] sm:$0xff]
  %v3737 = vld [vmem:[#allocation3 + $0x249] sm:$0xff]
  %v3738 = vld [vmem:[#allocation3 + $0x251] sm:$0xff]
  %v3739 = vld [vmem:[#allocation3 + $0x269] sm:$0xff]
  %v3740 = vld [vmem:[#allocation3 + $0x271] sm:$0xff]
  %v3741 = vld [vmem:[#allocation3 + $0x289] sm:$0xff]
  %v3742 = vld [vmem:[#allocation3 + $0x291] sm:$0xff]
  %v3743 = vld [vmem:[#allocation3 + $0x2a9] sm:$0xff]
  %v3744 = vld [vmem:[#allocation3 + $0x2b1] sm:$0xff]
  %v3745 = vld [vmem:[#allocation3 + $0x2c9] sm:$0xff]
  %v3746 = vld [vmem:[#allocation3 + $0x2d1] sm:$0xff]
  %v3747 = vld [vmem:[#allocation3 + $0x2e9] sm:$0xff]
  %v3748 = vld [vmem:[#allocation3 + $0x2f1] sm:$0xff]
  %v3749 = vld [vmem:[#allocation3 + $0x309] sm:$0xff]
  %v3750 = vld [vmem:[#allocation3 + $0x311] sm:$0xff]
  %v3751 = vld [vmem:[#allocation3 + $0x329] sm:$0xff]
  %v3752 = vld [vmem:[#allocation3 + $0x331] sm:$0xff]
  %v3753 = vld [vmem:[#allocation3 + $0x349] sm:$0xff]
  %v3754 = vld [vmem:[#allocation3 + $0x351] sm:$0xff]
  %v3755 = vld [vmem:[#allocation3 + $0x369] sm:$0xff]
  %v3756 = vld [vmem:[#allocation3 + $0x371] sm:$0xff]
  %v3757 = vld [vmem:[#allocation3 + $0x389] sm:$0xff]
  %v3758 = vld [vmem:[#allocation3 + $0x391] sm:$0xff]
  %v3759 = vld [vmem:[#allocation3 + $0x3a9] sm:$0xff]
  %v3760 = vld [vmem:[#allocation3 + $0x3b1] sm:$0xff]
  %v3761 = vld [vmem:[#allocation3 + $0x3c9] sm:$0xff]
  %v3762 = vld [vmem:[#allocation3 + $0x3d1] sm:$0xff]
  %v3763 = vld [vmem:[#allocation3 + $0x3e9] sm:$0xff]
  %v3764 = vld [vmem:[#allocation3 + $0x3f1] sm:$0xff]
  %v3765 = vld [vmem:[#allocation3 + $0x409] sm:$0xff]
  %v3766 = vld [vmem:[#allocation3 + $0x411] sm:$0xff]
  %v3767 = vld [vmem:[#allocation3 + $0x429] sm:$0xff]
  %v3768 = vld [vmem:[#allocation3 + $0x431] sm:$0xff]
  %v3769 = vld [vmem:[#allocation3 + $0x449] sm:$0xff]
  %v3770 = vld [vmem:[#allocation3 + $0x451] sm:$0xff]
  %v3771 = vld [vmem:[#allocation3 + $0x469] sm:$0xff]
  %v3772 = vld [vmem:[#allocation3 + $0x471] sm:$0xff]
  %3845 = vrot.lane.b32.xlu0 %v3629, 32
  %v3846 = vpop.permute.xlu0 %3845
  %3847 = vrot.lane.b32.xlu0 %v3630, 32
  %v3848 = vpop.permute.xlu0 %3847
  %3849 = vrot.lane.b32.xlu0 %v3631, 32
  %v3850 = vpop.permute.xlu0 %3849
  %3851 = vrot.lane.b32.xlu0 %v3632, 32
  %v3852 = vpop.permute.xlu0 %3851
  %3853 = vrot.lane.b32.xlu0 %v3633, 32
  %v3854 = vpop.permute.xlu0 %3853
  %3855 = vrot.lane.b32.xlu0 %v3634, 32
  %v3856 = vpop.permute.xlu0 %3855
  %3857 = vrot.lane.b32.xlu0 %v3635, 32
  %v3858 = vpop.permute.xlu0 %3857
  %3859 = vrot.lane.b32.xlu0 %v3636, 32
  %v3860 = vpop.permute.xlu0 %3859
  %3861 = vrot.lane.b32.xlu0 %v3637, 32
  %v3862 = vpop.permute.xlu0 %3861
  %3863 = vrot.lane.b32.xlu0 %v3638, 32
  %v3864 = vpop.permute.xlu0 %3863
  %3865 = vrot.lane.b32.xlu0 %v3639, 32
  %v3866 = vpop.permute.xlu0 %3865
  %3867 = vrot.lane.b32.xlu0 %v3640, 32
  %v3868 = vpop.permute.xlu0 %3867
  %3869 = vrot.lane.b32.xlu0 %v3641, 32
  %v3870 = vpop.permute.xlu0 %3869
  %3871 = vrot.lane.b32.xlu0 %v3642, 32
  %v3872 = vpop.permute.xlu0 %3871
  %3873 = vrot.lane.b32.xlu0 %v3643, 32
  %v3874 = vpop.permute.xlu0 %3873
  %3875 = vrot.lane.b32.xlu0 %v3644, 32
  %v3876 = vpop.permute.xlu0 %3875
  %3877 = vrot.lane.b32.xlu0 %v3645, 32
  %v3878 = vpop.permute.xlu0 %3877
  %3879 = vrot.lane.b32.xlu0 %v3646, 32
  %v3880 = vpop.permute.xlu0 %3879
  %3881 = vrot.lane.b32.xlu0 %v3647, 32
  %v3882 = vpop.permute.xlu0 %3881
  %3883 = vrot.lane.b32.xlu0 %v3648, 32
  %v3884 = vpop.permute.xlu0 %3883
  %3885 = vrot.lane.b32.xlu0 %v3649, 32
  %v3886 = vpop.permute.xlu0 %3885
  %3887 = vrot.lane.b32.xlu0 %v3650, 32
  %v3888 = vpop.permute.xlu0 %3887
  %3889 = vrot.lane.b32.xlu0 %v3651, 32
  %v3890 = vpop.permute.xlu0 %3889
  %3891 = vrot.lane.b32.xlu0 %v3652, 32
  %v3892 = vpop.permute.xlu0 %3891
  %3893 = vrot.lane.b32.xlu0 %v3653, 32
  %v3894 = vpop.permute.xlu0 %3893
  %3895 = vrot.lane.b32.xlu0 %v3654, 32
  %v3896 = vpop.permute.xlu0 %3895
  %3897 = vrot.lane.b32.xlu0 %v3655, 32
  %v3898 = vpop.permute.xlu0 %3897
  %3899 = vrot.lane.b32.xlu0 %v3656, 32
  %v3900 = vpop.permute.xlu0 %3899
  %3901 = vrot.lane.b32.xlu0 %v3657, 32
  %v3902 = vpop.permute.xlu0 %3901
  %3903 = vrot.lane.b32.xlu0 %v3658, 32
  %v3904 = vpop.permute.xlu0 %3903
  %3905 = vrot.lane.b32.xlu0 %v3659, 32
  %v3906 = vpop.permute.xlu0 %3905
  %3907 = vrot.lane.b32.xlu0 %v3660, 32
  %v3908 = vpop.permute.xlu0 %3907
  %3909 = vrot.lane.b32.xlu0 %v3661, 32
  %v3910 = vpop.permute.xlu0 %3909
  %3911 = vrot.lane.b32.xlu0 %v3662, 32
  %v3912 = vpop.permute.xlu0 %3911
  %3913 = vrot.lane.b32.xlu0 %v3663, 32
  %v3914 = vpop.permute.xlu0 %3913
  %3915 = vrot.lane.b32.xlu0 %v3664, 32
  %v3916 = vpop.permute.xlu0 %3915
  %3917 = vrot.lane.b32.xlu0 %v3665, 32
  %v3918 = vpop.permute.xlu0 %3917
  %3919 = vrot.lane.b32.xlu0 %v3666, 32
  %v3920 = vpop.permute.xlu0 %3919
  %3921 = vrot.lane.b32.xlu0 %v3667, 32
  %v3922 = vpop.permute.xlu0 %3921
  %3923 = vrot.lane.b32.xlu0 %v3668, 32
  %v3924 = vpop.permute.xlu0 %3923
  %3925 = vrot.lane.b32.xlu0 %v3669, 32
  %v3926 = vpop.permute.xlu0 %3925
  %3927 = vrot.lane.b32.xlu0 %v3670, 32
  %v3928 = vpop.permute.xlu0 %3927
  %3929 = vrot.lane.b32.xlu0 %v3671, 32
  %v3930 = vpop.permute.xlu0 %3929
  %3931 = vrot.lane.b32.xlu0 %v3672, 32
  %v3932 = vpop.permute.xlu0 %3931
  %3933 = vrot.lane.b32.xlu0 %v3673, 32
  %v3934 = vpop.permute.xlu0 %3933
  %3935 = vrot.lane.b32.xlu0 %v3674, 32
  %v3936 = vpop.permute.xlu0 %3935
  %3937 = vrot.lane.b32.xlu0 %v3675, 32
  %v3938 = vpop.permute.xlu0 %3937
  %3939 = vrot.lane.b32.xlu0 %v3676, 32
  %v3940 = vpop.permute.xlu0 %3939
  %3941 = vrot.lane.b32.xlu0 %v3677, 32
  %v3942 = vpop.permute.xlu0 %3941
  %3943 = vrot.lane.b32.xlu0 %v3678, 32
  %v3944 = vpop.permute.xlu0 %3943
  %3945 = vrot.lane.b32.xlu0 %v3679, 32
  %v3946 = vpop.permute.xlu0 %3945
  %3947 = vrot.lane.b32.xlu0 %v3680, 32
  %v3948 = vpop.permute.xlu0 %3947
  %3949 = vrot.lane.b32.xlu0 %v3681, 32
  %v3950 = vpop.permute.xlu0 %3949
  %3951 = vrot.lane.b32.xlu0 %v3682, 32
  %v3952 = vpop.permute.xlu0 %3951
  %3953 = vrot.lane.b32.xlu0 %v3683, 32
  %v3954 = vpop.permute.xlu0 %3953
  %3955 = vrot.lane.b32.xlu0 %v3684, 32
  %v3956 = vpop.permute.xlu0 %3955
  %3957 = vrot.lane.b32.xlu0 %v3685, 32
  %v3958 = vpop.permute.xlu0 %3957
  %3959 = vrot.lane.b32.xlu0 %v3686, 32
  %v3960 = vpop.permute.xlu0 %3959
  %3961 = vrot.lane.b32.xlu0 %v3687, 32
  %v3962 = vpop.permute.xlu0 %3961
  %3963 = vrot.lane.b32.xlu0 %v3688, 32
  %v3964 = vpop.permute.xlu0 %3963
  %3965 = vrot.lane.b32.xlu0 %v3689, 32
  %v3966 = vpop.permute.xlu0 %3965
  %3967 = vrot.lane.b32.xlu0 %v3690, 32
  %v3968 = vpop.permute.xlu0 %3967
  %3969 = vrot.lane.b32.xlu0 %v3691, 32
  %v3970 = vpop.permute.xlu0 %3969
  %3971 = vrot.lane.b32.xlu0 %v3692, 32
  %v3972 = vpop.permute.xlu0 %3971
  %3973 = vrot.lane.b32.xlu0 %v3693, 32
  %v3974 = vpop.permute.xlu0 %3973
  %3975 = vrot.lane.b32.xlu0 %v3694, 32
  %v3976 = vpop.permute.xlu0 %3975
  %3977 = vrot.lane.b32.xlu0 %v3695, 32
  %v3978 = vpop.permute.xlu0 %3977
  %3979 = vrot.lane.b32.xlu0 %v3696, 32
  %v3980 = vpop.permute.xlu0 %3979
  %3981 = vrot.lane.b32.xlu0 %v3697, 32
  %v3982 = vpop.permute.xlu0 %3981
  %3983 = vrot.lane.b32.xlu0 %v3698, 32
  %v3984 = vpop.permute.xlu0 %3983
  %3985 = vrot.lane.b32.xlu0 %v3699, 32
  %v3986 = vpop.permute.xlu0 %3985
  %3987 = vrot.lane.b32.xlu0 %v3700, 32
  %v3988 = vpop.permute.xlu0 %3987
  %4133 = vrot.lane.b32.xlu0 %v3701, 64
  %v4134 = vpop.permute.xlu0 %4133
  %4135 = vrot.lane.b32.xlu0 %v3702, 64
  %v4136 = vpop.permute.xlu0 %4135
  %4137 = vrot.lane.b32.xlu0 %v3703, 64
  %v4138 = vpop.permute.xlu0 %4137
  %4139 = vrot.lane.b32.xlu0 %v3704, 64
  %v4140 = vpop.permute.xlu0 %4139
  %4141 = vrot.lane.b32.xlu0 %v3705, 64
  %v4142 = vpop.permute.xlu0 %4141
  %4143 = vrot.lane.b32.xlu0 %v3706, 64
  %v4144 = vpop.permute.xlu0 %4143
  %4145 = vrot.lane.b32.xlu0 %v3707, 64
  %v4146 = vpop.permute.xlu0 %4145
  %4147 = vrot.lane.b32.xlu0 %v3708, 64
  %v4148 = vpop.permute.xlu0 %4147
  %4149 = vrot.lane.b32.xlu0 %v3709, 64
  %v4150 = vpop.permute.xlu0 %4149
  %4151 = vrot.lane.b32.xlu0 %v3710, 64
  %v4152 = vpop.permute.xlu0 %4151
  %4153 = vrot.lane.b32.xlu0 %v3711, 64
  %v4154 = vpop.permute.xlu0 %4153
  %4155 = vrot.lane.b32.xlu0 %v3712, 64
  %v4156 = vpop.permute.xlu0 %4155
  %4157 = vrot.lane.b32.xlu0 %v3713, 64
  %v4158 = vpop.permute.xlu0 %4157
  %4159 = vrot.lane.b32.xlu0 %v3714, 64
  %v4160 = vpop.permute.xlu0 %4159
  %4161 = vrot.lane.b32.xlu0 %v3715, 64
  %v4162 = vpop.permute.xlu0 %4161
  %4163 = vrot.lane.b32.xlu0 %v3716, 64
  %v4164 = vpop.permute.xlu0 %4163
  %4165 = vrot.lane.b32.xlu0 %v3717, 64
  %v4166 = vpop.permute.xlu0 %4165
  %4167 = vrot.lane.b32.xlu0 %v3718, 64
  %v4168 = vpop.permute.xlu0 %4167
  %4169 = vrot.lane.b32.xlu0 %v3719, 64
  %v4170 = vpop.permute.xlu0 %4169
  %4171 = vrot.lane.b32.xlu0 %v3720, 64
  %v4172 = vpop.permute.xlu0 %4171
  %4173 = vrot.lane.b32.xlu0 %v3721, 64
  %v4174 = vpop.permute.xlu0 %4173
  %4175 = vrot.lane.b32.xlu0 %v3722, 64
  %v4176 = vpop.permute.xlu0 %4175
  %4177 = vrot.lane.b32.xlu0 %v3723, 64
  %v4178 = vpop.permute.xlu0 %4177
  %4179 = vrot.lane.b32.xlu0 %v3724, 64
  %v4180 = vpop.permute.xlu0 %4179
  %4181 = vrot.lane.b32.xlu0 %v3725, 64
  %v4182 = vpop.permute.xlu0 %4181
  %4183 = vrot.lane.b32.xlu0 %v3726, 64
  %v4184 = vpop.permute.xlu0 %4183
  %4185 = vrot.lane.b32.xlu0 %v3727, 64
  %v4186 = vpop.permute.xlu0 %4185
  %4187 = vrot.lane.b32.xlu0 %v3728, 64
  %v4188 = vpop.permute.xlu0 %4187
  %4189 = vrot.lane.b32.xlu0 %v3729, 64
  %v4190 = vpop.permute.xlu0 %4189
  %4191 = vrot.lane.b32.xlu0 %v3730, 64
  %v4192 = vpop.permute.xlu0 %4191
  %4193 = vrot.lane.b32.xlu0 %v3731, 64
  %v4194 = vpop.permute.xlu0 %4193
  %4195 = vrot.lane.b32.xlu0 %v3732, 64
  %v4196 = vpop.permute.xlu0 %4195
  %4197 = vrot.lane.b32.xlu0 %v3733, 64
  %v4198 = vpop.permute.xlu0 %4197
  %4199 = vrot.lane.b32.xlu0 %v3734, 64
  %v4200 = vpop.permute.xlu0 %4199
  %4201 = vrot.lane.b32.xlu0 %v3735, 64
  %v4202 = vpop.permute.xlu0 %4201
  %4203 = vrot.lane.b32.xlu0 %v3736, 64
  %v4204 = vpop.permute.xlu0 %4203
  %4205 = vrot.lane.b32.xlu0 %v3737, 64
  %v4206 = vpop.permute.xlu0 %4205
  %4207 = vrot.lane.b32.xlu0 %v3738, 64
  %v4208 = vpop.permute.xlu0 %4207
  %4209 = vrot.lane.b32.xlu0 %v3739, 64
  %v4210 = vpop.permute.xlu0 %4209
  %4211 = vrot.lane.b32.xlu0 %v3740, 64
  %v4212 = vpop.permute.xlu0 %4211
  %4213 = vrot.lane.b32.xlu0 %v3741, 64
  %v4214 = vpop.permute.xlu0 %4213
  %4215 = vrot.lane.b32.xlu0 %v3742, 64
  %v4216 = vpop.permute.xlu0 %4215
  %4217 = vrot.lane.b32.xlu0 %v3743, 64
  %v4218 = vpop.permute.xlu0 %4217
  %4219 = vrot.lane.b32.xlu0 %v3744, 64
  %v4220 = vpop.permute.xlu0 %4219
  %4221 = vrot.lane.b32.xlu0 %v3745, 64
  %v4222 = vpop.permute.xlu0 %4221
  %4223 = vrot.lane.b32.xlu0 %v3746, 64
  %v4224 = vpop.permute.xlu0 %4223
  %4225 = vrot.lane.b32.xlu0 %v3747, 64
  %v4226 = vpop.permute.xlu0 %4225
  %4227 = vrot.lane.b32.xlu0 %v3748, 64
  %v4228 = vpop.permute.xlu0 %4227
  %4229 = vrot.lane.b32.xlu0 %v3749, 64
  %v4230 = vpop.permute.xlu0 %4229
  %4231 = vrot.lane.b32.xlu0 %v3750, 64
  %v4232 = vpop.permute.xlu0 %4231
  %4233 = vrot.lane.b32.xlu0 %v3751, 64
  %v4234 = vpop.permute.xlu0 %4233
  %4235 = vrot.lane.b32.xlu0 %v3752, 64
  %v4236 = vpop.permute.xlu0 %4235
  %4237 = vrot.lane.b32.xlu0 %v3753, 64
  %v4238 = vpop.permute.xlu0 %4237
  %4239 = vrot.lane.b32.xlu0 %v3754, 64
  %v4240 = vpop.permute.xlu0 %4239
  %4241 = vrot.lane.b32.xlu0 %v3755, 64
  %v4242 = vpop.permute.xlu0 %4241
  %4243 = vrot.lane.b32.xlu0 %v3756, 64
  %v4244 = vpop.permute.xlu0 %4243
  %4245 = vrot.lane.b32.xlu0 %v3757, 64
  %v4246 = vpop.permute.xlu0 %4245
  %4247 = vrot.lane.b32.xlu0 %v3758, 64
  %v4248 = vpop.permute.xlu0 %4247
  %4249 = vrot.lane.b32.xlu0 %v3759, 64
  %v4250 = vpop.permute.xlu0 %4249
  %4251 = vrot.lane.b32.xlu0 %v3760, 64
  %v4252 = vpop.permute.xlu0 %4251
  %4253 = vrot.lane.b32.xlu0 %v3761, 64
  %v4254 = vpop.permute.xlu0 %4253
  %4255 = vrot.lane.b32.xlu0 %v3762, 64
  %v4256 = vpop.permute.xlu0 %4255
  %4257 = vrot.lane.b32.xlu0 %v3763, 64
  %v4258 = vpop.permute.xlu0 %4257
  %4259 = vrot.lane.b32.xlu0 %v3764, 64
  %v4260 = vpop.permute.xlu0 %4259
  %4261 = vrot.lane.b32.xlu0 %v3765, 64
  %v4262 = vpop.permute.xlu0 %4261
  %4263 = vrot.lane.b32.xlu0 %v3766, 64
  %v4264 = vpop.permute.xlu0 %4263
  %4265 = vrot.lane.b32.xlu0 %v3767, 64
  %v4266 = vpop.permute.xlu0 %4265
  %4267 = vrot.lane.b32.xlu0 %v3768, 64
  %v4268 = vpop.permute.xlu0 %4267
  %4269 = vrot.lane.b32.xlu0 %v3769, 64
  %v4270 = vpop.permute.xlu0 %4269
  %4271 = vrot.lane.b32.xlu0 %v3770, 64
  %v4272 = vpop.permute.xlu0 %4271
  %4273 = vrot.lane.b32.xlu0 %v3771, 64
  %v4274 = vpop.permute.xlu0 %4273
  %4275 = vrot.lane.b32.xlu0 %v3772, 64
  %v4276 = vpop.permute.xlu0 %4275
  %v4349 = vsel %vm141, %v3557, %v3846
  %v4350 = vsel %vm141, %v3558, %v3848
  %v4351 = vsel %vm141, %v3559, %v3850
  %v4352 = vsel %vm141, %v3560, %v3852
  %v4353 = vsel %vm141, %v3561, %v3854
  %v4354 = vsel %vm141, %v3562, %v3856
  %v4355 = vsel %vm141, %v3563, %v3858
  %v4356 = vsel %vm141, %v3564, %v3860
  %v4357 = vsel %vm141, %v3565, %v3862
  %v4358 = vsel %vm141, %v3566, %v3864
  %v4359 = vsel %vm141, %v3567, %v3866
  %v4360 = vsel %vm141, %v3568, %v3868
  %v4361 = vsel %vm141, %v3569, %v3870
  %v4362 = vsel %vm141, %v3570, %v3872
  %v4363 = vsel %vm141, %v3571, %v3874
  %v4364 = vsel %vm141, %v3572, %v3876
  %v4365 = vsel %vm141, %v3573, %v3878
  %v4366 = vsel %vm141, %v3574, %v3880
  %v4367 = vsel %vm141, %v3575, %v3882
  %v4368 = vsel %vm141, %v3576, %v3884
  %v4369 = vsel %vm141, %v3577, %v3886
  %v4370 = vsel %vm141, %v3578, %v3888
  %v4371 = vsel %vm141, %v3579, %v3890
  %v4372 = vsel %vm141, %v3580, %v3892
  %v4373 = vsel %vm141, %v3581, %v3894
  %v4374 = vsel %vm141, %v3582, %v3896
  %v4375 = vsel %vm141, %v3583, %v3898
  %v4376 = vsel %vm141, %v3584, %v3900
  %v4377 = vsel %vm141, %v3585, %v3902
  %v4378 = vsel %vm141, %v3586, %v3904
  %v4379 = vsel %vm141, %v3587, %v3906
  %v4380 = vsel %vm141, %v3588, %v3908
  %v4381 = vsel %vm141, %v3589, %v3910
  %v4382 = vsel %vm141, %v3590, %v3912
  %v4383 = vsel %vm141, %v3591, %v3914
  %v4384 = vsel %vm141, %v3592, %v3916
  %v4385 = vsel %vm141, %v3593, %v3918
  %v4386 = vsel %vm141, %v3594, %v3920
  %v4387 = vsel %vm141, %v3595, %v3922
  %v4388 = vsel %vm141, %v3596, %v3924
  %v4389 = vsel %vm141, %v3597, %v3926
  %v4390 = vsel %vm141, %v3598, %v3928
  %v4391 = vsel %vm141, %v3599, %v3930
  %v4392 = vsel %vm141, %v3600, %v3932
  %v4393 = vsel %vm141, %v3601, %v3934
  %v4394 = vsel %vm141, %v3602, %v3936
  %v4395 = vsel %vm141, %v3603, %v3938
  %v4396 = vsel %vm141, %v3604, %v3940
  %v4397 = vsel %vm141, %v3605, %v3942
  %v4398 = vsel %vm141, %v3606, %v3944
  %v4399 = vsel %vm141, %v3607, %v3946
  %v4400 = vsel %vm141, %v3608, %v3948
  %v4401 = vsel %vm141, %v3609, %v3950
  %v4402 = vsel %vm141, %v3610, %v3952
  %v4403 = vsel %vm141, %v3611, %v3954
  %v4404 = vsel %vm141, %v3612, %v3956
  %v4405 = vsel %vm141, %v3613, %v3958
  %v4406 = vsel %vm141, %v3614, %v3960
  %v4407 = vsel %vm141, %v3615, %v3962
  %v4408 = vsel %vm141, %v3616, %v3964
  %v4409 = vsel %vm141, %v3617, %v3966
  %v4410 = vsel %vm141, %v3618, %v3968
  %v4411 = vsel %vm141, %v3619, %v3970
  %v4412 = vsel %vm141, %v3620, %v3972
  %v4413 = vsel %vm141, %v3621, %v3974
  %v4414 = vsel %vm141, %v3622, %v3976
  %v4415 = vsel %vm141, %v3623, %v3978
  %v4416 = vsel %vm141, %v3624, %v3980
  %v4417 = vsel %vm141, %v3625, %v3982
  %v4418 = vsel %vm141, %v3626, %v3984
  %v4419 = vsel %vm141, %v3627, %v3986
  %v4420 = vsel %vm141, %v3628, %v3988
  %vm4421 = vcmask 523264
  %v4422 = vsel %vm4421, %v4349, %v4134
  %v4423 = vsel %vm4421, %v4350, %v4136
  %v4424 = vsel %vm4421, %v4351, %v4138
  %v4425 = vsel %vm4421, %v4352, %v4140
  %v4426 = vsel %vm4421, %v4353, %v4142
  %v4427 = vsel %vm4421, %v4354, %v4144
  %v4428 = vsel %vm4421, %v4355, %v4146
  %v4429 = vsel %vm4421, %v4356, %v4148
  %v4430 = vsel %vm4421, %v4357, %v4150
  %v4431 = vsel %vm4421, %v4358, %v4152
  %v4432 = vsel %vm4421, %v4359, %v4154
  %v4433 = vsel %vm4421, %v4360, %v4156
  %v4434 = vsel %vm4421, %v4361, %v4158
  %v4435 = vsel %vm4421, %v4362, %v4160
  %v4436 = vsel %vm4421, %v4363, %v4162
  %v4437 = vsel %vm4421, %v4364, %v4164
  %v4438 = vsel %vm4421, %v4365, %v4166
  %v4439 = vsel %vm4421, %v4366, %v4168
  %v4440 = vsel %vm4421, %v4367, %v4170
  %v4441 = vsel %vm4421, %v4368, %v4172
  %v4442 = vsel %vm4421, %v4369, %v4174
  %v4443 = vsel %vm4421, %v4370, %v4176
  %v4444 = vsel %vm4421, %v4371, %v4178
  %v4445 = vsel %vm4421, %v4372, %v4180
  %v4446 = vsel %vm4421, %v4373, %v4182
  %v4447 = vsel %vm4421, %v4374, %v4184
  %v4448 = vsel %vm4421, %v4375, %v4186
  %v4449 = vsel %vm4421, %v4376, %v4188
  %v4450 = vsel %vm4421, %v4377, %v4190
  %v4451 = vsel %vm4421, %v4378, %v4192
  %v4452 = vsel %vm4421, %v4379, %v4194
  %v4453 = vsel %vm4421, %v4380, %v4196
  %v4454 = vsel %vm4421, %v4381, %v4198
  %v4455 = vsel %vm4421, %v4382, %v4200
  %v4456 = vsel %vm4421, %v4383, %v4202
  %v4457 = vsel %vm4421, %v4384, %v4204
  %v4458 = vsel %vm4421, %v4385, %v4206
  %v4459 = vsel %vm4421, %v4386, %v4208
  %v4460 = vsel %vm4421, %v4387, %v4210
  %v4461 = vsel %vm4421, %v4388, %v4212
  %v4462 = vsel %vm4421, %v4389, %v4214
  %v4463 = vsel %vm4421, %v4390, %v4216
  %v4464 = vsel %vm4421, %v4391, %v4218
  %v4465 = vsel %vm4421, %v4392, %v4220
  %v4466 = vsel %vm4421, %v4393, %v4222
  %v4467 = vsel %vm4421, %v4394, %v4224
  %v4468 = vsel %vm4421, %v4395, %v4226
  %v4469 = vsel %vm4421, %v4396, %v4228
  %v4470 = vsel %vm4421, %v4397, %v4230
  %v4471 = vsel %vm4421, %v4398, %v4232
  %v4472 = vsel %vm4421, %v4399, %v4234
  %v4473 = vsel %vm4421, %v4400, %v4236
  %v4474 = vsel %vm4421, %v4401, %v4238
  %v4475 = vsel %vm4421, %v4402, %v4240
  %v4476 = vsel %vm4421, %v4403, %v4242
  %v4477 = vsel %vm4421, %v4404, %v4244
  %v4478 = vsel %vm4421, %v4405, %v4246
  %v4479 = vsel %vm4421, %v4406, %v4248
  %v4480 = vsel %vm4421, %v4407, %v4250
  %v4481 = vsel %vm4421, %v4408, %v4252
  %v4482 = vsel %vm4421, %v4409, %v4254
  %v4483 = vsel %vm4421, %v4410, %v4256
  %v4484 = vsel %vm4421, %v4411, %v4258
  %v4485 = vsel %vm4421, %v4412, %v4260
  %v4486 = vsel %vm4421, %v4413, %v4262
  %v4487 = vsel %vm4421, %v4414, %v4264
  %v4488 = vsel %vm4421, %v4415, %v4266
  %v4489 = vsel %vm4421, %v4416, %v4268
  %v4490 = vsel %vm4421, %v4417, %v4270
  %v4491 = vsel %vm4421, %v4418, %v4272
  %v4492 = vsel %vm4421, %v4419, %v4274
  %v4493 = vsel %vm4421, %v4420, %v4276
  %v4494 = vld [vmem:[%s5] sm:$0xff]
  %v4495 = vld [vmem:[%s5 + $0x8] sm:$0xff]
  %v4496 = vld [vmem:[%s5 + $0x10] sm:$0xff]
  %v4497 = vld [vmem:[%s5 + $0x18] sm:$0xff]
  %v4498 = vld [vmem:[%s5 + $0x20] sm:$0xff]
  %v4499 = vld [vmem:[%s5 + $0x28] sm:$0xff]
  %v4500 = vld [vmem:[%s5 + $0x30] sm:$0xff]
  %v4501 = vld [vmem:[%s5 + $0x38] sm:$0xff]
  %v4502 = vld [vmem:[%s5 + $0x40] sm:$0xff]
  %v4503 = vld [vmem:[%s5 + $0x48] sm:$0xff]
  %v4504 = vld [vmem:[%s5 + $0x50] sm:$0xff]
  %v4505 = vld [vmem:[%s5 + $0x58] sm:$0xff]
  %s4506 = scalar_lea.vmem %s5, 96
  %v4507 = vld [vmem:[%s4506] sm:$0xff]
  %v4508 = vld [vmem:[%s4506 + $0x8] sm:$0xff]
  %v4509 = vld [vmem:[%s4506 + $0x10] sm:$0xff]
  %v4510 = vld [vmem:[%s4506 + $0x18] sm:$0xff]
  %v4511 = vld [vmem:[%s4506 + $0x20] sm:$0xff]
  %v4512 = vld [vmem:[%s4506 + $0x28] sm:$0xff]
  %v4513 = vld [vmem:[%s4506 + $0x30] sm:$0xff]
  %v4514 = vld [vmem:[%s4506 + $0x38] sm:$0xff]
  %v4515 = vld [vmem:[%s4506 + $0x40] sm:$0xff]
  %v4516 = vld [vmem:[%s4506 + $0x48] sm:$0xff]
  %v4517 = vld [vmem:[%s4506 + $0x50] sm:$0xff]
  %v4518 = vld [vmem:[%s4506 + $0x58] sm:$0xff]
  %vm4519 = vcmask 785408
  %v4521 = vsel %vm4519, %v4424, 0
  %v4524 = vsel %vm4519, %v4425, 0
  %v4527 = vsel %vm4519, %v4426, 0
  %v4530 = vsel %vm4519, %v4427, 0
  %v4533 = vsel %vm4519, %v4428, 0
  %v4536 = vsel %vm4519, %v4429, 0
  %v4539 = vsel %vm4519, %v4430, 0
  %v4542 = vsel %vm4519, %v4431, 0
  %v4545 = vsel %vm4519, %v4432, 0
  %v4548 = vsel %vm4519, %v4433, 0
  %v4551 = vsel %vm4519, %v4434, 0
  %v4554 = vsel %vm4519, %v4435, 0
  %v4557 = vsel %vm4519, %v4436, 0
  %v4560 = vsel %vm4519, %v4437, 0
  %v4563 = vsel %vm4519, %v4438, 0
  %v4566 = vsel %vm4519, %v4439, 0
  %v4569 = vsel %vm4519, %v4440, 0
  %v4572 = vsel %vm4519, %v4441, 0
  %v4575 = vsel %vm4519, %v4442, 0
  %v4578 = vsel %vm4519, %v4443, 0
  %v4581 = vsel %vm4519, %v4444, 0
  %v4584 = vsel %vm4519, %v4445, 0
  %v4587 = vsel %vm4519, %v4446, 0
  %v4590 = vsel %vm4519, %v4447, 0
  %v4593 = vsel %vm4519, %v4448, 0
  %v4596 = vsel %vm4519, %v4449, 0
  %v4599 = vsel %vm4519, %v4450, 0
  %v4602 = vsel %vm4519, %v4451, 0
  %v4605 = vsel %vm4519, %v4452, 0
  %v4608 = vsel %vm4519, %v4453, 0
  %v4611 = vsel %vm4519, %v4454, 0
  %v4614 = vsel %vm4519, %v4455, 0
  %v4617 = vsel %vm4519, %v4460, 0
  %v4620 = vsel %vm4519, %v4461, 0
  %v4623 = vsel %vm4519, %v4462, 0
  %v4626 = vsel %vm4519, %v4463, 0
  %v4629 = vsel %vm4519, %v4464, 0
  %v4632 = vsel %vm4519, %v4465, 0
  %v4635 = vsel %vm4519, %v4466, 0
  %v4638 = vsel %vm4519, %v4467, 0
  %v4641 = vsel %vm4519, %v4468, 0
  %v4644 = vsel %vm4519, %v4469, 0
  %v4647 = vsel %vm4519, %v4470, 0
  %v4650 = vsel %vm4519, %v4471, 0
  %v4653 = vsel %vm4519, %v4472, 0
  %v4656 = vsel %vm4519, %v4473, 0
  %v4659 = vsel %vm4519, %v4474, 0
  %v4662 = vsel %vm4519, %v4475, 0
  %v4665 = vsel %vm4519, %v4476, 0
  %v4668 = vsel %vm4519, %v4477, 0
  %v4671 = vsel %vm4519, %v4478, 0
  %v4674 = vsel %vm4519, %v4479, 0
  %v4677 = vsel %vm4519, %v4480, 0
  %v4680 = vsel %vm4519, %v4481, 0
  %v4683 = vsel %vm4519, %v4482, 0
  %v4686 = vsel %vm4519, %v4483, 0
  %v4689 = vsel %vm4519, %v4484, 0
  %v4692 = vsel %vm4519, %v4485, 0
  %v4695 = vsel %vm4519, %v4486, 0
  %v4698 = vsel %vm4519, %v4487, 0
  %v4701 = vsel %vm4519, %v4488, 0
  %v4704 = vsel %vm4519, %v4489, 0
  %v4707 = vsel %vm4519, %v4490, 0
  %v4710 = vsel %vm4519, %v4491, 0
  %4712 = vmatprep.subr.mxu0 0.0
  %4713 = vmatpush1.msra.mxu0 0.0
  %4714 = vmatprep.subr.mxu0 0.0
  %4715 = vmatpush1.msra.mxu0 0.0
  %4716 = vmatprep.subr.mxu0 0.0
  %4717 = vmatpush1.msra.mxu0 0.0
  %4718 = vmatprep.subr.mxu0 0.0
  %4719 = vmatpush1.msra.mxu0 0.0
  %4720 = vmatprep.subr.mxu0 0.0
  %4721 = vmatpush1.msra.mxu0 %v4518
  %4722 = vmatprep.subr.mxu0 0.0
  %4723 = vmatpush1.msra.mxu0 %v4517
  %4724 = vmatprep.subr.mxu0 0.0
  %4725 = vmatpush1.msra.mxu0 %v4516
  %4726 = vmatprep.subr.mxu0 0.0
  %4727 = vmatpush1.msra.mxu0 %v4515
  %4728 = vmatprep.subr.mxu0 0.0
  %4729 = vmatpush1.msra.mxu0 %v4514
  %4730 = vmatprep.subr.mxu0 0.0
  %4731 = vmatpush1.msra.mxu0 %v4513
  %4732 = vmatprep.subr.mxu0 0.0
  %4733 = vmatpush1.msra.mxu0 %v4512
  %4734 = vmatprep.subr.mxu0 0.0
  %4735 = vmatpush1.msra.mxu0 %v4511
  %4736 = vmatprep.subr.mxu0 0.0
  %4737 = vmatpush1.msra.mxu0 %v4510
  %4738 = vmatprep.subr.mxu0 0.0
  %4739 = vmatpush1.msra.mxu0 %v4509
  %4740 = vmatprep.subr.mxu0 0.0
  %4741 = vmatpush1.msra.mxu0 %v4508
  %4742 = vmatprep.subr.mxu0 0.0
  %4743 = vmatpush1.msra.mxu0 %v4507
  %4744 = vmatprep.subr.mxu0 0.0
  %4745 = vmatpush2.msra.mxu0 0.0
  %4746 = vmatprep.subr.mxu0 0.0
  %4747 = vmatpush2.msra.mxu0 0.0
  %4748 = vmatprep.subr.mxu0 0.0
  %4749 = vmatpush2.msra.mxu0 0.0
  %4750 = vmatprep.subr.mxu0 0.0
  %4751 = vmatpush2.msra.mxu0 0.0
  %4752 = vmatprep.subr.mxu0 0.0
  %4753 = vmatpush2.msra.mxu0 0.0
  %4754 = vmatprep.subr.mxu0 0.0
  %4755 = vmatpush2.msra.mxu0 0.0
  %4756 = vmatprep.subr.mxu0 0.0
  %4757 = vmatpush2.msra.mxu0 0.0
  %4758 = vmatprep.subr.mxu0 0.0
  %4759 = vmatpush2.msra.mxu0 0.0
  %4760 = vmatprep.subr.mxu0 0.0
  %4761 = vmatpush2.msra.mxu0 0.0
  %4762 = vmatprep.subr.mxu0 0.0
  %4763 = vmatpush2.msra.mxu0 0.0
  %4764 = vmatprep.subr.mxu0 0.0
  %4765 = vmatpush2.msra.mxu0 0.0
  %4766 = vmatprep.subr.mxu0 0.0
  %4767 = vmatpush2.msra.mxu0 0.0
  %4768 = vmatprep.subr.mxu0 0.0
  %4769 = vmatpush2.msra.mxu0 0.0
  %4770 = vmatprep.subr.mxu0 0.0
  %4771 = vmatpush2.msra.mxu0 0.0
  %4772 = vmatprep.subr.mxu0 0.0
  %4773 = vmatpush2.msra.mxu0 0.0
  %4774 = vmatprep.subr.mxu0 0.0
  %4775 = vmatpush2.msra.mxu0 0.0
  %4776 = vmatprep.mubr.f32.mxu0 0.0
  %4777 = vmatmul.mubr.f32.gmra.mxu0 %v4521
  %v4778 = vpop.f32.mrf.mxu0
  %v4779 = vadd.f32 0.0, %v4778
  %v4780 = vpop.f32.mrf.mxu0
  %4781 = vmatprep.mubr.f32.mxu0 0.0
  %4782 = vmatmul.mubr.f32.gmra.mxu0 %v4524
  %v4783 = vpop.f32.mrf.mxu0
  %v4784 = vadd.f32 0.0, %v4783
  %v4785 = vpop.f32.mrf.mxu0
  %4786 = vmatprep.mubr.f32.mxu0 0.0
  %4787 = vmatmul.mubr.f32.gmra.mxu0 %v4527
  %v4788 = vpop.f32.mrf.mxu0
  %v4789 = vadd.f32 0.0, %v4788
  %v4790 = vpop.f32.mrf.mxu0
  %4791 = vmatprep.mubr.f32.mxu0 0.0
  %4792 = vmatmul.mubr.f32.gmra.mxu0 %v4530
  %v4793 = vpop.f32.mrf.mxu0
  %v4794 = vadd.f32 0.0, %v4793
  %v4795 = vpop.f32.mrf.mxu0
  %4796 = vmatprep.mubr.f32.mxu0 0.0
  %4797 = vmatmul.mubr.f32.gmra.mxu0 %v4533
  %v4798 = vpop.f32.mrf.mxu0
  %v4799 = vadd.f32 0.0, %v4798
  %v4800 = vpop.f32.mrf.mxu0
  %4801 = vmatprep.mubr.f32.mxu0 0.0
  %4802 = vmatmul.mubr.f32.gmra.mxu0 %v4536
  %v4803 = vpop.f32.mrf.mxu0
  %v4804 = vadd.f32 0.0, %v4803
  %v4805 = vpop.f32.mrf.mxu0
  %4806 = vmatprep.mubr.f32.mxu0 0.0
  %4807 = vmatmul.mubr.f32.gmra.mxu0 %v4539
  %v4808 = vpop.f32.mrf.mxu0
  %v4809 = vadd.f32 0.0, %v4808
  %v4810 = vpop.f32.mrf.mxu0
  %4811 = vmatprep.mubr.f32.mxu0 0.0
  %4812 = vmatmul.mubr.f32.gmra.mxu0 %v4542
  %v4813 = vpop.f32.mrf.mxu0
  %v4814 = vadd.f32 0.0, %v4813
  %v4815 = vpop.f32.mrf.mxu0
  %4816 = vmatprep.mubr.f32.mxu0 0.0
  %4817 = vmatmul.mubr.f32.gmra.mxu0 %v4545
  %v4818 = vpop.f32.mrf.mxu0
  %v4819 = vadd.f32 0.0, %v4818
  %v4820 = vpop.f32.mrf.mxu0
  %4821 = vmatprep.mubr.f32.mxu0 0.0
  %4822 = vmatmul.mubr.f32.gmra.mxu0 %v4548
  %v4823 = vpop.f32.mrf.mxu0
  %v4824 = vadd.f32 0.0, %v4823
  %v4825 = vpop.f32.mrf.mxu0
  %4826 = vmatprep.mubr.f32.mxu0 0.0
  %4827 = vmatmul.mubr.f32.gmra.mxu0 %v4551
  %v4828 = vpop.f32.mrf.mxu0
  %v4829 = vadd.f32 0.0, %v4828
  %v4830 = vpop.f32.mrf.mxu0
  %4831 = vmatprep.mubr.f32.mxu0 0.0
  %4832 = vmatmul.mubr.f32.gmra.mxu0 %v4554
  %v4833 = vpop.f32.mrf.mxu0
  %v4834 = vadd.f32 0.0, %v4833
  %v4835 = vpop.f32.mrf.mxu0
  %4836 = vmatprep.mubr.f32.mxu0 0.0
  %4837 = vmatmul.mubr.f32.gmra.mxu0 %v4557
  %v4838 = vpop.f32.mrf.mxu0
  %v4839 = vadd.f32 0.0, %v4838
  %v4840 = vpop.f32.mrf.mxu0
  %4841 = vmatprep.mubr.f32.mxu0 0.0
  %4842 = vmatmul.mubr.f32.gmra.mxu0 %v4560
  %v4843 = vpop.f32.mrf.mxu0
  %v4844 = vadd.f32 0.0, %v4843
  %v4845 = vpop.f32.mrf.mxu0
  %4846 = vmatprep.mubr.f32.mxu0 0.0
  %4847 = vmatmul.mubr.f32.gmra.mxu0 %v4563
  %v4848 = vpop.f32.mrf.mxu0
  %v4849 = vadd.f32 0.0, %v4848
  %v4850 = vpop.f32.mrf.mxu0
  %4851 = vmatprep.mubr.f32.mxu0 0.0
  %4852 = vmatmul.mubr.f32.gmra.mxu0 %v4566
  %v4853 = vpop.f32.mrf.mxu0
  %v4854 = vadd.f32 0.0, %v4853
  %v4855 = vpop.f32.mrf.mxu0
  %4856 = vmatprep.mubr.f32.mxu0 0.0
  %4857 = vmatmul.mubr.f32.gmra.mxu0 %v4569
  %v4858 = vpop.f32.mrf.mxu0
  %v4859 = vadd.f32 0.0, %v4858
  %v4860 = vpop.f32.mrf.mxu0
  %4861 = vmatprep.mubr.f32.mxu0 0.0
  %4862 = vmatmul.mubr.f32.gmra.mxu0 %v4572
  %v4863 = vpop.f32.mrf.mxu0
  %v4864 = vadd.f32 0.0, %v4863
  %v4865 = vpop.f32.mrf.mxu0
  %4866 = vmatprep.mubr.f32.mxu0 0.0
  %4867 = vmatmul.mubr.f32.gmra.mxu0 %v4575
  %v4868 = vpop.f32.mrf.mxu0
  %v4869 = vadd.f32 0.0, %v4868
  %v4870 = vpop.f32.mrf.mxu0
  %4871 = vmatprep.mubr.f32.mxu0 0.0
  %4872 = vmatmul.mubr.f32.gmra.mxu0 %v4578
  %v4873 = vpop.f32.mrf.mxu0
  %v4874 = vadd.f32 0.0, %v4873
  %v4875 = vpop.f32.mrf.mxu0
  %4876 = vmatprep.mubr.f32.mxu0 0.0
  %4877 = vmatmul.mubr.f32.gmra.mxu0 %v4581
  %v4878 = vpop.f32.mrf.mxu0
  %v4879 = vadd.f32 0.0, %v4878
  %v4880 = vpop.f32.mrf.mxu0
  %4881 = vmatprep.mubr.f32.mxu0 0.0
  %4882 = vmatmul.mubr.f32.gmra.mxu0 %v4584
  %v4883 = vpop.f32.mrf.mxu0
  %v4884 = vadd.f32 0.0, %v4883
  %v4885 = vpop.f32.mrf.mxu0
  %4886 = vmatprep.mubr.f32.mxu0 0.0
  %4887 = vmatmul.mubr.f32.gmra.mxu0 %v4587
  %v4888 = vpop.f32.mrf.mxu0
  %v4889 = vadd.f32 0.0, %v4888
  %v4890 = vpop.f32.mrf.mxu0
  %4891 = vmatprep.mubr.f32.mxu0 0.0
  %4892 = vmatmul.mubr.f32.gmra.mxu0 %v4590
  %v4893 = vpop.f32.mrf.mxu0
  %v4894 = vadd.f32 0.0, %v4893
  %v4895 = vpop.f32.mrf.mxu0
  %4896 = vmatprep.mubr.f32.mxu0 0.0
  %4897 = vmatmul.mubr.f32.gmra.mxu0 %v4593
  %v4898 = vpop.f32.mrf.mxu0
  %v4899 = vadd.f32 0.0, %v4898
  %v4900 = vpop.f32.mrf.mxu0
  %4901 = vmatprep.mubr.f32.mxu0 0.0
  %4902 = vmatmul.mubr.f32.gmra.mxu0 %v4596
  %v4903 = vpop.f32.mrf.mxu0
  %v4904 = vadd.f32 0.0, %v4903
  %v4905 = vpop.f32.mrf.mxu0
  %4906 = vmatprep.mubr.f32.mxu0 0.0
  %4907 = vmatmul.mubr.f32.gmra.mxu0 %v4599
  %v4908 = vpop.f32.mrf.mxu0
  %v4909 = vadd.f32 0.0, %v4908
  %v4910 = vpop.f32.mrf.mxu0
  %4911 = vmatprep.mubr.f32.mxu0 0.0
  %4912 = vmatmul.mubr.f32.gmra.mxu0 %v4602
  %v4913 = vpop.f32.mrf.mxu0
  %v4914 = vadd.f32 0.0, %v4913
  %v4915 = vpop.f32.mrf.mxu0
  %4916 = vmatprep.mubr.f32.mxu0 0.0
  %4917 = vmatmul.mubr.f32.gmra.mxu0 %v4605
  %v4918 = vpop.f32.mrf.mxu0
  %v4919 = vadd.f32 0.0, %v4918
  %v4920 = vpop.f32.mrf.mxu0
  %4921 = vmatprep.mubr.f32.mxu0 0.0
  %4922 = vmatmul.mubr.f32.gmra.mxu0 %v4608
  %v4923 = vpop.f32.mrf.mxu0
  %v4924 = vadd.f32 0.0, %v4923
  %v4925 = vpop.f32.mrf.mxu0
  %4926 = vmatprep.mubr.f32.mxu0 0.0
  %4927 = vmatmul.mubr.f32.gmra.mxu0 %v4611
  %v4928 = vpop.f32.mrf.mxu0
  %v4929 = vadd.f32 0.0, %v4928
  %v4930 = vpop.f32.mrf.mxu0
  %4931 = vmatprep.mubr.f32.mxu0 0.0
  %4932 = vmatmul.mubr.f32.gmra.mxu0 %v4614
  %v4933 = vpop.f32.mrf.mxu0
  %v4934 = vadd.f32 0.0, %v4933
  %v4935 = vpop.f32.mrf.mxu0
  %4936 = vmatprep.mubr.f32.mxu0 0.0
  %4937 = vmatmul.mubr.f32.gmra.mxu0 %v4617
  %v4938 = vpop.f32.mrf.mxu0
  %v4939 = vadd.f32 0.0, %v4938
  %v4940 = vpop.f32.mrf.mxu0
  %4941 = vmatprep.mubr.f32.mxu0 0.0
  %4942 = vmatmul.mubr.f32.gmra.mxu0 %v4620
  %v4943 = vpop.f32.mrf.mxu0
  %v4944 = vadd.f32 0.0, %v4943
  %v4945 = vpop.f32.mrf.mxu0
  %4946 = vmatprep.mubr.f32.mxu0 0.0
  %4947 = vmatmul.mubr.f32.gmra.mxu0 %v4623
  %v4948 = vpop.f32.mrf.mxu0
  %v4949 = vadd.f32 0.0, %v4948
  %v4950 = vpop.f32.mrf.mxu0
  %4951 = vmatprep.mubr.f32.mxu0 0.0
  %4952 = vmatmul.mubr.f32.gmra.mxu0 %v4626
  %v4953 = vpop.f32.mrf.mxu0
  %v4954 = vadd.f32 0.0, %v4953
  %v4955 = vpop.f32.mrf.mxu0
  %4956 = vmatprep.mubr.f32.mxu0 0.0
  %4957 = vmatmul.mubr.f32.gmra.mxu0 %v4629
  %v4958 = vpop.f32.mrf.mxu0
  %v4959 = vadd.f32 0.0, %v4958
  %v4960 = vpop.f32.mrf.mxu0
  %4961 = vmatprep.mubr.f32.mxu0 0.0
  %4962 = vmatmul.mubr.f32.gmra.mxu0 %v4632
  %v4963 = vpop.f32.mrf.mxu0
  %v4964 = vadd.f32 0.0, %v4963
  %v4965 = vpop.f32.mrf.mxu0
  %4966 = vmatprep.mubr.f32.mxu0 0.0
  %4967 = vmatmul.mubr.f32.gmra.mxu0 %v4635
  %v4968 = vpop.f32.mrf.mxu0
  %v4969 = vadd.f32 0.0, %v4968
  %v4970 = vpop.f32.mrf.mxu0
  %4971 = vmatprep.mubr.f32.mxu0 0.0
  %4972 = vmatmul.mubr.f32.gmra.mxu0 %v4638
  %v4973 = vpop.f32.mrf.mxu0
  %v4974 = vadd.f32 0.0, %v4973
  %v4975 = vpop.f32.mrf.mxu0
  %4976 = vmatprep.mubr.f32.mxu0 0.0
  %4977 = vmatmul.mubr.f32.gmra.mxu0 %v4641
  %v4978 = vpop.f32.mrf.mxu0
  %v4979 = vadd.f32 0.0, %v4978
  %v4980 = vpop.f32.mrf.mxu0
  %4981 = vmatprep.mubr.f32.mxu0 0.0
  %4982 = vmatmul.mubr.f32.gmra.mxu0 %v4644
  %v4983 = vpop.f32.mrf.mxu0
  %v4984 = vadd.f32 0.0, %v4983
  %v4985 = vpop.f32.mrf.mxu0
  %4986 = vmatprep.mubr.f32.mxu0 0.0
  %4987 = vmatmul.mubr.f32.gmra.mxu0 %v4647
  %v4988 = vpop.f32.mrf.mxu0
  %v4989 = vadd.f32 0.0, %v4988
  %v4990 = vpop.f32.mrf.mxu0
  %4991 = vmatprep.mubr.f32.mxu0 0.0
  %4992 = vmatmul.mubr.f32.gmra.mxu0 %v4650
  %v4993 = vpop.f32.mrf.mxu0
  %v4994 = vadd.f32 0.0, %v4993
  %v4995 = vpop.f32.mrf.mxu0
  %4996 = vmatprep.mubr.f32.mxu0 0.0
  %4997 = vmatmul.mubr.f32.gmra.mxu0 %v4653
  %v4998 = vpop.f32.mrf.mxu0
  %v4999 = vadd.f32 0.0, %v4998
  %v5000 = vpop.f32.mrf.mxu0
  %5001 = vmatprep.mubr.f32.mxu0 0.0
  %5002 = vmatmul.mubr.f32.gmra.mxu0 %v4656
  %v5003 = vpop.f32.mrf.mxu0
  %v5004 = vadd.f32 0.0, %v5003
  %v5005 = vpop.f32.mrf.mxu0
  %5006 = vmatprep.mubr.f32.mxu0 0.0
  %5007 = vmatmul.mubr.f32.gmra.mxu0 %v4659
  %v5008 = vpop.f32.mrf.mxu0
  %v5009 = vadd.f32 0.0, %v5008
  %v5010 = vpop.f32.mrf.mxu0
  %5011 = vmatprep.mubr.f32.mxu0 0.0
  %5012 = vmatmul.mubr.f32.gmra.mxu0 %v4662
  %v5013 = vpop.f32.mrf.mxu0
  %v5014 = vadd.f32 0.0, %v5013
  %v5015 = vpop.f32.mrf.mxu0
  %5016 = vmatprep.mubr.f32.mxu0 0.0
  %5017 = vmatmul.mubr.f32.gmra.mxu0 %v4665
  %v5018 = vpop.f32.mrf.mxu0
  %v5019 = vadd.f32 0.0, %v5018
  %v5020 = vpop.f32.mrf.mxu0
  %5021 = vmatprep.mubr.f32.mxu0 0.0
  %5022 = vmatmul.mubr.f32.gmra.mxu0 %v4668
  %v5023 = vpop.f32.mrf.mxu0
  %v5024 = vadd.f32 0.0, %v5023
  %v5025 = vpop.f32.mrf.mxu0
  %5026 = vmatprep.mubr.f32.mxu0 0.0
  %5027 = vmatmul.mubr.f32.gmra.mxu0 %v4671
  %v5028 = vpop.f32.mrf.mxu0
  %v5029 = vadd.f32 0.0, %v5028
  %v5030 = vpop.f32.mrf.mxu0
  %5031 = vmatprep.mubr.f32.mxu0 0.0
  %5032 = vmatmul.mubr.f32.gmra.mxu0 %v4674
  %v5033 = vpop.f32.mrf.mxu0
  %v5034 = vadd.f32 0.0, %v5033
  %v5035 = vpop.f32.mrf.mxu0
  %5036 = vmatprep.mubr.f32.mxu0 0.0
  %5037 = vmatmul.mubr.f32.gmra.mxu0 %v4677
  %v5038 = vpop.f32.mrf.mxu0
  %v5039 = vadd.f32 0.0, %v5038
  %v5040 = vpop.f32.mrf.mxu0
  %5041 = vmatprep.mubr.f32.mxu0 0.0
  %5042 = vmatmul.mubr.f32.gmra.mxu0 %v4680
  %v5043 = vpop.f32.mrf.mxu0
  %v5044 = vadd.f32 0.0, %v5043
  %v5045 = vpop.f32.mrf.mxu0
  %5046 = vmatprep.mubr.f32.mxu0 0.0
  %5047 = vmatmul.mubr.f32.gmra.mxu0 %v4683
  %v5048 = vpop.f32.mrf.mxu0
  %v5049 = vadd.f32 0.0, %v5048
  %v5050 = vpop.f32.mrf.mxu0
  %5051 = vmatprep.mubr.f32.mxu0 0.0
  %5052 = vmatmul.mubr.f32.gmra.mxu0 %v4686
  %v5053 = vpop.f32.mrf.mxu0
  %v5054 = vadd.f32 0.0, %v5053
  %v5055 = vpop.f32.mrf.mxu0
  %5056 = vmatprep.mubr.f32.mxu0 0.0
  %5057 = vmatmul.mubr.f32.gmra.mxu0 %v4689
  %v5058 = vpop.f32.mrf.mxu0
  %v5059 = vadd.f32 0.0, %v5058
  %v5060 = vpop.f32.mrf.mxu0
  %5061 = vmatprep.mubr.f32.mxu0 0.0
  %5062 = vmatmul.mubr.f32.gmra.mxu0 %v4692
  %v5063 = vpop.f32.mrf.mxu0
  %v5064 = vadd.f32 0.0, %v5063
  %v5065 = vpop.f32.mrf.mxu0
  %5066 = vmatprep.mubr.f32.mxu0 0.0
  %5067 = vmatmul.mubr.f32.gmra.mxu0 %v4695
  %v5068 = vpop.f32.mrf.mxu0
  %v5069 = vadd.f32 0.0, %v5068
  %v5070 = vpop.f32.mrf.mxu0
  %5071 = vmatprep.mubr.f32.mxu0 0.0
  %5072 = vmatmul.mubr.f32.gmra.mxu0 %v4698
  %v5073 = vpop.f32.mrf.mxu0
  %v5074 = vadd.f32 0.0, %v5073
  %v5075 = vpop.f32.mrf.mxu0
  %5076 = vmatprep.mubr.f32.mxu0 0.0
  %5077 = vmatmul.mubr.f32.gmra.mxu0 %v4701
  %v5078 = vpop.f32.mrf.mxu0
  %v5079 = vadd.f32 0.0, %v5078
  %v5080 = vpop.f32.mrf.mxu0
  %5081 = vmatprep.mubr.f32.mxu0 0.0
  %5082 = vmatmul.mubr.f32.gmra.mxu0 %v4704
  %v5083 = vpop.f32.mrf.mxu0
  %v5084 = vadd.f32 0.0, %v5083
  %v5085 = vpop.f32.mrf.mxu0
  %5086 = vmatprep.mubr.f32.mxu0 0.0
  %5087 = vmatmul.mubr.f32.gmra.mxu0 %v4707
  %v5088 = vpop.f32.mrf.mxu0
  %v5089 = vadd.f32 0.0, %v5088
  %v5090 = vpop.f32.mrf.mxu0
  %5091 = vmatprep.mubr.f32.mxu0 0.0
  %5092 = vmatmul.mubr.f32.gmra.mxu0 %v4710
  %v5093 = vpop.f32.mrf.mxu0
  %v5094 = vadd.f32 0.0, %v5093
  %v5095 = vpop.f32.mrf.mxu0
  %5096 = vdwg.mxu0
  %v5098 = vsel %vm4519, %v4422, 0
  %v5101 = vsel %vm4519, %v4423, 0
  %v5104 = vsel %vm4519, %v4458, 0
  %v5107 = vsel %vm4519, %v4459, 0
  %5109 = vmatprep.subr.mxu0 0.0
  %5110 = vmatpush1.msra.mxu0 0.0
  %5111 = vmatprep.subr.mxu0 0.0
  %5112 = vmatpush1.msra.mxu0 0.0
  %5113 = vmatprep.subr.mxu0 0.0
  %5114 = vmatpush1.msra.mxu0 0.0
  %5115 = vmatprep.subr.mxu0 0.0
  %5116 = vmatpush1.msra.mxu0 0.0
  %5117 = vmatprep.subr.mxu0 0.0
  %5118 = vmatpush1.msra.mxu0 %v4505
  %5119 = vmatprep.subr.mxu0 0.0
  %5120 = vmatpush1.msra.mxu0 %v4504
  %5121 = vmatprep.subr.mxu0 0.0
  %5122 = vmatpush1.msra.mxu0 %v4503
  %5123 = vmatprep.subr.mxu0 0.0
  %5124 = vmatpush1.msra.mxu0 %v4502
  %5125 = vmatprep.subr.mxu0 0.0
  %5126 = vmatpush1.msra.mxu0 %v4501
  %5127 = vmatprep.subr.mxu0 0.0
  %5128 = vmatpush1.msra.mxu0 %v4500
  %5129 = vmatprep.subr.mxu0 0.0
  %5130 = vmatpush1.msra.mxu0 %v4499
  %5131 = vmatprep.subr.mxu0 0.0
  %5132 = vmatpush1.msra.mxu0 %v4498
  %5133 = vmatprep.subr.mxu0 0.0
  %5134 = vmatpush1.msra.mxu0 %v4497
  %5135 = vmatprep.subr.mxu0 0.0
  %5136 = vmatpush1.msra.mxu0 %v4496
  %5137 = vmatprep.subr.mxu0 0.0
  %5138 = vmatpush1.msra.mxu0 %v4495
  %5139 = vmatprep.subr.mxu0 0.0
  %5140 = vmatpush1.msra.mxu0 %v4494
  %5141 = vmatprep.subr.mxu0 0.0
  %5142 = vmatpush2.msra.mxu0 0.0
  %5143 = vmatprep.subr.mxu0 0.0
  %5144 = vmatpush2.msra.mxu0 0.0
  %5145 = vmatprep.subr.mxu0 0.0
  %5146 = vmatpush2.msra.mxu0 0.0
  %5147 = vmatprep.subr.mxu0 0.0
  %5148 = vmatpush2.msra.mxu0 0.0
  %5149 = vmatprep.subr.mxu0 0.0
  %5150 = vmatpush2.msra.mxu0 0.0
  %5151 = vmatprep.subr.mxu0 0.0
  %5152 = vmatpush2.msra.mxu0 0.0
  %5153 = vmatprep.subr.mxu0 0.0
  %5154 = vmatpush2.msra.mxu0 0.0
  %5155 = vmatprep.subr.mxu0 0.0
  %5156 = vmatpush2.msra.mxu0 0.0
  %5157 = vmatprep.subr.mxu0 0.0
  %5158 = vmatpush2.msra.mxu0 0.0
  %5159 = vmatprep.subr.mxu0 0.0
  %5160 = vmatpush2.msra.mxu0 0.0
  %5161 = vmatprep.subr.mxu0 0.0
  %5162 = vmatpush2.msra.mxu0 0.0
  %5163 = vmatprep.subr.mxu0 0.0
  %5164 = vmatpush2.msra.mxu0 0.0
  %5165 = vmatprep.subr.mxu0 0.0
  %5166 = vmatpush2.msra.mxu0 0.0
  %5167 = vmatprep.subr.mxu0 0.0
  %5168 = vmatpush2.msra.mxu0 0.0
  %5169 = vmatprep.subr.mxu0 0.0
  %5170 = vmatpush2.msra.mxu0 0.0
  %5171 = vmatprep.subr.mxu0 0.0
  %5172 = vmatpush2.msra.mxu0 0.0
  %5173 = vmatprep.mubr.f32.mxu0 0.0
  %5174 = vmatmul.mubr.f32.gmra.mxu0 %v5098
  %v5175 = vpop.f32.mrf.mxu0
  %v5176 = vadd.f32 %v4779, %v5175
  %v5177 = vpop.f32.mrf.mxu0
  %5178 = vmatprep.mubr.f32.mxu0 0.0
  %5179 = vmatmul.mubr.f32.gmra.mxu0 %v5101
  %v5180 = vpop.f32.mrf.mxu0
  %v5181 = vadd.f32 %v4784, %v5180
  %v5182 = vpop.f32.mrf.mxu0
  %5183 = vmatprep.mubr.f32.mxu0 0.0
  %5184 = vmatmul.mubr.f32.gmra.mxu0 %v4521
  %v5185 = vpop.f32.mrf.mxu0
  %v5186 = vadd.f32 %v4789, %v5185
  %v5187 = vpop.f32.mrf.mxu0
  %5188 = vmatprep.mubr.f32.mxu0 0.0
  %5189 = vmatmul.mubr.f32.gmra.mxu0 %v4524
  %v5190 = vpop.f32.mrf.mxu0
  %v5191 = vadd.f32 %v4794, %v5190
  %v5192 = vpop.f32.mrf.mxu0
  %5193 = vmatprep.mubr.f32.mxu0 0.0
  %5194 = vmatmul.mubr.f32.gmra.mxu0 %v4527
  %v5195 = vpop.f32.mrf.mxu0
  %v5196 = vadd.f32 %v4799, %v5195
  %v5197 = vpop.f32.mrf.mxu0
  %5198 = vmatprep.mubr.f32.mxu0 0.0
  %5199 = vmatmul.mubr.f32.gmra.mxu0 %v4530
  %v5200 = vpop.f32.mrf.mxu0
  %v5201 = vadd.f32 %v4804, %v5200
  %v5202 = vpop.f32.mrf.mxu0
  %5203 = vmatprep.mubr.f32.mxu0 0.0
  %5204 = vmatmul.mubr.f32.gmra.mxu0 %v4533
  %v5205 = vpop.f32.mrf.mxu0
  %v5206 = vadd.f32 %v4809, %v5205
  %v5207 = vpop.f32.mrf.mxu0
  %5208 = vmatprep.mubr.f32.mxu0 0.0
  %5209 = vmatmul.mubr.f32.gmra.mxu0 %v4536
  %v5210 = vpop.f32.mrf.mxu0
  %v5211 = vadd.f32 %v4814, %v5210
  %v5212 = vpop.f32.mrf.mxu0
  %5213 = vmatprep.mubr.f32.mxu0 0.0
  %5214 = vmatmul.mubr.f32.gmra.mxu0 %v4539
  %v5215 = vpop.f32.mrf.mxu0
  %v5216 = vadd.f32 %v4819, %v5215
  %v5217 = vpop.f32.mrf.mxu0
  %5218 = vmatprep.mubr.f32.mxu0 0.0
  %5219 = vmatmul.mubr.f32.gmra.mxu0 %v4542
  %v5220 = vpop.f32.mrf.mxu0
  %v5221 = vadd.f32 %v4824, %v5220
  %v5222 = vpop.f32.mrf.mxu0
  %5223 = vmatprep.mubr.f32.mxu0 0.0
  %5224 = vmatmul.mubr.f32.gmra.mxu0 %v4545
  %v5225 = vpop.f32.mrf.mxu0
  %v5226 = vadd.f32 %v4829, %v5225
  %v5227 = vpop.f32.mrf.mxu0
  %5228 = vmatprep.mubr.f32.mxu0 0.0
  %5229 = vmatmul.mubr.f32.gmra.mxu0 %v4548
  %v5230 = vpop.f32.mrf.mxu0
  %v5231 = vadd.f32 %v4834, %v5230
  %v5232 = vpop.f32.mrf.mxu0
  %5233 = vmatprep.mubr.f32.mxu0 0.0
  %5234 = vmatmul.mubr.f32.gmra.mxu0 %v4551
  %v5235 = vpop.f32.mrf.mxu0
  %v5236 = vadd.f32 %v4839, %v5235
  %v5237 = vpop.f32.mrf.mxu0
  %5238 = vmatprep.mubr.f32.mxu0 0.0
  %5239 = vmatmul.mubr.f32.gmra.mxu0 %v4554
  %v5240 = vpop.f32.mrf.mxu0
  %v5241 = vadd.f32 %v4844, %v5240
  %v5242 = vpop.f32.mrf.mxu0
  %5243 = vmatprep.mubr.f32.mxu0 0.0
  %5244 = vmatmul.mubr.f32.gmra.mxu0 %v4557
  %v5245 = vpop.f32.mrf.mxu0
  %v5246 = vadd.f32 %v4849, %v5245
  %v5247 = vpop.f32.mrf.mxu0
  %5248 = vmatprep.mubr.f32.mxu0 0.0
  %5249 = vmatmul.mubr.f32.gmra.mxu0 %v4560
  %v5250 = vpop.f32.mrf.mxu0
  %v5251 = vadd.f32 %v4854, %v5250
  %v5252 = vpop.f32.mrf.mxu0
  %5253 = vmatprep.mubr.f32.mxu0 0.0
  %5254 = vmatmul.mubr.f32.gmra.mxu0 %v4563
  %v5255 = vpop.f32.mrf.mxu0
  %v5256 = vadd.f32 %v4859, %v5255
  %v5257 = vpop.f32.mrf.mxu0
  %5258 = vmatprep.mubr.f32.mxu0 0.0
  %5259 = vmatmul.mubr.f32.gmra.mxu0 %v4566
  %v5260 = vpop.f32.mrf.mxu0
  %v5261 = vadd.f32 %v4864, %v5260
  %v5262 = vpop.f32.mrf.mxu0
  %5263 = vmatprep.mubr.f32.mxu0 0.0
  %5264 = vmatmul.mubr.f32.gmra.mxu0 %v4569
  %v5265 = vpop.f32.mrf.mxu0
  %v5266 = vadd.f32 %v4869, %v5265
  %v5267 = vpop.f32.mrf.mxu0
  %5268 = vmatprep.mubr.f32.mxu0 0.0
  %5269 = vmatmul.mubr.f32.gmra.mxu0 %v4572
  %v5270 = vpop.f32.mrf.mxu0
  %v5271 = vadd.f32 %v4874, %v5270
  %v5272 = vpop.f32.mrf.mxu0
  %5273 = vmatprep.mubr.f32.mxu0 0.0
  %5274 = vmatmul.mubr.f32.gmra.mxu0 %v4575
  %v5275 = vpop.f32.mrf.mxu0
  %v5276 = vadd.f32 %v4879, %v5275
  %v5277 = vpop.f32.mrf.mxu0
  %5278 = vmatprep.mubr.f32.mxu0 0.0
  %5279 = vmatmul.mubr.f32.gmra.mxu0 %v4578
  %v5280 = vpop.f32.mrf.mxu0
  %v5281 = vadd.f32 %v4884, %v5280
  %v5282 = vpop.f32.mrf.mxu0
  %5283 = vmatprep.mubr.f32.mxu0 0.0
  %5284 = vmatmul.mubr.f32.gmra.mxu0 %v4581
  %v5285 = vpop.f32.mrf.mxu0
  %v5286 = vadd.f32 %v4889, %v5285
  %v5287 = vpop.f32.mrf.mxu0
  %5288 = vmatprep.mubr.f32.mxu0 0.0
  %5289 = vmatmul.mubr.f32.gmra.mxu0 %v4584
  %v5290 = vpop.f32.mrf.mxu0
  %v5291 = vadd.f32 %v4894, %v5290
  %v5292 = vpop.f32.mrf.mxu0
  %5293 = vmatprep.mubr.f32.mxu0 0.0
  %5294 = vmatmul.mubr.f32.gmra.mxu0 %v4587
  %v5295 = vpop.f32.mrf.mxu0
  %v5296 = vadd.f32 %v4899, %v5295
  %v5297 = vpop.f32.mrf.mxu0
  %5298 = vmatprep.mubr.f32.mxu0 0.0
  %5299 = vmatmul.mubr.f32.gmra.mxu0 %v4590
  %v5300 = vpop.f32.mrf.mxu0
  %v5301 = vadd.f32 %v4904, %v5300
  %v5302 = vpop.f32.mrf.mxu0
  %5303 = vmatprep.mubr.f32.mxu0 0.0
  %5304 = vmatmul.mubr.f32.gmra.mxu0 %v4593
  %v5305 = vpop.f32.mrf.mxu0
  %v5306 = vadd.f32 %v4909, %v5305
  %v5307 = vpop.f32.mrf.mxu0
  %5308 = vmatprep.mubr.f32.mxu0 0.0
  %5309 = vmatmul.mubr.f32.gmra.mxu0 %v4596
  %v5310 = vpop.f32.mrf.mxu0
  %v5311 = vadd.f32 %v4914, %v5310
  %v5312 = vpop.f32.mrf.mxu0
  %5313 = vmatprep.mubr.f32.mxu0 0.0
  %5314 = vmatmul.mubr.f32.gmra.mxu0 %v4599
  %v5315 = vpop.f32.mrf.mxu0
  %v5316 = vadd.f32 %v4919, %v5315
  %v5317 = vpop.f32.mrf.mxu0
  %5318 = vmatprep.mubr.f32.mxu0 0.0
  %5319 = vmatmul.mubr.f32.gmra.mxu0 %v4602
  %v5320 = vpop.f32.mrf.mxu0
  %v5321 = vadd.f32 %v4924, %v5320
  %v5322 = vpop.f32.mrf.mxu0
  %5323 = vmatprep.mubr.f32.mxu0 0.0
  %5324 = vmatmul.mubr.f32.gmra.mxu0 %v4605
  %v5325 = vpop.f32.mrf.mxu0
  %v5326 = vadd.f32 %v4929, %v5325
  %v5327 = vpop.f32.mrf.mxu0
  %5328 = vmatprep.mubr.f32.mxu0 0.0
  %5329 = vmatmul.mubr.f32.gmra.mxu0 %v4608
  %v5330 = vpop.f32.mrf.mxu0
  %v5331 = vadd.f32 %v4934, %v5330
  %v5332 = vpop.f32.mrf.mxu0
  %5333 = vmatprep.mubr.f32.mxu0 0.0
  %5334 = vmatmul.mubr.f32.gmra.mxu0 %v5104
  %v5335 = vpop.f32.mrf.mxu0
  %v5336 = vadd.f32 %v4939, %v5335
  %v5337 = vpop.f32.mrf.mxu0
  %5338 = vmatprep.mubr.f32.mxu0 0.0
  %5339 = vmatmul.mubr.f32.gmra.mxu0 %v5107
  %v5340 = vpop.f32.mrf.mxu0
  %v5341 = vadd.f32 %v4944, %v5340
  %v5342 = vpop.f32.mrf.mxu0
  %5343 = vmatprep.mubr.f32.mxu0 0.0
  %5344 = vmatmul.mubr.f32.gmra.mxu0 %v4617
  %v5345 = vpop.f32.mrf.mxu0
  %v5346 = vadd.f32 %v4949, %v5345
  %v5347 = vpop.f32.mrf.mxu0
  %5348 = vmatprep.mubr.f32.mxu0 0.0
  %5349 = vmatmul.mubr.f32.gmra.mxu0 %v4620
  %v5350 = vpop.f32.mrf.mxu0
  %v5351 = vadd.f32 %v4954, %v5350
  %v5352 = vpop.f32.mrf.mxu0
  %5353 = vmatprep.mubr.f32.mxu0 0.0
  %5354 = vmatmul.mubr.f32.gmra.mxu0 %v4623
  %v5355 = vpop.f32.mrf.mxu0
  %v5356 = vadd.f32 %v4959, %v5355
  %v5357 = vpop.f32.mrf.mxu0
  %5358 = vmatprep.mubr.f32.mxu0 0.0
  %5359 = vmatmul.mubr.f32.gmra.mxu0 %v4626
  %v5360 = vpop.f32.mrf.mxu0
  %v5361 = vadd.f32 %v4964, %v5360
  %v5362 = vpop.f32.mrf.mxu0
  %5363 = vmatprep.mubr.f32.mxu0 0.0
  %5364 = vmatmul.mubr.f32.gmra.mxu0 %v4629
  %v5365 = vpop.f32.mrf.mxu0
  %v5366 = vadd.f32 %v4969, %v5365
  %v5367 = vpop.f32.mrf.mxu0
  %5368 = vmatprep.mubr.f32.mxu0 0.0
  %5369 = vmatmul.mubr.f32.gmra.mxu0 %v4632
  %v5370 = vpop.f32.mrf.mxu0
  %v5371 = vadd.f32 %v4974, %v5370
  %v5372 = vpop.f32.mrf.mxu0
  %5373 = vmatprep.mubr.f32.mxu0 0.0
  %5374 = vmatmul.mubr.f32.gmra.mxu0 %v4635
  %v5375 = vpop.f32.mrf.mxu0
  %v5376 = vadd.f32 %v4979, %v5375
  %v5377 = vpop.f32.mrf.mxu0
  %5378 = vmatprep.mubr.f32.mxu0 0.0
  %5379 = vmatmul.mubr.f32.gmra.mxu0 %v4638
  %v5380 = vpop.f32.mrf.mxu0
  %v5381 = vadd.f32 %v4984, %v5380
  %v5382 = vpop.f32.mrf.mxu0
  %5383 = vmatprep.mubr.f32.mxu0 0.0
  %5384 = vmatmul.mubr.f32.gmra.mxu0 %v4641
  %v5385 = vpop.f32.mrf.mxu0
  %v5386 = vadd.f32 %v4989, %v5385
  %v5387 = vpop.f32.mrf.mxu0
  %5388 = vmatprep.mubr.f32.mxu0 0.0
  %5389 = vmatmul.mubr.f32.gmra.mxu0 %v4644
  %v5390 = vpop.f32.mrf.mxu0
  %v5391 = vadd.f32 %v4994, %v5390
  %v5392 = vpop.f32.mrf.mxu0
  %5393 = vmatprep.mubr.f32.mxu0 0.0
  %5394 = vmatmul.mubr.f32.gmra.mxu0 %v4647
  %v5395 = vpop.f32.mrf.mxu0
  %v5396 = vadd.f32 %v4999, %v5395
  %v5397 = vpop.f32.mrf.mxu0
  %5398 = vmatprep.mubr.f32.mxu0 0.0
  %5399 = vmatmul.mubr.f32.gmra.mxu0 %v4650
  %v5400 = vpop.f32.mrf.mxu0
  %v5401 = vadd.f32 %v5004, %v5400
  %v5402 = vpop.f32.mrf.mxu0
  %5403 = vmatprep.mubr.f32.mxu0 0.0
  %5404 = vmatmul.mubr.f32.gmra.mxu0 %v4653
  %v5405 = vpop.f32.mrf.mxu0
  %v5406 = vadd.f32 %v5009, %v5405
  %v5407 = vpop.f32.mrf.mxu0
  %5408 = vmatprep.mubr.f32.mxu0 0.0
  %5409 = vmatmul.mubr.f32.gmra.mxu0 %v4656
  %v5410 = vpop.f32.mrf.mxu0
  %v5411 = vadd.f32 %v5014, %v5410
  %v5412 = vpop.f32.mrf.mxu0
  %5413 = vmatprep.mubr.f32.mxu0 0.0
  %5414 = vmatmul.mubr.f32.gmra.mxu0 %v4659
  %v5415 = vpop.f32.mrf.mxu0
  %v5416 = vadd.f32 %v5019, %v5415
  %v5417 = vpop.f32.mrf.mxu0
  %5418 = vmatprep.mubr.f32.mxu0 0.0
  %5419 = vmatmul.mubr.f32.gmra.mxu0 %v4662
  %v5420 = vpop.f32.mrf.mxu0
  %v5421 = vadd.f32 %v5024, %v5420
  %v5422 = vpop.f32.mrf.mxu0
  %5423 = vmatprep.mubr.f32.mxu0 0.0
  %5424 = vmatmul.mubr.f32.gmra.mxu0 %v4665
  %v5425 = vpop.f32.mrf.mxu0
  %v5426 = vadd.f32 %v5029, %v5425
  %v5427 = vpop.f32.mrf.mxu0
  %5428 = vmatprep.mubr.f32.mxu0 0.0
  %5429 = vmatmul.mubr.f32.gmra.mxu0 %v4668
  %v5430 = vpop.f32.mrf.mxu0
  %v5431 = vadd.f32 %v5034, %v5430
  %v5432 = vpop.f32.mrf.mxu0
  %5433 = vmatprep.mubr.f32.mxu0 0.0
  %5434 = vmatmul.mubr.f32.gmra.mxu0 %v4671
  %v5435 = vpop.f32.mrf.mxu0
  %v5436 = vadd.f32 %v5039, %v5435
  %v5437 = vpop.f32.mrf.mxu0
  %5438 = vmatprep.mubr.f32.mxu0 0.0
  %5439 = vmatmul.mubr.f32.gmra.mxu0 %v4674
  %v5440 = vpop.f32.mrf.mxu0
  %v5441 = vadd.f32 %v5044, %v5440
  %v5442 = vpop.f32.mrf.mxu0
  %5443 = vmatprep.mubr.f32.mxu0 0.0
  %5444 = vmatmul.mubr.f32.gmra.mxu0 %v4677
  %v5445 = vpop.f32.mrf.mxu0
  %v5446 = vadd.f32 %v5049, %v5445
  %v5447 = vpop.f32.mrf.mxu0
  %5448 = vmatprep.mubr.f32.mxu0 0.0
  %5449 = vmatmul.mubr.f32.gmra.mxu0 %v4680
  %v5450 = vpop.f32.mrf.mxu0
  %v5451 = vadd.f32 %v5054, %v5450
  %v5452 = vpop.f32.mrf.mxu0
  %5453 = vmatprep.mubr.f32.mxu0 0.0
  %5454 = vmatmul.mubr.f32.gmra.mxu0 %v4683
  %v5455 = vpop.f32.mrf.mxu0
  %v5456 = vadd.f32 %v5059, %v5455
  %v5457 = vpop.f32.mrf.mxu0
  %5458 = vmatprep.mubr.f32.mxu0 0.0
  %5459 = vmatmul.mubr.f32.gmra.mxu0 %v4686
  %v5460 = vpop.f32.mrf.mxu0
  %v5461 = vadd.f32 %v5064, %v5460
  %v5462 = vpop.f32.mrf.mxu0
  %5463 = vmatprep.mubr.f32.mxu0 0.0
  %5464 = vmatmul.mubr.f32.gmra.mxu0 %v4689
  %v5465 = vpop.f32.mrf.mxu0
  %v5466 = vadd.f32 %v5069, %v5465
  %v5467 = vpop.f32.mrf.mxu0
  %5468 = vmatprep.mubr.f32.mxu0 0.0
  %5469 = vmatmul.mubr.f32.gmra.mxu0 %v4692
  %v5470 = vpop.f32.mrf.mxu0
  %v5471 = vadd.f32 %v5074, %v5470
  %v5472 = vpop.f32.mrf.mxu0
  %5473 = vmatprep.mubr.f32.mxu0 0.0
  %5474 = vmatmul.mubr.f32.gmra.mxu0 %v4695
  %v5475 = vpop.f32.mrf.mxu0
  %v5476 = vadd.f32 %v5079, %v5475
  %v5477 = vpop.f32.mrf.mxu0
  %5478 = vmatprep.mubr.f32.mxu0 0.0
  %5479 = vmatmul.mubr.f32.gmra.mxu0 %v4698
  %v5480 = vpop.f32.mrf.mxu0
  %v5481 = vadd.f32 %v5084, %v5480
  %v5482 = vpop.f32.mrf.mxu0
  %5483 = vmatprep.mubr.f32.mxu0 0.0
  %5484 = vmatmul.mubr.f32.gmra.mxu0 %v4701
  %v5485 = vpop.f32.mrf.mxu0
  %v5486 = vadd.f32 %v5089, %v5485
  %v5487 = vpop.f32.mrf.mxu0
  %5488 = vmatprep.mubr.f32.mxu0 0.0
  %5489 = vmatmul.mubr.f32.gmra.mxu0 %v4704
  %v5490 = vpop.f32.mrf.mxu0
  %v5491 = vadd.f32 %v5094, %v5490
  %v5492 = vpop.f32.mrf.mxu0
  %5493 = vdwg.mxu0
  %s5494 = scalar_lea.vmem %s5, 192
  %v5495 = vld [vmem:[%s5494] sm:$0xff]
  %v5496 = vld [vmem:[%s5494 + $0x8] sm:$0xff]
  %v5497 = vld [vmem:[%s5494 + $0x10] sm:$0xff]
  %v5498 = vld [vmem:[%s5494 + $0x18] sm:$0xff]
  %v5499 = vld [vmem:[%s5494 + $0x20] sm:$0xff]
  %v5500 = vld [vmem:[%s5494 + $0x28] sm:$0xff]
  %v5501 = vld [vmem:[%s5494 + $0x30] sm:$0xff]
  %v5502 = vld [vmem:[%s5494 + $0x38] sm:$0xff]
  %v5503 = vld [vmem:[%s5494 + $0x40] sm:$0xff]
  %v5504 = vld [vmem:[%s5494 + $0x48] sm:$0xff]
  %v5505 = vld [vmem:[%s5494 + $0x50] sm:$0xff]
  %v5506 = vld [vmem:[%s5494 + $0x58] sm:$0xff]
  %v5508 = vsel %vm4519, %v4456, 0
  %v5511 = vsel %vm4519, %v4457, 0
  %v5514 = vsel %vm4519, %v4492, 0
  %v5517 = vsel %vm4519, %v4493, 0
  %5519 = vmatprep.subr.mxu0 0.0
  %5520 = vmatpush1.msra.mxu0 0.0
  %5521 = vmatprep.subr.mxu0 0.0
  %5522 = vmatpush1.msra.mxu0 0.0
  %5523 = vmatprep.subr.mxu0 0.0
  %5524 = vmatpush1.msra.mxu0 0.0
  %5525 = vmatprep.subr.mxu0 0.0
  %5526 = vmatpush1.msra.mxu0 0.0
  %5527 = vmatprep.subr.mxu0 0.0
  %5528 = vmatpush1.msra.mxu0 %v5506
  %5529 = vmatprep.subr.mxu0 0.0
  %5530 = vmatpush1.msra.mxu0 %v5505
  %5531 = vmatprep.subr.mxu0 0.0
  %5532 = vmatpush1.msra.mxu0 %v5504
  %5533 = vmatprep.subr.mxu0 0.0
  %5534 = vmatpush1.msra.mxu0 %v5503
  %5535 = vmatprep.subr.mxu0 0.0
  %5536 = vmatpush1.msra.mxu0 %v5502
  %5537 = vmatprep.subr.mxu0 0.0
  %5538 = vmatpush1.msra.mxu0 %v5501
  %5539 = vmatprep.subr.mxu0 0.0
  %5540 = vmatpush1.msra.mxu0 %v5500
  %5541 = vmatprep.subr.mxu0 0.0
  %5542 = vmatpush1.msra.mxu0 %v5499
  %5543 = vmatprep.subr.mxu0 0.0
  %5544 = vmatpush1.msra.mxu0 %v5498
  %5545 = vmatprep.subr.mxu0 0.0
  %5546 = vmatpush1.msra.mxu0 %v5497
  %5547 = vmatprep.subr.mxu0 0.0
  %5548 = vmatpush1.msra.mxu0 %v5496
  %5549 = vmatprep.subr.mxu0 0.0
  %5550 = vmatpush1.msra.mxu0 %v5495
  %5551 = vmatprep.subr.mxu0 0.0
  %5552 = vmatpush2.msra.mxu0 0.0
  %5553 = vmatprep.subr.mxu0 0.0
  %5554 = vmatpush2.msra.mxu0 0.0
  %5555 = vmatprep.subr.mxu0 0.0
  %5556 = vmatpush2.msra.mxu0 0.0
  %5557 = vmatprep.subr.mxu0 0.0
  %5558 = vmatpush2.msra.mxu0 0.0
  %5559 = vmatprep.subr.mxu0 0.0
  %5560 = vmatpush2.msra.mxu0 0.0
  %5561 = vmatprep.subr.mxu0 0.0
  %5562 = vmatpush2.msra.mxu0 0.0
  %5563 = vmatprep.subr.mxu0 0.0
  %5564 = vmatpush2.msra.mxu0 0.0
  %5565 = vmatprep.subr.mxu0 0.0
  %5566 = vmatpush2.msra.mxu0 0.0
  %5567 = vmatprep.subr.mxu0 0.0
  %5568 = vmatpush2.msra.mxu0 0.0
  %5569 = vmatprep.subr.mxu0 0.0
  %5570 = vmatpush2.msra.mxu0 0.0
  %5571 = vmatprep.subr.mxu0 0.0
  %5572 = vmatpush2.msra.mxu0 0.0
  %5573 = vmatprep.subr.mxu0 0.0
  %5574 = vmatpush2.msra.mxu0 0.0
  %5575 = vmatprep.subr.mxu0 0.0
  %5576 = vmatpush2.msra.mxu0 0.0
  %5577 = vmatprep.subr.mxu0 0.0
  %5578 = vmatpush2.msra.mxu0 0.0
  %5579 = vmatprep.subr.mxu0 0.0
  %5580 = vmatpush2.msra.mxu0 0.0
  %5581 = vmatprep.subr.mxu0 0.0
  %5582 = vmatpush2.msra.mxu0 0.0
  %5583 = vmatprep.mubr.f32.mxu0 0.0
  %5584 = vmatmul.mubr.f32.gmra.mxu0 %v4527
  %v5585 = vpop.f32.mrf.mxu0
  %v5586 = vadd.f32 0.0, %v5585
  %v5587 = vpop.f32.mrf.mxu0
  %5588 = vmatprep.mubr.f32.mxu0 0.0
  %5589 = vmatmul.mubr.f32.gmra.mxu0 %v4530
  %v5590 = vpop.f32.mrf.mxu0
  %v5591 = vadd.f32 0.0, %v5590
  %v5592 = vpop.f32.mrf.mxu0
  %5593 = vmatprep.mubr.f32.mxu0 0.0
  %5594 = vmatmul.mubr.f32.gmra.mxu0 %v4533
  %v5595 = vpop.f32.mrf.mxu0
  %v5596 = vadd.f32 0.0, %v5595
  %v5597 = vpop.f32.mrf.mxu0
  %5598 = vmatprep.mubr.f32.mxu0 0.0
  %5599 = vmatmul.mubr.f32.gmra.mxu0 %v4536
  %v5600 = vpop.f32.mrf.mxu0
  %v5601 = vadd.f32 0.0, %v5600
  %v5602 = vpop.f32.mrf.mxu0
  %5603 = vmatprep.mubr.f32.mxu0 0.0
  %5604 = vmatmul.mubr.f32.gmra.mxu0 %v4539
  %v5605 = vpop.f32.mrf.mxu0
  %v5606 = vadd.f32 0.0, %v5605
  %v5607 = vpop.f32.mrf.mxu0
  %5608 = vmatprep.mubr.f32.mxu0 0.0
  %5609 = vmatmul.mubr.f32.gmra.mxu0 %v4542
  %v5610 = vpop.f32.mrf.mxu0
  %v5611 = vadd.f32 0.0, %v5610
  %v5612 = vpop.f32.mrf.mxu0
  %5613 = vmatprep.mubr.f32.mxu0 0.0
  %5614 = vmatmul.mubr.f32.gmra.mxu0 %v4545
  %v5615 = vpop.f32.mrf.mxu0
  %v5616 = vadd.f32 0.0, %v5615
  %v5617 = vpop.f32.mrf.mxu0
  %5618 = vmatprep.mubr.f32.mxu0 0.0
  %5619 = vmatmul.mubr.f32.gmra.mxu0 %v4548
  %v5620 = vpop.f32.mrf.mxu0
  %v5621 = vadd.f32 0.0, %v5620
  %v5622 = vpop.f32.mrf.mxu0
  %5623 = vmatprep.mubr.f32.mxu0 0.0
  %5624 = vmatmul.mubr.f32.gmra.mxu0 %v4551
  %v5625 = vpop.f32.mrf.mxu0
  %v5626 = vadd.f32 0.0, %v5625
  %v5627 = vpop.f32.mrf.mxu0
  %5628 = vmatprep.mubr.f32.mxu0 0.0
  %5629 = vmatmul.mubr.f32.gmra.mxu0 %v4554
  %v5630 = vpop.f32.mrf.mxu0
  %v5631 = vadd.f32 0.0, %v5630
  %v5632 = vpop.f32.mrf.mxu0
  %5633 = vmatprep.mubr.f32.mxu0 0.0
  %5634 = vmatmul.mubr.f32.gmra.mxu0 %v4557
  %v5635 = vpop.f32.mrf.mxu0
  %v5636 = vadd.f32 0.0, %v5635
  %v5637 = vpop.f32.mrf.mxu0
  %5638 = vmatprep.mubr.f32.mxu0 0.0
  %5639 = vmatmul.mubr.f32.gmra.mxu0 %v4560
  %v5640 = vpop.f32.mrf.mxu0
  %v5641 = vadd.f32 0.0, %v5640
  %v5642 = vpop.f32.mrf.mxu0
  %5643 = vmatprep.mubr.f32.mxu0 0.0
  %5644 = vmatmul.mubr.f32.gmra.mxu0 %v4563
  %v5645 = vpop.f32.mrf.mxu0
  %v5646 = vadd.f32 0.0, %v5645
  %v5647 = vpop.f32.mrf.mxu0
  %5648 = vmatprep.mubr.f32.mxu0 0.0
  %5649 = vmatmul.mubr.f32.gmra.mxu0 %v4566
  %v5650 = vpop.f32.mrf.mxu0
  %v5651 = vadd.f32 0.0, %v5650
  %v5652 = vpop.f32.mrf.mxu0
  %5653 = vmatprep.mubr.f32.mxu0 0.0
  %5654 = vmatmul.mubr.f32.gmra.mxu0 %v4569
  %v5655 = vpop.f32.mrf.mxu0
  %v5656 = vadd.f32 0.0, %v5655
  %v5657 = vpop.f32.mrf.mxu0
  %5658 = vmatprep.mubr.f32.mxu0 0.0
  %5659 = vmatmul.mubr.f32.gmra.mxu0 %v4572
  %v5660 = vpop.f32.mrf.mxu0
  %v5661 = vadd.f32 0.0, %v5660
  %v5662 = vpop.f32.mrf.mxu0
  %5663 = vmatprep.mubr.f32.mxu0 0.0
  %5664 = vmatmul.mubr.f32.gmra.mxu0 %v4575
  %v5665 = vpop.f32.mrf.mxu0
  %v5666 = vadd.f32 0.0, %v5665
  %v5667 = vpop.f32.mrf.mxu0
  %5668 = vmatprep.mubr.f32.mxu0 0.0
  %5669 = vmatmul.mubr.f32.gmra.mxu0 %v4578
  %v5670 = vpop.f32.mrf.mxu0
  %v5671 = vadd.f32 0.0, %v5670
  %v5672 = vpop.f32.mrf.mxu0
  %5673 = vmatprep.mubr.f32.mxu0 0.0
  %5674 = vmatmul.mubr.f32.gmra.mxu0 %v4581
  %v5675 = vpop.f32.mrf.mxu0
  %v5676 = vadd.f32 0.0, %v5675
  %v5677 = vpop.f32.mrf.mxu0
  %5678 = vmatprep.mubr.f32.mxu0 0.0
  %5679 = vmatmul.mubr.f32.gmra.mxu0 %v4584
  %v5680 = vpop.f32.mrf.mxu0
  %v5681 = vadd.f32 0.0, %v5680
  %v5682 = vpop.f32.mrf.mxu0
  %5683 = vmatprep.mubr.f32.mxu0 0.0
  %5684 = vmatmul.mubr.f32.gmra.mxu0 %v4587
  %v5685 = vpop.f32.mrf.mxu0
  %v5686 = vadd.f32 0.0, %v5685
  %v5687 = vpop.f32.mrf.mxu0
  %5688 = vmatprep.mubr.f32.mxu0 0.0
  %5689 = vmatmul.mubr.f32.gmra.mxu0 %v4590
  %v5690 = vpop.f32.mrf.mxu0
  %v5691 = vadd.f32 0.0, %v5690
  %v5692 = vpop.f32.mrf.mxu0
  %5693 = vmatprep.mubr.f32.mxu0 0.0
  %5694 = vmatmul.mubr.f32.gmra.mxu0 %v4593
  %v5695 = vpop.f32.mrf.mxu0
  %v5696 = vadd.f32 0.0, %v5695
  %v5697 = vpop.f32.mrf.mxu0
  %5698 = vmatprep.mubr.f32.mxu0 0.0
  %5699 = vmatmul.mubr.f32.gmra.mxu0 %v4596
  %v5700 = vpop.f32.mrf.mxu0
  %v5701 = vadd.f32 0.0, %v5700
  %v5702 = vpop.f32.mrf.mxu0
  %5703 = vmatprep.mubr.f32.mxu0 0.0
  %5704 = vmatmul.mubr.f32.gmra.mxu0 %v4599
  %v5705 = vpop.f32.mrf.mxu0
  %v5706 = vadd.f32 0.0, %v5705
  %v5707 = vpop.f32.mrf.mxu0
  %5708 = vmatprep.mubr.f32.mxu0 0.0
  %5709 = vmatmul.mubr.f32.gmra.mxu0 %v4602
  %v5710 = vpop.f32.mrf.mxu0
  %v5711 = vadd.f32 0.0, %v5710
  %v5712 = vpop.f32.mrf.mxu0
  %5713 = vmatprep.mubr.f32.mxu0 0.0
  %5714 = vmatmul.mubr.f32.gmra.mxu0 %v4605
  %v5715 = vpop.f32.mrf.mxu0
  %v5716 = vadd.f32 0.0, %v5715
  %v5717 = vpop.f32.mrf.mxu0
  %5718 = vmatprep.mubr.f32.mxu0 0.0
  %5719 = vmatmul.mubr.f32.gmra.mxu0 %v4608
  %v5720 = vpop.f32.mrf.mxu0
  %v5721 = vadd.f32 0.0, %v5720
  %v5722 = vpop.f32.mrf.mxu0
  %5723 = vmatprep.mubr.f32.mxu0 0.0
  %5724 = vmatmul.mubr.f32.gmra.mxu0 %v4611
  %v5725 = vpop.f32.mrf.mxu0
  %v5726 = vadd.f32 0.0, %v5725
  %v5727 = vpop.f32.mrf.mxu0
  %5728 = vmatprep.mubr.f32.mxu0 0.0
  %5729 = vmatmul.mubr.f32.gmra.mxu0 %v4614
  %v5730 = vpop.f32.mrf.mxu0
  %v5731 = vadd.f32 0.0, %v5730
  %v5732 = vpop.f32.mrf.mxu0
  %5733 = vmatprep.mubr.f32.mxu0 0.0
  %5734 = vmatmul.mubr.f32.gmra.mxu0 %v5508
  %v5735 = vpop.f32.mrf.mxu0
  %v5736 = vadd.f32 0.0, %v5735
  %v5737 = vpop.f32.mrf.mxu0
  %5738 = vmatprep.mubr.f32.mxu0 0.0
  %5739 = vmatmul.mubr.f32.gmra.mxu0 %v5511
  %v5740 = vpop.f32.mrf.mxu0
  %v5741 = vadd.f32 0.0, %v5740
  %v5742 = vpop.f32.mrf.mxu0
  %5743 = vmatprep.mubr.f32.mxu0 0.0
  %5744 = vmatmul.mubr.f32.gmra.mxu0 %v4623
  %v5745 = vpop.f32.mrf.mxu0
  %v5746 = vadd.f32 0.0, %v5745
  %v5747 = vpop.f32.mrf.mxu0
  %5748 = vmatprep.mubr.f32.mxu0 0.0
  %5749 = vmatmul.mubr.f32.gmra.mxu0 %v4626
  %v5750 = vpop.f32.mrf.mxu0
  %v5751 = vadd.f32 0.0, %v5750
  %v5752 = vpop.f32.mrf.mxu0
  %5753 = vmatprep.mubr.f32.mxu0 0.0
  %5754 = vmatmul.mubr.f32.gmra.mxu0 %v4629
  %v5755 = vpop.f32.mrf.mxu0
  %v5756 = vadd.f32 0.0, %v5755
  %v5757 = vpop.f32.mrf.mxu0
  %5758 = vmatprep.mubr.f32.mxu0 0.0
  %5759 = vmatmul.mubr.f32.gmra.mxu0 %v4632
  %v5760 = vpop.f32.mrf.mxu0
  %v5761 = vadd.f32 0.0, %v5760
  %v5762 = vpop.f32.mrf.mxu0
  %5763 = vmatprep.mubr.f32.mxu0 0.0
  %5764 = vmatmul.mubr.f32.gmra.mxu0 %v4635
  %v5765 = vpop.f32.mrf.mxu0
  %v5766 = vadd.f32 0.0, %v5765
  %v5767 = vpop.f32.mrf.mxu0
  %5768 = vmatprep.mubr.f32.mxu0 0.0
  %5769 = vmatmul.mubr.f32.gmra.mxu0 %v4638
  %v5770 = vpop.f32.mrf.mxu0
  %v5771 = vadd.f32 0.0, %v5770
  %v5772 = vpop.f32.mrf.mxu0
  %5773 = vmatprep.mubr.f32.mxu0 0.0
  %5774 = vmatmul.mubr.f32.gmra.mxu0 %v4641
  %v5775 = vpop.f32.mrf.mxu0
  %v5776 = vadd.f32 0.0, %v5775
  %v5777 = vpop.f32.mrf.mxu0
  %5778 = vmatprep.mubr.f32.mxu0 0.0
  %5779 = vmatmul.mubr.f32.gmra.mxu0 %v4644
  %v5780 = vpop.f32.mrf.mxu0
  %v5781 = vadd.f32 0.0, %v5780
  %v5782 = vpop.f32.mrf.mxu0
  %5783 = vmatprep.mubr.f32.mxu0 0.0
  %5784 = vmatmul.mubr.f32.gmra.mxu0 %v4647
  %v5785 = vpop.f32.mrf.mxu0
  %v5786 = vadd.f32 0.0, %v5785
  %v5787 = vpop.f32.mrf.mxu0
  %5788 = vmatprep.mubr.f32.mxu0 0.0
  %5789 = vmatmul.mubr.f32.gmra.mxu0 %v4650
  %v5790 = vpop.f32.mrf.mxu0
  %v5791 = vadd.f32 0.0, %v5790
  %v5792 = vpop.f32.mrf.mxu0
  %5793 = vmatprep.mubr.f32.mxu0 0.0
  %5794 = vmatmul.mubr.f32.gmra.mxu0 %v4653
  %v5795 = vpop.f32.mrf.mxu0
  %v5796 = vadd.f32 0.0, %v5795
  %v5797 = vpop.f32.mrf.mxu0
  %5798 = vmatprep.mubr.f32.mxu0 0.0
  %5799 = vmatmul.mubr.f32.gmra.mxu0 %v4656
  %v5800 = vpop.f32.mrf.mxu0
  %v5801 = vadd.f32 0.0, %v5800
  %v5802 = vpop.f32.mrf.mxu0
  %5803 = vmatprep.mubr.f32.mxu0 0.0
  %5804 = vmatmul.mubr.f32.gmra.mxu0 %v4659
  %v5805 = vpop.f32.mrf.mxu0
  %v5806 = vadd.f32 0.0, %v5805
  %v5807 = vpop.f32.mrf.mxu0
  %5808 = vmatprep.mubr.f32.mxu0 0.0
  %5809 = vmatmul.mubr.f32.gmra.mxu0 %v4662
  %v5810 = vpop.f32.mrf.mxu0
  %v5811 = vadd.f32 0.0, %v5810
  %v5812 = vpop.f32.mrf.mxu0
  %5813 = vmatprep.mubr.f32.mxu0 0.0
  %5814 = vmatmul.mubr.f32.gmra.mxu0 %v4665
  %v5815 = vpop.f32.mrf.mxu0
  %v5816 = vadd.f32 0.0, %v5815
  %v5817 = vpop.f32.mrf.mxu0
  %5818 = vmatprep.mubr.f32.mxu0 0.0
  %5819 = vmatmul.mubr.f32.gmra.mxu0 %v4668
  %v5820 = vpop.f32.mrf.mxu0
  %v5821 = vadd.f32 0.0, %v5820
  %v5822 = vpop.f32.mrf.mxu0
  %5823 = vmatprep.mubr.f32.mxu0 0.0
  %5824 = vmatmul.mubr.f32.gmra.mxu0 %v4671
  %v5825 = vpop.f32.mrf.mxu0
  %v5826 = vadd.f32 0.0, %v5825
  %v5827 = vpop.f32.mrf.mxu0
  %5828 = vmatprep.mubr.f32.mxu0 0.0
  %5829 = vmatmul.mubr.f32.gmra.mxu0 %v4674
  %v5830 = vpop.f32.mrf.mxu0
  %v5831 = vadd.f32 0.0, %v5830
  %v5832 = vpop.f32.mrf.mxu0
  %5833 = vmatprep.mubr.f32.mxu0 0.0
  %5834 = vmatmul.mubr.f32.gmra.mxu0 %v4677
  %v5835 = vpop.f32.mrf.mxu0
  %v5836 = vadd.f32 0.0, %v5835
  %v5837 = vpop.f32.mrf.mxu0
  %5838 = vmatprep.mubr.f32.mxu0 0.0
  %5839 = vmatmul.mubr.f32.gmra.mxu0 %v4680
  %v5840 = vpop.f32.mrf.mxu0
  %v5841 = vadd.f32 0.0, %v5840
  %v5842 = vpop.f32.mrf.mxu0
  %5843 = vmatprep.mubr.f32.mxu0 0.0
  %5844 = vmatmul.mubr.f32.gmra.mxu0 %v4683
  %v5845 = vpop.f32.mrf.mxu0
  %v5846 = vadd.f32 0.0, %v5845
  %v5847 = vpop.f32.mrf.mxu0
  %5848 = vmatprep.mubr.f32.mxu0 0.0
  %5849 = vmatmul.mubr.f32.gmra.mxu0 %v4686
  %v5850 = vpop.f32.mrf.mxu0
  %v5851 = vadd.f32 0.0, %v5850
  %v5852 = vpop.f32.mrf.mxu0
  %5853 = vmatprep.mubr.f32.mxu0 0.0
  %5854 = vmatmul.mubr.f32.gmra.mxu0 %v4689
  %v5855 = vpop.f32.mrf.mxu0
  %v5856 = vadd.f32 0.0, %v5855
  %v5857 = vpop.f32.mrf.mxu0
  %5858 = vmatprep.mubr.f32.mxu0 0.0
  %5859 = vmatmul.mubr.f32.gmra.mxu0 %v4692
  %v5860 = vpop.f32.mrf.mxu0
  %v5861 = vadd.f32 0.0, %v5860
  %v5862 = vpop.f32.mrf.mxu0
  %5863 = vmatprep.mubr.f32.mxu0 0.0
  %5864 = vmatmul.mubr.f32.gmra.mxu0 %v4695
  %v5865 = vpop.f32.mrf.mxu0
  %v5866 = vadd.f32 0.0, %v5865
  %v5867 = vpop.f32.mrf.mxu0
  %5868 = vmatprep.mubr.f32.mxu0 0.0
  %5869 = vmatmul.mubr.f32.gmra.mxu0 %v4698
  %v5870 = vpop.f32.mrf.mxu0
  %v5871 = vadd.f32 0.0, %v5870
  %v5872 = vpop.f32.mrf.mxu0
  %5873 = vmatprep.mubr.f32.mxu0 0.0
  %5874 = vmatmul.mubr.f32.gmra.mxu0 %v4701
  %v5875 = vpop.f32.mrf.mxu0
  %v5876 = vadd.f32 0.0, %v5875
  %v5877 = vpop.f32.mrf.mxu0
  %5878 = vmatprep.mubr.f32.mxu0 0.0
  %5879 = vmatmul.mubr.f32.gmra.mxu0 %v4704
  %v5880 = vpop.f32.mrf.mxu0
  %v5881 = vadd.f32 0.0, %v5880
  %v5882 = vpop.f32.mrf.mxu0
  %5883 = vmatprep.mubr.f32.mxu0 0.0
  %5884 = vmatmul.mubr.f32.gmra.mxu0 %v4707
  %v5885 = vpop.f32.mrf.mxu0
  %v5886 = vadd.f32 0.0, %v5885
  %v5887 = vpop.f32.mrf.mxu0
  %5888 = vmatprep.mubr.f32.mxu0 0.0
  %5889 = vmatmul.mubr.f32.gmra.mxu0 %v4710
  %v5890 = vpop.f32.mrf.mxu0
  %v5891 = vadd.f32 0.0, %v5890
  %v5892 = vpop.f32.mrf.mxu0
  %5893 = vmatprep.mubr.f32.mxu0 0.0
  %5894 = vmatmul.mubr.f32.gmra.mxu0 %v5514
  %v5895 = vpop.f32.mrf.mxu0
  %v5896 = vadd.f32 0.0, %v5895
  %v5897 = vpop.f32.mrf.mxu0
  %5898 = vmatprep.mubr.f32.mxu0 0.0
  %5899 = vmatmul.mubr.f32.gmra.mxu0 %v5517
  %v5900 = vpop.f32.mrf.mxu0
  %v5901 = vadd.f32 0.0, %v5900
  %v5902 = vpop.f32.mrf.mxu0
  %5903 = vdwg.mxu0
  %v5904 = vadd.f32 %v5176, %v5586
  %v5905 = vadd.f32 %v5181, %v5591
  %v5906 = vadd.f32 %v5186, %v5596
  %v5907 = vadd.f32 %v5191, %v5601
  %v5908 = vadd.f32 %v5196, %v5606
  %v5909 = vadd.f32 %v5201, %v5611
  %v5910 = vadd.f32 %v5206, %v5616
  %v5911 = vadd.f32 %v5211, %v5621
  %v5912 = vadd.f32 %v5216, %v5626
  %v5913 = vadd.f32 %v5221, %v5631
  %v5914 = vadd.f32 %v5226, %v5636
  %v5915 = vadd.f32 %v5231, %v5641
  %v5916 = vadd.f32 %v5236, %v5646
  %v5917 = vadd.f32 %v5241, %v5651
  %v5918 = vadd.f32 %v5246, %v5656
  %v5919 = vadd.f32 %v5251, %v5661
  %v5920 = vadd.f32 %v5256, %v5666
  %v5921 = vadd.f32 %v5261, %v5671
  %v5922 = vadd.f32 %v5266, %v5676
  %v5923 = vadd.f32 %v5271, %v5681
  %v5924 = vadd.f32 %v5276, %v5686
  %v5925 = vadd.f32 %v5281, %v5691
  %v5926 = vadd.f32 %v5286, %v5696
  %v5927 = vadd.f32 %v5291, %v5701
  %v5928 = vadd.f32 %v5296, %v5706
  %v5929 = vadd.f32 %v5301, %v5711
  %v5930 = vadd.f32 %v5306, %v5716
  %v5931 = vadd.f32 %v5311, %v5721
  %v5932 = vadd.f32 %v5316, %v5726
  %v5933 = vadd.f32 %v5321, %v5731
  %v5934 = vadd.f32 %v5326, %v5736
  %v5935 = vadd.f32 %v5331, %v5741
  %v5936 = vadd.f32 %v5336, %v5746
  %v5937 = vadd.f32 %v5341, %v5751
  %v5938 = vadd.f32 %v5346, %v5756
  %v5939 = vadd.f32 %v5351, %v5761
  %v5940 = vadd.f32 %v5356, %v5766
  %v5941 = vadd.f32 %v5361, %v5771
  %v5942 = vadd.f32 %v5366, %v5776
  %v5943 = vadd.f32 %v5371, %v5781
  %v5944 = vadd.f32 %v5376, %v5786
  %v5945 = vadd.f32 %v5381, %v5791
  %v5946 = vadd.f32 %v5386, %v5796
  %v5947 = vadd.f32 %v5391, %v5801
  %v5948 = vadd.f32 %v5396, %v5806
  %v5949 = vadd.f32 %v5401, %v5811
  %v5950 = vadd.f32 %v5406, %v5816
  %v5951 = vadd.f32 %v5411, %v5821
  %v5952 = vadd.f32 %v5416, %v5826
  %v5953 = vadd.f32 %v5421, %v5831
  %v5954 = vadd.f32 %v5426, %v5836
  %v5955 = vadd.f32 %v5431, %v5841
  %v5956 = vadd.f32 %v5436, %v5846
  %v5957 = vadd.f32 %v5441, %v5851
  %v5958 = vadd.f32 %v5446, %v5856
  %v5959 = vadd.f32 %v5451, %v5861
  %v5960 = vadd.f32 %v5456, %v5866
  %v5961 = vadd.f32 %v5461, %v5871
  %v5962 = vadd.f32 %v5466, %v5876
  %v5963 = vadd.f32 %v5471, %v5881
  %v5964 = vadd.f32 %v5476, %v5886
  %v5965 = vadd.f32 %v5481, %v5891
  %v5966 = vadd.f32 %v5486, %v5896
  %v5967 = vadd.f32 %v5491, %v5901
  %v5968 = vld [vmem:[%s6] sm:$0x1]
  %v5970 = vlaneseq
  %v5971 = vshrl.u32 %v5970, 7
  %v5972 = vsub.s32 0, %v5971
  %v5973 = vrot.slane %v5968, %v5972
  %v5975 = vadd.f32 %v5904, %v5973
  %v5976 = vadd.f32 %v5905, %v5973
  %v5977 = vadd.f32 %v5906, %v5973
  %v5978 = vadd.f32 %v5907, %v5973
  %v5979 = vadd.f32 %v5908, %v5973
  %v5980 = vadd.f32 %v5909, %v5973
  %v5981 = vadd.f32 %v5910, %v5973
  %v5982 = vadd.f32 %v5911, %v5973
  %v5983 = vadd.f32 %v5912, %v5973
  %v5984 = vadd.f32 %v5913, %v5973
  %v5985 = vadd.f32 %v5914, %v5973
  %v5986 = vadd.f32 %v5915, %v5973
  %v5987 = vadd.f32 %v5916, %v5973
  %v5988 = vadd.f32 %v5917, %v5973
  %v5989 = vadd.f32 %v5918, %v5973
  %v5990 = vadd.f32 %v5919, %v5973
  %v5991 = vadd.f32 %v5920, %v5973
  %v5992 = vadd.f32 %v5921, %v5973
  %v5993 = vadd.f32 %v5922, %v5973
  %v5994 = vadd.f32 %v5923, %v5973
  %v5995 = vadd.f32 %v5924, %v5973
  %v5996 = vadd.f32 %v5925, %v5973
  %v5997 = vadd.f32 %v5926, %v5973
  %v5998 = vadd.f32 %v5927, %v5973
  %v5999 = vadd.f32 %v5928, %v5973
  %v6000 = vadd.f32 %v5929, %v5973
  %v6001 = vadd.f32 %v5930, %v5973
  %v6002 = vadd.f32 %v5931, %v5973
  %v6003 = vadd.f32 %v5932, %v5973
  %v6004 = vadd.f32 %v5933, %v5973
  %v6005 = vadd.f32 %v5934, %v5973
  %v6006 = vadd.f32 %v5935, %v5973
  %v6007 = vadd.f32 %v5936, %v5973
  %v6008 = vadd.f32 %v5937, %v5973
  %v6009 = vadd.f32 %v5938, %v5973
  %v6010 = vadd.f32 %v5939, %v5973
  %v6011 = vadd.f32 %v5940, %v5973
  %v6012 = vadd.f32 %v5941, %v5973
  %v6013 = vadd.f32 %v5942, %v5973
  %v6014 = vadd.f32 %v5943, %v5973
  %v6015 = vadd.f32 %v5944, %v5973
  %v6016 = vadd.f32 %v5945, %v5973
  %v6017 = vadd.f32 %v5946, %v5973
  %v6018 = vadd.f32 %v5947, %v5973
  %v6019 = vadd.f32 %v5948, %v5973
  %v6020 = vadd.f32 %v5949, %v5973
  %v6021 = vadd.f32 %v5950, %v5973
  %v6022 = vadd.f32 %v5951, %v5973
  %v6023 = vadd.f32 %v5952, %v5973
  %v6024 = vadd.f32 %v5953, %v5973
  %v6025 = vadd.f32 %v5954, %v5973
  %v6026 = vadd.f32 %v5955, %v5973
  %v6027 = vadd.f32 %v5956, %v5973
  %v6028 = vadd.f32 %v5957, %v5973
  %v6029 = vadd.f32 %v5958, %v5973
  %v6030 = vadd.f32 %v5959, %v5973
  %v6031 = vadd.f32 %v5960, %v5973
  %v6032 = vadd.f32 %v5961, %v5973
  %v6033 = vadd.f32 %v5962, %v5973
  %v6034 = vadd.f32 %v5963, %v5973
  %v6035 = vadd.f32 %v5964, %v5973
  %v6036 = vadd.f32 %v5965, %v5973
  %v6037 = vadd.f32 %v5966, %v5973
  %v6038 = vadd.f32 %v5967, %v5973
  %v6039 = vld [vmem:[%s7] sm:$0x1]
  %v6040 = vld [vmem:[%s8] sm:$0x1]
  %v6041 = vmul.f32 %v5975, 0.01
  %v6042 = vmul.f32 %v5976, 0.01
  %v6043 = vmul.f32 %v5977, 0.01
  %v6044 = vmul.f32 %v5978, 0.01
  %v6045 = vmul.f32 %v5979, 0.01
  %v6046 = vmul.f32 %v5980, 0.01
  %v6047 = vmul.f32 %v5981, 0.01
  %v6048 = vmul.f32 %v5982, 0.01
  %v6049 = vmul.f32 %v5983, 0.01
  %v6050 = vmul.f32 %v5984, 0.01
  %v6051 = vmul.f32 %v5985, 0.01
  %v6052 = vmul.f32 %v5986, 0.01
  %v6053 = vmul.f32 %v5987, 0.01
  %v6054 = vmul.f32 %v5988, 0.01
  %v6055 = vmul.f32 %v5989, 0.01
  %v6056 = vmul.f32 %v5990, 0.01
  %v6057 = vmul.f32 %v5991, 0.01
  %v6058 = vmul.f32 %v5992, 0.01
  %v6059 = vmul.f32 %v5993, 0.01
  %v6060 = vmul.f32 %v5994, 0.01
  %v6061 = vmul.f32 %v5995, 0.01
  %v6062 = vmul.f32 %v5996, 0.01
  %v6063 = vmul.f32 %v5997, 0.01
  %v6064 = vmul.f32 %v5998, 0.01
  %v6065 = vmul.f32 %v5999, 0.01
  %v6066 = vmul.f32 %v6000, 0.01
  %v6067 = vmul.f32 %v6001, 0.01
  %v6068 = vmul.f32 %v6002, 0.01
  %v6069 = vmul.f32 %v6003, 0.01
  %v6070 = vmul.f32 %v6004, 0.01
  %v6071 = vmul.f32 %v6005, 0.01
  %v6072 = vmul.f32 %v6006, 0.01
  %v6073 = vmul.f32 %v6007, 0.01
  %v6074 = vmul.f32 %v6008, 0.01
  %v6075 = vmul.f32 %v6009, 0.01
  %v6076 = vmul.f32 %v6010, 0.01
  %v6077 = vmul.f32 %v6011, 0.01
  %v6078 = vmul.f32 %v6012, 0.01
  %v6079 = vmul.f32 %v6013, 0.01
  %v6080 = vmul.f32 %v6014, 0.01
  %v6081 = vmul.f32 %v6015, 0.01
  %v6082 = vmul.f32 %v6016, 0.01
  %v6083 = vmul.f32 %v6017, 0.01
  %v6084 = vmul.f32 %v6018, 0.01
  %v6085 = vmul.f32 %v6019, 0.01
  %v6086 = vmul.f32 %v6020, 0.01
  %v6087 = vmul.f32 %v6021, 0.01
  %v6088 = vmul.f32 %v6022, 0.01
  %v6089 = vmul.f32 %v6023, 0.01
  %v6090 = vmul.f32 %v6024, 0.01
  %v6091 = vmul.f32 %v6025, 0.01
  %v6092 = vmul.f32 %v6026, 0.01
  %v6093 = vmul.f32 %v6027, 0.01
  %v6094 = vmul.f32 %v6028, 0.01
  %v6095 = vmul.f32 %v6029, 0.01
  %v6096 = vmul.f32 %v6030, 0.01
  %v6097 = vmul.f32 %v6031, 0.01
  %v6098 = vmul.f32 %v6032, 0.01
  %v6099 = vmul.f32 %v6033, 0.01
  %v6100 = vmul.f32 %v6034, 0.01
  %v6101 = vmul.f32 %v6035, 0.01
  %v6102 = vmul.f32 %v6036, 0.01
  %v6103 = vmul.f32 %v6037, 0.01
  %v6104 = vmul.f32 %v6038, 0.01
  %v6105 = vmax.f32 %v5975, %v6041
  %v6106 = vmax.f32 %v5976, %v6042
  %v6107 = vmax.f32 %v5977, %v6043
  %v6108 = vmax.f32 %v5978, %v6044
  %v6109 = vmax.f32 %v5979, %v6045
  %v6110 = vmax.f32 %v5980, %v6046
  %v6111 = vmax.f32 %v5981, %v6047
  %v6112 = vmax.f32 %v5982, %v6048
  %v6113 = vmax.f32 %v5983, %v6049
  %v6114 = vmax.f32 %v5984, %v6050
  %v6115 = vmax.f32 %v5985, %v6051
  %v6116 = vmax.f32 %v5986, %v6052
  %v6117 = vmax.f32 %v5987, %v6053
  %v6118 = vmax.f32 %v5988, %v6054
  %v6119 = vmax.f32 %v5989, %v6055
  %v6120 = vmax.f32 %v5990, %v6056
  %v6121 = vmax.f32 %v5991, %v6057
  %v6122 = vmax.f32 %v5992, %v6058
  %v6123 = vmax.f32 %v5993, %v6059
  %v6124 = vmax.f32 %v5994, %v6060
  %v6125 = vmax.f32 %v5995, %v6061
  %v6126 = vmax.f32 %v5996, %v6062
  %v6127 = vmax.f32 %v5997, %v6063
  %v6128 = vmax.f32 %v5998, %v6064
  %v6129 = vmax.f32 %v5999, %v6065
  %v6130 = vmax.f32 %v6000, %v6066
  %v6131 = vmax.f32 %v6001, %v6067
  %v6132 = vmax.f32 %v6002, %v6068
  %v6133 = vmax.f32 %v6003, %v6069
  %v6134 = vmax.f32 %v6004, %v6070
  %v6135 = vmax.f32 %v6005, %v6071
  %v6136 = vmax.f32 %v6006, %v6072
  %v6137 = vmax.f32 %v6007, %v6073
  %v6138 = vmax.f32 %v6008, %v6074
  %v6139 = vmax.f32 %v6009, %v6075
  %v6140 = vmax.f32 %v6010, %v6076
  %v6141 = vmax.f32 %v6011, %v6077
  %v6142 = vmax.f32 %v6012, %v6078
  %v6143 = vmax.f32 %v6013, %v6079
  %v6144 = vmax.f32 %v6014, %v6080
  %v6145 = vmax.f32 %v6015, %v6081
  %v6146 = vmax.f32 %v6016, %v6082
  %v6147 = vmax.f32 %v6017, %v6083
  %v6148 = vmax.f32 %v6018, %v6084
  %v6149 = vmax.f32 %v6019, %v6085
  %v6150 = vmax.f32 %v6020, %v6086
  %v6151 = vmax.f32 %v6021, %v6087
  %v6152 = vmax.f32 %v6022, %v6088
  %v6153 = vmax.f32 %v6023, %v6089
  %v6154 = vmax.f32 %v6024, %v6090
  %v6155 = vmax.f32 %v6025, %v6091
  %v6156 = vmax.f32 %v6026, %v6092
  %v6157 = vmax.f32 %v6027, %v6093
  %v6158 = vmax.f32 %v6028, %v6094
  %v6159 = vmax.f32 %v6029, %v6095
  %v6160 = vmax.f32 %v6030, %v6096
  %v6161 = vmax.f32 %v6031, %v6097
  %v6162 = vmax.f32 %v6032, %v6098
  %v6163 = vmax.f32 %v6033, %v6099
  %v6164 = vmax.f32 %v6034, %v6100
  %v6165 = vmax.f32 %v6035, %v6101
  %v6166 = vmax.f32 %v6036, %v6102
  %v6167 = vmax.f32 %v6037, %v6103
  %v6168 = vmax.f32 %v6038, %v6104
  %v6169 = vsel %vm141, %v6105, 0.0
  %v6170 = vsel %vm141, %v6106, 0.0
  %v6171 = vadd.f32 %v6169, %v6170
  %v6172 = vsel %vm141, %v6107, 0.0
  %v6173 = vadd.f32 %v6171, %v6172
  %v6174 = vsel %vm141, %v6108, 0.0
  %v6175 = vadd.f32 %v6173, %v6174
  %v6176 = vsel %vm141, %v6109, 0.0
  %v6177 = vadd.f32 %v6175, %v6176
  %v6178 = vsel %vm141, %v6110, 0.0
  %v6179 = vadd.f32 %v6177, %v6178
  %v6180 = vsel %vm141, %v6111, 0.0
  %v6181 = vadd.f32 %v6179, %v6180
  %v6182 = vsel %vm141, %v6112, 0.0
  %v6183 = vadd.f32 %v6181, %v6182
  %v6184 = vsel %vm141, %v6113, 0.0
  %v6185 = vadd.f32 %v6183, %v6184
  %v6186 = vsel %vm141, %v6114, 0.0
  %v6187 = vadd.f32 %v6185, %v6186
  %v6188 = vsel %vm141, %v6115, 0.0
  %v6189 = vadd.f32 %v6187, %v6188
  %v6190 = vsel %vm141, %v6116, 0.0
  %v6191 = vadd.f32 %v6189, %v6190
  %v6192 = vsel %vm141, %v6117, 0.0
  %v6193 = vadd.f32 %v6191, %v6192
  %v6194 = vsel %vm141, %v6118, 0.0
  %v6195 = vadd.f32 %v6193, %v6194
  %v6196 = vsel %vm141, %v6119, 0.0
  %v6197 = vadd.f32 %v6195, %v6196
  %v6198 = vsel %vm141, %v6120, 0.0
  %v6199 = vadd.f32 %v6197, %v6198
  %v6200 = vsel %vm141, %v6121, 0.0
  %v6201 = vadd.f32 %v6199, %v6200
  %v6202 = vsel %vm141, %v6122, 0.0
  %v6203 = vadd.f32 %v6201, %v6202
  %v6204 = vsel %vm141, %v6123, 0.0
  %v6205 = vadd.f32 %v6203, %v6204
  %v6206 = vsel %vm141, %v6124, 0.0
  %v6207 = vadd.f32 %v6205, %v6206
  %v6208 = vsel %vm141, %v6125, 0.0
  %v6209 = vadd.f32 %v6207, %v6208
  %v6210 = vsel %vm141, %v6126, 0.0
  %v6211 = vadd.f32 %v6209, %v6210
  %v6212 = vsel %vm141, %v6127, 0.0
  %v6213 = vadd.f32 %v6211, %v6212
  %v6214 = vsel %vm141, %v6128, 0.0
  %v6215 = vadd.f32 %v6213, %v6214
  %v6216 = vsel %vm141, %v6129, 0.0
  %v6217 = vadd.f32 %v6215, %v6216
  %v6218 = vsel %vm141, %v6130, 0.0
  %v6219 = vadd.f32 %v6217, %v6218
  %v6220 = vsel %vm141, %v6131, 0.0
  %v6221 = vadd.f32 %v6219, %v6220
  %v6222 = vsel %vm141, %v6132, 0.0
  %v6223 = vadd.f32 %v6221, %v6222
  %v6224 = vsel %vm141, %v6133, 0.0
  %v6225 = vadd.f32 %v6223, %v6224
  %v6226 = vsel %vm141, %v6134, 0.0
  %v6227 = vadd.f32 %v6225, %v6226
  %v6228 = vsel %vm141, %v6135, 0.0
  %v6229 = vadd.f32 %v6227, %v6228
  %v6230 = vsel %vm141, %v6136, 0.0
  %v6231 = vadd.f32 %v6229, %v6230
  %v6232 = vsel %vm141, %v6137, 0.0
  %v6233 = vadd.f32 %v6231, %v6232
  %v6234 = vsel %vm141, %v6138, 0.0
  %v6235 = vadd.f32 %v6233, %v6234
  %v6236 = vsel %vm141, %v6139, 0.0
  %v6237 = vadd.f32 %v6235, %v6236
  %v6238 = vsel %vm141, %v6140, 0.0
  %v6239 = vadd.f32 %v6237, %v6238
  %v6240 = vsel %vm141, %v6141, 0.0
  %v6241 = vadd.f32 %v6239, %v6240
  %v6242 = vsel %vm141, %v6142, 0.0
  %v6243 = vadd.f32 %v6241, %v6242
  %v6244 = vsel %vm141, %v6143, 0.0
  %v6245 = vadd.f32 %v6243, %v6244
  %v6246 = vsel %vm141, %v6144, 0.0
  %v6247 = vadd.f32 %v6245, %v6246
  %v6248 = vsel %vm141, %v6145, 0.0
  %v6249 = vadd.f32 %v6247, %v6248
  %v6250 = vsel %vm141, %v6146, 0.0
  %v6251 = vadd.f32 %v6249, %v6250
  %v6252 = vsel %vm141, %v6147, 0.0
  %v6253 = vadd.f32 %v6251, %v6252
  %v6254 = vsel %vm141, %v6148, 0.0
  %v6255 = vadd.f32 %v6253, %v6254
  %v6256 = vsel %vm141, %v6149, 0.0
  %v6257 = vadd.f32 %v6255, %v6256
  %v6258 = vsel %vm141, %v6150, 0.0
  %v6259 = vadd.f32 %v6257, %v6258
  %v6260 = vsel %vm141, %v6151, 0.0
  %v6261 = vadd.f32 %v6259, %v6260
  %v6262 = vsel %vm141, %v6152, 0.0
  %v6263 = vadd.f32 %v6261, %v6262
  %v6264 = vsel %vm141, %v6153, 0.0
  %v6265 = vadd.f32 %v6263, %v6264
  %v6266 = vsel %vm141, %v6154, 0.0
  %v6267 = vadd.f32 %v6265, %v6266
  %v6268 = vsel %vm141, %v6155, 0.0
  %v6269 = vadd.f32 %v6267, %v6268
  %v6270 = vsel %vm141, %v6156, 0.0
  %v6271 = vadd.f32 %v6269, %v6270
  %v6272 = vsel %vm141, %v6157, 0.0
  %v6273 = vadd.f32 %v6271, %v6272
  %v6274 = vsel %vm141, %v6158, 0.0
  %v6275 = vadd.f32 %v6273, %v6274
  %v6276 = vsel %vm141, %v6159, 0.0
  %v6277 = vadd.f32 %v6275, %v6276
  %v6278 = vsel %vm141, %v6160, 0.0
  %v6279 = vadd.f32 %v6277, %v6278
  %v6280 = vsel %vm141, %v6161, 0.0
  %v6281 = vadd.f32 %v6279, %v6280
  %v6282 = vsel %vm141, %v6162, 0.0
  %v6283 = vadd.f32 %v6281, %v6282
  %v6284 = vsel %vm141, %v6163, 0.0
  %v6285 = vadd.f32 %v6283, %v6284
  %v6286 = vsel %vm141, %v6164, 0.0
  %v6287 = vadd.f32 %v6285, %v6286
  %v6288 = vsel %vm141, %v6165, 0.0
  %v6289 = vadd.f32 %v6287, %v6288
  %v6290 = vsel %vm141, %v6166, 0.0
  %v6291 = vadd.f32 %v6289, %v6290
  %v6292 = vsel %vm141, %v6167, 0.0
  %v6293 = vadd.f32 %v6291, %v6292
  %v6294 = vsel %vm141, %v6168, 0.0
  %v6295 = vadd.f32 %v6293, %v6294
  %v6296 = vrot.slane %v6295, 4
  %v6297 = vadd.f32 %v6295, %v6296
  %v6298 = vrot.slane %v6297, 2
  %v6299 = vadd.f32 %v6297, %v6298
  %v6300 = vrot.slane %v6299, 1
  %v6301 = vadd.f32 %v6299, %v6300
  %v6302 = vmul.f32 %v6301, 0.001953125
  %v6303 = vsub.f32 %v6105, %v6302
  %v6304 = vsub.f32 %v6106, %v6302
  %v6305 = vsub.f32 %v6107, %v6302
  %v6306 = vsub.f32 %v6108, %v6302
  %v6307 = vsub.f32 %v6109, %v6302
  %v6308 = vsub.f32 %v6110, %v6302
  %v6309 = vsub.f32 %v6111, %v6302
  %v6310 = vsub.f32 %v6112, %v6302
  %v6311 = vsub.f32 %v6113, %v6302
  %v6312 = vsub.f32 %v6114, %v6302
  %v6313 = vsub.f32 %v6115, %v6302
  %v6314 = vsub.f32 %v6116, %v6302
  %v6315 = vsub.f32 %v6117, %v6302
  %v6316 = vsub.f32 %v6118, %v6302
  %v6317 = vsub.f32 %v6119, %v6302
  %v6318 = vsub.f32 %v6120, %v6302
  %v6319 = vsub.f32 %v6121, %v6302
  %v6320 = vsub.f32 %v6122, %v6302
  %v6321 = vsub.f32 %v6123, %v6302
  %v6322 = vsub.f32 %v6124, %v6302
  %v6323 = vsub.f32 %v6125, %v6302
  %v6324 = vsub.f32 %v6126, %v6302
  %v6325 = vsub.f32 %v6127, %v6302
  %v6326 = vsub.f32 %v6128, %v6302
  %v6327 = vsub.f32 %v6129, %v6302
  %v6328 = vsub.f32 %v6130, %v6302
  %v6329 = vsub.f32 %v6131, %v6302
  %v6330 = vsub.f32 %v6132, %v6302
  %v6331 = vsub.f32 %v6133, %v6302
  %v6332 = vsub.f32 %v6134, %v6302
  %v6333 = vsub.f32 %v6135, %v6302
  %v6334 = vsub.f32 %v6136, %v6302
  %v6335 = vsub.f32 %v6137, %v6302
  %v6336 = vsub.f32 %v6138, %v6302
  %v6337 = vsub.f32 %v6139, %v6302
  %v6338 = vsub.f32 %v6140, %v6302
  %v6339 = vsub.f32 %v6141, %v6302
  %v6340 = vsub.f32 %v6142, %v6302
  %v6341 = vsub.f32 %v6143, %v6302
  %v6342 = vsub.f32 %v6144, %v6302
  %v6343 = vsub.f32 %v6145, %v6302
  %v6344 = vsub.f32 %v6146, %v6302
  %v6345 = vsub.f32 %v6147, %v6302
  %v6346 = vsub.f32 %v6148, %v6302
  %v6347 = vsub.f32 %v6149, %v6302
  %v6348 = vsub.f32 %v6150, %v6302
  %v6349 = vsub.f32 %v6151, %v6302
  %v6350 = vsub.f32 %v6152, %v6302
  %v6351 = vsub.f32 %v6153, %v6302
  %v6352 = vsub.f32 %v6154, %v6302
  %v6353 = vsub.f32 %v6155, %v6302
  %v6354 = vsub.f32 %v6156, %v6302
  %v6355 = vsub.f32 %v6157, %v6302
  %v6356 = vsub.f32 %v6158, %v6302
  %v6357 = vsub.f32 %v6159, %v6302
  %v6358 = vsub.f32 %v6160, %v6302
  %v6359 = vsub.f32 %v6161, %v6302
  %v6360 = vsub.f32 %v6162, %v6302
  %v6361 = vsub.f32 %v6163, %v6302
  %v6362 = vsub.f32 %v6164, %v6302
  %v6363 = vsub.f32 %v6165, %v6302
  %v6364 = vsub.f32 %v6166, %v6302
  %v6365 = vsub.f32 %v6167, %v6302
  %v6366 = vsub.f32 %v6168, %v6302
  %v6367 = vmul.f32 %v6303, %v6303
  %v6368 = vmul.f32 %v6304, %v6304
  %v6369 = vmul.f32 %v6305, %v6305
  %v6370 = vmul.f32 %v6306, %v6306
  %v6371 = vmul.f32 %v6307, %v6307
  %v6372 = vmul.f32 %v6308, %v6308
  %v6373 = vmul.f32 %v6309, %v6309
  %v6374 = vmul.f32 %v6310, %v6310
  %v6375 = vmul.f32 %v6311, %v6311
  %v6376 = vmul.f32 %v6312, %v6312
  %v6377 = vmul.f32 %v6313, %v6313
  %v6378 = vmul.f32 %v6314, %v6314
  %v6379 = vmul.f32 %v6315, %v6315
  %v6380 = vmul.f32 %v6316, %v6316
  %v6381 = vmul.f32 %v6317, %v6317
  %v6382 = vmul.f32 %v6318, %v6318
  %v6383 = vmul.f32 %v6319, %v6319
  %v6384 = vmul.f32 %v6320, %v6320
  %v6385 = vmul.f32 %v6321, %v6321
  %v6386 = vmul.f32 %v6322, %v6322
  %v6387 = vmul.f32 %v6323, %v6323
  %v6388 = vmul.f32 %v6324, %v6324
  %v6389 = vmul.f32 %v6325, %v6325
  %v6390 = vmul.f32 %v6326, %v6326
  %v6391 = vmul.f32 %v6327, %v6327
  %v6392 = vmul.f32 %v6328, %v6328
  %v6393 = vmul.f32 %v6329, %v6329
  %v6394 = vmul.f32 %v6330, %v6330
  %v6395 = vmul.f32 %v6331, %v6331
  %v6396 = vmul.f32 %v6332, %v6332
  %v6397 = vmul.f32 %v6333, %v6333
  %v6398 = vmul.f32 %v6334, %v6334
  %v6399 = vmul.f32 %v6335, %v6335
  %v6400 = vmul.f32 %v6336, %v6336
  %v6401 = vmul.f32 %v6337, %v6337
  %v6402 = vmul.f32 %v6338, %v6338
  %v6403 = vmul.f32 %v6339, %v6339
  %v6404 = vmul.f32 %v6340, %v6340
  %v6405 = vmul.f32 %v6341, %v6341
  %v6406 = vmul.f32 %v6342, %v6342
  %v6407 = vmul.f32 %v6343, %v6343
  %v6408 = vmul.f32 %v6344, %v6344
  %v6409 = vmul.f32 %v6345, %v6345
  %v6410 = vmul.f32 %v6346, %v6346
  %v6411 = vmul.f32 %v6347, %v6347
  %v6412 = vmul.f32 %v6348, %v6348
  %v6413 = vmul.f32 %v6349, %v6349
  %v6414 = vmul.f32 %v6350, %v6350
  %v6415 = vmul.f32 %v6351, %v6351
  %v6416 = vmul.f32 %v6352, %v6352
  %v6417 = vmul.f32 %v6353, %v6353
  %v6418 = vmul.f32 %v6354, %v6354
  %v6419 = vmul.f32 %v6355, %v6355
  %v6420 = vmul.f32 %v6356, %v6356
  %v6421 = vmul.f32 %v6357, %v6357
  %v6422 = vmul.f32 %v6358, %v6358
  %v6423 = vmul.f32 %v6359, %v6359
  %v6424 = vmul.f32 %v6360, %v6360
  %v6425 = vmul.f32 %v6361, %v6361
  %v6426 = vmul.f32 %v6362, %v6362
  %v6427 = vmul.f32 %v6363, %v6363
  %v6428 = vmul.f32 %v6364, %v6364
  %v6429 = vmul.f32 %v6365, %v6365
  %v6430 = vmul.f32 %v6366, %v6366
  %v6431 = vsel %vm141, %v6367, 0.0
  %v6432 = vsel %vm141, %v6368, 0.0
  %v6433 = vadd.f32 %v6431, %v6432
  %v6434 = vsel %vm141, %v6369, 0.0
  %v6435 = vadd.f32 %v6433, %v6434
  %v6436 = vsel %vm141, %v6370, 0.0
  %v6437 = vadd.f32 %v6435, %v6436
  %v6438 = vsel %vm141, %v6371, 0.0
  %v6439 = vadd.f32 %v6437, %v6438
  %v6440 = vsel %vm141, %v6372, 0.0
  %v6441 = vadd.f32 %v6439, %v6440
  %v6442 = vsel %vm141, %v6373, 0.0
  %v6443 = vadd.f32 %v6441, %v6442
  %v6444 = vsel %vm141, %v6374, 0.0
  %v6445 = vadd.f32 %v6443, %v6444
  %v6446 = vsel %vm141, %v6375, 0.0
  %v6447 = vadd.f32 %v6445, %v6446
  %v6448 = vsel %vm141, %v6376, 0.0
  %v6449 = vadd.f32 %v6447, %v6448
  %v6450 = vsel %vm141, %v6377, 0.0
  %v6451 = vadd.f32 %v6449, %v6450
  %v6452 = vsel %vm141, %v6378, 0.0
  %v6453 = vadd.f32 %v6451, %v6452
  %v6454 = vsel %vm141, %v6379, 0.0
  %v6455 = vadd.f32 %v6453, %v6454
  %v6456 = vsel %vm141, %v6380, 0.0
  %v6457 = vadd.f32 %v6455, %v6456
  %v6458 = vsel %vm141, %v6381, 0.0
  %v6459 = vadd.f32 %v6457, %v6458
  %v6460 = vsel %vm141, %v6382, 0.0
  %v6461 = vadd.f32 %v6459, %v6460
  %v6462 = vsel %vm141, %v6383, 0.0
  %v6463 = vadd.f32 %v6461, %v6462
  %v6464 = vsel %vm141, %v6384, 0.0
  %v6465 = vadd.f32 %v6463, %v6464
  %v6466 = vsel %vm141, %v6385, 0.0
  %v6467 = vadd.f32 %v6465, %v6466
  %v6468 = vsel %vm141, %v6386, 0.0
  %v6469 = vadd.f32 %v6467, %v6468
  %v6470 = vsel %vm141, %v6387, 0.0
  %v6471 = vadd.f32 %v6469, %v6470
  %v6472 = vsel %vm141, %v6388, 0.0
  %v6473 = vadd.f32 %v6471, %v6472
  %v6474 = vsel %vm141, %v6389, 0.0
  %v6475 = vadd.f32 %v6473, %v6474
  %v6476 = vsel %vm141, %v6390, 0.0
  %v6477 = vadd.f32 %v6475, %v6476
  %v6478 = vsel %vm141, %v6391, 0.0
  %v6479 = vadd.f32 %v6477, %v6478
  %v6480 = vsel %vm141, %v6392, 0.0
  %v6481 = vadd.f32 %v6479, %v6480
  %v6482 = vsel %vm141, %v6393, 0.0
  %v6483 = vadd.f32 %v6481, %v6482
  %v6484 = vsel %vm141, %v6394, 0.0
  %v6485 = vadd.f32 %v6483, %v6484
  %v6486 = vsel %vm141, %v6395, 0.0
  %v6487 = vadd.f32 %v6485, %v6486
  %v6488 = vsel %vm141, %v6396, 0.0
  %v6489 = vadd.f32 %v6487, %v6488
  %v6490 = vsel %vm141, %v6397, 0.0
  %v6491 = vadd.f32 %v6489, %v6490
  %v6492 = vsel %vm141, %v6398, 0.0
  %v6493 = vadd.f32 %v6491, %v6492
  %v6494 = vsel %vm141, %v6399, 0.0
  %v6495 = vadd.f32 %v6493, %v6494
  %v6496 = vsel %vm141, %v6400, 0.0
  %v6497 = vadd.f32 %v6495, %v6496
  %v6498 = vsel %vm141, %v6401, 0.0
  %v6499 = vadd.f32 %v6497, %v6498
  %v6500 = vsel %vm141, %v6402, 0.0
  %v6501 = vadd.f32 %v6499, %v6500
  %v6502 = vsel %vm141, %v6403, 0.0
  %v6503 = vadd.f32 %v6501, %v6502
  %v6504 = vsel %vm141, %v6404, 0.0
  %v6505 = vadd.f32 %v6503, %v6504
  %v6506 = vsel %vm141, %v6405, 0.0
  %v6507 = vadd.f32 %v6505, %v6506
  %v6508 = vsel %vm141, %v6406, 0.0
  %v6509 = vadd.f32 %v6507, %v6508
  %v6510 = vsel %vm141, %v6407, 0.0
  %v6511 = vadd.f32 %v6509, %v6510
  %v6512 = vsel %vm141, %v6408, 0.0
  %v6513 = vadd.f32 %v6511, %v6512
  %v6514 = vsel %vm141, %v6409, 0.0
  %v6515 = vadd.f32 %v6513, %v6514
  %v6516 = vsel %vm141, %v6410, 0.0
  %v6517 = vadd.f32 %v6515, %v6516
  %v6518 = vsel %vm141, %v6411, 0.0
  %v6519 = vadd.f32 %v6517, %v6518
  %v6520 = vsel %vm141, %v6412, 0.0
  %v6521 = vadd.f32 %v6519, %v6520
  %v6522 = vsel %vm141, %v6413, 0.0
  %v6523 = vadd.f32 %v6521, %v6522
  %v6524 = vsel %vm141, %v6414, 0.0
  %v6525 = vadd.f32 %v6523, %v6524
  %v6526 = vsel %vm141, %v6415, 0.0
  %v6527 = vadd.f32 %v6525, %v6526
  %v6528 = vsel %vm141, %v6416, 0.0
  %v6529 = vadd.f32 %v6527, %v6528
  %v6530 = vsel %vm141, %v6417, 0.0
  %v6531 = vadd.f32 %v6529, %v6530
  %v6532 = vsel %vm141, %v6418, 0.0
  %v6533 = vadd.f32 %v6531, %v6532
  %v6534 = vsel %vm141, %v6419, 0.0
  %v6535 = vadd.f32 %v6533, %v6534
  %v6536 = vsel %vm141, %v6420, 0.0
  %v6537 = vadd.f32 %v6535, %v6536
  %v6538 = vsel %vm141, %v6421, 0.0
  %v6539 = vadd.f32 %v6537, %v6538
  %v6540 = vsel %vm141, %v6422, 0.0
  %v6541 = vadd.f32 %v6539, %v6540
  %v6542 = vsel %vm141, %v6423, 0.0
  %v6543 = vadd.f32 %v6541, %v6542
  %v6544 = vsel %vm141, %v6424, 0.0
  %v6545 = vadd.f32 %v6543, %v6544
  %v6546 = vsel %vm141, %v6425, 0.0
  %v6547 = vadd.f32 %v6545, %v6546
  %v6548 = vsel %vm141, %v6426, 0.0
  %v6549 = vadd.f32 %v6547, %v6548
  %v6550 = vsel %vm141, %v6427, 0.0
  %v6551 = vadd.f32 %v6549, %v6550
  %v6552 = vsel %vm141, %v6428, 0.0
  %v6553 = vadd.f32 %v6551, %v6552
  %v6554 = vsel %vm141, %v6429, 0.0
  %v6555 = vadd.f32 %v6553, %v6554
  %v6556 = vsel %vm141, %v6430, 0.0
  %v6557 = vadd.f32 %v6555, %v6556
  %v6558 = vrot.slane %v6557, 4
  %v6559 = vadd.f32 %v6557, %v6558
  %v6560 = vrot.slane %v6559, 2
  %v6561 = vadd.f32 %v6559, %v6560
  %v6562 = vrot.slane %v6561, 1
  %v6563 = vadd.f32 %v6561, %v6562
  %v6564 = vmul.f32 %v6563, 0.001953125
  %v6565 = vadd.f32 %v6564, 1e-05
  %v6566 = vrsqrt.pop %v6565
  %v6567 = vmul.f32 %v6039, %v6566
  %v6569 = vlaneseq
  %v6570 = vshrl.u32 %v6569, 7
  %v6571 = vsub.s32 0, %v6570
  %v6572 = vrot.slane %v6567, %v6571
  %v6574 = vmul.f32 %v6303, %v6572
  %v6575 = vmul.f32 %v6304, %v6572
  %v6576 = vmul.f32 %v6305, %v6572
  %v6577 = vmul.f32 %v6306, %v6572
  %v6578 = vmul.f32 %v6307, %v6572
  %v6579 = vmul.f32 %v6308, %v6572
  %v6580 = vmul.f32 %v6309, %v6572
  %v6581 = vmul.f32 %v6310, %v6572
  %v6582 = vmul.f32 %v6311, %v6572
  %v6583 = vmul.f32 %v6312, %v6572
  %v6584 = vmul.f32 %v6313, %v6572
  %v6585 = vmul.f32 %v6314, %v6572
  %v6586 = vmul.f32 %v6315, %v6572
  %v6587 = vmul.f32 %v6316, %v6572
  %v6588 = vmul.f32 %v6317, %v6572
  %v6589 = vmul.f32 %v6318, %v6572
  %v6590 = vmul.f32 %v6319, %v6572
  %v6591 = vmul.f32 %v6320, %v6572
  %v6592 = vmul.f32 %v6321, %v6572
  %v6593 = vmul.f32 %v6322, %v6572
  %v6594 = vmul.f32 %v6323, %v6572
  %v6595 = vmul.f32 %v6324, %v6572
  %v6596 = vmul.f32 %v6325, %v6572
  %v6597 = vmul.f32 %v6326, %v6572
  %v6598 = vmul.f32 %v6327, %v6572
  %v6599 = vmul.f32 %v6328, %v6572
  %v6600 = vmul.f32 %v6329, %v6572
  %v6601 = vmul.f32 %v6330, %v6572
  %v6602 = vmul.f32 %v6331, %v6572
  %v6603 = vmul.f32 %v6332, %v6572
  %v6604 = vmul.f32 %v6333, %v6572
  %v6605 = vmul.f32 %v6334, %v6572
  %v6606 = vmul.f32 %v6335, %v6572
  %v6607 = vmul.f32 %v6336, %v6572
  %v6608 = vmul.f32 %v6337, %v6572
  %v6609 = vmul.f32 %v6338, %v6572
  %v6610 = vmul.f32 %v6339, %v6572
  %v6611 = vmul.f32 %v6340, %v6572
  %v6612 = vmul.f32 %v6341, %v6572
  %v6613 = vmul.f32 %v6342, %v6572
  %v6614 = vmul.f32 %v6343, %v6572
  %v6615 = vmul.f32 %v6344, %v6572
  %v6616 = vmul.f32 %v6345, %v6572
  %v6617 = vmul.f32 %v6346, %v6572
  %v6618 = vmul.f32 %v6347, %v6572
  %v6619 = vmul.f32 %v6348, %v6572
  %v6620 = vmul.f32 %v6349, %v6572
  %v6621 = vmul.f32 %v6350, %v6572
  %v6622 = vmul.f32 %v6351, %v6572
  %v6623 = vmul.f32 %v6352, %v6572
  %v6624 = vmul.f32 %v6353, %v6572
  %v6625 = vmul.f32 %v6354, %v6572
  %v6626 = vmul.f32 %v6355, %v6572
  %v6627 = vmul.f32 %v6356, %v6572
  %v6628 = vmul.f32 %v6357, %v6572
  %v6629 = vmul.f32 %v6358, %v6572
  %v6630 = vmul.f32 %v6359, %v6572
  %v6631 = vmul.f32 %v6360, %v6572
  %v6632 = vmul.f32 %v6361, %v6572
  %v6633 = vmul.f32 %v6362, %v6572
  %v6634 = vmul.f32 %v6363, %v6572
  %v6635 = vmul.f32 %v6364, %v6572
  %v6636 = vmul.f32 %v6365, %v6572
  %v6637 = vmul.f32 %v6366, %v6572
  %v6639 = vlaneseq
  %v6640 = vshrl.u32 %v6639, 7
  %v6641 = vsub.s32 0, %v6640
  %v6642 = vrot.slane %v6040, %v6641
  %v6644 = vadd.f32 %v6574, %v6642
  %v6645 = vadd.f32 %v6575, %v6642
  %v6646 = vadd.f32 %v6576, %v6642
  %v6647 = vadd.f32 %v6577, %v6642
  %v6648 = vadd.f32 %v6578, %v6642
  %v6649 = vadd.f32 %v6579, %v6642
  %v6650 = vadd.f32 %v6580, %v6642
  %v6651 = vadd.f32 %v6581, %v6642
  %v6652 = vadd.f32 %v6582, %v6642
  %v6653 = vadd.f32 %v6583, %v6642
  %v6654 = vadd.f32 %v6584, %v6642
  %v6655 = vadd.f32 %v6585, %v6642
  %v6656 = vadd.f32 %v6586, %v6642
  %v6657 = vadd.f32 %v6587, %v6642
  %v6658 = vadd.f32 %v6588, %v6642
  %v6659 = vadd.f32 %v6589, %v6642
  %v6660 = vadd.f32 %v6590, %v6642
  %v6661 = vadd.f32 %v6591, %v6642
  %v6662 = vadd.f32 %v6592, %v6642
  %v6663 = vadd.f32 %v6593, %v6642
  %v6664 = vadd.f32 %v6594, %v6642
  %v6665 = vadd.f32 %v6595, %v6642
  %v6666 = vadd.f32 %v6596, %v6642
  %v6667 = vadd.f32 %v6597, %v6642
  %v6668 = vadd.f32 %v6598, %v6642
  %v6669 = vadd.f32 %v6599, %v6642
  %v6670 = vadd.f32 %v6600, %v6642
  %v6671 = vadd.f32 %v6601, %v6642
  %v6672 = vadd.f32 %v6602, %v6642
  %v6673 = vadd.f32 %v6603, %v6642
  %v6674 = vadd.f32 %v6604, %v6642
  %v6675 = vadd.f32 %v6605, %v6642
  %v6676 = vadd.f32 %v6606, %v6642
  %v6677 = vadd.f32 %v6607, %v6642
  %v6678 = vadd.f32 %v6608, %v6642
  %v6679 = vadd.f32 %v6609, %v6642
  %v6680 = vadd.f32 %v6610, %v6642
  %v6681 = vadd.f32 %v6611, %v6642
  %v6682 = vadd.f32 %v6612, %v6642
  %v6683 = vadd.f32 %v6613, %v6642
  %v6684 = vadd.f32 %v6614, %v6642
  %v6685 = vadd.f32 %v6615, %v6642
  %v6686 = vadd.f32 %v6616, %v6642
  %v6687 = vadd.f32 %v6617, %v6642
  %v6688 = vadd.f32 %v6618, %v6642
  %v6689 = vadd.f32 %v6619, %v6642
  %v6690 = vadd.f32 %v6620, %v6642
  %v6691 = vadd.f32 %v6621, %v6642
  %v6692 = vadd.f32 %v6622, %v6642
  %v6693 = vadd.f32 %v6623, %v6642
  %v6694 = vadd.f32 %v6624, %v6642
  %v6695 = vadd.f32 %v6625, %v6642
  %v6696 = vadd.f32 %v6626, %v6642
  %v6697 = vadd.f32 %v6627, %v6642
  %v6698 = vadd.f32 %v6628, %v6642
  %v6699 = vadd.f32 %v6629, %v6642
  %v6700 = vadd.f32 %v6630, %v6642
  %v6701 = vadd.f32 %v6631, %v6642
  %v6702 = vadd.f32 %v6632, %v6642
  %v6703 = vadd.f32 %v6633, %v6642
  %v6704 = vadd.f32 %v6634, %v6642
  %v6705 = vadd.f32 %v6635, %v6642
  %v6706 = vadd.f32 %v6636, %v6642
  %v6707 = vadd.f32 %v6637, %v6642
  %6708 = vst.msk [vmem:[%s3492 + $0x8] sm:$0xff] %vm141, %v6644
  %6709 = vst.msk [vmem:[%s3492 + $0x10] sm:$0xff] %vm141, %v6645
  %6710 = vst.msk [vmem:[%s3492 + $0x28] sm:$0xff] %vm141, %v6646
  %6711 = vst.msk [vmem:[%s3492 + $0x30] sm:$0xff] %vm141, %v6647
  %6712 = vst.msk [vmem:[%s3492 + $0x48] sm:$0xff] %vm141, %v6648
  %6713 = vst.msk [vmem:[%s3492 + $0x50] sm:$0xff] %vm141, %v6649
  %6714 = vst.msk [vmem:[%s3492 + $0x68] sm:$0xff] %vm141, %v6650
  %6715 = vst.msk [vmem:[%s3492 + $0x70] sm:$0xff] %vm141, %v6651
  %6716 = vst.msk [vmem:[%s3492 + $0x88] sm:$0xff] %vm141, %v6652
  %6717 = vst.msk [vmem:[%s3492 + $0x90] sm:$0xff] %vm141, %v6653
  %6718 = vst.msk [vmem:[%s3492 + $0xa8] sm:$0xff] %vm141, %v6654
  %6719 = vst.msk [vmem:[%s3492 + $0xb0] sm:$0xff] %vm141, %v6655
  %6720 = vst.msk [vmem:[%s3492 + $0xc8] sm:$0xff] %vm141, %v6656
  %6721 = vst.msk [vmem:[%s3492 + $0xd0] sm:$0xff] %vm141, %v6657
  %6722 = vst.msk [vmem:[%s3492 + $0xe8] sm:$0xff] %vm141, %v6658
  %6723 = vst.msk [vmem:[%s3492 + $0xf0] sm:$0xff] %vm141, %v6659
  %6724 = vst.msk [vmem:[%s3492 + $0x108] sm:$0xff] %vm141, %v6660
  %6725 = vst.msk [vmem:[%s3492 + $0x110] sm:$0xff] %vm141, %v6661
  %6726 = vst.msk [vmem:[%s3492 + $0x128] sm:$0xff] %vm141, %v6662
  %6727 = vst.msk [vmem:[%s3492 + $0x130] sm:$0xff] %vm141, %v6663
  %6728 = vst.msk [vmem:[%s3492 + $0x148] sm:$0xff] %vm141, %v6664
  %6729 = vst.msk [vmem:[%s3492 + $0x150] sm:$0xff] %vm141, %v6665
  %6730 = vst.msk [vmem:[%s3492 + $0x168] sm:$0xff] %vm141, %v6666
  %6731 = vst.msk [vmem:[%s3492 + $0x170] sm:$0xff] %vm141, %v6667
  %6732 = vst.msk [vmem:[%s3492 + $0x188] sm:$0xff] %vm141, %v6668
  %6733 = vst.msk [vmem:[%s3492 + $0x190] sm:$0xff] %vm141, %v6669
  %6734 = vst.msk [vmem:[%s3492 + $0x1a8] sm:$0xff] %vm141, %v6670
  %6735 = vst.msk [vmem:[%s3492 + $0x1b0] sm:$0xff] %vm141, %v6671
  %6736 = vst.msk [vmem:[%s3492 + $0x1c8] sm:$0xff] %vm141, %v6672
  %6737 = vst.msk [vmem:[%s3492 + $0x1d0] sm:$0xff] %vm141, %v6673
  %6738 = vst.msk [vmem:[%s3492 + $0x1e8] sm:$0xff] %vm141, %v6674
  %6739 = vst.msk [vmem:[%s3492 + $0x1f0] sm:$0xff] %vm141, %v6675
  %6740 = vst.msk [vmem:[%s3492 + $0x248] sm:$0xff] %vm141, %v6676
  %6741 = vst.msk [vmem:[%s3492 + $0x250] sm:$0xff] %vm141, %v6677
  %6742 = vst.msk [vmem:[%s3492 + $0x268] sm:$0xff] %vm141, %v6678
  %6743 = vst.msk [vmem:[%s3492 + $0x270] sm:$0xff] %vm141, %v6679
  %6744 = vst.msk [vmem:[%s3492 + $0x288] sm:$0xff] %vm141, %v6680
  %6745 = vst.msk [vmem:[%s3492 + $0x290] sm:$0xff] %vm141, %v6681
  %6746 = vst.msk [vmem:[%s3492 + $0x2a8] sm:$0xff] %vm141, %v6682
  %6747 = vst.msk [vmem:[%s3492 + $0x2b0] sm:$0xff] %vm141, %v6683
  %6748 = vst.msk [vmem:[%s3492 + $0x2c8] sm:$0xff] %vm141, %v6684
  %6749 = vst.msk [vmem:[%s3492 + $0x2d0] sm:$0xff] %vm141, %v6685
  %6750 = vst.msk [vmem:[%s3492 + $0x2e8] sm:$0xff] %vm141, %v6686
  %6751 = vst.msk [vmem:[%s3492 + $0x2f0] sm:$0xff] %vm141, %v6687
  %6752 = vst.msk [vmem:[%s3492 + $0x308] sm:$0xff] %vm141, %v6688
  %6753 = vst.msk [vmem:[%s3492 + $0x310] sm:$0xff] %vm141, %v6689
  %6754 = vst.msk [vmem:[%s3492 + $0x328] sm:$0xff] %vm141, %v6690
  %6755 = vst.msk [vmem:[%s3492 + $0x330] sm:$0xff] %vm141, %v6691
  %6756 = vst.msk [vmem:[%s3492 + $0x348] sm:$0xff] %vm141, %v6692
  %6757 = vst.msk [vmem:[%s3492 + $0x350] sm:$0xff] %vm141, %v6693
  %6758 = vst.msk [vmem:[%s3492 + $0x368] sm:$0xff] %vm141, %v6694
  %6759 = vst.msk [vmem:[%s3492 + $0x370] sm:$0xff] %vm141, %v6695
  %6760 = vst.msk [vmem:[%s3492 + $0x388] sm:$0xff] %vm141, %v6696
  %6761 = vst.msk [vmem:[%s3492 + $0x390] sm:$0xff] %vm141, %v6697
  %6762 = vst.msk [vmem:[%s3492 + $0x3a8] sm:$0xff] %vm141, %v6698
  %6763 = vst.msk [vmem:[%s3492 + $0x3b0] sm:$0xff] %vm141, %v6699
  %6764 = vst.msk [vmem:[%s3492 + $0x3c8] sm:$0xff] %vm141, %v6700
  %6765 = vst.msk [vmem:[%s3492 + $0x3d0] sm:$0xff] %vm141, %v6701
  %6766 = vst.msk [vmem:[%s3492 + $0x3e8] sm:$0xff] %vm141, %v6702
  %6767 = vst.msk [vmem:[%s3492 + $0x3f0] sm:$0xff] %vm141, %v6703
  %6768 = vst.msk [vmem:[%s3492 + $0x408] sm:$0xff] %vm141, %v6704
  %6769 = vst.msk [vmem:[%s3492 + $0x410] sm:$0xff] %vm141, %v6705
  %6770 = vst.msk [vmem:[%s3492 + $0x428] sm:$0xff] %vm141, %v6706
  %6771 = vst.msk [vmem:[%s3492 + $0x430] sm:$0xff] %vm141, %v6707
  %v6772 = vld [vmem:[#allocation3 + $0x7] sm:$0xff]
  %v6773 = vld [vmem:[#allocation3 + $0xf] sm:$0xff]
  %v6774 = vld [vmem:[#allocation3 + $0x27] sm:$0xff]
  %v6775 = vld [vmem:[#allocation3 + $0x2f] sm:$0xff]
  %v6776 = vld [vmem:[#allocation3 + $0x47] sm:$0xff]
  %v6777 = vld [vmem:[#allocation3 + $0x4f] sm:$0xff]
  %v6778 = vld [vmem:[#allocation3 + $0x67] sm:$0xff]
  %v6779 = vld [vmem:[#allocation3 + $0x6f] sm:$0xff]
  %v6780 = vld [vmem:[#allocation3 + $0x87] sm:$0xff]
  %v6781 = vld [vmem:[#allocation3 + $0x8f] sm:$0xff]
  %v6782 = vld [vmem:[#allocation3 + $0xa7] sm:$0xff]
  %v6783 = vld [vmem:[#allocation3 + $0xaf] sm:$0xff]
  %v6784 = vld [vmem:[#allocation3 + $0xc7] sm:$0xff]
  %v6785 = vld [vmem:[#allocation3 + $0xcf] sm:$0xff]
  %v6786 = vld [vmem:[#allocation3 + $0xe7] sm:$0xff]
  %v6787 = vld [vmem:[#allocation3 + $0xef] sm:$0xff]
  %v6788 = vld [vmem:[#allocation3 + $0x107] sm:$0xff]
  %v6789 = vld [vmem:[#allocation3 + $0x10f] sm:$0xff]
  %v6790 = vld [vmem:[#allocation3 + $0x127] sm:$0xff]
  %v6791 = vld [vmem:[#allocation3 + $0x12f] sm:$0xff]
  %v6792 = vld [vmem:[#allocation3 + $0x147] sm:$0xff]
  %v6793 = vld [vmem:[#allocation3 + $0x14f] sm:$0xff]
  %v6794 = vld [vmem:[#allocation3 + $0x167] sm:$0xff]
  %v6795 = vld [vmem:[#allocation3 + $0x16f] sm:$0xff]
  %v6796 = vld [vmem:[#allocation3 + $0x187] sm:$0xff]
  %v6797 = vld [vmem:[#allocation3 + $0x18f] sm:$0xff]
  %v6798 = vld [vmem:[#allocation3 + $0x1a7] sm:$0xff]
  %v6799 = vld [vmem:[#allocation3 + $0x1af] sm:$0xff]
  %v6800 = vld [vmem:[#allocation3 + $0x1c7] sm:$0xff]
  %v6801 = vld [vmem:[#allocation3 + $0x1cf] sm:$0xff]
  %v6802 = vld [vmem:[#allocation3 + $0x1e7] sm:$0xff]
  %v6803 = vld [vmem:[#allocation3 + $0x1ef] sm:$0xff]
  %v6804 = vld [vmem:[#allocation3 + $0x207] sm:$0xff]
  %v6805 = vld [vmem:[#allocation3 + $0x20f] sm:$0xff]
  %v6806 = vld [vmem:[#allocation3 + $0x227] sm:$0xff]
  %v6807 = vld [vmem:[#allocation3 + $0x22f] sm:$0xff]
  %v6808 = vld [vmem:[#allocation3 + $0x247] sm:$0xff]
  %v6809 = vld [vmem:[#allocation3 + $0x24f] sm:$0xff]
  %v6810 = vld [vmem:[#allocation3 + $0x267] sm:$0xff]
  %v6811 = vld [vmem:[#allocation3 + $0x26f] sm:$0xff]
  %v6812 = vld [vmem:[#allocation3 + $0x287] sm:$0xff]
  %v6813 = vld [vmem:[#allocation3 + $0x28f] sm:$0xff]
  %v6814 = vld [vmem:[#allocation3 + $0x2a7] sm:$0xff]
  %v6815 = vld [vmem:[#allocation3 + $0x2af] sm:$0xff]
  %v6816 = vld [vmem:[#allocation3 + $0x2c7] sm:$0xff]
  %v6817 = vld [vmem:[#allocation3 + $0x2cf] sm:$0xff]
  %v6818 = vld [vmem:[#allocation3 + $0x2e7] sm:$0xff]
  %v6819 = vld [vmem:[#allocation3 + $0x2ef] sm:$0xff]
  %v6820 = vld [vmem:[#allocation3 + $0x307] sm:$0xff]
  %v6821 = vld [vmem:[#allocation3 + $0x30f] sm:$0xff]
  %v6822 = vld [vmem:[#allocation3 + $0x327] sm:$0xff]
  %v6823 = vld [vmem:[#allocation3 + $0x32f] sm:$0xff]
  %v6824 = vld [vmem:[#allocation3 + $0x347] sm:$0xff]
  %v6825 = vld [vmem:[#allocation3 + $0x34f] sm:$0xff]
  %v6826 = vld [vmem:[#allocation3 + $0x367] sm:$0xff]
  %v6827 = vld [vmem:[#allocation3 + $0x36f] sm:$0xff]
  %v6828 = vld [vmem:[#allocation3 + $0x387] sm:$0xff]
  %v6829 = vld [vmem:[#allocation3 + $0x38f] sm:$0xff]
  %v6830 = vld [vmem:[#allocation3 + $0x3a7] sm:$0xff]
  %v6831 = vld [vmem:[#allocation3 + $0x3af] sm:$0xff]
  %v6832 = vld [vmem:[#allocation3 + $0x3c7] sm:$0xff]
  %v6833 = vld [vmem:[#allocation3 + $0x3cf] sm:$0xff]
  %v6834 = vld [vmem:[#allocation3 + $0x3e7] sm:$0xff]
  %v6835 = vld [vmem:[#allocation3 + $0x3ef] sm:$0xff]
  %v6836 = vld [vmem:[#allocation3 + $0x407] sm:$0xff]
  %v6837 = vld [vmem:[#allocation3 + $0x40f] sm:$0xff]
  %v6838 = vld [vmem:[#allocation3 + $0x427] sm:$0xff]
  %v6839 = vld [vmem:[#allocation3 + $0x42f] sm:$0xff]
  %v6840 = vld [vmem:[#allocation3 + $0x447] sm:$0xff]
  %v6841 = vld [vmem:[#allocation3 + $0x44f] sm:$0xff]
  %v6842 = vld [vmem:[#allocation3 + $0x467] sm:$0xff]
  %v6843 = vld [vmem:[#allocation3 + $0x46f] sm:$0xff]
  %v6844 = vld [vmem:[#allocation3 + $0x8] sm:$0xff]
  %v6845 = vld [vmem:[#allocation3 + $0x10] sm:$0xff]
  %v6846 = vld [vmem:[#allocation3 + $0x28] sm:$0xff]
  %v6847 = vld [vmem:[#allocation3 + $0x30] sm:$0xff]
  %v6848 = vld [vmem:[#allocation3 + $0x48] sm:$0xff]
  %v6849 = vld [vmem:[#allocation3 + $0x50] sm:$0xff]
  %v6850 = vld [vmem:[#allocation3 + $0x68] sm:$0xff]
  %v6851 = vld [vmem:[#allocation3 + $0x70] sm:$0xff]
  %v6852 = vld [vmem:[#allocation3 + $0x88] sm:$0xff]
  %v6853 = vld [vmem:[#allocation3 + $0x90] sm:$0xff]
  %v6854 = vld [vmem:[#allocation3 + $0xa8] sm:$0xff]
  %v6855 = vld [vmem:[#allocation3 + $0xb0] sm:$0xff]
  %v6856 = vld [vmem:[#allocation3 + $0xc8] sm:$0xff]
  %v6857 = vld [vmem:[#allocation3 + $0xd0] sm:$0xff]
  %v6858 = vld [vmem:[#allocation3 + $0xe8] sm:$0xff]
  %v6859 = vld [vmem:[#allocation3 + $0xf0] sm:$0xff]
  %v6860 = vld [vmem:[#allocation3 + $0x108] sm:$0xff]
  %v6861 = vld [vmem:[#allocation3 + $0x110] sm:$0xff]
  %v6862 = vld [vmem:[#allocation3 + $0x128] sm:$0xff]
  %v6863 = vld [vmem:[#allocation3 + $0x130] sm:$0xff]
  %v6864 = vld [vmem:[#allocation3 + $0x148] sm:$0xff]
  %v6865 = vld [vmem:[#allocation3 + $0x150] sm:$0xff]
  %v6866 = vld [vmem:[#allocation3 + $0x168] sm:$0xff]
  %v6867 = vld [vmem:[#allocation3 + $0x170] sm:$0xff]
  %v6868 = vld [vmem:[#allocation3 + $0x188] sm:$0xff]
  %v6869 = vld [vmem:[#allocation3 + $0x190] sm:$0xff]
  %v6870 = vld [vmem:[#allocation3 + $0x1a8] sm:$0xff]
  %v6871 = vld [vmem:[#allocation3 + $0x1b0] sm:$0xff]
  %v6872 = vld [vmem:[#allocation3 + $0x1c8] sm:$0xff]
  %v6873 = vld [vmem:[#allocation3 + $0x1d0] sm:$0xff]
  %v6874 = vld [vmem:[#allocation3 + $0x1e8] sm:$0xff]
  %v6875 = vld [vmem:[#allocation3 + $0x1f0] sm:$0xff]
  %v6876 = vld [vmem:[#allocation3 + $0x208] sm:$0xff]
  %v6877 = vld [vmem:[#allocation3 + $0x210] sm:$0xff]
  %v6878 = vld [vmem:[#allocation3 + $0x228] sm:$0xff]
  %v6879 = vld [vmem:[#allocation3 + $0x230] sm:$0xff]
  %v6880 = vld [vmem:[#allocation3 + $0x248] sm:$0xff]
  %v6881 = vld [vmem:[#allocation3 + $0x250] sm:$0xff]
  %v6882 = vld [vmem:[#allocation3 + $0x268] sm:$0xff]
  %v6883 = vld [vmem:[#allocation3 + $0x270] sm:$0xff]
  %v6884 = vld [vmem:[#allocation3 + $0x288] sm:$0xff]
  %v6885 = vld [vmem:[#allocation3 + $0x290] sm:$0xff]
  %v6886 = vld [vmem:[#allocation3 + $0x2a8] sm:$0xff]
  %v6887 = vld [vmem:[#allocation3 + $0x2b0] sm:$0xff]
  %v6888 = vld [vmem:[#allocation3 + $0x2c8] sm:$0xff]
  %v6889 = vld [vmem:[#allocation3 + $0x2d0] sm:$0xff]
  %v6890 = vld [vmem:[#allocation3 + $0x2e8] sm:$0xff]
  %v6891 = vld [vmem:[#allocation3 + $0x2f0] sm:$0xff]
  %v6892 = vld [vmem:[#allocation3 + $0x308] sm:$0xff]
  %v6893 = vld [vmem:[#allocation3 + $0x310] sm:$0xff]
  %v6894 = vld [vmem:[#allocation3 + $0x328] sm:$0xff]
  %v6895 = vld [vmem:[#allocation3 + $0x330] sm:$0xff]
  %v6896 = vld [vmem:[#allocation3 + $0x348] sm:$0xff]
  %v6897 = vld [vmem:[#allocation3 + $0x350] sm:$0xff]
  %v6898 = vld [vmem:[#allocation3 + $0x368] sm:$0xff]
  %v6899 = vld [vmem:[#allocation3 + $0x370] sm:$0xff]
  %v6900 = vld [vmem:[#allocation3 + $0x388] sm:$0xff]
  %v6901 = vld [vmem:[#allocation3 + $0x390] sm:$0xff]
  %v6902 = vld [vmem:[#allocation3 + $0x3a8] sm:$0xff]
  %v6903 = vld [vmem:[#allocation3 + $0x3b0] sm:$0xff]
  %v6904 = vld [vmem:[#allocation3 + $0x3c8] sm:$0xff]
  %v6905 = vld [vmem:[#allocation3 + $0x3d0] sm:$0xff]
  %v6906 = vld [vmem:[#allocation3 + $0x3e8] sm:$0xff]
  %v6907 = vld [vmem:[#allocation3 + $0x3f0] sm:$0xff]
  %v6908 = vld [vmem:[#allocation3 + $0x408] sm:$0xff]
  %v6909 = vld [vmem:[#allocation3 + $0x410] sm:$0xff]
  %v6910 = vld [vmem:[#allocation3 + $0x428] sm:$0xff]
  %v6911 = vld [vmem:[#allocation3 + $0x430] sm:$0xff]
  %v6912 = vld [vmem:[#allocation3 + $0x448] sm:$0xff]
  %v6913 = vld [vmem:[#allocation3 + $0x450] sm:$0xff]
  %v6914 = vld [vmem:[#allocation3 + $0x468] sm:$0xff]
  %v6915 = vld [vmem:[#allocation3 + $0x470] sm:$0xff]
  %v6916 = vld [vmem:[#allocation3 + $0x9] sm:$0xff]
  %v6917 = vld [vmem:[#allocation3 + $0x11] sm:$0xff]
  %v6918 = vld [vmem:[#allocation3 + $0x29] sm:$0xff]
  %v6919 = vld [vmem:[#allocation3 + $0x31] sm:$0xff]
  %v6920 = vld [vmem:[#allocation3 + $0x49] sm:$0xff]
  %v6921 = vld [vmem:[#allocation3 + $0x51] sm:$0xff]
  %v6922 = vld [vmem:[#allocation3 + $0x69] sm:$0xff]
  %v6923 = vld [vmem:[#allocation3 + $0x71] sm:$0xff]
  %v6924 = vld [vmem:[#allocation3 + $0x89] sm:$0xff]
  %v6925 = vld [vmem:[#allocation3 + $0x91] sm:$0xff]
  %v6926 = vld [vmem:[#allocation3 + $0xa9] sm:$0xff]
  %v6927 = vld [vmem:[#allocation3 + $0xb1] sm:$0xff]
  %v6928 = vld [vmem:[#allocation3 + $0xc9] sm:$0xff]
  %v6929 = vld [vmem:[#allocation3 + $0xd1] sm:$0xff]
  %v6930 = vld [vmem:[#allocation3 + $0xe9] sm:$0xff]
  %v6931 = vld [vmem:[#allocation3 + $0xf1] sm:$0xff]
  %v6932 = vld [vmem:[#allocation3 + $0x109] sm:$0xff]
  %v6933 = vld [vmem:[#allocation3 + $0x111] sm:$0xff]
  %v6934 = vld [vmem:[#allocation3 + $0x129] sm:$0xff]
  %v6935 = vld [vmem:[#allocation3 + $0x131] sm:$0xff]
  %v6936 = vld [vmem:[#allocation3 + $0x149] sm:$0xff]
  %v6937 = vld [vmem:[#allocation3 + $0x151] sm:$0xff]
  %v6938 = vld [vmem:[#allocation3 + $0x169] sm:$0xff]
  %v6939 = vld [vmem:[#allocation3 + $0x171] sm:$0xff]
  %v6940 = vld [vmem:[#allocation3 + $0x189] sm:$0xff]
  %v6941 = vld [vmem:[#allocation3 + $0x191] sm:$0xff]
  %v6942 = vld [vmem:[#allocation3 + $0x1a9] sm:$0xff]
  %v6943 = vld [vmem:[#allocation3 + $0x1b1] sm:$0xff]
  %v6944 = vld [vmem:[#allocation3 + $0x1c9] sm:$0xff]
  %v6945 = vld [vmem:[#allocation3 + $0x1d1] sm:$0xff]
  %v6946 = vld [vmem:[#allocation3 + $0x1e9] sm:$0xff]
  %v6947 = vld [vmem:[#allocation3 + $0x1f1] sm:$0xff]
  %v6948 = vld [vmem:[#allocation3 + $0x209] sm:$0xff]
  %v6949 = vld [vmem:[#allocation3 + $0x211] sm:$0xff]
  %v6950 = vld [vmem:[#allocation3 + $0x229] sm:$0xff]
  %v6951 = vld [vmem:[#allocation3 + $0x231] sm:$0xff]
  %v6952 = vld [vmem:[#allocation3 + $0x249] sm:$0xff]
  %v6953 = vld [vmem:[#allocation3 + $0x251] sm:$0xff]
  %v6954 = vld [vmem:[#allocation3 + $0x269] sm:$0xff]
  %v6955 = vld [vmem:[#allocation3 + $0x271] sm:$0xff]
  %v6956 = vld [vmem:[#allocation3 + $0x289] sm:$0xff]
  %v6957 = vld [vmem:[#allocation3 + $0x291] sm:$0xff]
  %v6958 = vld [vmem:[#allocation3 + $0x2a9] sm:$0xff]
  %v6959 = vld [vmem:[#allocation3 + $0x2b1] sm:$0xff]
  %v6960 = vld [vmem:[#allocation3 + $0x2c9] sm:$0xff]
  %v6961 = vld [vmem:[#allocation3 + $0x2d1] sm:$0xff]
  %v6962 = vld [vmem:[#allocation3 + $0x2e9] sm:$0xff]
  %v6963 = vld [vmem:[#allocation3 + $0x2f1] sm:$0xff]
  %v6964 = vld [vmem:[#allocation3 + $0x309] sm:$0xff]
  %v6965 = vld [vmem:[#allocation3 + $0x311] sm:$0xff]
  %v6966 = vld [vmem:[#allocation3 + $0x329] sm:$0xff]
  %v6967 = vld [vmem:[#allocation3 + $0x331] sm:$0xff]
  %v6968 = vld [vmem:[#allocation3 + $0x349] sm:$0xff]
  %v6969 = vld [vmem:[#allocation3 + $0x351] sm:$0xff]
  %v6970 = vld [vmem:[#allocation3 + $0x369] sm:$0xff]
  %v6971 = vld [vmem:[#allocation3 + $0x371] sm:$0xff]
  %v6972 = vld [vmem:[#allocation3 + $0x389] sm:$0xff]
  %v6973 = vld [vmem:[#allocation3 + $0x391] sm:$0xff]
  %v6974 = vld [vmem:[#allocation3 + $0x3a9] sm:$0xff]
  %v6975 = vld [vmem:[#allocation3 + $0x3b1] sm:$0xff]
  %v6976 = vld [vmem:[#allocation3 + $0x3c9] sm:$0xff]
  %v6977 = vld [vmem:[#allocation3 + $0x3d1] sm:$0xff]
  %v6978 = vld [vmem:[#allocation3 + $0x3e9] sm:$0xff]
  %v6979 = vld [vmem:[#allocation3 + $0x3f1] sm:$0xff]
  %v6980 = vld [vmem:[#allocation3 + $0x409] sm:$0xff]
  %v6981 = vld [vmem:[#allocation3 + $0x411] sm:$0xff]
  %v6982 = vld [vmem:[#allocation3 + $0x429] sm:$0xff]
  %v6983 = vld [vmem:[#allocation3 + $0x431] sm:$0xff]
  %v6984 = vld [vmem:[#allocation3 + $0x449] sm:$0xff]
  %v6985 = vld [vmem:[#allocation3 + $0x451] sm:$0xff]
  %v6986 = vld [vmem:[#allocation3 + $0x469] sm:$0xff]
  %v6987 = vld [vmem:[#allocation3 + $0x471] sm:$0xff]
  %7060 = vrot.lane.b32.xlu0 %v6844, 32
  %v7061 = vpop.permute.xlu0 %7060
  %7062 = vrot.lane.b32.xlu0 %v6845, 32
  %v7063 = vpop.permute.xlu0 %7062
  %7064 = vrot.lane.b32.xlu0 %v6846, 32
  %v7065 = vpop.permute.xlu0 %7064
  %7066 = vrot.lane.b32.xlu0 %v6847, 32
  %v7067 = vpop.permute.xlu0 %7066
  %7068 = vrot.lane.b32.xlu0 %v6848, 32
  %v7069 = vpop.permute.xlu0 %7068
  %7070 = vrot.lane.b32.xlu0 %v6849, 32
  %v7071 = vpop.permute.xlu0 %7070
  %7072 = vrot.lane.b32.xlu0 %v6850, 32
  %v7073 = vpop.permute.xlu0 %7072
  %7074 = vrot.lane.b32.xlu0 %v6851, 32
  %v7075 = vpop.permute.xlu0 %7074
  %7076 = vrot.lane.b32.xlu0 %v6852, 32
  %v7077 = vpop.permute.xlu0 %7076
  %7078 = vrot.lane.b32.xlu0 %v6853, 32
  %v7079 = vpop.permute.xlu0 %7078
  %7080 = vrot.lane.b32.xlu0 %v6854, 32
  %v7081 = vpop.permute.xlu0 %7080
  %7082 = vrot.lane.b32.xlu0 %v6855, 32
  %v7083 = vpop.permute.xlu0 %7082
  %7084 = vrot.lane.b32.xlu0 %v6856, 32
  %v7085 = vpop.permute.xlu0 %7084
  %7086 = vrot.lane.b32.xlu0 %v6857, 32
  %v7087 = vpop.permute.xlu0 %7086
  %7088 = vrot.lane.b32.xlu0 %v6858, 32
  %v7089 = vpop.permute.xlu0 %7088
  %7090 = vrot.lane.b32.xlu0 %v6859, 32
  %v7091 = vpop.permute.xlu0 %7090
  %7092 = vrot.lane.b32.xlu0 %v6860, 32
  %v7093 = vpop.permute.xlu0 %7092
  %7094 = vrot.lane.b32.xlu0 %v6861, 32
  %v7095 = vpop.permute.xlu0 %7094
  %7096 = vrot.lane.b32.xlu0 %v6862, 32
  %v7097 = vpop.permute.xlu0 %7096
  %7098 = vrot.lane.b32.xlu0 %v6863, 32
  %v7099 = vpop.permute.xlu0 %7098
  %7100 = vrot.lane.b32.xlu0 %v6864, 32
  %v7101 = vpop.permute.xlu0 %7100
  %7102 = vrot.lane.b32.xlu0 %v6865, 32
  %v7103 = vpop.permute.xlu0 %7102
  %7104 = vrot.lane.b32.xlu0 %v6866, 32
  %v7105 = vpop.permute.xlu0 %7104
  %7106 = vrot.lane.b32.xlu0 %v6867, 32
  %v7107 = vpop.permute.xlu0 %7106
  %7108 = vrot.lane.b32.xlu0 %v6868, 32
  %v7109 = vpop.permute.xlu0 %7108
  %7110 = vrot.lane.b32.xlu0 %v6869, 32
  %v7111 = vpop.permute.xlu0 %7110
  %7112 = vrot.lane.b32.xlu0 %v6870, 32
  %v7113 = vpop.permute.xlu0 %7112
  %7114 = vrot.lane.b32.xlu0 %v6871, 32
  %v7115 = vpop.permute.xlu0 %7114
  %7116 = vrot.lane.b32.xlu0 %v6872, 32
  %v7117 = vpop.permute.xlu0 %7116
  %7118 = vrot.lane.b32.xlu0 %v6873, 32
  %v7119 = vpop.permute.xlu0 %7118
  %7120 = vrot.lane.b32.xlu0 %v6874, 32
  %v7121 = vpop.permute.xlu0 %7120
  %7122 = vrot.lane.b32.xlu0 %v6875, 32
  %v7123 = vpop.permute.xlu0 %7122
  %7124 = vrot.lane.b32.xlu0 %v6876, 32
  %v7125 = vpop.permute.xlu0 %7124
  %7126 = vrot.lane.b32.xlu0 %v6877, 32
  %v7127 = vpop.permute.xlu0 %7126
  %7128 = vrot.lane.b32.xlu0 %v6878, 32
  %v7129 = vpop.permute.xlu0 %7128
  %7130 = vrot.lane.b32.xlu0 %v6879, 32
  %v7131 = vpop.permute.xlu0 %7130
  %7132 = vrot.lane.b32.xlu0 %v6880, 32
  %v7133 = vpop.permute.xlu0 %7132
  %7134 = vrot.lane.b32.xlu0 %v6881, 32
  %v7135 = vpop.permute.xlu0 %7134
  %7136 = vrot.lane.b32.xlu0 %v6882, 32
  %v7137 = vpop.permute.xlu0 %7136
  %7138 = vrot.lane.b32.xlu0 %v6883, 32
  %v7139 = vpop.permute.xlu0 %7138
  %7140 = vrot.lane.b32.xlu0 %v6884, 32
  %v7141 = vpop.permute.xlu0 %7140
  %7142 = vrot.lane.b32.xlu0 %v6885, 32
  %v7143 = vpop.permute.xlu0 %7142
  %7144 = vrot.lane.b32.xlu0 %v6886, 32
  %v7145 = vpop.permute.xlu0 %7144
  %7146 = vrot.lane.b32.xlu0 %v6887, 32
  %v7147 = vpop.permute.xlu0 %7146
  %7148 = vrot.lane.b32.xlu0 %v6888, 32
  %v7149 = vpop.permute.xlu0 %7148
  %7150 = vrot.lane.b32.xlu0 %v6889, 32
  %v7151 = vpop.permute.xlu0 %7150
  %7152 = vrot.lane.b32.xlu0 %v6890, 32
  %v7153 = vpop.permute.xlu0 %7152
  %7154 = vrot.lane.b32.xlu0 %v6891, 32
  %v7155 = vpop.permute.xlu0 %7154
  %7156 = vrot.lane.b32.xlu0 %v6892, 32
  %v7157 = vpop.permute.xlu0 %7156
  %7158 = vrot.lane.b32.xlu0 %v6893, 32
  %v7159 = vpop.permute.xlu0 %7158
  %7160 = vrot.lane.b32.xlu0 %v6894, 32
  %v7161 = vpop.permute.xlu0 %7160
  %7162 = vrot.lane.b32.xlu0 %v6895, 32
  %v7163 = vpop.permute.xlu0 %7162
  %7164 = vrot.lane.b32.xlu0 %v6896, 32
  %v7165 = vpop.permute.xlu0 %7164
  %7166 = vrot.lane.b32.xlu0 %v6897, 32
  %v7167 = vpop.permute.xlu0 %7166
  %7168 = vrot.lane.b32.xlu0 %v6898, 32
  %v7169 = vpop.permute.xlu0 %7168
  %7170 = vrot.lane.b32.xlu0 %v6899, 32
  %v7171 = vpop.permute.xlu0 %7170
  %7172 = vrot.lane.b32.xlu0 %v6900, 32
  %v7173 = vpop.permute.xlu0 %7172
  %7174 = vrot.lane.b32.xlu0 %v6901, 32
  %v7175 = vpop.permute.xlu0 %7174
  %7176 = vrot.lane.b32.xlu0 %v6902, 32
  %v7177 = vpop.permute.xlu0 %7176
  %7178 = vrot.lane.b32.xlu0 %v6903, 32
  %v7179 = vpop.permute.xlu0 %7178
  %7180 = vrot.lane.b32.xlu0 %v6904, 32
  %v7181 = vpop.permute.xlu0 %7180
  %7182 = vrot.lane.b32.xlu0 %v6905, 32
  %v7183 = vpop.permute.xlu0 %7182
  %7184 = vrot.lane.b32.xlu0 %v6906, 32
  %v7185 = vpop.permute.xlu0 %7184
  %7186 = vrot.lane.b32.xlu0 %v6907, 32
  %v7187 = vpop.permute.xlu0 %7186
  %7188 = vrot.lane.b32.xlu0 %v6908, 32
  %v7189 = vpop.permute.xlu0 %7188
  %7190 = vrot.lane.b32.xlu0 %v6909, 32
  %v7191 = vpop.permute.xlu0 %7190
  %7192 = vrot.lane.b32.xlu0 %v6910, 32
  %v7193 = vpop.permute.xlu0 %7192
  %7194 = vrot.lane.b32.xlu0 %v6911, 32
  %v7195 = vpop.permute.xlu0 %7194
  %7196 = vrot.lane.b32.xlu0 %v6912, 32
  %v7197 = vpop.permute.xlu0 %7196
  %7198 = vrot.lane.b32.xlu0 %v6913, 32
  %v7199 = vpop.permute.xlu0 %7198
  %7200 = vrot.lane.b32.xlu0 %v6914, 32
  %v7201 = vpop.permute.xlu0 %7200
  %7202 = vrot.lane.b32.xlu0 %v6915, 32
  %v7203 = vpop.permute.xlu0 %7202
  %7348 = vrot.lane.b32.xlu0 %v6916, 64
  %v7349 = vpop.permute.xlu0 %7348
  %7350 = vrot.lane.b32.xlu0 %v6917, 64
  %v7351 = vpop.permute.xlu0 %7350
  %7352 = vrot.lane.b32.xlu0 %v6918, 64
  %v7353 = vpop.permute.xlu0 %7352
  %7354 = vrot.lane.b32.xlu0 %v6919, 64
  %v7355 = vpop.permute.xlu0 %7354
  %7356 = vrot.lane.b32.xlu0 %v6920, 64
  %v7357 = vpop.permute.xlu0 %7356
  %7358 = vrot.lane.b32.xlu0 %v6921, 64
  %v7359 = vpop.permute.xlu0 %7358
  %7360 = vrot.lane.b32.xlu0 %v6922, 64
  %v7361 = vpop.permute.xlu0 %7360
  %7362 = vrot.lane.b32.xlu0 %v6923, 64
  %v7363 = vpop.permute.xlu0 %7362
  %7364 = vrot.lane.b32.xlu0 %v6924, 64
  %v7365 = vpop.permute.xlu0 %7364
  %7366 = vrot.lane.b32.xlu0 %v6925, 64
  %v7367 = vpop.permute.xlu0 %7366
  %7368 = vrot.lane.b32.xlu0 %v6926, 64
  %v7369 = vpop.permute.xlu0 %7368
  %7370 = vrot.lane.b32.xlu0 %v6927, 64
  %v7371 = vpop.permute.xlu0 %7370
  %7372 = vrot.lane.b32.xlu0 %v6928, 64
  %v7373 = vpop.permute.xlu0 %7372
  %7374 = vrot.lane.b32.xlu0 %v6929, 64
  %v7375 = vpop.permute.xlu0 %7374
  %7376 = vrot.lane.b32.xlu0 %v6930, 64
  %v7377 = vpop.permute.xlu0 %7376
  %7378 = vrot.lane.b32.xlu0 %v6931, 64
  %v7379 = vpop.permute.xlu0 %7378
  %7380 = vrot.lane.b32.xlu0 %v6932, 64
  %v7381 = vpop.permute.xlu0 %7380
  %7382 = vrot.lane.b32.xlu0 %v6933, 64
  %v7383 = vpop.permute.xlu0 %7382
  %7384 = vrot.lane.b32.xlu0 %v6934, 64
  %v7385 = vpop.permute.xlu0 %7384
  %7386 = vrot.lane.b32.xlu0 %v6935, 64
  %v7387 = vpop.permute.xlu0 %7386
  %7388 = vrot.lane.b32.xlu0 %v6936, 64
  %v7389 = vpop.permute.xlu0 %7388
  %7390 = vrot.lane.b32.xlu0 %v6937, 64
  %v7391 = vpop.permute.xlu0 %7390
  %7392 = vrot.lane.b32.xlu0 %v6938, 64
  %v7393 = vpop.permute.xlu0 %7392
  %7394 = vrot.lane.b32.xlu0 %v6939, 64
  %v7395 = vpop.permute.xlu0 %7394
  %7396 = vrot.lane.b32.xlu0 %v6940, 64
  %v7397 = vpop.permute.xlu0 %7396
  %7398 = vrot.lane.b32.xlu0 %v6941, 64
  %v7399 = vpop.permute.xlu0 %7398
  %7400 = vrot.lane.b32.xlu0 %v6942, 64
  %v7401 = vpop.permute.xlu0 %7400
  %7402 = vrot.lane.b32.xlu0 %v6943, 64
  %v7403 = vpop.permute.xlu0 %7402
  %7404 = vrot.lane.b32.xlu0 %v6944, 64
  %v7405 = vpop.permute.xlu0 %7404
  %7406 = vrot.lane.b32.xlu0 %v6945, 64
  %v7407 = vpop.permute.xlu0 %7406
  %7408 = vrot.lane.b32.xlu0 %v6946, 64
  %v7409 = vpop.permute.xlu0 %7408
  %7410 = vrot.lane.b32.xlu0 %v6947, 64
  %v7411 = vpop.permute.xlu0 %7410
  %7412 = vrot.lane.b32.xlu0 %v6948, 64
  %v7413 = vpop.permute.xlu0 %7412
  %7414 = vrot.lane.b32.xlu0 %v6949, 64
  %v7415 = vpop.permute.xlu0 %7414
  %7416 = vrot.lane.b32.xlu0 %v6950, 64
  %v7417 = vpop.permute.xlu0 %7416
  %7418 = vrot.lane.b32.xlu0 %v6951, 64
  %v7419 = vpop.permute.xlu0 %7418
  %7420 = vrot.lane.b32.xlu0 %v6952, 64
  %v7421 = vpop.permute.xlu0 %7420
  %7422 = vrot.lane.b32.xlu0 %v6953, 64
  %v7423 = vpop.permute.xlu0 %7422
  %7424 = vrot.lane.b32.xlu0 %v6954, 64
  %v7425 = vpop.permute.xlu0 %7424
  %7426 = vrot.lane.b32.xlu0 %v6955, 64
  %v7427 = vpop.permute.xlu0 %7426
  %7428 = vrot.lane.b32.xlu0 %v6956, 64
  %v7429 = vpop.permute.xlu0 %7428
  %7430 = vrot.lane.b32.xlu0 %v6957, 64
  %v7431 = vpop.permute.xlu0 %7430
  %7432 = vrot.lane.b32.xlu0 %v6958, 64
  %v7433 = vpop.permute.xlu0 %7432
  %7434 = vrot.lane.b32.xlu0 %v6959, 64
  %v7435 = vpop.permute.xlu0 %7434
  %7436 = vrot.lane.b32.xlu0 %v6960, 64
  %v7437 = vpop.permute.xlu0 %7436
  %7438 = vrot.lane.b32.xlu0 %v6961, 64
  %v7439 = vpop.permute.xlu0 %7438
  %7440 = vrot.lane.b32.xlu0 %v6962, 64
  %v7441 = vpop.permute.xlu0 %7440
  %7442 = vrot.lane.b32.xlu0 %v6963, 64
  %v7443 = vpop.permute.xlu0 %7442
  %7444 = vrot.lane.b32.xlu0 %v6964, 64
  %v7445 = vpop.permute.xlu0 %7444
  %7446 = vrot.lane.b32.xlu0 %v6965, 64
  %v7447 = vpop.permute.xlu0 %7446
  %7448 = vrot.lane.b32.xlu0 %v6966, 64
  %v7449 = vpop.permute.xlu0 %7448
  %7450 = vrot.lane.b32.xlu0 %v6967, 64
  %v7451 = vpop.permute.xlu0 %7450
  %7452 = vrot.lane.b32.xlu0 %v6968, 64
  %v7453 = vpop.permute.xlu0 %7452
  %7454 = vrot.lane.b32.xlu0 %v6969, 64
  %v7455 = vpop.permute.xlu0 %7454
  %7456 = vrot.lane.b32.xlu0 %v6970, 64
  %v7457 = vpop.permute.xlu0 %7456
  %7458 = vrot.lane.b32.xlu0 %v6971, 64
  %v7459 = vpop.permute.xlu0 %7458
  %7460 = vrot.lane.b32.xlu0 %v6972, 64
  %v7461 = vpop.permute.xlu0 %7460
  %7462 = vrot.lane.b32.xlu0 %v6973, 64
  %v7463 = vpop.permute.xlu0 %7462
  %7464 = vrot.lane.b32.xlu0 %v6974, 64
  %v7465 = vpop.permute.xlu0 %7464
  %7466 = vrot.lane.b32.xlu0 %v6975, 64
  %v7467 = vpop.permute.xlu0 %7466
  %7468 = vrot.lane.b32.xlu0 %v6976, 64
  %v7469 = vpop.permute.xlu0 %7468
  %7470 = vrot.lane.b32.xlu0 %v6977, 64
  %v7471 = vpop.permute.xlu0 %7470
  %7472 = vrot.lane.b32.xlu0 %v6978, 64
  %v7473 = vpop.permute.xlu0 %7472
  %7474 = vrot.lane.b32.xlu0 %v6979, 64
  %v7475 = vpop.permute.xlu0 %7474
  %7476 = vrot.lane.b32.xlu0 %v6980, 64
  %v7477 = vpop.permute.xlu0 %7476
  %7478 = vrot.lane.b32.xlu0 %v6981, 64
  %v7479 = vpop.permute.xlu0 %7478
  %7480 = vrot.lane.b32.xlu0 %v6982, 64
  %v7481 = vpop.permute.xlu0 %7480
  %7482 = vrot.lane.b32.xlu0 %v6983, 64
  %v7483 = vpop.permute.xlu0 %7482
  %7484 = vrot.lane.b32.xlu0 %v6984, 64
  %v7485 = vpop.permute.xlu0 %7484
  %7486 = vrot.lane.b32.xlu0 %v6985, 64
  %v7487 = vpop.permute.xlu0 %7486
  %7488 = vrot.lane.b32.xlu0 %v6986, 64
  %v7489 = vpop.permute.xlu0 %7488
  %7490 = vrot.lane.b32.xlu0 %v6987, 64
  %v7491 = vpop.permute.xlu0 %7490
  %v7564 = vsel %vm141, %v6772, %v7061
  %v7565 = vsel %vm141, %v6773, %v7063
  %v7566 = vsel %vm141, %v6774, %v7065
  %v7567 = vsel %vm141, %v6775, %v7067
  %v7568 = vsel %vm141, %v6776, %v7069
  %v7569 = vsel %vm141, %v6777, %v7071
  %v7570 = vsel %vm141, %v6778, %v7073
  %v7571 = vsel %vm141, %v6779, %v7075
  %v7572 = vsel %vm141, %v6780, %v7077
  %v7573 = vsel %vm141, %v6781, %v7079
  %v7574 = vsel %vm141, %v6782, %v7081
  %v7575 = vsel %vm141, %v6783, %v7083
  %v7576 = vsel %vm141, %v6784, %v7085
  %v7577 = vsel %vm141, %v6785, %v7087
  %v7578 = vsel %vm141, %v6786, %v7089
  %v7579 = vsel %vm141, %v6787, %v7091
  %v7580 = vsel %vm141, %v6788, %v7093
  %v7581 = vsel %vm141, %v6789, %v7095
  %v7582 = vsel %vm141, %v6790, %v7097
  %v7583 = vsel %vm141, %v6791, %v7099
  %v7584 = vsel %vm141, %v6792, %v7101
  %v7585 = vsel %vm141, %v6793, %v7103
  %v7586 = vsel %vm141, %v6794, %v7105
  %v7587 = vsel %vm141, %v6795, %v7107
  %v7588 = vsel %vm141, %v6796, %v7109
  %v7589 = vsel %vm141, %v6797, %v7111
  %v7590 = vsel %vm141, %v6798, %v7113
  %v7591 = vsel %vm141, %v6799, %v7115
  %v7592 = vsel %vm141, %v6800, %v7117
  %v7593 = vsel %vm141, %v6801, %v7119
  %v7594 = vsel %vm141, %v6802, %v7121
  %v7595 = vsel %vm141, %v6803, %v7123
  %v7596 = vsel %vm141, %v6804, %v7125
  %v7597 = vsel %vm141, %v6805, %v7127
  %v7598 = vsel %vm141, %v6806, %v7129
  %v7599 = vsel %vm141, %v6807, %v7131
  %v7600 = vsel %vm141, %v6808, %v7133
  %v7601 = vsel %vm141, %v6809, %v7135
  %v7602 = vsel %vm141, %v6810, %v7137
  %v7603 = vsel %vm141, %v6811, %v7139
  %v7604 = vsel %vm141, %v6812, %v7141
  %v7605 = vsel %vm141, %v6813, %v7143
  %v7606 = vsel %vm141, %v6814, %v7145
  %v7607 = vsel %vm141, %v6815, %v7147
  %v7608 = vsel %vm141, %v6816, %v7149
  %v7609 = vsel %vm141, %v6817, %v7151
  %v7610 = vsel %vm141, %v6818, %v7153
  %v7611 = vsel %vm141, %v6819, %v7155
  %v7612 = vsel %vm141, %v6820, %v7157
  %v7613 = vsel %vm141, %v6821, %v7159
  %v7614 = vsel %vm141, %v6822, %v7161
  %v7615 = vsel %vm141, %v6823, %v7163
  %v7616 = vsel %vm141, %v6824, %v7165
  %v7617 = vsel %vm141, %v6825, %v7167
  %v7618 = vsel %vm141, %v6826, %v7169
  %v7619 = vsel %vm141, %v6827, %v7171
  %v7620 = vsel %vm141, %v6828, %v7173
  %v7621 = vsel %vm141, %v6829, %v7175
  %v7622 = vsel %vm141, %v6830, %v7177
  %v7623 = vsel %vm141, %v6831, %v7179
  %v7624 = vsel %vm141, %v6832, %v7181
  %v7625 = vsel %vm141, %v6833, %v7183
  %v7626 = vsel %vm141, %v6834, %v7185
  %v7627 = vsel %vm141, %v6835, %v7187
  %v7628 = vsel %vm141, %v6836, %v7189
  %v7629 = vsel %vm141, %v6837, %v7191
  %v7630 = vsel %vm141, %v6838, %v7193
  %v7631 = vsel %vm141, %v6839, %v7195
  %v7632 = vsel %vm141, %v6840, %v7197
  %v7633 = vsel %vm141, %v6841, %v7199
  %v7634 = vsel %vm141, %v6842, %v7201
  %v7635 = vsel %vm141, %v6843, %v7203
  %v7636 = vsel %vm4421, %v7564, %v7349
  %v7637 = vsel %vm4421, %v7565, %v7351
  %v7638 = vsel %vm4421, %v7566, %v7353
  %v7639 = vsel %vm4421, %v7567, %v7355
  %v7640 = vsel %vm4421, %v7568, %v7357
  %v7641 = vsel %vm4421, %v7569, %v7359
  %v7642 = vsel %vm4421, %v7570, %v7361
  %v7643 = vsel %vm4421, %v7571, %v7363
  %v7644 = vsel %vm4421, %v7572, %v7365
  %v7645 = vsel %vm4421, %v7573, %v7367
  %v7646 = vsel %vm4421, %v7574, %v7369
  %v7647 = vsel %vm4421, %v7575, %v7371
  %v7648 = vsel %vm4421, %v7576, %v7373
  %v7649 = vsel %vm4421, %v7577, %v7375
  %v7650 = vsel %vm4421, %v7578, %v7377
  %v7651 = vsel %vm4421, %v7579, %v7379
  %v7652 = vsel %vm4421, %v7580, %v7381
  %v7653 = vsel %vm4421, %v7581, %v7383
  %v7654 = vsel %vm4421, %v7582, %v7385
  %v7655 = vsel %vm4421, %v7583, %v7387
  %v7656 = vsel %vm4421, %v7584, %v7389
  %v7657 = vsel %vm4421, %v7585, %v7391
  %v7658 = vsel %vm4421, %v7586, %v7393
  %v7659 = vsel %vm4421, %v7587, %v7395
  %v7660 = vsel %vm4421, %v7588, %v7397
  %v7661 = vsel %vm4421, %v7589, %v7399
  %v7662 = vsel %vm4421, %v7590, %v7401
  %v7663 = vsel %vm4421, %v7591, %v7403
  %v7664 = vsel %vm4421, %v7592, %v7405
  %v7665 = vsel %vm4421, %v7593, %v7407
  %v7666 = vsel %vm4421, %v7594, %v7409
  %v7667 = vsel %vm4421, %v7595, %v7411
  %v7668 = vsel %vm4421, %v7596, %v7413
  %v7669 = vsel %vm4421, %v7597, %v7415
  %v7670 = vsel %vm4421, %v7598, %v7417
  %v7671 = vsel %vm4421, %v7599, %v7419
  %v7672 = vsel %vm4421, %v7600, %v7421
  %v7673 = vsel %vm4421, %v7601, %v7423
  %v7674 = vsel %vm4421, %v7602, %v7425
  %v7675 = vsel %vm4421, %v7603, %v7427
  %v7676 = vsel %vm4421, %v7604, %v7429
  %v7677 = vsel %vm4421, %v7605, %v7431
  %v7678 = vsel %vm4421, %v7606, %v7433
  %v7679 = vsel %vm4421, %v7607, %v7435
  %v7680 = vsel %vm4421, %v7608, %v7437
  %v7681 = vsel %vm4421, %v7609, %v7439
  %v7682 = vsel %vm4421, %v7610, %v7441
  %v7683 = vsel %vm4421, %v7611, %v7443
  %v7684 = vsel %vm4421, %v7612, %v7445
  %v7685 = vsel %vm4421, %v7613, %v7447
  %v7686 = vsel %vm4421, %v7614, %v7449
  %v7687 = vsel %vm4421, %v7615, %v7451
  %v7688 = vsel %vm4421, %v7616, %v7453
  %v7689 = vsel %vm4421, %v7617, %v7455
  %v7690 = vsel %vm4421, %v7618, %v7457
  %v7691 = vsel %vm4421, %v7619, %v7459
  %v7692 = vsel %vm4421, %v7620, %v7461
  %v7693 = vsel %vm4421, %v7621, %v7463
  %v7694 = vsel %vm4421, %v7622, %v7465
  %v7695 = vsel %vm4421, %v7623, %v7467
  %v7696 = vsel %vm4421, %v7624, %v7469
  %v7697 = vsel %vm4421, %v7625, %v7471
  %v7698 = vsel %vm4421, %v7626, %v7473
  %v7699 = vsel %vm4421, %v7627, %v7475
  %v7700 = vsel %vm4421, %v7628, %v7477
  %v7701 = vsel %vm4421, %v7629, %v7479
  %v7702 = vsel %vm4421, %v7630, %v7481
  %v7703 = vsel %vm4421, %v7631, %v7483
  %v7704 = vsel %vm4421, %v7632, %v7485
  %v7705 = vsel %vm4421, %v7633, %v7487
  %v7706 = vsel %vm4421, %v7634, %v7489
  %v7707 = vsel %vm4421, %v7635, %v7491
  %v7708 = vld [vmem:[%s9] sm:$0xff]
  %v7709 = vld [vmem:[%s9 + $0x8] sm:$0xff]
  %v7710 = vld [vmem:[%s9 + $0x10] sm:$0xff]
  %v7711 = vld [vmem:[%s9 + $0x18] sm:$0xff]
  %v7712 = vld [vmem:[%s9 + $0x20] sm:$0xff]
  %v7713 = vld [vmem:[%s9 + $0x28] sm:$0xff]
  %v7714 = vld [vmem:[%s9 + $0x30] sm:$0xff]
  %v7715 = vld [vmem:[%s9 + $0x38] sm:$0xff]
  %v7716 = vld [vmem:[%s9 + $0x40] sm:$0xff]
  %v7717 = vld [vmem:[%s9 + $0x48] sm:$0xff]
  %v7718 = vld [vmem:[%s9 + $0x50] sm:$0xff]
  %v7719 = vld [vmem:[%s9 + $0x58] sm:$0xff]
  %s7720 = scalar_lea.vmem %s9, 96
  %v7721 = vld [vmem:[%s7720] sm:$0xff]
  %v7722 = vld [vmem:[%s7720 + $0x8] sm:$0xff]
  %v7723 = vld [vmem:[%s7720 + $0x10] sm:$0xff]
  %v7724 = vld [vmem:[%s7720 + $0x18] sm:$0xff]
  %v7725 = vld [vmem:[%s7720 + $0x20] sm:$0xff]
  %v7726 = vld [vmem:[%s7720 + $0x28] sm:$0xff]
  %v7727 = vld [vmem:[%s7720 + $0x30] sm:$0xff]
  %v7728 = vld [vmem:[%s7720 + $0x38] sm:$0xff]
  %v7729 = vld [vmem:[%s7720 + $0x40] sm:$0xff]
  %v7730 = vld [vmem:[%s7720 + $0x48] sm:$0xff]
  %v7731 = vld [vmem:[%s7720 + $0x50] sm:$0xff]
  %v7732 = vld [vmem:[%s7720 + $0x58] sm:$0xff]
  %v7734 = vsel %vm4519, %v7638, 0
  %v7737 = vsel %vm4519, %v7639, 0
  %v7740 = vsel %vm4519, %v7640, 0
  %v7743 = vsel %vm4519, %v7641, 0
  %v7746 = vsel %vm4519, %v7642, 0
  %v7749 = vsel %vm4519, %v7643, 0
  %v7752 = vsel %vm4519, %v7644, 0
  %v7755 = vsel %vm4519, %v7645, 0
  %v7758 = vsel %vm4519, %v7646, 0
  %v7761 = vsel %vm4519, %v7647, 0
  %v7764 = vsel %vm4519, %v7648, 0
  %v7767 = vsel %vm4519, %v7649, 0
  %v7770 = vsel %vm4519, %v7650, 0
  %v7773 = vsel %vm4519, %v7651, 0
  %v7776 = vsel %vm4519, %v7652, 0
  %v7779 = vsel %vm4519, %v7653, 0
  %v7782 = vsel %vm4519, %v7654, 0
  %v7785 = vsel %vm4519, %v7655, 0
  %v7788 = vsel %vm4519, %v7656, 0
  %v7791 = vsel %vm4519, %v7657, 0
  %v7794 = vsel %vm4519, %v7658, 0
  %v7797 = vsel %vm4519, %v7659, 0
  %v7800 = vsel %vm4519, %v7660, 0
  %v7803 = vsel %vm4519, %v7661, 0
  %v7806 = vsel %vm4519, %v7662, 0
  %v7809 = vsel %vm4519, %v7663, 0
  %v7812 = vsel %vm4519, %v7664, 0
  %v7815 = vsel %vm4519, %v7665, 0
  %v7818 = vsel %vm4519, %v7666, 0
  %v7821 = vsel %vm4519, %v7667, 0
  %v7824 = vsel %vm4519, %v7668, 0
  %v7827 = vsel %vm4519, %v7669, 0
  %v7830 = vsel %vm4519, %v7674, 0
  %v7833 = vsel %vm4519, %v7675, 0
  %v7836 = vsel %vm4519, %v7676, 0
  %v7839 = vsel %vm4519, %v7677, 0
  %v7842 = vsel %vm4519, %v7678, 0
  %v7845 = vsel %vm4519, %v7679, 0
  %v7848 = vsel %vm4519, %v7680, 0
  %v7851 = vsel %vm4519, %v7681, 0
  %v7854 = vsel %vm4519, %v7682, 0
  %v7857 = vsel %vm4519, %v7683, 0
  %v7860 = vsel %vm4519, %v7684, 0
  %v7863 = vsel %vm4519, %v7685, 0
  %v7866 = vsel %vm4519, %v7686, 0
  %v7869 = vsel %vm4519, %v7687, 0
  %v7872 = vsel %vm4519, %v7688, 0
  %v7875 = vsel %vm4519, %v7689, 0
  %v7878 = vsel %vm4519, %v7690, 0
  %v7881 = vsel %vm4519, %v7691, 0
  %v7884 = vsel %vm4519, %v7692, 0
  %v7887 = vsel %vm4519, %v7693, 0
  %v7890 = vsel %vm4519, %v7694, 0
  %v7893 = vsel %vm4519, %v7695, 0
  %v7896 = vsel %vm4519, %v7696, 0
  %v7899 = vsel %vm4519, %v7697, 0
  %v7902 = vsel %vm4519, %v7698, 0
  %v7905 = vsel %vm4519, %v7699, 0
  %v7908 = vsel %vm4519, %v7700, 0
  %v7911 = vsel %vm4519, %v7701, 0
  %v7914 = vsel %vm4519, %v7702, 0
  %v7917 = vsel %vm4519, %v7703, 0
  %v7920 = vsel %vm4519, %v7704, 0
  %v7923 = vsel %vm4519, %v7705, 0
  %7925 = vmatprep.subr.mxu0 0.0
  %7926 = vmatpush1.msra.mxu0 0.0
  %7927 = vmatprep.subr.mxu0 0.0
  %7928 = vmatpush1.msra.mxu0 0.0
  %7929 = vmatprep.subr.mxu0 0.0
  %7930 = vmatpush1.msra.mxu0 0.0
  %7931 = vmatprep.subr.mxu0 0.0
  %7932 = vmatpush1.msra.mxu0 0.0
  %7933 = vmatprep.subr.mxu0 0.0
  %7934 = vmatpush1.msra.mxu0 %v7732
  %7935 = vmatprep.subr.mxu0 0.0
  %7936 = vmatpush1.msra.mxu0 %v7731
  %7937 = vmatprep.subr.mxu0 0.0
  %7938 = vmatpush1.msra.mxu0 %v7730
  %7939 = vmatprep.subr.mxu0 0.0
  %7940 = vmatpush1.msra.mxu0 %v7729
  %7941 = vmatprep.subr.mxu0 0.0
  %7942 = vmatpush1.msra.mxu0 %v7728
  %7943 = vmatprep.subr.mxu0 0.0
  %7944 = vmatpush1.msra.mxu0 %v7727
  %7945 = vmatprep.subr.mxu0 0.0
  %7946 = vmatpush1.msra.mxu0 %v7726
  %7947 = vmatprep.subr.mxu0 0.0
  %7948 = vmatpush1.msra.mxu0 %v7725
  %7949 = vmatprep.subr.mxu0 0.0
  %7950 = vmatpush1.msra.mxu0 %v7724
  %7951 = vmatprep.subr.mxu0 0.0
  %7952 = vmatpush1.msra.mxu0 %v7723
  %7953 = vmatprep.subr.mxu0 0.0
  %7954 = vmatpush1.msra.mxu0 %v7722
  %7955 = vmatprep.subr.mxu0 0.0
  %7956 = vmatpush1.msra.mxu0 %v7721
  %7957 = vmatprep.subr.mxu0 0.0
  %7958 = vmatpush2.msra.mxu0 0.0
  %7959 = vmatprep.subr.mxu0 0.0
  %7960 = vmatpush2.msra.mxu0 0.0
  %7961 = vmatprep.subr.mxu0 0.0
  %7962 = vmatpush2.msra.mxu0 0.0
  %7963 = vmatprep.subr.mxu0 0.0
  %7964 = vmatpush2.msra.mxu0 0.0
  %7965 = vmatprep.subr.mxu0 0.0
  %7966 = vmatpush2.msra.mxu0 0.0
  %7967 = vmatprep.subr.mxu0 0.0
  %7968 = vmatpush2.msra.mxu0 0.0
  %7969 = vmatprep.subr.mxu0 0.0
  %7970 = vmatpush2.msra.mxu0 0.0
  %7971 = vmatprep.subr.mxu0 0.0
  %7972 = vmatpush2.msra.mxu0 0.0
  %7973 = vmatprep.subr.mxu0 0.0
  %7974 = vmatpush2.msra.mxu0 0.0
  %7975 = vmatprep.subr.mxu0 0.0
  %7976 = vmatpush2.msra.mxu0 0.0
  %7977 = vmatprep.subr.mxu0 0.0
  %7978 = vmatpush2.msra.mxu0 0.0
  %7979 = vmatprep.subr.mxu0 0.0
  %7980 = vmatpush2.msra.mxu0 0.0
  %7981 = vmatprep.subr.mxu0 0.0
  %7982 = vmatpush2.msra.mxu0 0.0
  %7983 = vmatprep.subr.mxu0 0.0
  %7984 = vmatpush2.msra.mxu0 0.0
  %7985 = vmatprep.subr.mxu0 0.0
  %7986 = vmatpush2.msra.mxu0 0.0
  %7987 = vmatprep.subr.mxu0 0.0
  %7988 = vmatpush2.msra.mxu0 0.0
  %7989 = vmatprep.mubr.f32.mxu0 0.0
  %7990 = vmatmul.mubr.f32.gmra.mxu0 %v7734
  %v7991 = vpop.f32.mrf.mxu0
  %v7992 = vadd.f32 0.0, %v7991
  %v7993 = vpop.f32.mrf.mxu0
  %7994 = vmatprep.mubr.f32.mxu0 0.0
  %7995 = vmatmul.mubr.f32.gmra.mxu0 %v7737
  %v7996 = vpop.f32.mrf.mxu0
  %v7997 = vadd.f32 0.0, %v7996
  %v7998 = vpop.f32.mrf.mxu0
  %7999 = vmatprep.mubr.f32.mxu0 0.0
  %8000 = vmatmul.mubr.f32.gmra.mxu0 %v7740
  %v8001 = vpop.f32.mrf.mxu0
  %v8002 = vadd.f32 0.0, %v8001
  %v8003 = vpop.f32.mrf.mxu0
  %8004 = vmatprep.mubr.f32.mxu0 0.0
  %8005 = vmatmul.mubr.f32.gmra.mxu0 %v7743
  %v8006 = vpop.f32.mrf.mxu0
  %v8007 = vadd.f32 0.0, %v8006
  %v8008 = vpop.f32.mrf.mxu0
  %8009 = vmatprep.mubr.f32.mxu0 0.0
  %8010 = vmatmul.mubr.f32.gmra.mxu0 %v7746
  %v8011 = vpop.f32.mrf.mxu0
  %v8012 = vadd.f32 0.0, %v8011
  %v8013 = vpop.f32.mrf.mxu0
  %8014 = vmatprep.mubr.f32.mxu0 0.0
  %8015 = vmatmul.mubr.f32.gmra.mxu0 %v7749
  %v8016 = vpop.f32.mrf.mxu0
  %v8017 = vadd.f32 0.0, %v8016
  %v8018 = vpop.f32.mrf.mxu0
  %8019 = vmatprep.mubr.f32.mxu0 0.0
  %8020 = vmatmul.mubr.f32.gmra.mxu0 %v7752
  %v8021 = vpop.f32.mrf.mxu0
  %v8022 = vadd.f32 0.0, %v8021
  %v8023 = vpop.f32.mrf.mxu0
  %8024 = vmatprep.mubr.f32.mxu0 0.0
  %8025 = vmatmul.mubr.f32.gmra.mxu0 %v7755
  %v8026 = vpop.f32.mrf.mxu0
  %v8027 = vadd.f32 0.0, %v8026
  %v8028 = vpop.f32.mrf.mxu0
  %8029 = vmatprep.mubr.f32.mxu0 0.0
  %8030 = vmatmul.mubr.f32.gmra.mxu0 %v7758
  %v8031 = vpop.f32.mrf.mxu0
  %v8032 = vadd.f32 0.0, %v8031
  %v8033 = vpop.f32.mrf.mxu0
  %8034 = vmatprep.mubr.f32.mxu0 0.0
  %8035 = vmatmul.mubr.f32.gmra.mxu0 %v7761
  %v8036 = vpop.f32.mrf.mxu0
  %v8037 = vadd.f32 0.0, %v8036
  %v8038 = vpop.f32.mrf.mxu0
  %8039 = vmatprep.mubr.f32.mxu0 0.0
  %8040 = vmatmul.mubr.f32.gmra.mxu0 %v7764
  %v8041 = vpop.f32.mrf.mxu0
  %v8042 = vadd.f32 0.0, %v8041
  %v8043 = vpop.f32.mrf.mxu0
  %8044 = vmatprep.mubr.f32.mxu0 0.0
  %8045 = vmatmul.mubr.f32.gmra.mxu0 %v7767
  %v8046 = vpop.f32.mrf.mxu0
  %v8047 = vadd.f32 0.0, %v8046
  %v8048 = vpop.f32.mrf.mxu0
  %8049 = vmatprep.mubr.f32.mxu0 0.0
  %8050 = vmatmul.mubr.f32.gmra.mxu0 %v7770
  %v8051 = vpop.f32.mrf.mxu0
  %v8052 = vadd.f32 0.0, %v8051
  %v8053 = vpop.f32.mrf.mxu0
  %8054 = vmatprep.mubr.f32.mxu0 0.0
  %8055 = vmatmul.mubr.f32.gmra.mxu0 %v7773
  %v8056 = vpop.f32.mrf.mxu0
  %v8057 = vadd.f32 0.0, %v8056
  %v8058 = vpop.f32.mrf.mxu0
  %8059 = vmatprep.mubr.f32.mxu0 0.0
  %8060 = vmatmul.mubr.f32.gmra.mxu0 %v7776
  %v8061 = vpop.f32.mrf.mxu0
  %v8062 = vadd.f32 0.0, %v8061
  %v8063 = vpop.f32.mrf.mxu0
  %8064 = vmatprep.mubr.f32.mxu0 0.0
  %8065 = vmatmul.mubr.f32.gmra.mxu0 %v7779
  %v8066 = vpop.f32.mrf.mxu0
  %v8067 = vadd.f32 0.0, %v8066
  %v8068 = vpop.f32.mrf.mxu0
  %8069 = vmatprep.mubr.f32.mxu0 0.0
  %8070 = vmatmul.mubr.f32.gmra.mxu0 %v7782
  %v8071 = vpop.f32.mrf.mxu0
  %v8072 = vadd.f32 0.0, %v8071
  %v8073 = vpop.f32.mrf.mxu0
  %8074 = vmatprep.mubr.f32.mxu0 0.0
  %8075 = vmatmul.mubr.f32.gmra.mxu0 %v7785
  %v8076 = vpop.f32.mrf.mxu0
  %v8077 = vadd.f32 0.0, %v8076
  %v8078 = vpop.f32.mrf.mxu0
  %8079 = vmatprep.mubr.f32.mxu0 0.0
  %8080 = vmatmul.mubr.f32.gmra.mxu0 %v7788
  %v8081 = vpop.f32.mrf.mxu0
  %v8082 = vadd.f32 0.0, %v8081
  %v8083 = vpop.f32.mrf.mxu0
  %8084 = vmatprep.mubr.f32.mxu0 0.0
  %8085 = vmatmul.mubr.f32.gmra.mxu0 %v7791
  %v8086 = vpop.f32.mrf.mxu0
  %v8087 = vadd.f32 0.0, %v8086
  %v8088 = vpop.f32.mrf.mxu0
  %8089 = vmatprep.mubr.f32.mxu0 0.0
  %8090 = vmatmul.mubr.f32.gmra.mxu0 %v7794
  %v8091 = vpop.f32.mrf.mxu0
  %v8092 = vadd.f32 0.0, %v8091
  %v8093 = vpop.f32.mrf.mxu0
  %8094 = vmatprep.mubr.f32.mxu0 0.0
  %8095 = vmatmul.mubr.f32.gmra.mxu0 %v7797
  %v8096 = vpop.f32.mrf.mxu0
  %v8097 = vadd.f32 0.0, %v8096
  %v8098 = vpop.f32.mrf.mxu0
  %8099 = vmatprep.mubr.f32.mxu0 0.0
  %8100 = vmatmul.mubr.f32.gmra.mxu0 %v7800
  %v8101 = vpop.f32.mrf.mxu0
  %v8102 = vadd.f32 0.0, %v8101
  %v8103 = vpop.f32.mrf.mxu0
  %8104 = vmatprep.mubr.f32.mxu0 0.0
  %8105 = vmatmul.mubr.f32.gmra.mxu0 %v7803
  %v8106 = vpop.f32.mrf.mxu0
  %v8107 = vadd.f32 0.0, %v8106
  %v8108 = vpop.f32.mrf.mxu0
  %8109 = vmatprep.mubr.f32.mxu0 0.0
  %8110 = vmatmul.mubr.f32.gmra.mxu0 %v7806
  %v8111 = vpop.f32.mrf.mxu0
  %v8112 = vadd.f32 0.0, %v8111
  %v8113 = vpop.f32.mrf.mxu0
  %8114 = vmatprep.mubr.f32.mxu0 0.0
  %8115 = vmatmul.mubr.f32.gmra.mxu0 %v7809
  %v8116 = vpop.f32.mrf.mxu0
  %v8117 = vadd.f32 0.0, %v8116
  %v8118 = vpop.f32.mrf.mxu0
  %8119 = vmatprep.mubr.f32.mxu0 0.0
  %8120 = vmatmul.mubr.f32.gmra.mxu0 %v7812
  %v8121 = vpop.f32.mrf.mxu0
  %v8122 = vadd.f32 0.0, %v8121
  %v8123 = vpop.f32.mrf.mxu0
  %8124 = vmatprep.mubr.f32.mxu0 0.0
  %8125 = vmatmul.mubr.f32.gmra.mxu0 %v7815
  %v8126 = vpop.f32.mrf.mxu0
  %v8127 = vadd.f32 0.0, %v8126
  %v8128 = vpop.f32.mrf.mxu0
  %8129 = vmatprep.mubr.f32.mxu0 0.0
  %8130 = vmatmul.mubr.f32.gmra.mxu0 %v7818
  %v8131 = vpop.f32.mrf.mxu0
  %v8132 = vadd.f32 0.0, %v8131
  %v8133 = vpop.f32.mrf.mxu0
  %8134 = vmatprep.mubr.f32.mxu0 0.0
  %8135 = vmatmul.mubr.f32.gmra.mxu0 %v7821
  %v8136 = vpop.f32.mrf.mxu0
  %v8137 = vadd.f32 0.0, %v8136
  %v8138 = vpop.f32.mrf.mxu0
  %8139 = vmatprep.mubr.f32.mxu0 0.0
  %8140 = vmatmul.mubr.f32.gmra.mxu0 %v7824
  %v8141 = vpop.f32.mrf.mxu0
  %v8142 = vadd.f32 0.0, %v8141
  %v8143 = vpop.f32.mrf.mxu0
  %8144 = vmatprep.mubr.f32.mxu0 0.0
  %8145 = vmatmul.mubr.f32.gmra.mxu0 %v7827
  %v8146 = vpop.f32.mrf.mxu0
  %v8147 = vadd.f32 0.0, %v8146
  %v8148 = vpop.f32.mrf.mxu0
  %8149 = vmatprep.mubr.f32.mxu0 0.0
  %8150 = vmatmul.mubr.f32.gmra.mxu0 %v7830
  %v8151 = vpop.f32.mrf.mxu0
  %v8152 = vadd.f32 0.0, %v8151
  %v8153 = vpop.f32.mrf.mxu0
  %8154 = vmatprep.mubr.f32.mxu0 0.0
  %8155 = vmatmul.mubr.f32.gmra.mxu0 %v7833
  %v8156 = vpop.f32.mrf.mxu0
  %v8157 = vadd.f32 0.0, %v8156
  %v8158 = vpop.f32.mrf.mxu0
  %8159 = vmatprep.mubr.f32.mxu0 0.0
  %8160 = vmatmul.mubr.f32.gmra.mxu0 %v7836
  %v8161 = vpop.f32.mrf.mxu0
  %v8162 = vadd.f32 0.0, %v8161
  %v8163 = vpop.f32.mrf.mxu0
  %8164 = vmatprep.mubr.f32.mxu0 0.0
  %8165 = vmatmul.mubr.f32.gmra.mxu0 %v7839
  %v8166 = vpop.f32.mrf.mxu0
  %v8167 = vadd.f32 0.0, %v8166
  %v8168 = vpop.f32.mrf.mxu0
  %8169 = vmatprep.mubr.f32.mxu0 0.0
  %8170 = vmatmul.mubr.f32.gmra.mxu0 %v7842
  %v8171 = vpop.f32.mrf.mxu0
  %v8172 = vadd.f32 0.0, %v8171
  %v8173 = vpop.f32.mrf.mxu0
  %8174 = vmatprep.mubr.f32.mxu0 0.0
  %8175 = vmatmul.mubr.f32.gmra.mxu0 %v7845
  %v8176 = vpop.f32.mrf.mxu0
  %v8177 = vadd.f32 0.0, %v8176
  %v8178 = vpop.f32.mrf.mxu0
  %8179 = vmatprep.mubr.f32.mxu0 0.0
  %8180 = vmatmul.mubr.f32.gmra.mxu0 %v7848
  %v8181 = vpop.f32.mrf.mxu0
  %v8182 = vadd.f32 0.0, %v8181
  %v8183 = vpop.f32.mrf.mxu0
  %8184 = vmatprep.mubr.f32.mxu0 0.0
  %8185 = vmatmul.mubr.f32.gmra.mxu0 %v7851
  %v8186 = vpop.f32.mrf.mxu0
  %v8187 = vadd.f32 0.0, %v8186
  %v8188 = vpop.f32.mrf.mxu0
  %8189 = vmatprep.mubr.f32.mxu0 0.0
  %8190 = vmatmul.mubr.f32.gmra.mxu0 %v7854
  %v8191 = vpop.f32.mrf.mxu0
  %v8192 = vadd.f32 0.0, %v8191
  %v8193 = vpop.f32.mrf.mxu0
  %8194 = vmatprep.mubr.f32.mxu0 0.0
  %8195 = vmatmul.mubr.f32.gmra.mxu0 %v7857
  %v8196 = vpop.f32.mrf.mxu0
  %v8197 = vadd.f32 0.0, %v8196
  %v8198 = vpop.f32.mrf.mxu0
  %8199 = vmatprep.mubr.f32.mxu0 0.0
  %8200 = vmatmul.mubr.f32.gmra.mxu0 %v7860
  %v8201 = vpop.f32.mrf.mxu0
  %v8202 = vadd.f32 0.0, %v8201
  %v8203 = vpop.f32.mrf.mxu0
  %8204 = vmatprep.mubr.f32.mxu0 0.0
  %8205 = vmatmul.mubr.f32.gmra.mxu0 %v7863
  %v8206 = vpop.f32.mrf.mxu0
  %v8207 = vadd.f32 0.0, %v8206
  %v8208 = vpop.f32.mrf.mxu0
  %8209 = vmatprep.mubr.f32.mxu0 0.0
  %8210 = vmatmul.mubr.f32.gmra.mxu0 %v7866
  %v8211 = vpop.f32.mrf.mxu0
  %v8212 = vadd.f32 0.0, %v8211
  %v8213 = vpop.f32.mrf.mxu0
  %8214 = vmatprep.mubr.f32.mxu0 0.0
  %8215 = vmatmul.mubr.f32.gmra.mxu0 %v7869
  %v8216 = vpop.f32.mrf.mxu0
  %v8217 = vadd.f32 0.0, %v8216
  %v8218 = vpop.f32.mrf.mxu0
  %8219 = vmatprep.mubr.f32.mxu0 0.0
  %8220 = vmatmul.mubr.f32.gmra.mxu0 %v7872
  %v8221 = vpop.f32.mrf.mxu0
  %v8222 = vadd.f32 0.0, %v8221
  %v8223 = vpop.f32.mrf.mxu0
  %8224 = vmatprep.mubr.f32.mxu0 0.0
  %8225 = vmatmul.mubr.f32.gmra.mxu0 %v7875
  %v8226 = vpop.f32.mrf.mxu0
  %v8227 = vadd.f32 0.0, %v8226
  %v8228 = vpop.f32.mrf.mxu0
  %8229 = vmatprep.mubr.f32.mxu0 0.0
  %8230 = vmatmul.mubr.f32.gmra.mxu0 %v7878
  %v8231 = vpop.f32.mrf.mxu0
  %v8232 = vadd.f32 0.0, %v8231
  %v8233 = vpop.f32.mrf.mxu0
  %8234 = vmatprep.mubr.f32.mxu0 0.0
  %8235 = vmatmul.mubr.f32.gmra.mxu0 %v7881
  %v8236 = vpop.f32.mrf.mxu0
  %v8237 = vadd.f32 0.0, %v8236
  %v8238 = vpop.f32.mrf.mxu0
  %8239 = vmatprep.mubr.f32.mxu0 0.0
  %8240 = vmatmul.mubr.f32.gmra.mxu0 %v7884
  %v8241 = vpop.f32.mrf.mxu0
  %v8242 = vadd.f32 0.0, %v8241
  %v8243 = vpop.f32.mrf.mxu0
  %8244 = vmatprep.mubr.f32.mxu0 0.0
  %8245 = vmatmul.mubr.f32.gmra.mxu0 %v7887
  %v8246 = vpop.f32.mrf.mxu0
  %v8247 = vadd.f32 0.0, %v8246
  %v8248 = vpop.f32.mrf.mxu0
  %8249 = vmatprep.mubr.f32.mxu0 0.0
  %8250 = vmatmul.mubr.f32.gmra.mxu0 %v7890
  %v8251 = vpop.f32.mrf.mxu0
  %v8252 = vadd.f32 0.0, %v8251
  %v8253 = vpop.f32.mrf.mxu0
  %8254 = vmatprep.mubr.f32.mxu0 0.0
  %8255 = vmatmul.mubr.f32.gmra.mxu0 %v7893
  %v8256 = vpop.f32.mrf.mxu0
  %v8257 = vadd.f32 0.0, %v8256
  %v8258 = vpop.f32.mrf.mxu0
  %8259 = vmatprep.mubr.f32.mxu0 0.0
  %8260 = vmatmul.mubr.f32.gmra.mxu0 %v7896
  %v8261 = vpop.f32.mrf.mxu0
  %v8262 = vadd.f32 0.0, %v8261
  %v8263 = vpop.f32.mrf.mxu0
  %8264 = vmatprep.mubr.f32.mxu0 0.0
  %8265 = vmatmul.mubr.f32.gmra.mxu0 %v7899
  %v8266 = vpop.f32.mrf.mxu0
  %v8267 = vadd.f32 0.0, %v8266
  %v8268 = vpop.f32.mrf.mxu0
  %8269 = vmatprep.mubr.f32.mxu0 0.0
  %8270 = vmatmul.mubr.f32.gmra.mxu0 %v7902
  %v8271 = vpop.f32.mrf.mxu0
  %v8272 = vadd.f32 0.0, %v8271
  %v8273 = vpop.f32.mrf.mxu0
  %8274 = vmatprep.mubr.f32.mxu0 0.0
  %8275 = vmatmul.mubr.f32.gmra.mxu0 %v7905
  %v8276 = vpop.f32.mrf.mxu0
  %v8277 = vadd.f32 0.0, %v8276
  %v8278 = vpop.f32.mrf.mxu0
  %8279 = vmatprep.mubr.f32.mxu0 0.0
  %8280 = vmatmul.mubr.f32.gmra.mxu0 %v7908
  %v8281 = vpop.f32.mrf.mxu0
  %v8282 = vadd.f32 0.0, %v8281
  %v8283 = vpop.f32.mrf.mxu0
  %8284 = vmatprep.mubr.f32.mxu0 0.0
  %8285 = vmatmul.mubr.f32.gmra.mxu0 %v7911
  %v8286 = vpop.f32.mrf.mxu0
  %v8287 = vadd.f32 0.0, %v8286
  %v8288 = vpop.f32.mrf.mxu0
  %8289 = vmatprep.mubr.f32.mxu0 0.0
  %8290 = vmatmul.mubr.f32.gmra.mxu0 %v7914
  %v8291 = vpop.f32.mrf.mxu0
  %v8292 = vadd.f32 0.0, %v8291
  %v8293 = vpop.f32.mrf.mxu0
  %8294 = vmatprep.mubr.f32.mxu0 0.0
  %8295 = vmatmul.mubr.f32.gmra.mxu0 %v7917
  %v8296 = vpop.f32.mrf.mxu0
  %v8297 = vadd.f32 0.0, %v8296
  %v8298 = vpop.f32.mrf.mxu0
  %8299 = vmatprep.mubr.f32.mxu0 0.0
  %8300 = vmatmul.mubr.f32.gmra.mxu0 %v7920
  %v8301 = vpop.f32.mrf.mxu0
  %v8302 = vadd.f32 0.0, %v8301
  %v8303 = vpop.f32.mrf.mxu0
  %8304 = vmatprep.mubr.f32.mxu0 0.0
  %8305 = vmatmul.mubr.f32.gmra.mxu0 %v7923
  %v8306 = vpop.f32.mrf.mxu0
  %v8307 = vadd.f32 0.0, %v8306
  %v8308 = vpop.f32.mrf.mxu0
  %8309 = vdwg.mxu0
  %v8311 = vsel %vm4519, %v7636, 0
  %v8314 = vsel %vm4519, %v7637, 0
  %v8317 = vsel %vm4519, %v7672, 0
  %v8320 = vsel %vm4519, %v7673, 0
  %8322 = vmatprep.subr.mxu0 0.0
  %8323 = vmatpush1.msra.mxu0 0.0
  %8324 = vmatprep.subr.mxu0 0.0
  %8325 = vmatpush1.msra.mxu0 0.0
  %8326 = vmatprep.subr.mxu0 0.0
  %8327 = vmatpush1.msra.mxu0 0.0
  %8328 = vmatprep.subr.mxu0 0.0
  %8329 = vmatpush1.msra.mxu0 0.0
  %8330 = vmatprep.subr.mxu0 0.0
  %8331 = vmatpush1.msra.mxu0 %v7719
  %8332 = vmatprep.subr.mxu0 0.0
  %8333 = vmatpush1.msra.mxu0 %v7718
  %8334 = vmatprep.subr.mxu0 0.0
  %8335 = vmatpush1.msra.mxu0 %v7717
  %8336 = vmatprep.subr.mxu0 0.0
  %8337 = vmatpush1.msra.mxu0 %v7716
  %8338 = vmatprep.subr.mxu0 0.0
  %8339 = vmatpush1.msra.mxu0 %v7715
  %8340 = vmatprep.subr.mxu0 0.0
  %8341 = vmatpush1.msra.mxu0 %v7714
  %8342 = vmatprep.subr.mxu0 0.0
  %8343 = vmatpush1.msra.mxu0 %v7713
  %8344 = vmatprep.subr.mxu0 0.0
  %8345 = vmatpush1.msra.mxu0 %v7712
  %8346 = vmatprep.subr.mxu0 0.0
  %8347 = vmatpush1.msra.mxu0 %v7711
  %8348 = vmatprep.subr.mxu0 0.0
  %8349 = vmatpush1.msra.mxu0 %v7710
  %8350 = vmatprep.subr.mxu0 0.0
  %8351 = vmatpush1.msra.mxu0 %v7709
  %8352 = vmatprep.subr.mxu0 0.0
  %8353 = vmatpush1.msra.mxu0 %v7708
  %8354 = vmatprep.subr.mxu0 0.0
  %8355 = vmatpush2.msra.mxu0 0.0
  %8356 = vmatprep.subr.mxu0 0.0
  %8357 = vmatpush2.msra.mxu0 0.0
  %8358 = vmatprep.subr.mxu0 0.0
  %8359 = vmatpush2.msra.mxu0 0.0
  %8360 = vmatprep.subr.mxu0 0.0
  %8361 = vmatpush2.msra.mxu0 0.0
  %8362 = vmatprep.subr.mxu0 0.0
  %8363 = vmatpush2.msra.mxu0 0.0
  %8364 = vmatprep.subr.mxu0 0.0
  %8365 = vmatpush2.msra.mxu0 0.0
  %8366 = vmatprep.subr.mxu0 0.0
  %8367 = vmatpush2.msra.mxu0 0.0
  %8368 = vmatprep.subr.mxu0 0.0
  %8369 = vmatpush2.msra.mxu0 0.0
  %8370 = vmatprep.subr.mxu0 0.0
  %8371 = vmatpush2.msra.mxu0 0.0
  %8372 = vmatprep.subr.mxu0 0.0
  %8373 = vmatpush2.msra.mxu0 0.0
  %8374 = vmatprep.subr.mxu0 0.0
  %8375 = vmatpush2.msra.mxu0 0.0
  %8376 = vmatprep.subr.mxu0 0.0
  %8377 = vmatpush2.msra.mxu0 0.0
  %8378 = vmatprep.subr.mxu0 0.0
  %8379 = vmatpush2.msra.mxu0 0.0
  %8380 = vmatprep.subr.mxu0 0.0
  %8381 = vmatpush2.msra.mxu0 0.0
  %8382 = vmatprep.subr.mxu0 0.0
  %8383 = vmatpush2.msra.mxu0 0.0
  %8384 = vmatprep.subr.mxu0 0.0
  %8385 = vmatpush2.msra.mxu0 0.0
  %8386 = vmatprep.mubr.f32.mxu0 0.0
  %8387 = vmatmul.mubr.f32.gmra.mxu0 %v8311
  %v8388 = vpop.f32.mrf.mxu0
  %v8389 = vadd.f32 %v7992, %v8388
  %v8390 = vpop.f32.mrf.mxu0
  %8391 = vmatprep.mubr.f32.mxu0 0.0
  %8392 = vmatmul.mubr.f32.gmra.mxu0 %v8314
  %v8393 = vpop.f32.mrf.mxu0
  %v8394 = vadd.f32 %v7997, %v8393
  %v8395 = vpop.f32.mrf.mxu0
  %8396 = vmatprep.mubr.f32.mxu0 0.0
  %8397 = vmatmul.mubr.f32.gmra.mxu0 %v7734
  %v8398 = vpop.f32.mrf.mxu0
  %v8399 = vadd.f32 %v8002, %v8398
  %v8400 = vpop.f32.mrf.mxu0
  %8401 = vmatprep.mubr.f32.mxu0 0.0
  %8402 = vmatmul.mubr.f32.gmra.mxu0 %v7737
  %v8403 = vpop.f32.mrf.mxu0
  %v8404 = vadd.f32 %v8007, %v8403
  %v8405 = vpop.f32.mrf.mxu0
  %8406 = vmatprep.mubr.f32.mxu0 0.0
  %8407 = vmatmul.mubr.f32.gmra.mxu0 %v7740
  %v8408 = vpop.f32.mrf.mxu0
  %v8409 = vadd.f32 %v8012, %v8408
  %v8410 = vpop.f32.mrf.mxu0
  %8411 = vmatprep.mubr.f32.mxu0 0.0
  %8412 = vmatmul.mubr.f32.gmra.mxu0 %v7743
  %v8413 = vpop.f32.mrf.mxu0
  %v8414 = vadd.f32 %v8017, %v8413
  %v8415 = vpop.f32.mrf.mxu0
  %8416 = vmatprep.mubr.f32.mxu0 0.0
  %8417 = vmatmul.mubr.f32.gmra.mxu0 %v7746
  %v8418 = vpop.f32.mrf.mxu0
  %v8419 = vadd.f32 %v8022, %v8418
  %v8420 = vpop.f32.mrf.mxu0
  %8421 = vmatprep.mubr.f32.mxu0 0.0
  %8422 = vmatmul.mubr.f32.gmra.mxu0 %v7749
  %v8423 = vpop.f32.mrf.mxu0
  %v8424 = vadd.f32 %v8027, %v8423
  %v8425 = vpop.f32.mrf.mxu0
  %8426 = vmatprep.mubr.f32.mxu0 0.0
  %8427 = vmatmul.mubr.f32.gmra.mxu0 %v7752
  %v8428 = vpop.f32.mrf.mxu0
  %v8429 = vadd.f32 %v8032, %v8428
  %v8430 = vpop.f32.mrf.mxu0
  %8431 = vmatprep.mubr.f32.mxu0 0.0
  %8432 = vmatmul.mubr.f32.gmra.mxu0 %v7755
  %v8433 = vpop.f32.mrf.mxu0
  %v8434 = vadd.f32 %v8037, %v8433
  %v8435 = vpop.f32.mrf.mxu0
  %8436 = vmatprep.mubr.f32.mxu0 0.0
  %8437 = vmatmul.mubr.f32.gmra.mxu0 %v7758
  %v8438 = vpop.f32.mrf.mxu0
  %v8439 = vadd.f32 %v8042, %v8438
  %v8440 = vpop.f32.mrf.mxu0
  %8441 = vmatprep.mubr.f32.mxu0 0.0
  %8442 = vmatmul.mubr.f32.gmra.mxu0 %v7761
  %v8443 = vpop.f32.mrf.mxu0
  %v8444 = vadd.f32 %v8047, %v8443
  %v8445 = vpop.f32.mrf.mxu0
  %8446 = vmatprep.mubr.f32.mxu0 0.0
  %8447 = vmatmul.mubr.f32.gmra.mxu0 %v7764
  %v8448 = vpop.f32.mrf.mxu0
  %v8449 = vadd.f32 %v8052, %v8448
  %v8450 = vpop.f32.mrf.mxu0
  %8451 = vmatprep.mubr.f32.mxu0 0.0
  %8452 = vmatmul.mubr.f32.gmra.mxu0 %v7767
  %v8453 = vpop.f32.mrf.mxu0
  %v8454 = vadd.f32 %v8057, %v8453
  %v8455 = vpop.f32.mrf.mxu0
  %8456 = vmatprep.mubr.f32.mxu0 0.0
  %8457 = vmatmul.mubr.f32.gmra.mxu0 %v7770
  %v8458 = vpop.f32.mrf.mxu0
  %v8459 = vadd.f32 %v8062, %v8458
  %v8460 = vpop.f32.mrf.mxu0
  %8461 = vmatprep.mubr.f32.mxu0 0.0
  %8462 = vmatmul.mubr.f32.gmra.mxu0 %v7773
  %v8463 = vpop.f32.mrf.mxu0
  %v8464 = vadd.f32 %v8067, %v8463
  %v8465 = vpop.f32.mrf.mxu0
  %8466 = vmatprep.mubr.f32.mxu0 0.0
  %8467 = vmatmul.mubr.f32.gmra.mxu0 %v7776
  %v8468 = vpop.f32.mrf.mxu0
  %v8469 = vadd.f32 %v8072, %v8468
  %v8470 = vpop.f32.mrf.mxu0
  %8471 = vmatprep.mubr.f32.mxu0 0.0
  %8472 = vmatmul.mubr.f32.gmra.mxu0 %v7779
  %v8473 = vpop.f32.mrf.mxu0
  %v8474 = vadd.f32 %v8077, %v8473
  %v8475 = vpop.f32.mrf.mxu0
  %8476 = vmatprep.mubr.f32.mxu0 0.0
  %8477 = vmatmul.mubr.f32.gmra.mxu0 %v7782
  %v8478 = vpop.f32.mrf.mxu0
  %v8479 = vadd.f32 %v8082, %v8478
  %v8480 = vpop.f32.mrf.mxu0
  %8481 = vmatprep.mubr.f32.mxu0 0.0
  %8482 = vmatmul.mubr.f32.gmra.mxu0 %v7785
  %v8483 = vpop.f32.mrf.mxu0
  %v8484 = vadd.f32 %v8087, %v8483
  %v8485 = vpop.f32.mrf.mxu0
  %8486 = vmatprep.mubr.f32.mxu0 0.0
  %8487 = vmatmul.mubr.f32.gmra.mxu0 %v7788
  %v8488 = vpop.f32.mrf.mxu0
  %v8489 = vadd.f32 %v8092, %v8488
  %v8490 = vpop.f32.mrf.mxu0
  %8491 = vmatprep.mubr.f32.mxu0 0.0
  %8492 = vmatmul.mubr.f32.gmra.mxu0 %v7791
  %v8493 = vpop.f32.mrf.mxu0
  %v8494 = vadd.f32 %v8097, %v8493
  %v8495 = vpop.f32.mrf.mxu0
  %8496 = vmatprep.mubr.f32.mxu0 0.0
  %8497 = vmatmul.mubr.f32.gmra.mxu0 %v7794
  %v8498 = vpop.f32.mrf.mxu0
  %v8499 = vadd.f32 %v8102, %v8498
  %v8500 = vpop.f32.mrf.mxu0
  %8501 = vmatprep.mubr.f32.mxu0 0.0
  %8502 = vmatmul.mubr.f32.gmra.mxu0 %v7797
  %v8503 = vpop.f32.mrf.mxu0
  %v8504 = vadd.f32 %v8107, %v8503
  %v8505 = vpop.f32.mrf.mxu0
  %8506 = vmatprep.mubr.f32.mxu0 0.0
  %8507 = vmatmul.mubr.f32.gmra.mxu0 %v7800
  %v8508 = vpop.f32.mrf.mxu0
  %v8509 = vadd.f32 %v8112, %v8508
  %v8510 = vpop.f32.mrf.mxu0
  %8511 = vmatprep.mubr.f32.mxu0 0.0
  %8512 = vmatmul.mubr.f32.gmra.mxu0 %v7803
  %v8513 = vpop.f32.mrf.mxu0
  %v8514 = vadd.f32 %v8117, %v8513
  %v8515 = vpop.f32.mrf.mxu0
  %8516 = vmatprep.mubr.f32.mxu0 0.0
  %8517 = vmatmul.mubr.f32.gmra.mxu0 %v7806
  %v8518 = vpop.f32.mrf.mxu0
  %v8519 = vadd.f32 %v8122, %v8518
  %v8520 = vpop.f32.mrf.mxu0
  %8521 = vmatprep.mubr.f32.mxu0 0.0
  %8522 = vmatmul.mubr.f32.gmra.mxu0 %v7809
  %v8523 = vpop.f32.mrf.mxu0
  %v8524 = vadd.f32 %v8127, %v8523
  %v8525 = vpop.f32.mrf.mxu0
  %8526 = vmatprep.mubr.f32.mxu0 0.0
  %8527 = vmatmul.mubr.f32.gmra.mxu0 %v7812
  %v8528 = vpop.f32.mrf.mxu0
  %v8529 = vadd.f32 %v8132, %v8528
  %v8530 = vpop.f32.mrf.mxu0
  %8531 = vmatprep.mubr.f32.mxu0 0.0
  %8532 = vmatmul.mubr.f32.gmra.mxu0 %v7815
  %v8533 = vpop.f32.mrf.mxu0
  %v8534 = vadd.f32 %v8137, %v8533
  %v8535 = vpop.f32.mrf.mxu0
  %8536 = vmatprep.mubr.f32.mxu0 0.0
  %8537 = vmatmul.mubr.f32.gmra.mxu0 %v7818
  %v8538 = vpop.f32.mrf.mxu0
  %v8539 = vadd.f32 %v8142, %v8538
  %v8540 = vpop.f32.mrf.mxu0
  %8541 = vmatprep.mubr.f32.mxu0 0.0
  %8542 = vmatmul.mubr.f32.gmra.mxu0 %v7821
  %v8543 = vpop.f32.mrf.mxu0
  %v8544 = vadd.f32 %v8147, %v8543
  %v8545 = vpop.f32.mrf.mxu0
  %8546 = vmatprep.mubr.f32.mxu0 0.0
  %8547 = vmatmul.mubr.f32.gmra.mxu0 %v8317
  %v8548 = vpop.f32.mrf.mxu0
  %v8549 = vadd.f32 %v8152, %v8548
  %v8550 = vpop.f32.mrf.mxu0
  %8551 = vmatprep.mubr.f32.mxu0 0.0
  %8552 = vmatmul.mubr.f32.gmra.mxu0 %v8320
  %v8553 = vpop.f32.mrf.mxu0
  %v8554 = vadd.f32 %v8157, %v8553
  %v8555 = vpop.f32.mrf.mxu0
  %8556 = vmatprep.mubr.f32.mxu0 0.0
  %8557 = vmatmul.mubr.f32.gmra.mxu0 %v7830
  %v8558 = vpop.f32.mrf.mxu0
  %v8559 = vadd.f32 %v8162, %v8558
  %v8560 = vpop.f32.mrf.mxu0
  %8561 = vmatprep.mubr.f32.mxu0 0.0
  %8562 = vmatmul.mubr.f32.gmra.mxu0 %v7833
  %v8563 = vpop.f32.mrf.mxu0
  %v8564 = vadd.f32 %v8167, %v8563
  %v8565 = vpop.f32.mrf.mxu0
  %8566 = vmatprep.mubr.f32.mxu0 0.0
  %8567 = vmatmul.mubr.f32.gmra.mxu0 %v7836
  %v8568 = vpop.f32.mrf.mxu0
  %v8569 = vadd.f32 %v8172, %v8568
  %v8570 = vpop.f32.mrf.mxu0
  %8571 = vmatprep.mubr.f32.mxu0 0.0
  %8572 = vmatmul.mubr.f32.gmra.mxu0 %v7839
  %v8573 = vpop.f32.mrf.mxu0
  %v8574 = vadd.f32 %v8177, %v8573
  %v8575 = vpop.f32.mrf.mxu0
  %8576 = vmatprep.mubr.f32.mxu0 0.0
  %8577 = vmatmul.mubr.f32.gmra.mxu0 %v7842
  %v8578 = vpop.f32.mrf.mxu0
  %v8579 = vadd.f32 %v8182, %v8578
  %v8580 = vpop.f32.mrf.mxu0
  %8581 = vmatprep.mubr.f32.mxu0 0.0
  %8582 = vmatmul.mubr.f32.gmra.mxu0 %v7845
  %v8583 = vpop.f32.mrf.mxu0
  %v8584 = vadd.f32 %v8187, %v8583
  %v8585 = vpop.f32.mrf.mxu0
  %8586 = vmatprep.mubr.f32.mxu0 0.0
  %8587 = vmatmul.mubr.f32.gmra.mxu0 %v7848
  %v8588 = vpop.f32.mrf.mxu0
  %v8589 = vadd.f32 %v8192, %v8588
  %v8590 = vpop.f32.mrf.mxu0
  %8591 = vmatprep.mubr.f32.mxu0 0.0
  %8592 = vmatmul.mubr.f32.gmra.mxu0 %v7851
  %v8593 = vpop.f32.mrf.mxu0
  %v8594 = vadd.f32 %v8197, %v8593
  %v8595 = vpop.f32.mrf.mxu0
  %8596 = vmatprep.mubr.f32.mxu0 0.0
  %8597 = vmatmul.mubr.f32.gmra.mxu0 %v7854
  %v8598 = vpop.f32.mrf.mxu0
  %v8599 = vadd.f32 %v8202, %v8598
  %v8600 = vpop.f32.mrf.mxu0
  %8601 = vmatprep.mubr.f32.mxu0 0.0
  %8602 = vmatmul.mubr.f32.gmra.mxu0 %v7857
  %v8603 = vpop.f32.mrf.mxu0
  %v8604 = vadd.f32 %v8207, %v8603
  %v8605 = vpop.f32.mrf.mxu0
  %8606 = vmatprep.mubr.f32.mxu0 0.0
  %8607 = vmatmul.mubr.f32.gmra.mxu0 %v7860
  %v8608 = vpop.f32.mrf.mxu0
  %v8609 = vadd.f32 %v8212, %v8608
  %v8610 = vpop.f32.mrf.mxu0
  %8611 = vmatprep.mubr.f32.mxu0 0.0
  %8612 = vmatmul.mubr.f32.gmra.mxu0 %v7863
  %v8613 = vpop.f32.mrf.mxu0
  %v8614 = vadd.f32 %v8217, %v8613
  %v8615 = vpop.f32.mrf.mxu0
  %8616 = vmatprep.mubr.f32.mxu0 0.0
  %8617 = vmatmul.mubr.f32.gmra.mxu0 %v7866
  %v8618 = vpop.f32.mrf.mxu0
  %v8619 = vadd.f32 %v8222, %v8618
  %v8620 = vpop.f32.mrf.mxu0
  %8621 = vmatprep.mubr.f32.mxu0 0.0
  %8622 = vmatmul.mubr.f32.gmra.mxu0 %v7869
  %v8623 = vpop.f32.mrf.mxu0
  %v8624 = vadd.f32 %v8227, %v8623
  %v8625 = vpop.f32.mrf.mxu0
  %8626 = vmatprep.mubr.f32.mxu0 0.0
  %8627 = vmatmul.mubr.f32.gmra.mxu0 %v7872
  %v8628 = vpop.f32.mrf.mxu0
  %v8629 = vadd.f32 %v8232, %v8628
  %v8630 = vpop.f32.mrf.mxu0
  %8631 = vmatprep.mubr.f32.mxu0 0.0
  %8632 = vmatmul.mubr.f32.gmra.mxu0 %v7875
  %v8633 = vpop.f32.mrf.mxu0
  %v8634 = vadd.f32 %v8237, %v8633
  %v8635 = vpop.f32.mrf.mxu0
  %8636 = vmatprep.mubr.f32.mxu0 0.0
  %8637 = vmatmul.mubr.f32.gmra.mxu0 %v7878
  %v8638 = vpop.f32.mrf.mxu0
  %v8639 = vadd.f32 %v8242, %v8638
  %v8640 = vpop.f32.mrf.mxu0
  %8641 = vmatprep.mubr.f32.mxu0 0.0
  %8642 = vmatmul.mubr.f32.gmra.mxu0 %v7881
  %v8643 = vpop.f32.mrf.mxu0
  %v8644 = vadd.f32 %v8247, %v8643
  %v8645 = vpop.f32.mrf.mxu0
  %8646 = vmatprep.mubr.f32.mxu0 0.0
  %8647 = vmatmul.mubr.f32.gmra.mxu0 %v7884
  %v8648 = vpop.f32.mrf.mxu0
  %v8649 = vadd.f32 %v8252, %v8648
  %v8650 = vpop.f32.mrf.mxu0
  %8651 = vmatprep.mubr.f32.mxu0 0.0
  %8652 = vmatmul.mubr.f32.gmra.mxu0 %v7887
  %v8653 = vpop.f32.mrf.mxu0
  %v8654 = vadd.f32 %v8257, %v8653
  %v8655 = vpop.f32.mrf.mxu0
  %8656 = vmatprep.mubr.f32.mxu0 0.0
  %8657 = vmatmul.mubr.f32.gmra.mxu0 %v7890
  %v8658 = vpop.f32.mrf.mxu0
  %v8659 = vadd.f32 %v8262, %v8658
  %v8660 = vpop.f32.mrf.mxu0
  %8661 = vmatprep.mubr.f32.mxu0 0.0
  %8662 = vmatmul.mubr.f32.gmra.mxu0 %v7893
  %v8663 = vpop.f32.mrf.mxu0
  %v8664 = vadd.f32 %v8267, %v8663
  %v8665 = vpop.f32.mrf.mxu0
  %8666 = vmatprep.mubr.f32.mxu0 0.0
  %8667 = vmatmul.mubr.f32.gmra.mxu0 %v7896
  %v8668 = vpop.f32.mrf.mxu0
  %v8669 = vadd.f32 %v8272, %v8668
  %v8670 = vpop.f32.mrf.mxu0
  %8671 = vmatprep.mubr.f32.mxu0 0.0
  %8672 = vmatmul.mubr.f32.gmra.mxu0 %v7899
  %v8673 = vpop.f32.mrf.mxu0
  %v8674 = vadd.f32 %v8277, %v8673
  %v8675 = vpop.f32.mrf.mxu0
  %8676 = vmatprep.mubr.f32.mxu0 0.0
  %8677 = vmatmul.mubr.f32.gmra.mxu0 %v7902
  %v8678 = vpop.f32.mrf.mxu0
  %v8679 = vadd.f32 %v8282, %v8678
  %v8680 = vpop.f32.mrf.mxu0
  %8681 = vmatprep.mubr.f32.mxu0 0.0
  %8682 = vmatmul.mubr.f32.gmra.mxu0 %v7905
  %v8683 = vpop.f32.mrf.mxu0
  %v8684 = vadd.f32 %v8287, %v8683
  %v8685 = vpop.f32.mrf.mxu0
  %8686 = vmatprep.mubr.f32.mxu0 0.0
  %8687 = vmatmul.mubr.f32.gmra.mxu0 %v7908
  %v8688 = vpop.f32.mrf.mxu0
  %v8689 = vadd.f32 %v8292, %v8688
  %v8690 = vpop.f32.mrf.mxu0
  %8691 = vmatprep.mubr.f32.mxu0 0.0
  %8692 = vmatmul.mubr.f32.gmra.mxu0 %v7911
  %v8693 = vpop.f32.mrf.mxu0
  %v8694 = vadd.f32 %v8297, %v8693
  %v8695 = vpop.f32.mrf.mxu0
  %8696 = vmatprep.mubr.f32.mxu0 0.0
  %8697 = vmatmul.mubr.f32.gmra.mxu0 %v7914
  %v8698 = vpop.f32.mrf.mxu0
  %v8699 = vadd.f32 %v8302, %v8698
  %v8700 = vpop.f32.mrf.mxu0
  %8701 = vmatprep.mubr.f32.mxu0 0.0
  %8702 = vmatmul.mubr.f32.gmra.mxu0 %v7917
  %v8703 = vpop.f32.mrf.mxu0
  %v8704 = vadd.f32 %v8307, %v8703
  %v8705 = vpop.f32.mrf.mxu0
  %8706 = vdwg.mxu0
  %s8707 = scalar_lea.vmem %s9, 192
  %v8708 = vld [vmem:[%s8707] sm:$0xff]
  %v8709 = vld [vmem:[%s8707 + $0x8] sm:$0xff]
  %v8710 = vld [vmem:[%s8707 + $0x10] sm:$0xff]
  %v8711 = vld [vmem:[%s8707 + $0x18] sm:$0xff]
  %v8712 = vld [vmem:[%s8707 + $0x20] sm:$0xff]
  %v8713 = vld [vmem:[%s8707 + $0x28] sm:$0xff]
  %v8714 = vld [vmem:[%s8707 + $0x30] sm:$0xff]
  %v8715 = vld [vmem:[%s8707 + $0x38] sm:$0xff]
  %v8716 = vld [vmem:[%s8707 + $0x40] sm:$0xff]
  %v8717 = vld [vmem:[%s8707 + $0x48] sm:$0xff]
  %v8718 = vld [vmem:[%s8707 + $0x50] sm:$0xff]
  %v8719 = vld [vmem:[%s8707 + $0x58] sm:$0xff]
  %v8721 = vsel %vm4519, %v7670, 0
  %v8724 = vsel %vm4519, %v7671, 0
  %v8727 = vsel %vm4519, %v7706, 0
  %v8730 = vsel %vm4519, %v7707, 0
  %8732 = vmatprep.subr.mxu0 0.0
  %8733 = vmatpush1.msra.mxu0 0.0
  %8734 = vmatprep.subr.mxu0 0.0
  %8735 = vmatpush1.msra.mxu0 0.0
  %8736 = vmatprep.subr.mxu0 0.0
  %8737 = vmatpush1.msra.mxu0 0.0
  %8738 = vmatprep.subr.mxu0 0.0
  %8739 = vmatpush1.msra.mxu0 0.0
  %8740 = vmatprep.subr.mxu0 0.0
  %8741 = vmatpush1.msra.mxu0 %v8719
  %8742 = vmatprep.subr.mxu0 0.0
  %8743 = vmatpush1.msra.mxu0 %v8718
  %8744 = vmatprep.subr.mxu0 0.0
  %8745 = vmatpush1.msra.mxu0 %v8717
  %8746 = vmatprep.subr.mxu0 0.0
  %8747 = vmatpush1.msra.mxu0 %v8716
  %8748 = vmatprep.subr.mxu0 0.0
  %8749 = vmatpush1.msra.mxu0 %v8715
  %8750 = vmatprep.subr.mxu0 0.0
  %8751 = vmatpush1.msra.mxu0 %v8714
  %8752 = vmatprep.subr.mxu0 0.0
  %8753 = vmatpush1.msra.mxu0 %v8713
  %8754 = vmatprep.subr.mxu0 0.0
  %8755 = vmatpush1.msra.mxu0 %v8712
  %8756 = vmatprep.subr.mxu0 0.0
  %8757 = vmatpush1.msra.mxu0 %v8711
  %8758 = vmatprep.subr.mxu0 0.0
  %8759 = vmatpush1.msra.mxu0 %v8710
  %8760 = vmatprep.subr.mxu0 0.0
  %8761 = vmatpush1.msra.mxu0 %v8709
  %8762 = vmatprep.subr.mxu0 0.0
  %8763 = vmatpush1.msra.mxu0 %v8708
  %8764 = vmatprep.subr.mxu0 0.0
  %8765 = vmatpush2.msra.mxu0 0.0
  %8766 = vmatprep.subr.mxu0 0.0
  %8767 = vmatpush2.msra.mxu0 0.0
  %8768 = vmatprep.subr.mxu0 0.0
  %8769 = vmatpush2.msra.mxu0 0.0
  %8770 = vmatprep.subr.mxu0 0.0
  %8771 = vmatpush2.msra.mxu0 0.0
  %8772 = vmatprep.subr.mxu0 0.0
  %8773 = vmatpush2.msra.mxu0 0.0
  %8774 = vmatprep.subr.mxu0 0.0
  %8775 = vmatpush2.msra.mxu0 0.0
  %8776 = vmatprep.subr.mxu0 0.0
  %8777 = vmatpush2.msra.mxu0 0.0
  %8778 = vmatprep.subr.mxu0 0.0
  %8779 = vmatpush2.msra.mxu0 0.0
  %8780 = vmatprep.subr.mxu0 0.0
  %8781 = vmatpush2.msra.mxu0 0.0
  %8782 = vmatprep.subr.mxu0 0.0
  %8783 = vmatpush2.msra.mxu0 0.0
  %8784 = vmatprep.subr.mxu0 0.0
  %8785 = vmatpush2.msra.mxu0 0.0
  %8786 = vmatprep.subr.mxu0 0.0
  %8787 = vmatpush2.msra.mxu0 0.0
  %8788 = vmatprep.subr.mxu0 0.0
  %8789 = vmatpush2.msra.mxu0 0.0
  %8790 = vmatprep.subr.mxu0 0.0
  %8791 = vmatpush2.msra.mxu0 0.0
  %8792 = vmatprep.subr.mxu0 0.0
  %8793 = vmatpush2.msra.mxu0 0.0
  %8794 = vmatprep.subr.mxu0 0.0
  %8795 = vmatpush2.msra.mxu0 0.0
  %8796 = vmatprep.mubr.f32.mxu0 0.0
  %8797 = vmatmul.mubr.f32.gmra.mxu0 %v7740
  %v8798 = vpop.f32.mrf.mxu0
  %v8799 = vadd.f32 0.0, %v8798
  %v8800 = vpop.f32.mrf.mxu0
  %8801 = vmatprep.mubr.f32.mxu0 0.0
  %8802 = vmatmul.mubr.f32.gmra.mxu0 %v7743
  %v8803 = vpop.f32.mrf.mxu0
  %v8804 = vadd.f32 0.0, %v8803
  %v8805 = vpop.f32.mrf.mxu0
  %8806 = vmatprep.mubr.f32.mxu0 0.0
  %8807 = vmatmul.mubr.f32.gmra.mxu0 %v7746
  %v8808 = vpop.f32.mrf.mxu0
  %v8809 = vadd.f32 0.0, %v8808
  %v8810 = vpop.f32.mrf.mxu0
  %8811 = vmatprep.mubr.f32.mxu0 0.0
  %8812 = vmatmul.mubr.f32.gmra.mxu0 %v7749
  %v8813 = vpop.f32.mrf.mxu0
  %v8814 = vadd.f32 0.0, %v8813
  %v8815 = vpop.f32.mrf.mxu0
  %8816 = vmatprep.mubr.f32.mxu0 0.0
  %8817 = vmatmul.mubr.f32.gmra.mxu0 %v7752
  %v8818 = vpop.f32.mrf.mxu0
  %v8819 = vadd.f32 0.0, %v8818
  %v8820 = vpop.f32.mrf.mxu0
  %8821 = vmatprep.mubr.f32.mxu0 0.0
  %8822 = vmatmul.mubr.f32.gmra.mxu0 %v7755
  %v8823 = vpop.f32.mrf.mxu0
  %v8824 = vadd.f32 0.0, %v8823
  %v8825 = vpop.f32.mrf.mxu0
  %8826 = vmatprep.mubr.f32.mxu0 0.0
  %8827 = vmatmul.mubr.f32.gmra.mxu0 %v7758
  %v8828 = vpop.f32.mrf.mxu0
  %v8829 = vadd.f32 0.0, %v8828
  %v8830 = vpop.f32.mrf.mxu0
  %8831 = vmatprep.mubr.f32.mxu0 0.0
  %8832 = vmatmul.mubr.f32.gmra.mxu0 %v7761
  %v8833 = vpop.f32.mrf.mxu0
  %v8834 = vadd.f32 0.0, %v8833
  %v8835 = vpop.f32.mrf.mxu0
  %8836 = vmatprep.mubr.f32.mxu0 0.0
  %8837 = vmatmul.mubr.f32.gmra.mxu0 %v7764
  %v8838 = vpop.f32.mrf.mxu0
  %v8839 = vadd.f32 0.0, %v8838
  %v8840 = vpop.f32.mrf.mxu0
  %8841 = vmatprep.mubr.f32.mxu0 0.0
  %8842 = vmatmul.mubr.f32.gmra.mxu0 %v7767
  %v8843 = vpop.f32.mrf.mxu0
  %v8844 = vadd.f32 0.0, %v8843
  %v8845 = vpop.f32.mrf.mxu0
  %8846 = vmatprep.mubr.f32.mxu0 0.0
  %8847 = vmatmul.mubr.f32.gmra.mxu0 %v7770
  %v8848 = vpop.f32.mrf.mxu0
  %v8849 = vadd.f32 0.0, %v8848
  %v8850 = vpop.f32.mrf.mxu0
  %8851 = vmatprep.mubr.f32.mxu0 0.0
  %8852 = vmatmul.mubr.f32.gmra.mxu0 %v7773
  %v8853 = vpop.f32.mrf.mxu0
  %v8854 = vadd.f32 0.0, %v8853
  %v8855 = vpop.f32.mrf.mxu0
  %8856 = vmatprep.mubr.f32.mxu0 0.0
  %8857 = vmatmul.mubr.f32.gmra.mxu0 %v7776
  %v8858 = vpop.f32.mrf.mxu0
  %v8859 = vadd.f32 0.0, %v8858
  %v8860 = vpop.f32.mrf.mxu0
  %8861 = vmatprep.mubr.f32.mxu0 0.0
  %8862 = vmatmul.mubr.f32.gmra.mxu0 %v7779
  %v8863 = vpop.f32.mrf.mxu0
  %v8864 = vadd.f32 0.0, %v8863
  %v8865 = vpop.f32.mrf.mxu0
  %8866 = vmatprep.mubr.f32.mxu0 0.0
  %8867 = vmatmul.mubr.f32.gmra.mxu0 %v7782
  %v8868 = vpop.f32.mrf.mxu0
  %v8869 = vadd.f32 0.0, %v8868
  %v8870 = vpop.f32.mrf.mxu0
  %8871 = vmatprep.mubr.f32.mxu0 0.0
  %8872 = vmatmul.mubr.f32.gmra.mxu0 %v7785
  %v8873 = vpop.f32.mrf.mxu0
  %v8874 = vadd.f32 0.0, %v8873
  %v8875 = vpop.f32.mrf.mxu0
  %8876 = vmatprep.mubr.f32.mxu0 0.0
  %8877 = vmatmul.mubr.f32.gmra.mxu0 %v7788
  %v8878 = vpop.f32.mrf.mxu0
  %v8879 = vadd.f32 0.0, %v8878
  %v8880 = vpop.f32.mrf.mxu0
  %8881 = vmatprep.mubr.f32.mxu0 0.0
  %8882 = vmatmul.mubr.f32.gmra.mxu0 %v7791
  %v8883 = vpop.f32.mrf.mxu0
  %v8884 = vadd.f32 0.0, %v8883
  %v8885 = vpop.f32.mrf.mxu0
  %8886 = vmatprep.mubr.f32.mxu0 0.0
  %8887 = vmatmul.mubr.f32.gmra.mxu0 %v7794
  %v8888 = vpop.f32.mrf.mxu0
  %v8889 = vadd.f32 0.0, %v8888
  %v8890 = vpop.f32.mrf.mxu0
  %8891 = vmatprep.mubr.f32.mxu0 0.0
  %8892 = vmatmul.mubr.f32.gmra.mxu0 %v7797
  %v8893 = vpop.f32.mrf.mxu0
  %v8894 = vadd.f32 0.0, %v8893
  %v8895 = vpop.f32.mrf.mxu0
  %8896 = vmatprep.mubr.f32.mxu0 0.0
  %8897 = vmatmul.mubr.f32.gmra.mxu0 %v7800
  %v8898 = vpop.f32.mrf.mxu0
  %v8899 = vadd.f32 0.0, %v8898
  %v8900 = vpop.f32.mrf.mxu0
  %8901 = vmatprep.mubr.f32.mxu0 0.0
  %8902 = vmatmul.mubr.f32.gmra.mxu0 %v7803
  %v8903 = vpop.f32.mrf.mxu0
  %v8904 = vadd.f32 0.0, %v8903
  %v8905 = vpop.f32.mrf.mxu0
  %8906 = vmatprep.mubr.f32.mxu0 0.0
  %8907 = vmatmul.mubr.f32.gmra.mxu0 %v7806
  %v8908 = vpop.f32.mrf.mxu0
  %v8909 = vadd.f32 0.0, %v8908
  %v8910 = vpop.f32.mrf.mxu0
  %8911 = vmatprep.mubr.f32.mxu0 0.0
  %8912 = vmatmul.mubr.f32.gmra.mxu0 %v7809
  %v8913 = vpop.f32.mrf.mxu0
  %v8914 = vadd.f32 0.0, %v8913
  %v8915 = vpop.f32.mrf.mxu0
  %8916 = vmatprep.mubr.f32.mxu0 0.0
  %8917 = vmatmul.mubr.f32.gmra.mxu0 %v7812
  %v8918 = vpop.f32.mrf.mxu0
  %v8919 = vadd.f32 0.0, %v8918
  %v8920 = vpop.f32.mrf.mxu0
  %8921 = vmatprep.mubr.f32.mxu0 0.0
  %8922 = vmatmul.mubr.f32.gmra.mxu0 %v7815
  %v8923 = vpop.f32.mrf.mxu0
  %v8924 = vadd.f32 0.0, %v8923
  %v8925 = vpop.f32.mrf.mxu0
  %8926 = vmatprep.mubr.f32.mxu0 0.0
  %8927 = vmatmul.mubr.f32.gmra.mxu0 %v7818
  %v8928 = vpop.f32.mrf.mxu0
  %v8929 = vadd.f32 0.0, %v8928
  %v8930 = vpop.f32.mrf.mxu0
  %8931 = vmatprep.mubr.f32.mxu0 0.0
  %8932 = vmatmul.mubr.f32.gmra.mxu0 %v7821
  %v8933 = vpop.f32.mrf.mxu0
  %v8934 = vadd.f32 0.0, %v8933
  %v8935 = vpop.f32.mrf.mxu0
  %8936 = vmatprep.mubr.f32.mxu0 0.0
  %8937 = vmatmul.mubr.f32.gmra.mxu0 %v7824
  %v8938 = vpop.f32.mrf.mxu0
  %v8939 = vadd.f32 0.0, %v8938
  %v8940 = vpop.f32.mrf.mxu0
  %8941 = vmatprep.mubr.f32.mxu0 0.0
  %8942 = vmatmul.mubr.f32.gmra.mxu0 %v7827
  %v8943 = vpop.f32.mrf.mxu0
  %v8944 = vadd.f32 0.0, %v8943
  %v8945 = vpop.f32.mrf.mxu0
  %8946 = vmatprep.mubr.f32.mxu0 0.0
  %8947 = vmatmul.mubr.f32.gmra.mxu0 %v8721
  %v8948 = vpop.f32.mrf.mxu0
  %v8949 = vadd.f32 0.0, %v8948
  %v8950 = vpop.f32.mrf.mxu0
  %8951 = vmatprep.mubr.f32.mxu0 0.0
  %8952 = vmatmul.mubr.f32.gmra.mxu0 %v8724
  %v8953 = vpop.f32.mrf.mxu0
  %v8954 = vadd.f32 0.0, %v8953
  %v8955 = vpop.f32.mrf.mxu0
  %8956 = vmatprep.mubr.f32.mxu0 0.0
  %8957 = vmatmul.mubr.f32.gmra.mxu0 %v7836
  %v8958 = vpop.f32.mrf.mxu0
  %v8959 = vadd.f32 0.0, %v8958
  %v8960 = vpop.f32.mrf.mxu0
  %8961 = vmatprep.mubr.f32.mxu0 0.0
  %8962 = vmatmul.mubr.f32.gmra.mxu0 %v7839
  %v8963 = vpop.f32.mrf.mxu0
  %v8964 = vadd.f32 0.0, %v8963
  %v8965 = vpop.f32.mrf.mxu0
  %8966 = vmatprep.mubr.f32.mxu0 0.0
  %8967 = vmatmul.mubr.f32.gmra.mxu0 %v7842
  %v8968 = vpop.f32.mrf.mxu0
  %v8969 = vadd.f32 0.0, %v8968
  %v8970 = vpop.f32.mrf.mxu0
  %8971 = vmatprep.mubr.f32.mxu0 0.0
  %8972 = vmatmul.mubr.f32.gmra.mxu0 %v7845
  %v8973 = vpop.f32.mrf.mxu0
  %v8974 = vadd.f32 0.0, %v8973
  %v8975 = vpop.f32.mrf.mxu0
  %8976 = vmatprep.mubr.f32.mxu0 0.0
  %8977 = vmatmul.mubr.f32.gmra.mxu0 %v7848
  %v8978 = vpop.f32.mrf.mxu0
  %v8979 = vadd.f32 0.0, %v8978
  %v8980 = vpop.f32.mrf.mxu0
  %8981 = vmatprep.mubr.f32.mxu0 0.0
  %8982 = vmatmul.mubr.f32.gmra.mxu0 %v7851
  %v8983 = vpop.f32.mrf.mxu0
  %v8984 = vadd.f32 0.0, %v8983
  %v8985 = vpop.f32.mrf.mxu0
  %8986 = vmatprep.mubr.f32.mxu0 0.0
  %8987 = vmatmul.mubr.f32.gmra.mxu0 %v7854
  %v8988 = vpop.f32.mrf.mxu0
  %v8989 = vadd.f32 0.0, %v8988
  %v8990 = vpop.f32.mrf.mxu0
  %8991 = vmatprep.mubr.f32.mxu0 0.0
  %8992 = vmatmul.mubr.f32.gmra.mxu0 %v7857
  %v8993 = vpop.f32.mrf.mxu0
  %v8994 = vadd.f32 0.0, %v8993
  %v8995 = vpop.f32.mrf.mxu0
  %8996 = vmatprep.mubr.f32.mxu0 0.0
  %8997 = vmatmul.mubr.f32.gmra.mxu0 %v7860
  %v8998 = vpop.f32.mrf.mxu0
  %v8999 = vadd.f32 0.0, %v8998
  %v9000 = vpop.f32.mrf.mxu0
  %9001 = vmatprep.mubr.f32.mxu0 0.0
  %9002 = vmatmul.mubr.f32.gmra.mxu0 %v7863
  %v9003 = vpop.f32.mrf.mxu0
  %v9004 = vadd.f32 0.0, %v9003
  %v9005 = vpop.f32.mrf.mxu0
  %9006 = vmatprep.mubr.f32.mxu0 0.0
  %9007 = vmatmul.mubr.f32.gmra.mxu0 %v7866
  %v9008 = vpop.f32.mrf.mxu0
  %v9009 = vadd.f32 0.0, %v9008
  %v9010 = vpop.f32.mrf.mxu0
  %9011 = vmatprep.mubr.f32.mxu0 0.0
  %9012 = vmatmul.mubr.f32.gmra.mxu0 %v7869
  %v9013 = vpop.f32.mrf.mxu0
  %v9014 = vadd.f32 0.0, %v9013
  %v9015 = vpop.f32.mrf.mxu0
  %9016 = vmatprep.mubr.f32.mxu0 0.0
  %9017 = vmatmul.mubr.f32.gmra.mxu0 %v7872
  %v9018 = vpop.f32.mrf.mxu0
  %v9019 = vadd.f32 0.0, %v9018
  %v9020 = vpop.f32.mrf.mxu0
  %9021 = vmatprep.mubr.f32.mxu0 0.0
  %9022 = vmatmul.mubr.f32.gmra.mxu0 %v7875
  %v9023 = vpop.f32.mrf.mxu0
  %v9024 = vadd.f32 0.0, %v9023
  %v9025 = vpop.f32.mrf.mxu0
  %9026 = vmatprep.mubr.f32.mxu0 0.0
  %9027 = vmatmul.mubr.f32.gmra.mxu0 %v7878
  %v9028 = vpop.f32.mrf.mxu0
  %v9029 = vadd.f32 0.0, %v9028
  %v9030 = vpop.f32.mrf.mxu0
  %9031 = vmatprep.mubr.f32.mxu0 0.0
  %9032 = vmatmul.mubr.f32.gmra.mxu0 %v7881
  %v9033 = vpop.f32.mrf.mxu0
  %v9034 = vadd.f32 0.0, %v9033
  %v9035 = vpop.f32.mrf.mxu0
  %9036 = vmatprep.mubr.f32.mxu0 0.0
  %9037 = vmatmul.mubr.f32.gmra.mxu0 %v7884
  %v9038 = vpop.f32.mrf.mxu0
  %v9039 = vadd.f32 0.0, %v9038
  %v9040 = vpop.f32.mrf.mxu0
  %9041 = vmatprep.mubr.f32.mxu0 0.0
  %9042 = vmatmul.mubr.f32.gmra.mxu0 %v7887
  %v9043 = vpop.f32.mrf.mxu0
  %v9044 = vadd.f32 0.0, %v9043
  %v9045 = vpop.f32.mrf.mxu0
  %9046 = vmatprep.mubr.f32.mxu0 0.0
  %9047 = vmatmul.mubr.f32.gmra.mxu0 %v7890
  %v9048 = vpop.f32.mrf.mxu0
  %v9049 = vadd.f32 0.0, %v9048
  %v9050 = vpop.f32.mrf.mxu0
  %9051 = vmatprep.mubr.f32.mxu0 0.0
  %9052 = vmatmul.mubr.f32.gmra.mxu0 %v7893
  %v9053 = vpop.f32.mrf.mxu0
  %v9054 = vadd.f32 0.0, %v9053
  %v9055 = vpop.f32.mrf.mxu0
  %9056 = vmatprep.mubr.f32.mxu0 0.0
  %9057 = vmatmul.mubr.f32.gmra.mxu0 %v7896
  %v9058 = vpop.f32.mrf.mxu0
  %v9059 = vadd.f32 0.0, %v9058
  %v9060 = vpop.f32.mrf.mxu0
  %9061 = vmatprep.mubr.f32.mxu0 0.0
  %9062 = vmatmul.mubr.f32.gmra.mxu0 %v7899
  %v9063 = vpop.f32.mrf.mxu0
  %v9064 = vadd.f32 0.0, %v9063
  %v9065 = vpop.f32.mrf.mxu0
  %9066 = vmatprep.mubr.f32.mxu0 0.0
  %9067 = vmatmul.mubr.f32.gmra.mxu0 %v7902
  %v9068 = vpop.f32.mrf.mxu0
  %v9069 = vadd.f32 0.0, %v9068
  %v9070 = vpop.f32.mrf.mxu0
  %9071 = vmatprep.mubr.f32.mxu0 0.0
  %9072 = vmatmul.mubr.f32.gmra.mxu0 %v7905
  %v9073 = vpop.f32.mrf.mxu0
  %v9074 = vadd.f32 0.0, %v9073
  %v9075 = vpop.f32.mrf.mxu0
  %9076 = vmatprep.mubr.f32.mxu0 0.0
  %9077 = vmatmul.mubr.f32.gmra.mxu0 %v7908
  %v9078 = vpop.f32.mrf.mxu0
  %v9079 = vadd.f32 0.0, %v9078
  %v9080 = vpop.f32.mrf.mxu0
  %9081 = vmatprep.mubr.f32.mxu0 0.0
  %9082 = vmatmul.mubr.f32.gmra.mxu0 %v7911
  %v9083 = vpop.f32.mrf.mxu0
  %v9084 = vadd.f32 0.0, %v9083
  %v9085 = vpop.f32.mrf.mxu0
  %9086 = vmatprep.mubr.f32.mxu0 0.0
  %9087 = vmatmul.mubr.f32.gmra.mxu0 %v7914
  %v9088 = vpop.f32.mrf.mxu0
  %v9089 = vadd.f32 0.0, %v9088
  %v9090 = vpop.f32.mrf.mxu0
  %9091 = vmatprep.mubr.f32.mxu0 0.0
  %9092 = vmatmul.mubr.f32.gmra.mxu0 %v7917
  %v9093 = vpop.f32.mrf.mxu0
  %v9094 = vadd.f32 0.0, %v9093
  %v9095 = vpop.f32.mrf.mxu0
  %9096 = vmatprep.mubr.f32.mxu0 0.0
  %9097 = vmatmul.mubr.f32.gmra.mxu0 %v7920
  %v9098 = vpop.f32.mrf.mxu0
  %v9099 = vadd.f32 0.0, %v9098
  %v9100 = vpop.f32.mrf.mxu0
  %9101 = vmatprep.mubr.f32.mxu0 0.0
  %9102 = vmatmul.mubr.f32.gmra.mxu0 %v7923
  %v9103 = vpop.f32.mrf.mxu0
  %v9104 = vadd.f32 0.0, %v9103
  %v9105 = vpop.f32.mrf.mxu0
  %9106 = vmatprep.mubr.f32.mxu0 0.0
  %9107 = vmatmul.mubr.f32.gmra.mxu0 %v8727
  %v9108 = vpop.f32.mrf.mxu0
  %v9109 = vadd.f32 0.0, %v9108
  %v9110 = vpop.f32.mrf.mxu0
  %9111 = vmatprep.mubr.f32.mxu0 0.0
  %9112 = vmatmul.mubr.f32.gmra.mxu0 %v8730
  %v9113 = vpop.f32.mrf.mxu0
  %v9114 = vadd.f32 0.0, %v9113
  %v9115 = vpop.f32.mrf.mxu0
  %9116 = vdwg.mxu0
  %v9117 = vadd.f32 %v8389, %v8799
  %v9118 = vadd.f32 %v8394, %v8804
  %v9119 = vadd.f32 %v8399, %v8809
  %v9120 = vadd.f32 %v8404, %v8814
  %v9121 = vadd.f32 %v8409, %v8819
  %v9122 = vadd.f32 %v8414, %v8824
  %v9123 = vadd.f32 %v8419, %v8829
  %v9124 = vadd.f32 %v8424, %v8834
  %v9125 = vadd.f32 %v8429, %v8839
  %v9126 = vadd.f32 %v8434, %v8844
  %v9127 = vadd.f32 %v8439, %v8849
  %v9128 = vadd.f32 %v8444, %v8854
  %v9129 = vadd.f32 %v8449, %v8859
  %v9130 = vadd.f32 %v8454, %v8864
  %v9131 = vadd.f32 %v8459, %v8869
  %v9132 = vadd.f32 %v8464, %v8874
  %v9133 = vadd.f32 %v8469, %v8879
  %v9134 = vadd.f32 %v8474, %v8884
  %v9135 = vadd.f32 %v8479, %v8889
  %v9136 = vadd.f32 %v8484, %v8894
  %v9137 = vadd.f32 %v8489, %v8899
  %v9138 = vadd.f32 %v8494, %v8904
  %v9139 = vadd.f32 %v8499, %v8909
  %v9140 = vadd.f32 %v8504, %v8914
  %v9141 = vadd.f32 %v8509, %v8919
  %v9142 = vadd.f32 %v8514, %v8924
  %v9143 = vadd.f32 %v8519, %v8929
  %v9144 = vadd.f32 %v8524, %v8934
  %v9145 = vadd.f32 %v8529, %v8939
  %v9146 = vadd.f32 %v8534, %v8944
  %v9147 = vadd.f32 %v8539, %v8949
  %v9148 = vadd.f32 %v8544, %v8954
  %v9149 = vadd.f32 %v8549, %v8959
  %v9150 = vadd.f32 %v8554, %v8964
  %v9151 = vadd.f32 %v8559, %v8969
  %v9152 = vadd.f32 %v8564, %v8974
  %v9153 = vadd.f32 %v8569, %v8979
  %v9154 = vadd.f32 %v8574, %v8984
  %v9155 = vadd.f32 %v8579, %v8989
  %v9156 = vadd.f32 %v8584, %v8994
  %v9157 = vadd.f32 %v8589, %v8999
  %v9158 = vadd.f32 %v8594, %v9004
  %v9159 = vadd.f32 %v8599, %v9009
  %v9160 = vadd.f32 %v8604, %v9014
  %v9161 = vadd.f32 %v8609, %v9019
  %v9162 = vadd.f32 %v8614, %v9024
  %v9163 = vadd.f32 %v8619, %v9029
  %v9164 = vadd.f32 %v8624, %v9034
  %v9165 = vadd.f32 %v8629, %v9039
  %v9166 = vadd.f32 %v8634, %v9044
  %v9167 = vadd.f32 %v8639, %v9049
  %v9168 = vadd.f32 %v8644, %v9054
  %v9169 = vadd.f32 %v8649, %v9059
  %v9170 = vadd.f32 %v8654, %v9064
  %v9171 = vadd.f32 %v8659, %v9069
  %v9172 = vadd.f32 %v8664, %v9074
  %v9173 = vadd.f32 %v8669, %v9079
  %v9174 = vadd.f32 %v8674, %v9084
  %v9175 = vadd.f32 %v8679, %v9089
  %v9176 = vadd.f32 %v8684, %v9094
  %v9177 = vadd.f32 %v8689, %v9099
  %v9178 = vadd.f32 %v8694, %v9104
  %v9179 = vadd.f32 %v8699, %v9109
  %v9180 = vadd.f32 %v8704, %v9114
  %9245 = vrot.lane.b32.xlu0 %v9117, 32
  %v9246 = vpop.permute.xlu0 %9245
  %9247 = vrot.lane.b32.xlu0 %v9118, 32
  %v9248 = vpop.permute.xlu0 %9247
  %9249 = vrot.lane.b32.xlu0 %v9119, 32
  %v9250 = vpop.permute.xlu0 %9249
  %9251 = vrot.lane.b32.xlu0 %v9120, 32
  %v9252 = vpop.permute.xlu0 %9251
  %9253 = vrot.lane.b32.xlu0 %v9121, 32
  %v9254 = vpop.permute.xlu0 %9253
  %9255 = vrot.lane.b32.xlu0 %v9122, 32
  %v9256 = vpop.permute.xlu0 %9255
  %9257 = vrot.lane.b32.xlu0 %v9123, 32
  %v9258 = vpop.permute.xlu0 %9257
  %9259 = vrot.lane.b32.xlu0 %v9124, 32
  %v9260 = vpop.permute.xlu0 %9259
  %9261 = vrot.lane.b32.xlu0 %v9125, 32
  %v9262 = vpop.permute.xlu0 %9261
  %9263 = vrot.lane.b32.xlu0 %v9126, 32
  %v9264 = vpop.permute.xlu0 %9263
  %9265 = vrot.lane.b32.xlu0 %v9127, 32
  %v9266 = vpop.permute.xlu0 %9265
  %9267 = vrot.lane.b32.xlu0 %v9128, 32
  %v9268 = vpop.permute.xlu0 %9267
  %9269 = vrot.lane.b32.xlu0 %v9129, 32
  %v9270 = vpop.permute.xlu0 %9269
  %9271 = vrot.lane.b32.xlu0 %v9130, 32
  %v9272 = vpop.permute.xlu0 %9271
  %9273 = vrot.lane.b32.xlu0 %v9131, 32
  %v9274 = vpop.permute.xlu0 %9273
  %9275 = vrot.lane.b32.xlu0 %v9132, 32
  %v9276 = vpop.permute.xlu0 %9275
  %9277 = vrot.lane.b32.xlu0 %v9133, 32
  %v9278 = vpop.permute.xlu0 %9277
  %9279 = vrot.lane.b32.xlu0 %v9134, 32
  %v9280 = vpop.permute.xlu0 %9279
  %9281 = vrot.lane.b32.xlu0 %v9135, 32
  %v9282 = vpop.permute.xlu0 %9281
  %9283 = vrot.lane.b32.xlu0 %v9136, 32
  %v9284 = vpop.permute.xlu0 %9283
  %9285 = vrot.lane.b32.xlu0 %v9137, 32
  %v9286 = vpop.permute.xlu0 %9285
  %9287 = vrot.lane.b32.xlu0 %v9138, 32
  %v9288 = vpop.permute.xlu0 %9287
  %9289 = vrot.lane.b32.xlu0 %v9139, 32
  %v9290 = vpop.permute.xlu0 %9289
  %9291 = vrot.lane.b32.xlu0 %v9140, 32
  %v9292 = vpop.permute.xlu0 %9291
  %9293 = vrot.lane.b32.xlu0 %v9141, 32
  %v9294 = vpop.permute.xlu0 %9293
  %9295 = vrot.lane.b32.xlu0 %v9142, 32
  %v9296 = vpop.permute.xlu0 %9295
  %9297 = vrot.lane.b32.xlu0 %v9143, 32
  %v9298 = vpop.permute.xlu0 %9297
  %9299 = vrot.lane.b32.xlu0 %v9144, 32
  %v9300 = vpop.permute.xlu0 %9299
  %9301 = vrot.lane.b32.xlu0 %v9145, 32
  %v9302 = vpop.permute.xlu0 %9301
  %9303 = vrot.lane.b32.xlu0 %v9146, 32
  %v9304 = vpop.permute.xlu0 %9303
  %9305 = vrot.lane.b32.xlu0 %v9147, 32
  %v9306 = vpop.permute.xlu0 %9305
  %9307 = vrot.lane.b32.xlu0 %v9148, 32
  %v9308 = vpop.permute.xlu0 %9307
  %9309 = vrot.lane.b32.xlu0 %v9149, 32
  %v9310 = vpop.permute.xlu0 %9309
  %9311 = vrot.lane.b32.xlu0 %v9150, 32
  %v9312 = vpop.permute.xlu0 %9311
  %9313 = vrot.lane.b32.xlu0 %v9151, 32
  %v9314 = vpop.permute.xlu0 %9313
  %9315 = vrot.lane.b32.xlu0 %v9152, 32
  %v9316 = vpop.permute.xlu0 %9315
  %9317 = vrot.lane.b32.xlu0 %v9153, 32
  %v9318 = vpop.permute.xlu0 %9317
  %9319 = vrot.lane.b32.xlu0 %v9154, 32
  %v9320 = vpop.permute.xlu0 %9319
  %9321 = vrot.lane.b32.xlu0 %v9155, 32
  %v9322 = vpop.permute.xlu0 %9321
  %9323 = vrot.lane.b32.xlu0 %v9156, 32
  %v9324 = vpop.permute.xlu0 %9323
  %9325 = vrot.lane.b32.xlu0 %v9157, 32
  %v9326 = vpop.permute.xlu0 %9325
  %9327 = vrot.lane.b32.xlu0 %v9158, 32
  %v9328 = vpop.permute.xlu0 %9327
  %9329 = vrot.lane.b32.xlu0 %v9159, 32
  %v9330 = vpop.permute.xlu0 %9329
  %9331 = vrot.lane.b32.xlu0 %v9160, 32
  %v9332 = vpop.permute.xlu0 %9331
  %9333 = vrot.lane.b32.xlu0 %v9161, 32
  %v9334 = vpop.permute.xlu0 %9333
  %9335 = vrot.lane.b32.xlu0 %v9162, 32
  %v9336 = vpop.permute.xlu0 %9335
  %9337 = vrot.lane.b32.xlu0 %v9163, 32
  %v9338 = vpop.permute.xlu0 %9337
  %9339 = vrot.lane.b32.xlu0 %v9164, 32
  %v9340 = vpop.permute.xlu0 %9339
  %9341 = vrot.lane.b32.xlu0 %v9165, 32
  %v9342 = vpop.permute.xlu0 %9341
  %9343 = vrot.lane.b32.xlu0 %v9166, 32
  %v9344 = vpop.permute.xlu0 %9343
  %9345 = vrot.lane.b32.xlu0 %v9167, 32
  %v9346 = vpop.permute.xlu0 %9345
  %9347 = vrot.lane.b32.xlu0 %v9168, 32
  %v9348 = vpop.permute.xlu0 %9347
  %9349 = vrot.lane.b32.xlu0 %v9169, 32
  %v9350 = vpop.permute.xlu0 %9349
  %9351 = vrot.lane.b32.xlu0 %v9170, 32
  %v9352 = vpop.permute.xlu0 %9351
  %9353 = vrot.lane.b32.xlu0 %v9171, 32
  %v9354 = vpop.permute.xlu0 %9353
  %9355 = vrot.lane.b32.xlu0 %v9172, 32
  %v9356 = vpop.permute.xlu0 %9355
  %9357 = vrot.lane.b32.xlu0 %v9173, 32
  %v9358 = vpop.permute.xlu0 %9357
  %9359 = vrot.lane.b32.xlu0 %v9174, 32
  %v9360 = vpop.permute.xlu0 %9359
  %9361 = vrot.lane.b32.xlu0 %v9175, 32
  %v9362 = vpop.permute.xlu0 %9361
  %9363 = vrot.lane.b32.xlu0 %v9176, 32
  %v9364 = vpop.permute.xlu0 %9363
  %9365 = vrot.lane.b32.xlu0 %v9177, 32
  %v9366 = vpop.permute.xlu0 %9365
  %9367 = vrot.lane.b32.xlu0 %v9178, 32
  %v9368 = vpop.permute.xlu0 %9367
  %9369 = vrot.lane.b32.xlu0 %v9179, 32
  %v9370 = vpop.permute.xlu0 %9369
  %9371 = vrot.lane.b32.xlu0 %v9180, 32
  %v9372 = vpop.permute.xlu0 %9371
  %v9437 = vadd.f32 %v5904, %v9246
  %v9438 = vadd.f32 %v5905, %v9248
  %v9439 = vadd.f32 %v5906, %v9250
  %v9440 = vadd.f32 %v5907, %v9252
  %v9441 = vadd.f32 %v5908, %v9254
  %v9442 = vadd.f32 %v5909, %v9256
  %v9443 = vadd.f32 %v5910, %v9258
  %v9444 = vadd.f32 %v5911, %v9260
  %v9445 = vadd.f32 %v5912, %v9262
  %v9446 = vadd.f32 %v5913, %v9264
  %v9447 = vadd.f32 %v5914, %v9266
  %v9448 = vadd.f32 %v5915, %v9268
  %v9449 = vadd.f32 %v5916, %v9270
  %v9450 = vadd.f32 %v5917, %v9272
  %v9451 = vadd.f32 %v5918, %v9274
  %v9452 = vadd.f32 %v5919, %v9276
  %v9453 = vadd.f32 %v5920, %v9278
  %v9454 = vadd.f32 %v5921, %v9280
  %v9455 = vadd.f32 %v5922, %v9282
  %v9456 = vadd.f32 %v5923, %v9284
  %v9457 = vadd.f32 %v5924, %v9286
  %v9458 = vadd.f32 %v5925, %v9288
  %v9459 = vadd.f32 %v5926, %v9290
  %v9460 = vadd.f32 %v5927, %v9292
  %v9461 = vadd.f32 %v5928, %v9294
  %v9462 = vadd.f32 %v5929, %v9296
  %v9463 = vadd.f32 %v5930, %v9298
  %v9464 = vadd.f32 %v5931, %v9300
  %v9465 = vadd.f32 %v5932, %v9302
  %v9466 = vadd.f32 %v5933, %v9304
  %v9467 = vadd.f32 %v5934, %v9306
  %v9468 = vadd.f32 %v5935, %v9308
  %v9469 = vadd.f32 %v5936, %v9310
  %v9470 = vadd.f32 %v5937, %v9312
  %v9471 = vadd.f32 %v5938, %v9314
  %v9472 = vadd.f32 %v5939, %v9316
  %v9473 = vadd.f32 %v5940, %v9318
  %v9474 = vadd.f32 %v5941, %v9320
  %v9475 = vadd.f32 %v5942, %v9322
  %v9476 = vadd.f32 %v5943, %v9324
  %v9477 = vadd.f32 %v5944, %v9326
  %v9478 = vadd.f32 %v5945, %v9328
  %v9479 = vadd.f32 %v5946, %v9330
  %v9480 = vadd.f32 %v5947, %v9332
  %v9481 = vadd.f32 %v5948, %v9334
  %v9482 = vadd.f32 %v5949, %v9336
  %v9483 = vadd.f32 %v5950, %v9338
  %v9484 = vadd.f32 %v5951, %v9340
  %v9485 = vadd.f32 %v5952, %v9342
  %v9486 = vadd.f32 %v5953, %v9344
  %v9487 = vadd.f32 %v5954, %v9346
  %v9488 = vadd.f32 %v5955, %v9348
  %v9489 = vadd.f32 %v5956, %v9350
  %v9490 = vadd.f32 %v5957, %v9352
  %v9491 = vadd.f32 %v5958, %v9354
  %v9492 = vadd.f32 %v5959, %v9356
  %v9493 = vadd.f32 %v5960, %v9358
  %v9494 = vadd.f32 %v5961, %v9360
  %v9495 = vadd.f32 %v5962, %v9362
  %v9496 = vadd.f32 %v5963, %v9364
  %v9497 = vadd.f32 %v5964, %v9366
  %v9498 = vadd.f32 %v5965, %v9368
  %v9499 = vadd.f32 %v5966, %v9370
  %v9500 = vadd.f32 %v5967, %v9372
  %v9501 = vld [vmem:[%s10] sm:$0x1]
  %v9503 = vlaneseq
  %v9504 = vshrl.u32 %v9503, 7
  %v9505 = vsub.s32 0, %v9504
  %v9506 = vrot.slane %v9501, %v9505
  %9507 = vrot.lane.b32.xlu0 %v9506, 32
  %v9508 = vpop.permute.xlu0 %9507
  %v9510 = vadd.f32 %v9437, %v9508
  %v9511 = vadd.f32 %v9438, %v9508
  %v9512 = vadd.f32 %v9439, %v9508
  %v9513 = vadd.f32 %v9440, %v9508
  %v9514 = vadd.f32 %v9441, %v9508
  %v9515 = vadd.f32 %v9442, %v9508
  %v9516 = vadd.f32 %v9443, %v9508
  %v9517 = vadd.f32 %v9444, %v9508
  %v9518 = vadd.f32 %v9445, %v9508
  %v9519 = vadd.f32 %v9446, %v9508
  %v9520 = vadd.f32 %v9447, %v9508
  %v9521 = vadd.f32 %v9448, %v9508
  %v9522 = vadd.f32 %v9449, %v9508
  %v9523 = vadd.f32 %v9450, %v9508
  %v9524 = vadd.f32 %v9451, %v9508
  %v9525 = vadd.f32 %v9452, %v9508
  %v9526 = vadd.f32 %v9453, %v9508
  %v9527 = vadd.f32 %v9454, %v9508
  %v9528 = vadd.f32 %v9455, %v9508
  %v9529 = vadd.f32 %v9456, %v9508
  %v9530 = vadd.f32 %v9457, %v9508
  %v9531 = vadd.f32 %v9458, %v9508
  %v9532 = vadd.f32 %v9459, %v9508
  %v9533 = vadd.f32 %v9460, %v9508
  %v9534 = vadd.f32 %v9461, %v9508
  %v9535 = vadd.f32 %v9462, %v9508
  %v9536 = vadd.f32 %v9463, %v9508
  %v9537 = vadd.f32 %v9464, %v9508
  %v9538 = vadd.f32 %v9465, %v9508
  %v9539 = vadd.f32 %v9466, %v9508
  %v9540 = vadd.f32 %v9467, %v9508
  %v9541 = vadd.f32 %v9468, %v9508
  %v9542 = vadd.f32 %v9469, %v9508
  %v9543 = vadd.f32 %v9470, %v9508
  %v9544 = vadd.f32 %v9471, %v9508
  %v9545 = vadd.f32 %v9472, %v9508
  %v9546 = vadd.f32 %v9473, %v9508
  %v9547 = vadd.f32 %v9474, %v9508
  %v9548 = vadd.f32 %v9475, %v9508
  %v9549 = vadd.f32 %v9476, %v9508
  %v9550 = vadd.f32 %v9477, %v9508
  %v9551 = vadd.f32 %v9478, %v9508
  %v9552 = vadd.f32 %v9479, %v9508
  %v9553 = vadd.f32 %v9480, %v9508
  %v9554 = vadd.f32 %v9481, %v9508
  %v9555 = vadd.f32 %v9482, %v9508
  %v9556 = vadd.f32 %v9483, %v9508
  %v9557 = vadd.f32 %v9484, %v9508
  %v9558 = vadd.f32 %v9485, %v9508
  %v9559 = vadd.f32 %v9486, %v9508
  %v9560 = vadd.f32 %v9487, %v9508
  %v9561 = vadd.f32 %v9488, %v9508
  %v9562 = vadd.f32 %v9489, %v9508
  %v9563 = vadd.f32 %v9490, %v9508
  %v9564 = vadd.f32 %v9491, %v9508
  %v9565 = vadd.f32 %v9492, %v9508
  %v9566 = vadd.f32 %v9493, %v9508
  %v9567 = vadd.f32 %v9494, %v9508
  %v9568 = vadd.f32 %v9495, %v9508
  %v9569 = vadd.f32 %v9496, %v9508
  %v9570 = vadd.f32 %v9497, %v9508
  %v9571 = vadd.f32 %v9498, %v9508
  %v9572 = vadd.f32 %v9499, %v9508
  %v9573 = vadd.f32 %v9500, %v9508
  %v9574 = vld [vmem:[%s11] sm:$0x1]
  %v9575 = vld [vmem:[%s12] sm:$0x1]
  %v9576 = vmul.f32 %v9510, 0.01
  %v9577 = vmul.f32 %v9511, 0.01
  %v9578 = vmul.f32 %v9512, 0.01
  %v9579 = vmul.f32 %v9513, 0.01
  %v9580 = vmul.f32 %v9514, 0.01
  %v9581 = vmul.f32 %v9515, 0.01
  %v9582 = vmul.f32 %v9516, 0.01
  %v9583 = vmul.f32 %v9517, 0.01
  %v9584 = vmul.f32 %v9518, 0.01
  %v9585 = vmul.f32 %v9519, 0.01
  %v9586 = vmul.f32 %v9520, 0.01
  %v9587 = vmul.f32 %v9521, 0.01
  %v9588 = vmul.f32 %v9522, 0.01
  %v9589 = vmul.f32 %v9523, 0.01
  %v9590 = vmul.f32 %v9524, 0.01
  %v9591 = vmul.f32 %v9525, 0.01
  %v9592 = vmul.f32 %v9526, 0.01
  %v9593 = vmul.f32 %v9527, 0.01
  %v9594 = vmul.f32 %v9528, 0.01
  %v9595 = vmul.f32 %v9529, 0.01
  %v9596 = vmul.f32 %v9530, 0.01
  %v9597 = vmul.f32 %v9531, 0.01
  %v9598 = vmul.f32 %v9532, 0.01
  %v9599 = vmul.f32 %v9533, 0.01
  %v9600 = vmul.f32 %v9534, 0.01
  %v9601 = vmul.f32 %v9535, 0.01
  %v9602 = vmul.f32 %v9536, 0.01
  %v9603 = vmul.f32 %v9537, 0.01
  %v9604 = vmul.f32 %v9538, 0.01
  %v9605 = vmul.f32 %v9539, 0.01
  %v9606 = vmul.f32 %v9540, 0.01
  %v9607 = vmul.f32 %v9541, 0.01
  %v9608 = vmul.f32 %v9542, 0.01
  %v9609 = vmul.f32 %v9543, 0.01
  %v9610 = vmul.f32 %v9544, 0.01
  %v9611 = vmul.f32 %v9545, 0.01
  %v9612 = vmul.f32 %v9546, 0.01
  %v9613 = vmul.f32 %v9547, 0.01
  %v9614 = vmul.f32 %v9548, 0.01
  %v9615 = vmul.f32 %v9549, 0.01
  %v9616 = vmul.f32 %v9550, 0.01
  %v9617 = vmul.f32 %v9551, 0.01
  %v9618 = vmul.f32 %v9552, 0.01
  %v9619 = vmul.f32 %v9553, 0.01
  %v9620 = vmul.f32 %v9554, 0.01
  %v9621 = vmul.f32 %v9555, 0.01
  %v9622 = vmul.f32 %v9556, 0.01
  %v9623 = vmul.f32 %v9557, 0.01
  %v9624 = vmul.f32 %v9558, 0.01
  %v9625 = vmul.f32 %v9559, 0.01
  %v9626 = vmul.f32 %v9560, 0.01
  %v9627 = vmul.f32 %v9561, 0.01
  %v9628 = vmul.f32 %v9562, 0.01
  %v9629 = vmul.f32 %v9563, 0.01
  %v9630 = vmul.f32 %v9564, 0.01
  %v9631 = vmul.f32 %v9565, 0.01
  %v9632 = vmul.f32 %v9566, 0.01
  %v9633 = vmul.f32 %v9567, 0.01
  %v9634 = vmul.f32 %v9568, 0.01
  %v9635 = vmul.f32 %v9569, 0.01
  %v9636 = vmul.f32 %v9570, 0.01
  %v9637 = vmul.f32 %v9571, 0.01
  %v9638 = vmul.f32 %v9572, 0.01
  %v9639 = vmul.f32 %v9573, 0.01
  %v9640 = vmax.f32 %v9510, %v9576
  %v9641 = vmax.f32 %v9511, %v9577
  %v9642 = vmax.f32 %v9512, %v9578
  %v9643 = vmax.f32 %v9513, %v9579
  %v9644 = vmax.f32 %v9514, %v9580
  %v9645 = vmax.f32 %v9515, %v9581
  %v9646 = vmax.f32 %v9516, %v9582
  %v9647 = vmax.f32 %v9517, %v9583
  %v9648 = vmax.f32 %v9518, %v9584
  %v9649 = vmax.f32 %v9519, %v9585
  %v9650 = vmax.f32 %v9520, %v9586
  %v9651 = vmax.f32 %v9521, %v9587
  %v9652 = vmax.f32 %v9522, %v9588
  %v9653 = vmax.f32 %v9523, %v9589
  %v9654 = vmax.f32 %v9524, %v9590
  %v9655 = vmax.f32 %v9525, %v9591
  %v9656 = vmax.f32 %v9526, %v9592
  %v9657 = vmax.f32 %v9527, %v9593
  %v9658 = vmax.f32 %v9528, %v9594
  %v9659 = vmax.f32 %v9529, %v9595
  %v9660 = vmax.f32 %v9530, %v9596
  %v9661 = vmax.f32 %v9531, %v9597
  %v9662 = vmax.f32 %v9532, %v9598
  %v9663 = vmax.f32 %v9533, %v9599
  %v9664 = vmax.f32 %v9534, %v9600
  %v9665 = vmax.f32 %v9535, %v9601
  %v9666 = vmax.f32 %v9536, %v9602
  %v9667 = vmax.f32 %v9537, %v9603
  %v9668 = vmax.f32 %v9538, %v9604
  %v9669 = vmax.f32 %v9539, %v9605
  %v9670 = vmax.f32 %v9540, %v9606
  %v9671 = vmax.f32 %v9541, %v9607
  %v9672 = vmax.f32 %v9542, %v9608
  %v9673 = vmax.f32 %v9543, %v9609
  %v9674 = vmax.f32 %v9544, %v9610
  %v9675 = vmax.f32 %v9545, %v9611
  %v9676 = vmax.f32 %v9546, %v9612
  %v9677 = vmax.f32 %v9547, %v9613
  %v9678 = vmax.f32 %v9548, %v9614
  %v9679 = vmax.f32 %v9549, %v9615
  %v9680 = vmax.f32 %v9550, %v9616
  %v9681 = vmax.f32 %v9551, %v9617
  %v9682 = vmax.f32 %v9552, %v9618
  %v9683 = vmax.f32 %v9553, %v9619
  %v9684 = vmax.f32 %v9554, %v9620
  %v9685 = vmax.f32 %v9555, %v9621
  %v9686 = vmax.f32 %v9556, %v9622
  %v9687 = vmax.f32 %v9557, %v9623
  %v9688 = vmax.f32 %v9558, %v9624
  %v9689 = vmax.f32 %v9559, %v9625
  %v9690 = vmax.f32 %v9560, %v9626
  %v9691 = vmax.f32 %v9561, %v9627
  %v9692 = vmax.f32 %v9562, %v9628
  %v9693 = vmax.f32 %v9563, %v9629
  %v9694 = vmax.f32 %v9564, %v9630
  %v9695 = vmax.f32 %v9565, %v9631
  %v9696 = vmax.f32 %v9566, %v9632
  %v9697 = vmax.f32 %v9567, %v9633
  %v9698 = vmax.f32 %v9568, %v9634
  %v9699 = vmax.f32 %v9569, %v9635
  %v9700 = vmax.f32 %v9570, %v9636
  %v9701 = vmax.f32 %v9571, %v9637
  %v9702 = vmax.f32 %v9572, %v9638
  %v9703 = vmax.f32 %v9573, %v9639
  %vm9704 = vcmask 523520
  %v9705 = vsel %vm9704, %v9640, 0.0
  %v9706 = vsel %vm9704, %v9641, 0.0
  %v9707 = vadd.f32 %v9705, %v9706
  %v9708 = vsel %vm9704, %v9642, 0.0
  %v9709 = vadd.f32 %v9707, %v9708
  %v9710 = vsel %vm9704, %v9643, 0.0
  %v9711 = vadd.f32 %v9709, %v9710
  %v9712 = vsel %vm9704, %v9644, 0.0
  %v9713 = vadd.f32 %v9711, %v9712
  %v9714 = vsel %vm9704, %v9645, 0.0
  %v9715 = vadd.f32 %v9713, %v9714
  %v9716 = vsel %vm9704, %v9646, 0.0
  %v9717 = vadd.f32 %v9715, %v9716
  %v9718 = vsel %vm9704, %v9647, 0.0
  %v9719 = vadd.f32 %v9717, %v9718
  %v9720 = vsel %vm9704, %v9648, 0.0
  %v9721 = vadd.f32 %v9719, %v9720
  %v9722 = vsel %vm9704, %v9649, 0.0
  %v9723 = vadd.f32 %v9721, %v9722
  %v9724 = vsel %vm9704, %v9650, 0.0
  %v9725 = vadd.f32 %v9723, %v9724
  %v9726 = vsel %vm9704, %v9651, 0.0
  %v9727 = vadd.f32 %v9725, %v9726
  %v9728 = vsel %vm9704, %v9652, 0.0
  %v9729 = vadd.f32 %v9727, %v9728
  %v9730 = vsel %vm9704, %v9653, 0.0
  %v9731 = vadd.f32 %v9729, %v9730
  %v9732 = vsel %vm9704, %v9654, 0.0
  %v9733 = vadd.f32 %v9731, %v9732
  %v9734 = vsel %vm9704, %v9655, 0.0
  %v9735 = vadd.f32 %v9733, %v9734
  %v9736 = vsel %vm9704, %v9656, 0.0
  %v9737 = vadd.f32 %v9735, %v9736
  %v9738 = vsel %vm9704, %v9657, 0.0
  %v9739 = vadd.f32 %v9737, %v9738
  %v9740 = vsel %vm9704, %v9658, 0.0
  %v9741 = vadd.f32 %v9739, %v9740
  %v9742 = vsel %vm9704, %v9659, 0.0
  %v9743 = vadd.f32 %v9741, %v9742
  %v9744 = vsel %vm9704, %v9660, 0.0
  %v9745 = vadd.f32 %v9743, %v9744
  %v9746 = vsel %vm9704, %v9661, 0.0
  %v9747 = vadd.f32 %v9745, %v9746
  %v9748 = vsel %vm9704, %v9662, 0.0
  %v9749 = vadd.f32 %v9747, %v9748
  %v9750 = vsel %vm9704, %v9663, 0.0
  %v9751 = vadd.f32 %v9749, %v9750
  %v9752 = vsel %vm9704, %v9664, 0.0
  %v9753 = vadd.f32 %v9751, %v9752
  %v9754 = vsel %vm9704, %v9665, 0.0
  %v9755 = vadd.f32 %v9753, %v9754
  %v9756 = vsel %vm9704, %v9666, 0.0
  %v9757 = vadd.f32 %v9755, %v9756
  %v9758 = vsel %vm9704, %v9667, 0.0
  %v9759 = vadd.f32 %v9757, %v9758
  %v9760 = vsel %vm9704, %v9668, 0.0
  %v9761 = vadd.f32 %v9759, %v9760
  %v9762 = vsel %vm9704, %v9669, 0.0
  %v9763 = vadd.f32 %v9761, %v9762
  %v9764 = vsel %vm9704, %v9670, 0.0
  %v9765 = vadd.f32 %v9763, %v9764
  %v9766 = vsel %vm9704, %v9671, 0.0
  %v9767 = vadd.f32 %v9765, %v9766
  %v9768 = vsel %vm9704, %v9672, 0.0
  %v9769 = vadd.f32 %v9767, %v9768
  %v9770 = vsel %vm9704, %v9673, 0.0
  %v9771 = vadd.f32 %v9769, %v9770
  %v9772 = vsel %vm9704, %v9674, 0.0
  %v9773 = vadd.f32 %v9771, %v9772
  %v9774 = vsel %vm9704, %v9675, 0.0
  %v9775 = vadd.f32 %v9773, %v9774
  %v9776 = vsel %vm9704, %v9676, 0.0
  %v9777 = vadd.f32 %v9775, %v9776
  %v9778 = vsel %vm9704, %v9677, 0.0
  %v9779 = vadd.f32 %v9777, %v9778
  %v9780 = vsel %vm9704, %v9678, 0.0
  %v9781 = vadd.f32 %v9779, %v9780
  %v9782 = vsel %vm9704, %v9679, 0.0
  %v9783 = vadd.f32 %v9781, %v9782
  %v9784 = vsel %vm9704, %v9680, 0.0
  %v9785 = vadd.f32 %v9783, %v9784
  %v9786 = vsel %vm9704, %v9681, 0.0
  %v9787 = vadd.f32 %v9785, %v9786
  %v9788 = vsel %vm9704, %v9682, 0.0
  %v9789 = vadd.f32 %v9787, %v9788
  %v9790 = vsel %vm9704, %v9683, 0.0
  %v9791 = vadd.f32 %v9789, %v9790
  %v9792 = vsel %vm9704, %v9684, 0.0
  %v9793 = vadd.f32 %v9791, %v9792
  %v9794 = vsel %vm9704, %v9685, 0.0
  %v9795 = vadd.f32 %v9793, %v9794
  %v9796 = vsel %vm9704, %v9686, 0.0
  %v9797 = vadd.f32 %v9795, %v9796
  %v9798 = vsel %vm9704, %v9687, 0.0
  %v9799 = vadd.f32 %v9797, %v9798
  %v9800 = vsel %vm9704, %v9688, 0.0
  %v9801 = vadd.f32 %v9799, %v9800
  %v9802 = vsel %vm9704, %v9689, 0.0
  %v9803 = vadd.f32 %v9801, %v9802
  %v9804 = vsel %vm9704, %v9690, 0.0
  %v9805 = vadd.f32 %v9803, %v9804
  %v9806 = vsel %vm9704, %v9691, 0.0
  %v9807 = vadd.f32 %v9805, %v9806
  %v9808 = vsel %vm9704, %v9692, 0.0
  %v9809 = vadd.f32 %v9807, %v9808
  %v9810 = vsel %vm9704, %v9693, 0.0
  %v9811 = vadd.f32 %v9809, %v9810
  %v9812 = vsel %vm9704, %v9694, 0.0
  %v9813 = vadd.f32 %v9811, %v9812
  %v9814 = vsel %vm9704, %v9695, 0.0
  %v9815 = vadd.f32 %v9813, %v9814
  %v9816 = vsel %vm9704, %v9696, 0.0
  %v9817 = vadd.f32 %v9815, %v9816
  %v9818 = vsel %vm9704, %v9697, 0.0
  %v9819 = vadd.f32 %v9817, %v9818
  %v9820 = vsel %vm9704, %v9698, 0.0
  %v9821 = vadd.f32 %v9819, %v9820
  %v9822 = vsel %vm9704, %v9699, 0.0
  %v9823 = vadd.f32 %v9821, %v9822
  %v9824 = vsel %vm9704, %v9700, 0.0
  %v9825 = vadd.f32 %v9823, %v9824
  %v9826 = vsel %vm9704, %v9701, 0.0
  %v9827 = vadd.f32 %v9825, %v9826
  %v9828 = vsel %vm9704, %v9702, 0.0
  %v9829 = vadd.f32 %v9827, %v9828
  %v9830 = vsel %vm9704, %v9703, 0.0
  %v9831 = vadd.f32 %v9829, %v9830
  %v9832 = vrot.slane %v9831, 4
  %v9833 = vadd.f32 %v9831, %v9832
  %v9834 = vrot.slane %v9833, 2
  %v9835 = vadd.f32 %v9833, %v9834
  %v9836 = vrot.slane %v9835, 1
  %v9837 = vadd.f32 %v9835, %v9836
  %v9838 = vmul.f32 %v9837, 0.001953125
  %v9839 = vsub.f32 %v9640, %v9838
  %v9840 = vsub.f32 %v9641, %v9838
  %v9841 = vsub.f32 %v9642, %v9838
  %v9842 = vsub.f32 %v9643, %v9838
  %v9843 = vsub.f32 %v9644, %v9838
  %v9844 = vsub.f32 %v9645, %v9838
  %v9845 = vsub.f32 %v9646, %v9838
  %v9846 = vsub.f32 %v9647, %v9838
  %v9847 = vsub.f32 %v9648, %v9838
  %v9848 = vsub.f32 %v9649, %v9838
  %v9849 = vsub.f32 %v9650, %v9838
  %v9850 = vsub.f32 %v9651, %v9838
  %v9851 = vsub.f32 %v9652, %v9838
  %v9852 = vsub.f32 %v9653, %v9838
  %v9853 = vsub.f32 %v9654, %v9838
  %v9854 = vsub.f32 %v9655, %v9838
  %v9855 = vsub.f32 %v9656, %v9838
  %v9856 = vsub.f32 %v9657, %v9838
  %v9857 = vsub.f32 %v9658, %v9838
  %v9858 = vsub.f32 %v9659, %v9838
  %v9859 = vsub.f32 %v9660, %v9838
  %v9860 = vsub.f32 %v9661, %v9838
  %v9861 = vsub.f32 %v9662, %v9838
  %v9862 = vsub.f32 %v9663, %v9838
  %v9863 = vsub.f32 %v9664, %v9838
  %v9864 = vsub.f32 %v9665, %v9838
  %v9865 = vsub.f32 %v9666, %v9838
  %v9866 = vsub.f32 %v9667, %v9838
  %v9867 = vsub.f32 %v9668, %v9838
  %v9868 = vsub.f32 %v9669, %v9838
  %v9869 = vsub.f32 %v9670, %v9838
  %v9870 = vsub.f32 %v9671, %v9838
  %v9871 = vsub.f32 %v9672, %v9838
  %v9872 = vsub.f32 %v9673, %v9838
  %v9873 = vsub.f32 %v9674, %v9838
  %v9874 = vsub.f32 %v9675, %v9838
  %v9875 = vsub.f32 %v9676, %v9838
  %v9876 = vsub.f32 %v9677, %v9838
  %v9877 = vsub.f32 %v9678, %v9838
  %v9878 = vsub.f32 %v9679, %v9838
  %v9879 = vsub.f32 %v9680, %v9838
  %v9880 = vsub.f32 %v9681, %v9838
  %v9881 = vsub.f32 %v9682, %v9838
  %v9882 = vsub.f32 %v9683, %v9838
  %v9883 = vsub.f32 %v9684, %v9838
  %v9884 = vsub.f32 %v9685, %v9838
  %v9885 = vsub.f32 %v9686, %v9838
  %v9886 = vsub.f32 %v9687, %v9838
  %v9887 = vsub.f32 %v9688, %v9838
  %v9888 = vsub.f32 %v9689, %v9838
  %v9889 = vsub.f32 %v9690, %v9838
  %v9890 = vsub.f32 %v9691, %v9838
  %v9891 = vsub.f32 %v9692, %v9838
  %v9892 = vsub.f32 %v9693, %v9838
  %v9893 = vsub.f32 %v9694, %v9838
  %v9894 = vsub.f32 %v9695, %v9838
  %v9895 = vsub.f32 %v9696, %v9838
  %v9896 = vsub.f32 %v9697, %v9838
  %v9897 = vsub.f32 %v9698, %v9838
  %v9898 = vsub.f32 %v9699, %v9838
  %v9899 = vsub.f32 %v9700, %v9838
  %v9900 = vsub.f32 %v9701, %v9838
  %v9901 = vsub.f32 %v9702, %v9838
  %v9902 = vsub.f32 %v9703, %v9838
  %v9903 = vmul.f32 %v9839, %v9839
  %v9904 = vmul.f32 %v9840, %v9840
  %v9905 = vmul.f32 %v9841, %v9841
  %v9906 = vmul.f32 %v9842, %v9842
  %v9907 = vmul.f32 %v9843, %v9843
  %v9908 = vmul.f32 %v9844, %v9844
  %v9909 = vmul.f32 %v9845, %v9845
  %v9910 = vmul.f32 %v9846, %v9846
  %v9911 = vmul.f32 %v9847, %v9847
  %v9912 = vmul.f32 %v9848, %v9848
  %v9913 = vmul.f32 %v9849, %v9849
  %v9914 = vmul.f32 %v9850, %v9850
  %v9915 = vmul.f32 %v9851, %v9851
  %v9916 = vmul.f32 %v9852, %v9852
  %v9917 = vmul.f32 %v9853, %v9853
  %v9918 = vmul.f32 %v9854, %v9854
  %v9919 = vmul.f32 %v9855, %v9855
  %v9920 = vmul.f32 %v9856, %v9856
  %v9921 = vmul.f32 %v9857, %v9857
  %v9922 = vmul.f32 %v9858, %v9858
  %v9923 = vmul.f32 %v9859, %v9859
  %v9924 = vmul.f32 %v9860, %v9860
  %v9925 = vmul.f32 %v9861, %v9861
  %v9926 = vmul.f32 %v9862, %v9862
  %v9927 = vmul.f32 %v9863, %v9863
  %v9928 = vmul.f32 %v9864, %v9864
  %v9929 = vmul.f32 %v9865, %v9865
  %v9930 = vmul.f32 %v9866, %v9866
  %v9931 = vmul.f32 %v9867, %v9867
  %v9932 = vmul.f32 %v9868, %v9868
  %v9933 = vmul.f32 %v9869, %v9869
  %v9934 = vmul.f32 %v9870, %v9870
  %v9935 = vmul.f32 %v9871, %v9871
  %v9936 = vmul.f32 %v9872, %v9872
  %v9937 = vmul.f32 %v9873, %v9873
  %v9938 = vmul.f32 %v9874, %v9874
  %v9939 = vmul.f32 %v9875, %v9875
  %v9940 = vmul.f32 %v9876, %v9876
  %v9941 = vmul.f32 %v9877, %v9877
  %v9942 = vmul.f32 %v9878, %v9878
  %v9943 = vmul.f32 %v9879, %v9879
  %v9944 = vmul.f32 %v9880, %v9880
  %v9945 = vmul.f32 %v9881, %v9881
  %v9946 = vmul.f32 %v9882, %v9882
  %v9947 = vmul.f32 %v9883, %v9883
  %v9948 = vmul.f32 %v9884, %v9884
  %v9949 = vmul.f32 %v9885, %v9885
  %v9950 = vmul.f32 %v9886, %v9886
  %v9951 = vmul.f32 %v9887, %v9887
  %v9952 = vmul.f32 %v9888, %v9888
  %v9953 = vmul.f32 %v9889, %v9889
  %v9954 = vmul.f32 %v9890, %v9890
  %v9955 = vmul.f32 %v9891, %v9891
  %v9956 = vmul.f32 %v9892, %v9892
  %v9957 = vmul.f32 %v9893, %v9893
  %v9958 = vmul.f32 %v9894, %v9894
  %v9959 = vmul.f32 %v9895, %v9895
  %v9960 = vmul.f32 %v9896, %v9896
  %v9961 = vmul.f32 %v9897, %v9897
  %v9962 = vmul.f32 %v9898, %v9898
  %v9963 = vmul.f32 %v9899, %v9899
  %v9964 = vmul.f32 %v9900, %v9900
  %v9965 = vmul.f32 %v9901, %v9901
  %v9966 = vmul.f32 %v9902, %v9902
  %v9967 = vsel %vm9704, %v9903, 0.0
  %v9968 = vsel %vm9704, %v9904, 0.0
  %v9969 = vadd.f32 %v9967, %v9968
  %v9970 = vsel %vm9704, %v9905, 0.0
  %v9971 = vadd.f32 %v9969, %v9970
  %v9972 = vsel %vm9704, %v9906, 0.0
  %v9973 = vadd.f32 %v9971, %v9972
  %v9974 = vsel %vm9704, %v9907, 0.0
  %v9975 = vadd.f32 %v9973, %v9974
  %v9976 = vsel %vm9704, %v9908, 0.0
  %v9977 = vadd.f32 %v9975, %v9976
  %v9978 = vsel %vm9704, %v9909, 0.0
  %v9979 = vadd.f32 %v9977, %v9978
  %v9980 = vsel %vm9704, %v9910, 0.0
  %v9981 = vadd.f32 %v9979, %v9980
  %v9982 = vsel %vm9704, %v9911, 0.0
  %v9983 = vadd.f32 %v9981, %v9982
  %v9984 = vsel %vm9704, %v9912, 0.0
  %v9985 = vadd.f32 %v9983, %v9984
  %v9986 = vsel %vm9704, %v9913, 0.0
  %v9987 = vadd.f32 %v9985, %v9986
  %v9988 = vsel %vm9704, %v9914, 0.0
  %v9989 = vadd.f32 %v9987, %v9988
  %v9990 = vsel %vm9704, %v9915, 0.0
  %v9991 = vadd.f32 %v9989, %v9990
  %v9992 = vsel %vm9704, %v9916, 0.0
  %v9993 = vadd.f32 %v9991, %v9992
  %v9994 = vsel %vm9704, %v9917, 0.0
  %v9995 = vadd.f32 %v9993, %v9994
  %v9996 = vsel %vm9704, %v9918, 0.0
  %v9997 = vadd.f32 %v9995, %v9996
  %v9998 = vsel %vm9704, %v9919, 0.0
  %v9999 = vadd.f32 %v9997, %v9998
  %v10000 = vsel %vm9704, %v9920, 0.0
  %v10001 = vadd.f32 %v9999, %v10000
  %v10002 = vsel %vm9704, %v9921, 0.0
  %v10003 = vadd.f32 %v10001, %v10002
  %v10004 = vsel %vm9704, %v9922, 0.0
  %v10005 = vadd.f32 %v10003, %v10004
  %v10006 = vsel %vm9704, %v9923, 0.0
  %v10007 = vadd.f32 %v10005, %v10006
  %v10008 = vsel %vm9704, %v9924, 0.0
  %v10009 = vadd.f32 %v10007, %v10008
  %v10010 = vsel %vm9704, %v9925, 0.0
  %v10011 = vadd.f32 %v10009, %v10010
  %v10012 = vsel %vm9704, %v9926, 0.0
  %v10013 = vadd.f32 %v10011, %v10012
  %v10014 = vsel %vm9704, %v9927, 0.0
  %v10015 = vadd.f32 %v10013, %v10014
  %v10016 = vsel %vm9704, %v9928, 0.0
  %v10017 = vadd.f32 %v10015, %v10016
  %v10018 = vsel %vm9704, %v9929, 0.0
  %v10019 = vadd.f32 %v10017, %v10018
  %v10020 = vsel %vm9704, %v9930, 0.0
  %v10021 = vadd.f32 %v10019, %v10020
  %v10022 = vsel %vm9704, %v9931, 0.0
  %v10023 = vadd.f32 %v10021, %v10022
  %v10024 = vsel %vm9704, %v9932, 0.0
  %v10025 = vadd.f32 %v10023, %v10024
  %v10026 = vsel %vm9704, %v9933, 0.0
  %v10027 = vadd.f32 %v10025, %v10026
  %v10028 = vsel %vm9704, %v9934, 0.0
  %v10029 = vadd.f32 %v10027, %v10028
  %v10030 = vsel %vm9704, %v9935, 0.0
  %v10031 = vadd.f32 %v10029, %v10030
  %v10032 = vsel %vm9704, %v9936, 0.0
  %v10033 = vadd.f32 %v10031, %v10032
  %v10034 = vsel %vm9704, %v9937, 0.0
  %v10035 = vadd.f32 %v10033, %v10034
  %v10036 = vsel %vm9704, %v9938, 0.0
  %v10037 = vadd.f32 %v10035, %v10036
  %v10038 = vsel %vm9704, %v9939, 0.0
  %v10039 = vadd.f32 %v10037, %v10038
  %v10040 = vsel %vm9704, %v9940, 0.0
  %v10041 = vadd.f32 %v10039, %v10040
  %v10042 = vsel %vm9704, %v9941, 0.0
  %v10043 = vadd.f32 %v10041, %v10042
  %v10044 = vsel %vm9704, %v9942, 0.0
  %v10045 = vadd.f32 %v10043, %v10044
  %v10046 = vsel %vm9704, %v9943, 0.0
  %v10047 = vadd.f32 %v10045, %v10046
  %v10048 = vsel %vm9704, %v9944, 0.0
  %v10049 = vadd.f32 %v10047, %v10048
  %v10050 = vsel %vm9704, %v9945, 0.0
  %v10051 = vadd.f32 %v10049, %v10050
  %v10052 = vsel %vm9704, %v9946, 0.0
  %v10053 = vadd.f32 %v10051, %v10052
  %v10054 = vsel %vm9704, %v9947, 0.0
  %v10055 = vadd.f32 %v10053, %v10054
  %v10056 = vsel %vm9704, %v9948, 0.0
  %v10057 = vadd.f32 %v10055, %v10056
  %v10058 = vsel %vm9704, %v9949, 0.0
  %v10059 = vadd.f32 %v10057, %v10058
  %v10060 = vsel %vm9704, %v9950, 0.0
  %v10061 = vadd.f32 %v10059, %v10060
  %v10062 = vsel %vm9704, %v9951, 0.0
  %v10063 = vadd.f32 %v10061, %v10062
  %v10064 = vsel %vm9704, %v9952, 0.0
  %v10065 = vadd.f32 %v10063, %v10064
  %v10066 = vsel %vm9704, %v9953, 0.0
  %v10067 = vadd.f32 %v10065, %v10066
  %v10068 = vsel %vm9704, %v9954, 0.0
  %v10069 = vadd.f32 %v10067, %v10068
  %v10070 = vsel %vm9704, %v9955, 0.0
  %v10071 = vadd.f32 %v10069, %v10070
  %v10072 = vsel %vm9704, %v9956, 0.0
  %v10073 = vadd.f32 %v10071, %v10072
  %v10074 = vsel %vm9704, %v9957, 0.0
  %v10075 = vadd.f32 %v10073, %v10074
  %v10076 = vsel %vm9704, %v9958, 0.0
  %v10077 = vadd.f32 %v10075, %v10076
  %v10078 = vsel %vm9704, %v9959, 0.0
  %v10079 = vadd.f32 %v10077, %v10078
  %v10080 = vsel %vm9704, %v9960, 0.0
  %v10081 = vadd.f32 %v10079, %v10080
  %v10082 = vsel %vm9704, %v9961, 0.0
  %v10083 = vadd.f32 %v10081, %v10082
  %v10084 = vsel %vm9704, %v9962, 0.0
  %v10085 = vadd.f32 %v10083, %v10084
  %v10086 = vsel %vm9704, %v9963, 0.0
  %v10087 = vadd.f32 %v10085, %v10086
  %v10088 = vsel %vm9704, %v9964, 0.0
  %v10089 = vadd.f32 %v10087, %v10088
  %v10090 = vsel %vm9704, %v9965, 0.0
  %v10091 = vadd.f32 %v10089, %v10090
  %v10092 = vsel %vm9704, %v9966, 0.0
  %v10093 = vadd.f32 %v10091, %v10092
  %v10094 = vrot.slane %v10093, 4
  %v10095 = vadd.f32 %v10093, %v10094
  %v10096 = vrot.slane %v10095, 2
  %v10097 = vadd.f32 %v10095, %v10096
  %v10098 = vrot.slane %v10097, 1
  %v10099 = vadd.f32 %v10097, %v10098
  %v10100 = vmul.f32 %v10099, 0.001953125
  %v10101 = vadd.f32 %v10100, 1e-05
  %v10102 = vrsqrt.pop %v10101
  %v10105 = vunpack.c.l.s4 1966171168
  %v10106 = vunpack.c.0.s8 %v10105
  %v10107 = vlaneseq
  %v10108 = vshrl.u32 %v10107, 7
  %v10109 = vsub.s32 %v10106, %v10108
  %v10110 = vrot.slane %v10102, %v10109
  %v10112 = vunpack.c.l.s4 1966171168
  %v10113 = vunpack.c.0.s8 %v10112
  %v10114 = vlaneseq
  %v10115 = vshrl.u32 %v10114, 7
  %v10116 = vsub.s32 %v10113, %v10115
  %v10117 = vrot.slane %v10110, %v10116
  %10118 = vrot.lane.b32.xlu0 %v10117, 96
  %v10119 = vpop.permute.xlu0 %10118
  %v10121 = vmul.f32 %v9574, %v10119
  %v10123 = vlaneseq
  %v10124 = vshrl.u32 %v10123, 7
  %v10125 = vsub.s32 0, %v10124
  %v10126 = vrot.slane %v10121, %v10125
  %10127 = vrot.lane.b32.xlu0 %v10126, 32
  %v10128 = vpop.permute.xlu0 %10127
  %v10130 = vmul.f32 %v9839, %v10128
  %v10131 = vmul.f32 %v9840, %v10128
  %v10132 = vmul.f32 %v9841, %v10128
  %v10133 = vmul.f32 %v9842, %v10128
  %v10134 = vmul.f32 %v9843, %v10128
  %v10135 = vmul.f32 %v9844, %v10128
  %v10136 = vmul.f32 %v9845, %v10128
  %v10137 = vmul.f32 %v9846, %v10128
  %v10138 = vmul.f32 %v9847, %v10128
  %v10139 = vmul.f32 %v9848, %v10128
  %v10140 = vmul.f32 %v9849, %v10128
  %v10141 = vmul.f32 %v9850, %v10128
  %v10142 = vmul.f32 %v9851, %v10128
  %v10143 = vmul.f32 %v9852, %v10128
  %v10144 = vmul.f32 %v9853, %v10128
  %v10145 = vmul.f32 %v9854, %v10128
  %v10146 = vmul.f32 %v9855, %v10128
  %v10147 = vmul.f32 %v9856, %v10128
  %v10148 = vmul.f32 %v9857, %v10128
  %v10149 = vmul.f32 %v9858, %v10128
  %v10150 = vmul.f32 %v9859, %v10128
  %v10151 = vmul.f32 %v9860, %v10128
  %v10152 = vmul.f32 %v9861, %v10128
  %v10153 = vmul.f32 %v9862, %v10128
  %v10154 = vmul.f32 %v9863, %v10128
  %v10155 = vmul.f32 %v9864, %v10128
  %v10156 = vmul.f32 %v9865, %v10128
  %v10157 = vmul.f32 %v9866, %v10128
  %v10158 = vmul.f32 %v9867, %v10128
  %v10159 = vmul.f32 %v9868, %v10128
  %v10160 = vmul.f32 %v9869, %v10128
  %v10161 = vmul.f32 %v9870, %v10128
  %v10162 = vmul.f32 %v9871, %v10128
  %v10163 = vmul.f32 %v9872, %v10128
  %v10164 = vmul.f32 %v9873, %v10128
  %v10165 = vmul.f32 %v9874, %v10128
  %v10166 = vmul.f32 %v9875, %v10128
  %v10167 = vmul.f32 %v9876, %v10128
  %v10168 = vmul.f32 %v9877, %v10128
  %v10169 = vmul.f32 %v9878, %v10128
  %v10170 = vmul.f32 %v9879, %v10128
  %v10171 = vmul.f32 %v9880, %v10128
  %v10172 = vmul.f32 %v9881, %v10128
  %v10173 = vmul.f32 %v9882, %v10128
  %v10174 = vmul.f32 %v9883, %v10128
  %v10175 = vmul.f32 %v9884, %v10128
  %v10176 = vmul.f32 %v9885, %v10128
  %v10177 = vmul.f32 %v9886, %v10128
  %v10178 = vmul.f32 %v9887, %v10128
  %v10179 = vmul.f32 %v9888, %v10128
  %v10180 = vmul.f32 %v9889, %v10128
  %v10181 = vmul.f32 %v9890, %v10128
  %v10182 = vmul.f32 %v9891, %v10128
  %v10183 = vmul.f32 %v9892, %v10128
  %v10184 = vmul.f32 %v9893, %v10128
  %v10185 = vmul.f32 %v9894, %v10128
  %v10186 = vmul.f32 %v9895, %v10128
  %v10187 = vmul.f32 %v9896, %v10128
  %v10188 = vmul.f32 %v9897, %v10128
  %v10189 = vmul.f32 %v9898, %v10128
  %v10190 = vmul.f32 %v9899, %v10128
  %v10191 = vmul.f32 %v9900, %v10128
  %v10192 = vmul.f32 %v9901, %v10128
  %v10193 = vmul.f32 %v9902, %v10128
  %v10195 = vlaneseq
  %v10196 = vshrl.u32 %v10195, 7
  %v10197 = vsub.s32 0, %v10196
  %v10198 = vrot.slane %v9575, %v10197
  %10199 = vrot.lane.b32.xlu0 %v10198, 32
  %v10200 = vpop.permute.xlu0 %10199
  %v10202 = vadd.f32 %v10130, %v10200
  %v10203 = vadd.f32 %v10131, %v10200
  %v10204 = vadd.f32 %v10132, %v10200
  %v10205 = vadd.f32 %v10133, %v10200
  %v10206 = vadd.f32 %v10134, %v10200
  %v10207 = vadd.f32 %v10135, %v10200
  %v10208 = vadd.f32 %v10136, %v10200
  %v10209 = vadd.f32 %v10137, %v10200
  %v10210 = vadd.f32 %v10138, %v10200
  %v10211 = vadd.f32 %v10139, %v10200
  %v10212 = vadd.f32 %v10140, %v10200
  %v10213 = vadd.f32 %v10141, %v10200
  %v10214 = vadd.f32 %v10142, %v10200
  %v10215 = vadd.f32 %v10143, %v10200
  %v10216 = vadd.f32 %v10144, %v10200
  %v10217 = vadd.f32 %v10145, %v10200
  %v10218 = vadd.f32 %v10146, %v10200
  %v10219 = vadd.f32 %v10147, %v10200
  %v10220 = vadd.f32 %v10148, %v10200
  %v10221 = vadd.f32 %v10149, %v10200
  %v10222 = vadd.f32 %v10150, %v10200
  %v10223 = vadd.f32 %v10151, %v10200
  %v10224 = vadd.f32 %v10152, %v10200
  %v10225 = vadd.f32 %v10153, %v10200
  %v10226 = vadd.f32 %v10154, %v10200
  %v10227 = vadd.f32 %v10155, %v10200
  %v10228 = vadd.f32 %v10156, %v10200
  %v10229 = vadd.f32 %v10157, %v10200
  %v10230 = vadd.f32 %v10158, %v10200
  %v10231 = vadd.f32 %v10159, %v10200
  %v10232 = vadd.f32 %v10160, %v10200
  %v10233 = vadd.f32 %v10161, %v10200
  %v10234 = vadd.f32 %v10162, %v10200
  %v10235 = vadd.f32 %v10163, %v10200
  %v10236 = vadd.f32 %v10164, %v10200
  %v10237 = vadd.f32 %v10165, %v10200
  %v10238 = vadd.f32 %v10166, %v10200
  %v10239 = vadd.f32 %v10167, %v10200
  %v10240 = vadd.f32 %v10168, %v10200
  %v10241 = vadd.f32 %v10169, %v10200
  %v10242 = vadd.f32 %v10170, %v10200
  %v10243 = vadd.f32 %v10171, %v10200
  %v10244 = vadd.f32 %v10172, %v10200
  %v10245 = vadd.f32 %v10173, %v10200
  %v10246 = vadd.f32 %v10174, %v10200
  %v10247 = vadd.f32 %v10175, %v10200
  %v10248 = vadd.f32 %v10176, %v10200
  %v10249 = vadd.f32 %v10177, %v10200
  %v10250 = vadd.f32 %v10178, %v10200
  %v10251 = vadd.f32 %v10179, %v10200
  %v10252 = vadd.f32 %v10180, %v10200
  %v10253 = vadd.f32 %v10181, %v10200
  %v10254 = vadd.f32 %v10182, %v10200
  %v10255 = vadd.f32 %v10183, %v10200
  %v10256 = vadd.f32 %v10184, %v10200
  %v10257 = vadd.f32 %v10185, %v10200
  %v10258 = vadd.f32 %v10186, %v10200
  %v10259 = vadd.f32 %v10187, %v10200
  %v10260 = vadd.f32 %v10188, %v10200
  %v10261 = vadd.f32 %v10189, %v10200
  %v10262 = vadd.f32 %v10190, %v10200
  %v10263 = vadd.f32 %v10191, %v10200
  %v10264 = vadd.f32 %v10192, %v10200
  %v10265 = vadd.f32 %v10193, %v10200
  %10330 = vrot.lane.b32.xlu0 %v10202, 96
  %v10331 = vpop.permute.xlu0 %10330
  %10332 = vrot.lane.b32.xlu0 %v10203, 96
  %v10333 = vpop.permute.xlu0 %10332
  %10334 = vrot.lane.b32.xlu0 %v10204, 96
  %v10335 = vpop.permute.xlu0 %10334
  %10336 = vrot.lane.b32.xlu0 %v10205, 96
  %v10337 = vpop.permute.xlu0 %10336
  %10338 = vrot.lane.b32.xlu0 %v10206, 96
  %v10339 = vpop.permute.xlu0 %10338
  %10340 = vrot.lane.b32.xlu0 %v10207, 96
  %v10341 = vpop.permute.xlu0 %10340
  %10342 = vrot.lane.b32.xlu0 %v10208, 96
  %v10343 = vpop.permute.xlu0 %10342
  %10344 = vrot.lane.b32.xlu0 %v10209, 96
  %v10345 = vpop.permute.xlu0 %10344
  %10346 = vrot.lane.b32.xlu0 %v10210, 96
  %v10347 = vpop.permute.xlu0 %10346
  %10348 = vrot.lane.b32.xlu0 %v10211, 96
  %v10349 = vpop.permute.xlu0 %10348
  %10350 = vrot.lane.b32.xlu0 %v10212, 96
  %v10351 = vpop.permute.xlu0 %10350
  %10352 = vrot.lane.b32.xlu0 %v10213, 96
  %v10353 = vpop.permute.xlu0 %10352
  %10354 = vrot.lane.b32.xlu0 %v10214, 96
  %v10355 = vpop.permute.xlu0 %10354
  %10356 = vrot.lane.b32.xlu0 %v10215, 96
  %v10357 = vpop.permute.xlu0 %10356
  %10358 = vrot.lane.b32.xlu0 %v10216, 96
  %v10359 = vpop.permute.xlu0 %10358
  %10360 = vrot.lane.b32.xlu0 %v10217, 96
  %v10361 = vpop.permute.xlu0 %10360
  %10362 = vrot.lane.b32.xlu0 %v10218, 96
  %v10363 = vpop.permute.xlu0 %10362
  %10364 = vrot.lane.b32.xlu0 %v10219, 96
  %v10365 = vpop.permute.xlu0 %10364
  %10366 = vrot.lane.b32.xlu0 %v10220, 96
  %v10367 = vpop.permute.xlu0 %10366
  %10368 = vrot.lane.b32.xlu0 %v10221, 96
  %v10369 = vpop.permute.xlu0 %10368
  %10370 = vrot.lane.b32.xlu0 %v10222, 96
  %v10371 = vpop.permute.xlu0 %10370
  %10372 = vrot.lane.b32.xlu0 %v10223, 96
  %v10373 = vpop.permute.xlu0 %10372
  %10374 = vrot.lane.b32.xlu0 %v10224, 96
  %v10375 = vpop.permute.xlu0 %10374
  %10376 = vrot.lane.b32.xlu0 %v10225, 96
  %v10377 = vpop.permute.xlu0 %10376
  %10378 = vrot.lane.b32.xlu0 %v10226, 96
  %v10379 = vpop.permute.xlu0 %10378
  %10380 = vrot.lane.b32.xlu0 %v10227, 96
  %v10381 = vpop.permute.xlu0 %10380
  %10382 = vrot.lane.b32.xlu0 %v10228, 96
  %v10383 = vpop.permute.xlu0 %10382
  %10384 = vrot.lane.b32.xlu0 %v10229, 96
  %v10385 = vpop.permute.xlu0 %10384
  %10386 = vrot.lane.b32.xlu0 %v10230, 96
  %v10387 = vpop.permute.xlu0 %10386
  %10388 = vrot.lane.b32.xlu0 %v10231, 96
  %v10389 = vpop.permute.xlu0 %10388
  %10390 = vrot.lane.b32.xlu0 %v10232, 96
  %v10391 = vpop.permute.xlu0 %10390
  %10392 = vrot.lane.b32.xlu0 %v10233, 96
  %v10393 = vpop.permute.xlu0 %10392
  %10394 = vrot.lane.b32.xlu0 %v10234, 96
  %v10395 = vpop.permute.xlu0 %10394
  %10396 = vrot.lane.b32.xlu0 %v10235, 96
  %v10397 = vpop.permute.xlu0 %10396
  %10398 = vrot.lane.b32.xlu0 %v10236, 96
  %v10399 = vpop.permute.xlu0 %10398
  %10400 = vrot.lane.b32.xlu0 %v10237, 96
  %v10401 = vpop.permute.xlu0 %10400
  %10402 = vrot.lane.b32.xlu0 %v10238, 96
  %v10403 = vpop.permute.xlu0 %10402
  %10404 = vrot.lane.b32.xlu0 %v10239, 96
  %v10405 = vpop.permute.xlu0 %10404
  %10406 = vrot.lane.b32.xlu0 %v10240, 96
  %v10407 = vpop.permute.xlu0 %10406
  %10408 = vrot.lane.b32.xlu0 %v10241, 96
  %v10409 = vpop.permute.xlu0 %10408
  %10410 = vrot.lane.b32.xlu0 %v10242, 96
  %v10411 = vpop.permute.xlu0 %10410
  %10412 = vrot.lane.b32.xlu0 %v10243, 96
  %v10413 = vpop.permute.xlu0 %10412
  %10414 = vrot.lane.b32.xlu0 %v10244, 96
  %v10415 = vpop.permute.xlu0 %10414
  %10416 = vrot.lane.b32.xlu0 %v10245, 96
  %v10417 = vpop.permute.xlu0 %10416
  %10418 = vrot.lane.b32.xlu0 %v10246, 96
  %v10419 = vpop.permute.xlu0 %10418
  %10420 = vrot.lane.b32.xlu0 %v10247, 96
  %v10421 = vpop.permute.xlu0 %10420
  %10422 = vrot.lane.b32.xlu0 %v10248, 96
  %v10423 = vpop.permute.xlu0 %10422
  %10424 = vrot.lane.b32.xlu0 %v10249, 96
  %v10425 = vpop.permute.xlu0 %10424
  %10426 = vrot.lane.b32.xlu0 %v10250, 96
  %v10427 = vpop.permute.xlu0 %10426
  %10428 = vrot.lane.b32.xlu0 %v10251, 96
  %v10429 = vpop.permute.xlu0 %10428
  %10430 = vrot.lane.b32.xlu0 %v10252, 96
  %v10431 = vpop.permute.xlu0 %10430
  %10432 = vrot.lane.b32.xlu0 %v10253, 96
  %v10433 = vpop.permute.xlu0 %10432
  %10434 = vrot.lane.b32.xlu0 %v10254, 96
  %v10435 = vpop.permute.xlu0 %10434
  %10436 = vrot.lane.b32.xlu0 %v10255, 96
  %v10437 = vpop.permute.xlu0 %10436
  %10438 = vrot.lane.b32.xlu0 %v10256, 96
  %v10439 = vpop.permute.xlu0 %10438
  %10440 = vrot.lane.b32.xlu0 %v10257, 96
  %v10441 = vpop.permute.xlu0 %10440
  %10442 = vrot.lane.b32.xlu0 %v10258, 96
  %v10443 = vpop.permute.xlu0 %10442
  %10444 = vrot.lane.b32.xlu0 %v10259, 96
  %v10445 = vpop.permute.xlu0 %10444
  %10446 = vrot.lane.b32.xlu0 %v10260, 96
  %v10447 = vpop.permute.xlu0 %10446
  %10448 = vrot.lane.b32.xlu0 %v10261, 96
  %v10449 = vpop.permute.xlu0 %10448
  %10450 = vrot.lane.b32.xlu0 %v10262, 96
  %v10451 = vpop.permute.xlu0 %10450
  %10452 = vrot.lane.b32.xlu0 %v10263, 96
  %v10453 = vpop.permute.xlu0 %10452
  %10454 = vrot.lane.b32.xlu0 %v10264, 96
  %v10455 = vpop.permute.xlu0 %10454
  %10456 = vrot.lane.b32.xlu0 %v10265, 96
  %v10457 = vpop.permute.xlu0 %10456
  %10522 = vst.msk [vmem:[%s3492 + $0x8] sm:$0xff] %vm141, %v10331
  %10523 = vst.msk [vmem:[%s3492 + $0x10] sm:$0xff] %vm141, %v10333
  %10524 = vst.msk [vmem:[%s3492 + $0x28] sm:$0xff] %vm141, %v10335
  %10525 = vst.msk [vmem:[%s3492 + $0x30] sm:$0xff] %vm141, %v10337
  %10526 = vst.msk [vmem:[%s3492 + $0x48] sm:$0xff] %vm141, %v10339
  %10527 = vst.msk [vmem:[%s3492 + $0x50] sm:$0xff] %vm141, %v10341
  %10528 = vst.msk [vmem:[%s3492 + $0x68] sm:$0xff] %vm141, %v10343
  %10529 = vst.msk [vmem:[%s3492 + $0x70] sm:$0xff] %vm141, %v10345
  %10530 = vst.msk [vmem:[%s3492 + $0x88] sm:$0xff] %vm141, %v10347
  %10531 = vst.msk [vmem:[%s3492 + $0x90] sm:$0xff] %vm141, %v10349
  %10532 = vst.msk [vmem:[%s3492 + $0xa8] sm:$0xff] %vm141, %v10351
  %10533 = vst.msk [vmem:[%s3492 + $0xb0] sm:$0xff] %vm141, %v10353
  %10534 = vst.msk [vmem:[%s3492 + $0xc8] sm:$0xff] %vm141, %v10355
  %10535 = vst.msk [vmem:[%s3492 + $0xd0] sm:$0xff] %vm141, %v10357
  %10536 = vst.msk [vmem:[%s3492 + $0xe8] sm:$0xff] %vm141, %v10359
  %10537 = vst.msk [vmem:[%s3492 + $0xf0] sm:$0xff] %vm141, %v10361
  %10538 = vst.msk [vmem:[%s3492 + $0x108] sm:$0xff] %vm141, %v10363
  %10539 = vst.msk [vmem:[%s3492 + $0x110] sm:$0xff] %vm141, %v10365
  %10540 = vst.msk [vmem:[%s3492 + $0x128] sm:$0xff] %vm141, %v10367
  %10541 = vst.msk [vmem:[%s3492 + $0x130] sm:$0xff] %vm141, %v10369
  %10542 = vst.msk [vmem:[%s3492 + $0x148] sm:$0xff] %vm141, %v10371
  %10543 = vst.msk [vmem:[%s3492 + $0x150] sm:$0xff] %vm141, %v10373
  %10544 = vst.msk [vmem:[%s3492 + $0x168] sm:$0xff] %vm141, %v10375
  %10545 = vst.msk [vmem:[%s3492 + $0x170] sm:$0xff] %vm141, %v10377
  %10546 = vst.msk [vmem:[%s3492 + $0x188] sm:$0xff] %vm141, %v10379
  %10547 = vst.msk [vmem:[%s3492 + $0x190] sm:$0xff] %vm141, %v10381
  %10548 = vst.msk [vmem:[%s3492 + $0x1a8] sm:$0xff] %vm141, %v10383
  %10549 = vst.msk [vmem:[%s3492 + $0x1b0] sm:$0xff] %vm141, %v10385
  %10550 = vst.msk [vmem:[%s3492 + $0x1c8] sm:$0xff] %vm141, %v10387
  %10551 = vst.msk [vmem:[%s3492 + $0x1d0] sm:$0xff] %vm141, %v10389
  %10552 = vst.msk [vmem:[%s3492 + $0x1e8] sm:$0xff] %vm141, %v10391
  %10553 = vst.msk [vmem:[%s3492 + $0x1f0] sm:$0xff] %vm141, %v10393
  %10554 = vst.msk [vmem:[%s3492 + $0x248] sm:$0xff] %vm141, %v10395
  %10555 = vst.msk [vmem:[%s3492 + $0x250] sm:$0xff] %vm141, %v10397
  %10556 = vst.msk [vmem:[%s3492 + $0x268] sm:$0xff] %vm141, %v10399
  %10557 = vst.msk [vmem:[%s3492 + $0x270] sm:$0xff] %vm141, %v10401
  %10558 = vst.msk [vmem:[%s3492 + $0x288] sm:$0xff] %vm141, %v10403
  %10559 = vst.msk [vmem:[%s3492 + $0x290] sm:$0xff] %vm141, %v10405
  %10560 = vst.msk [vmem:[%s3492 + $0x2a8] sm:$0xff] %vm141, %v10407
  %10561 = vst.msk [vmem:[%s3492 + $0x2b0] sm:$0xff] %vm141, %v10409
  %10562 = vst.msk [vmem:[%s3492 + $0x2c8] sm:$0xff] %vm141, %v10411
  %10563 = vst.msk [vmem:[%s3492 + $0x2d0] sm:$0xff] %vm141, %v10413
  %10564 = vst.msk [vmem:[%s3492 + $0x2e8] sm:$0xff] %vm141, %v10415
  %10565 = vst.msk [vmem:[%s3492 + $0x2f0] sm:$0xff] %vm141, %v10417
  %10566 = vst.msk [vmem:[%s3492 + $0x308] sm:$0xff] %vm141, %v10419
  %10567 = vst.msk [vmem:[%s3492 + $0x310] sm:$0xff] %vm141, %v10421
  %10568 = vst.msk [vmem:[%s3492 + $0x328] sm:$0xff] %vm141, %v10423
  %10569 = vst.msk [vmem:[%s3492 + $0x330] sm:$0xff] %vm141, %v10425
  %10570 = vst.msk [vmem:[%s3492 + $0x348] sm:$0xff] %vm141, %v10427
  %10571 = vst.msk [vmem:[%s3492 + $0x350] sm:$0xff] %vm141, %v10429
  %10572 = vst.msk [vmem:[%s3492 + $0x368] sm:$0xff] %vm141, %v10431
  %10573 = vst.msk [vmem:[%s3492 + $0x370] sm:$0xff] %vm141, %v10433
  %10574 = vst.msk [vmem:[%s3492 + $0x388] sm:$0xff] %vm141, %v10435
  %10575 = vst.msk [vmem:[%s3492 + $0x390] sm:$0xff] %vm141, %v10437
  %10576 = vst.msk [vmem:[%s3492 + $0x3a8] sm:$0xff] %vm141, %v10439
  %10577 = vst.msk [vmem:[%s3492 + $0x3b0] sm:$0xff] %vm141, %v10441
  %10578 = vst.msk [vmem:[%s3492 + $0x3c8] sm:$0xff] %vm141, %v10443
  %10579 = vst.msk [vmem:[%s3492 + $0x3d0] sm:$0xff] %vm141, %v10445
  %10580 = vst.msk [vmem:[%s3492 + $0x3e8] sm:$0xff] %vm141, %v10447
  %10581 = vst.msk [vmem:[%s3492 + $0x3f0] sm:$0xff] %vm141, %v10449
  %10582 = vst.msk [vmem:[%s3492 + $0x408] sm:$0xff] %vm141, %v10451
  %10583 = vst.msk [vmem:[%s3492 + $0x410] sm:$0xff] %vm141, %v10453
  %10584 = vst.msk [vmem:[%s3492 + $0x428] sm:$0xff] %vm141, %v10455
  %10585 = vst.msk [vmem:[%s3492 + $0x430] sm:$0xff] %vm141, %v10457
  %v10586 = vld [vmem:[#allocation3 + $0x7] sm:$0xff]
  %v10587 = vld [vmem:[#allocation3 + $0xf] sm:$0xff]
  %v10588 = vld [vmem:[#allocation3 + $0x27] sm:$0xff]
  %v10589 = vld [vmem:[#allocation3 + $0x2f] sm:$0xff]
  %v10590 = vld [vmem:[#allocation3 + $0x47] sm:$0xff]
  %v10591 = vld [vmem:[#allocation3 + $0x4f] sm:$0xff]
  %v10592 = vld [vmem:[#allocation3 + $0x67] sm:$0xff]
  %v10593 = vld [vmem:[#allocation3 + $0x6f] sm:$0xff]
  %v10594 = vld [vmem:[#allocation3 + $0x87] sm:$0xff]
  %v10595 = vld [vmem:[#allocation3 + $0x8f] sm:$0xff]
  %v10596 = vld [vmem:[#allocation3 + $0xa7] sm:$0xff]
  %v10597 = vld [vmem:[#allocation3 + $0xaf] sm:$0xff]
  %v10598 = vld [vmem:[#allocation3 + $0xc7] sm:$0xff]
  %v10599 = vld [vmem:[#allocation3 + $0xcf] sm:$0xff]
  %v10600 = vld [vmem:[#allocation3 + $0xe7] sm:$0xff]
  %v10601 = vld [vmem:[#allocation3 + $0xef] sm:$0xff]
  %v10602 = vld [vmem:[#allocation3 + $0x107] sm:$0xff]
  %v10603 = vld [vmem:[#allocation3 + $0x10f] sm:$0xff]
  %v10604 = vld [vmem:[#allocation3 + $0x127] sm:$0xff]
  %v10605 = vld [vmem:[#allocation3 + $0x12f] sm:$0xff]
  %v10606 = vld [vmem:[#allocation3 + $0x147] sm:$0xff]
  %v10607 = vld [vmem:[#allocation3 + $0x14f] sm:$0xff]
  %v10608 = vld [vmem:[#allocation3 + $0x167] sm:$0xff]
  %v10609 = vld [vmem:[#allocation3 + $0x16f] sm:$0xff]
  %v10610 = vld [vmem:[#allocation3 + $0x187] sm:$0xff]
  %v10611 = vld [vmem:[#allocation3 + $0x18f] sm:$0xff]
  %v10612 = vld [vmem:[#allocation3 + $0x1a7] sm:$0xff]
  %v10613 = vld [vmem:[#allocation3 + $0x1af] sm:$0xff]
  %v10614 = vld [vmem:[#allocation3 + $0x1c7] sm:$0xff]
  %v10615 = vld [vmem:[#allocation3 + $0x1cf] sm:$0xff]
  %v10616 = vld [vmem:[#allocation3 + $0x1e7] sm:$0xff]
  %v10617 = vld [vmem:[#allocation3 + $0x1ef] sm:$0xff]
  %v10618 = vld [vmem:[#allocation3 + $0x207] sm:$0xff]
  %v10619 = vld [vmem:[#allocation3 + $0x20f] sm:$0xff]
  %v10620 = vld [vmem:[#allocation3 + $0x227] sm:$0xff]
  %v10621 = vld [vmem:[#allocation3 + $0x22f] sm:$0xff]
  %v10622 = vld [vmem:[#allocation3 + $0x247] sm:$0xff]
  %v10623 = vld [vmem:[#allocation3 + $0x24f] sm:$0xff]
  %v10624 = vld [vmem:[#allocation3 + $0x267] sm:$0xff]
  %v10625 = vld [vmem:[#allocation3 + $0x26f] sm:$0xff]
  %v10626 = vld [vmem:[#allocation3 + $0x287] sm:$0xff]
  %v10627 = vld [vmem:[#allocation3 + $0x28f] sm:$0xff]
  %v10628 = vld [vmem:[#allocation3 + $0x2a7] sm:$0xff]
  %v10629 = vld [vmem:[#allocation3 + $0x2af] sm:$0xff]
  %v10630 = vld [vmem:[#allocation3 + $0x2c7] sm:$0xff]
  %v10631 = vld [vmem:[#allocation3 + $0x2cf] sm:$0xff]
  %v10632 = vld [vmem:[#allocation3 + $0x2e7] sm:$0xff]
  %v10633 = vld [vmem:[#allocation3 + $0x2ef] sm:$0xff]
  %v10634 = vld [vmem:[#allocation3 + $0x307] sm:$0xff]
  %v10635 = vld [vmem:[#allocation3 + $0x30f] sm:$0xff]
  %v10636 = vld [vmem:[#allocation3 + $0x327] sm:$0xff]
  %v10637 = vld [vmem:[#allocation3 + $0x32f] sm:$0xff]
  %v10638 = vld [vmem:[#allocation3 + $0x347] sm:$0xff]
  %v10639 = vld [vmem:[#allocation3 + $0x34f] sm:$0xff]
  %v10640 = vld [vmem:[#allocation3 + $0x367] sm:$0xff]
  %v10641 = vld [vmem:[#allocation3 + $0x36f] sm:$0xff]
  %v10642 = vld [vmem:[#allocation3 + $0x387] sm:$0xff]
  %v10643 = vld [vmem:[#allocation3 + $0x38f] sm:$0xff]
  %v10644 = vld [vmem:[#allocation3 + $0x3a7] sm:$0xff]
  %v10645 = vld [vmem:[#allocation3 + $0x3af] sm:$0xff]
  %v10646 = vld [vmem:[#allocation3 + $0x3c7] sm:$0xff]
  %v10647 = vld [vmem:[#allocation3 + $0x3cf] sm:$0xff]
  %v10648 = vld [vmem:[#allocation3 + $0x3e7] sm:$0xff]
  %v10649 = vld [vmem:[#allocation3 + $0x3ef] sm:$0xff]
  %v10650 = vld [vmem:[#allocation3 + $0x407] sm:$0xff]
  %v10651 = vld [vmem:[#allocation3 + $0x40f] sm:$0xff]
  %v10652 = vld [vmem:[#allocation3 + $0x427] sm:$0xff]
  %v10653 = vld [vmem:[#allocation3 + $0x42f] sm:$0xff]
  %v10654 = vld [vmem:[#allocation3 + $0x447] sm:$0xff]
  %v10655 = vld [vmem:[#allocation3 + $0x44f] sm:$0xff]
  %v10656 = vld [vmem:[#allocation3 + $0x467] sm:$0xff]
  %v10657 = vld [vmem:[#allocation3 + $0x46f] sm:$0xff]
  %v10658 = vld [vmem:[#allocation3 + $0x8] sm:$0xff]
  %v10659 = vld [vmem:[#allocation3 + $0x10] sm:$0xff]
  %v10660 = vld [vmem:[#allocation3 + $0x28] sm:$0xff]
  %v10661 = vld [vmem:[#allocation3 + $0x30] sm:$0xff]
  %v10662 = vld [vmem:[#allocation3 + $0x48] sm:$0xff]
  %v10663 = vld [vmem:[#allocation3 + $0x50] sm:$0xff]
  %v10664 = vld [vmem:[#allocation3 + $0x68] sm:$0xff]
  %v10665 = vld [vmem:[#allocation3 + $0x70] sm:$0xff]
  %v10666 = vld [vmem:[#allocation3 + $0x88] sm:$0xff]
  %v10667 = vld [vmem:[#allocation3 + $0x90] sm:$0xff]
  %v10668 = vld [vmem:[#allocation3 + $0xa8] sm:$0xff]
  %v10669 = vld [vmem:[#allocation3 + $0xb0] sm:$0xff]
  %v10670 = vld [vmem:[#allocation3 + $0xc8] sm:$0xff]
  %v10671 = vld [vmem:[#allocation3 + $0xd0] sm:$0xff]
  %v10672 = vld [vmem:[#allocation3 + $0xe8] sm:$0xff]
  %v10673 = vld [vmem:[#allocation3 + $0xf0] sm:$0xff]
  %v10674 = vld [vmem:[#allocation3 + $0x108] sm:$0xff]
  %v10675 = vld [vmem:[#allocation3 + $0x110] sm:$0xff]
  %v10676 = vld [vmem:[#allocation3 + $0x128] sm:$0xff]
  %v10677 = vld [vmem:[#allocation3 + $0x130] sm:$0xff]
  %v10678 = vld [vmem:[#allocation3 + $0x148] sm:$0xff]
  %v10679 = vld [vmem:[#allocation3 + $0x150] sm:$0xff]
  %v10680 = vld [vmem:[#allocation3 + $0x168] sm:$0xff]
  %v10681 = vld [vmem:[#allocation3 + $0x170] sm:$0xff]
  %v10682 = vld [vmem:[#allocation3 + $0x188] sm:$0xff]
  %v10683 = vld [vmem:[#allocation3 + $0x190] sm:$0xff]
  %v10684 = vld [vmem:[#allocation3 + $0x1a8] sm:$0xff]
  %v10685 = vld [vmem:[#allocation3 + $0x1b0] sm:$0xff]
  %v10686 = vld [vmem:[#allocation3 + $0x1c8] sm:$0xff]
  %v10687 = vld [vmem:[#allocation3 + $0x1d0] sm:$0xff]
  %v10688 = vld [vmem:[#allocation3 + $0x1e8] sm:$0xff]
  %v10689 = vld [vmem:[#allocation3 + $0x1f0] sm:$0xff]
  %v10690 = vld [vmem:[#allocation3 + $0x208] sm:$0xff]
  %v10691 = vld [vmem:[#allocation3 + $0x210] sm:$0xff]
  %v10692 = vld [vmem:[#allocation3 + $0x228] sm:$0xff]
  %v10693 = vld [vmem:[#allocation3 + $0x230] sm:$0xff]
  %v10694 = vld [vmem:[#allocation3 + $0x248] sm:$0xff]
  %v10695 = vld [vmem:[#allocation3 + $0x250] sm:$0xff]
  %v10696 = vld [vmem:[#allocation3 + $0x268] sm:$0xff]
  %v10697 = vld [vmem:[#allocation3 + $0x270] sm:$0xff]
  %v10698 = vld [vmem:[#allocation3 + $0x288] sm:$0xff]
  %v10699 = vld [vmem:[#allocation3 + $0x290] sm:$0xff]
  %v10700 = vld [vmem:[#allocation3 + $0x2a8] sm:$0xff]
  %v10701 = vld [vmem:[#allocation3 + $0x2b0] sm:$0xff]
  %v10702 = vld [vmem:[#allocation3 + $0x2c8] sm:$0xff]
  %v10703 = vld [vmem:[#allocation3 + $0x2d0] sm:$0xff]
  %v10704 = vld [vmem:[#allocation3 + $0x2e8] sm:$0xff]
  %v10705 = vld [vmem:[#allocation3 + $0x2f0] sm:$0xff]
  %v10706 = vld [vmem:[#allocation3 + $0x308] sm:$0xff]
  %v10707 = vld [vmem:[#allocation3 + $0x310] sm:$0xff]
  %v10708 = vld [vmem:[#allocation3 + $0x328] sm:$0xff]
  %v10709 = vld [vmem:[#allocation3 + $0x330] sm:$0xff]
  %v10710 = vld [vmem:[#allocation3 + $0x348] sm:$0xff]
  %v10711 = vld [vmem:[#allocation3 + $0x350] sm:$0xff]
  %v10712 = vld [vmem:[#allocation3 + $0x368] sm:$0xff]
  %v10713 = vld [vmem:[#allocation3 + $0x370] sm:$0xff]
  %v10714 = vld [vmem:[#allocation3 + $0x388] sm:$0xff]
  %v10715 = vld [vmem:[#allocation3 + $0x390] sm:$0xff]
  %v10716 = vld [vmem:[#allocation3 + $0x3a8] sm:$0xff]
  %v10717 = vld [vmem:[#allocation3 + $0x3b0] sm:$0xff]
  %v10718 = vld [vmem:[#allocation3 + $0x3c8] sm:$0xff]
  %v10719 = vld [vmem:[#allocation3 + $0x3d0] sm:$0xff]
  %v10720 = vld [vmem:[#allocation3 + $0x3e8] sm:$0xff]
  %v10721 = vld [vmem:[#allocation3 + $0x3f0] sm:$0xff]
  %v10722 = vld [vmem:[#allocation3 + $0x408] sm:$0xff]
  %v10723 = vld [vmem:[#allocation3 + $0x410] sm:$0xff]
  %v10724 = vld [vmem:[#allocation3 + $0x428] sm:$0xff]
  %v10725 = vld [vmem:[#allocation3 + $0x430] sm:$0xff]
  %v10726 = vld [vmem:[#allocation3 + $0x448] sm:$0xff]
  %v10727 = vld [vmem:[#allocation3 + $0x450] sm:$0xff]
  %v10728 = vld [vmem:[#allocation3 + $0x468] sm:$0xff]
  %v10729 = vld [vmem:[#allocation3 + $0x470] sm:$0xff]
  %v10730 = vld [vmem:[#allocation3 + $0x9] sm:$0xff]
  %v10731 = vld [vmem:[#allocation3 + $0x11] sm:$0xff]
  %v10732 = vld [vmem:[#allocation3 + $0x29] sm:$0xff]
  %v10733 = vld [vmem:[#allocation3 + $0x31] sm:$0xff]
  %v10734 = vld [vmem:[#allocation3 + $0x49] sm:$0xff]
  %v10735 = vld [vmem:[#allocation3 + $0x51] sm:$0xff]
  %v10736 = vld [vmem:[#allocation3 + $0x69] sm:$0xff]
  %v10737 = vld [vmem:[#allocation3 + $0x71] sm:$0xff]
  %v10738 = vld [vmem:[#allocation3 + $0x89] sm:$0xff]
  %v10739 = vld [vmem:[#allocation3 + $0x91] sm:$0xff]
  %v10740 = vld [vmem:[#allocation3 + $0xa9] sm:$0xff]
  %v10741 = vld [vmem:[#allocation3 + $0xb1] sm:$0xff]
  %v10742 = vld [vmem:[#allocation3 + $0xc9] sm:$0xff]
  %v10743 = vld [vmem:[#allocation3 + $0xd1] sm:$0xff]
  %v10744 = vld [vmem:[#allocation3 + $0xe9] sm:$0xff]
  %v10745 = vld [vmem:[#allocation3 + $0xf1] sm:$0xff]
  %v10746 = vld [vmem:[#allocation3 + $0x109] sm:$0xff]
  %v10747 = vld [vmem:[#allocation3 + $0x111] sm:$0xff]
  %v10748 = vld [vmem:[#allocation3 + $0x129] sm:$0xff]
  %v10749 = vld [vmem:[#allocation3 + $0x131] sm:$0xff]
  %v10750 = vld [vmem:[#allocation3 + $0x149] sm:$0xff]
  %v10751 = vld [vmem:[#allocation3 + $0x151] sm:$0xff]
  %v10752 = vld [vmem:[#allocation3 + $0x169] sm:$0xff]
  %v10753 = vld [vmem:[#allocation3 + $0x171] sm:$0xff]
  %v10754 = vld [vmem:[#allocation3 + $0x189] sm:$0xff]
  %v10755 = vld [vmem:[#allocation3 + $0x191] sm:$0xff]
  %v10756 = vld [vmem:[#allocation3 + $0x1a9] sm:$0xff]
  %v10757 = vld [vmem:[#allocation3 + $0x1b1] sm:$0xff]
  %v10758 = vld [vmem:[#allocation3 + $0x1c9] sm:$0xff]
  %v10759 = vld [vmem:[#allocation3 + $0x1d1] sm:$0xff]
  %v10760 = vld [vmem:[#allocation3 + $0x1e9] sm:$0xff]
  %v10761 = vld [vmem:[#allocation3 + $0x1f1] sm:$0xff]
  %v10762 = vld [vmem:[#allocation3 + $0x209] sm:$0xff]
  %v10763 = vld [vmem:[#allocation3 + $0x211] sm:$0xff]
  %v10764 = vld [vmem:[#allocation3 + $0x229] sm:$0xff]
  %v10765 = vld [vmem:[#allocation3 + $0x231] sm:$0xff]
  %v10766 = vld [vmem:[#allocation3 + $0x249] sm:$0xff]
  %v10767 = vld [vmem:[#allocation3 + $0x251] sm:$0xff]
  %v10768 = vld [vmem:[#allocation3 + $0x269] sm:$0xff]
  %v10769 = vld [vmem:[#allocation3 + $0x271] sm:$0xff]
  %v10770 = vld [vmem:[#allocation3 + $0x289] sm:$0xff]
  %v10771 = vld [vmem:[#allocation3 + $0x291] sm:$0xff]
  %v10772 = vld [vmem:[#allocation3 + $0x2a9] sm:$0xff]
  %v10773 = vld [vmem:[#allocation3 + $0x2b1] sm:$0xff]
  %v10774 = vld [vmem:[#allocation3 + $0x2c9] sm:$0xff]
  %v10775 = vld [vmem:[#allocation3 + $0x2d1] sm:$0xff]
  %v10776 = vld [vmem:[#allocation3 + $0x2e9] sm:$0xff]
  %v10777 = vld [vmem:[#allocation3 + $0x2f1] sm:$0xff]
  %v10778 = vld [vmem:[#allocation3 + $0x309] sm:$0xff]
  %v10779 = vld [vmem:[#allocation3 + $0x311] sm:$0xff]
  %v10780 = vld [vmem:[#allocation3 + $0x329] sm:$0xff]
  %v10781 = vld [vmem:[#allocation3 + $0x331] sm:$0xff]
  %v10782 = vld [vmem:[#allocation3 + $0x349] sm:$0xff]
  %v10783 = vld [vmem:[#allocation3 + $0x351] sm:$0xff]
  %v10784 = vld [vmem:[#allocation3 + $0x369] sm:$0xff]
  %v10785 = vld [vmem:[#allocation3 + $0x371] sm:$0xff]
  %v10786 = vld [vmem:[#allocation3 + $0x389] sm:$0xff]
  %v10787 = vld [vmem:[#allocation3 + $0x391] sm:$0xff]
  %v10788 = vld [vmem:[#allocation3 + $0x3a9] sm:$0xff]
  %v10789 = vld [vmem:[#allocation3 + $0x3b1] sm:$0xff]
  %v10790 = vld [vmem:[#allocation3 + $0x3c9] sm:$0xff]
  %v10791 = vld [vmem:[#allocation3 + $0x3d1] sm:$0xff]
  %v10792 = vld [vmem:[#allocation3 + $0x3e9] sm:$0xff]
  %v10793 = vld [vmem:[#allocation3 + $0x3f1] sm:$0xff]
  %v10794 = vld [vmem:[#allocation3 + $0x409] sm:$0xff]
  %v10795 = vld [vmem:[#allocation3 + $0x411] sm:$0xff]
  %v10796 = vld [vmem:[#allocation3 + $0x429] sm:$0xff]
  %v10797 = vld [vmem:[#allocation3 + $0x431] sm:$0xff]
  %v10798 = vld [vmem:[#allocation3 + $0x449] sm:$0xff]
  %v10799 = vld [vmem:[#allocation3 + $0x451] sm:$0xff]
  %v10800 = vld [vmem:[#allocation3 + $0x469] sm:$0xff]
  %v10801 = vld [vmem:[#allocation3 + $0x471] sm:$0xff]
  %10874 = vrot.lane.b32.xlu0 %v10658, 32
  %v10875 = vpop.permute.xlu0 %10874
  %10876 = vrot.lane.b32.xlu0 %v10659, 32
  %v10877 = vpop.permute.xlu0 %10876
  %10878 = vrot.lane.b32.xlu0 %v10660, 32
  %v10879 = vpop.permute.xlu0 %10878
  %10880 = vrot.lane.b32.xlu0 %v10661, 32
  %v10881 = vpop.permute.xlu0 %10880
  %10882 = vrot.lane.b32.xlu0 %v10662, 32
  %v10883 = vpop.permute.xlu0 %10882
  %10884 = vrot.lane.b32.xlu0 %v10663, 32
  %v10885 = vpop.permute.xlu0 %10884
  %10886 = vrot.lane.b32.xlu0 %v10664, 32
  %v10887 = vpop.permute.xlu0 %10886
  %10888 = vrot.lane.b32.xlu0 %v10665, 32
  %v10889 = vpop.permute.xlu0 %10888
  %10890 = vrot.lane.b32.xlu0 %v10666, 32
  %v10891 = vpop.permute.xlu0 %10890
  %10892 = vrot.lane.b32.xlu0 %v10667, 32
  %v10893 = vpop.permute.xlu0 %10892
  %10894 = vrot.lane.b32.xlu0 %v10668, 32
  %v10895 = vpop.permute.xlu0 %10894
  %10896 = vrot.lane.b32.xlu0 %v10669, 32
  %v10897 = vpop.permute.xlu0 %10896
  %10898 = vrot.lane.b32.xlu0 %v10670, 32
  %v10899 = vpop.permute.xlu0 %10898
  %10900 = vrot.lane.b32.xlu0 %v10671, 32
  %v10901 = vpop.permute.xlu0 %10900
  %10902 = vrot.lane.b32.xlu0 %v10672, 32
  %v10903 = vpop.permute.xlu0 %10902
  %10904 = vrot.lane.b32.xlu0 %v10673, 32
  %v10905 = vpop.permute.xlu0 %10904
  %10906 = vrot.lane.b32.xlu0 %v10674, 32
  %v10907 = vpop.permute.xlu0 %10906
  %10908 = vrot.lane.b32.xlu0 %v10675, 32
  %v10909 = vpop.permute.xlu0 %10908
  %10910 = vrot.lane.b32.xlu0 %v10676, 32
  %v10911 = vpop.permute.xlu0 %10910
  %10912 = vrot.lane.b32.xlu0 %v10677, 32
  %v10913 = vpop.permute.xlu0 %10912
  %10914 = vrot.lane.b32.xlu0 %v10678, 32
  %v10915 = vpop.permute.xlu0 %10914
  %10916 = vrot.lane.b32.xlu0 %v10679, 32
  %v10917 = vpop.permute.xlu0 %10916
  %10918 = vrot.lane.b32.xlu0 %v10680, 32
  %v10919 = vpop.permute.xlu0 %10918
  %10920 = vrot.lane.b32.xlu0 %v10681, 32
  %v10921 = vpop.permute.xlu0 %10920
  %10922 = vrot.lane.b32.xlu0 %v10682, 32
  %v10923 = vpop.permute.xlu0 %10922
  %10924 = vrot.lane.b32.xlu0 %v10683, 32
  %v10925 = vpop.permute.xlu0 %10924
  %10926 = vrot.lane.b32.xlu0 %v10684, 32
  %v10927 = vpop.permute.xlu0 %10926
  %10928 = vrot.lane.b32.xlu0 %v10685, 32
  %v10929 = vpop.permute.xlu0 %10928
  %10930 = vrot.lane.b32.xlu0 %v10686, 32
  %v10931 = vpop.permute.xlu0 %10930
  %10932 = vrot.lane.b32.xlu0 %v10687, 32
  %v10933 = vpop.permute.xlu0 %10932
  %10934 = vrot.lane.b32.xlu0 %v10688, 32
  %v10935 = vpop.permute.xlu0 %10934
  %10936 = vrot.lane.b32.xlu0 %v10689, 32
  %v10937 = vpop.permute.xlu0 %10936
  %10938 = vrot.lane.b32.xlu0 %v10690, 32
  %v10939 = vpop.permute.xlu0 %10938
  %10940 = vrot.lane.b32.xlu0 %v10691, 32
  %v10941 = vpop.permute.xlu0 %10940
  %10942 = vrot.lane.b32.xlu0 %v10692, 32
  %v10943 = vpop.permute.xlu0 %10942
  %10944 = vrot.lane.b32.xlu0 %v10693, 32
  %v10945 = vpop.permute.xlu0 %10944
  %10946 = vrot.lane.b32.xlu0 %v10694, 32
  %v10947 = vpop.permute.xlu0 %10946
  %10948 = vrot.lane.b32.xlu0 %v10695, 32
  %v10949 = vpop.permute.xlu0 %10948
  %10950 = vrot.lane.b32.xlu0 %v10696, 32
  %v10951 = vpop.permute.xlu0 %10950
  %10952 = vrot.lane.b32.xlu0 %v10697, 32
  %v10953 = vpop.permute.xlu0 %10952
  %10954 = vrot.lane.b32.xlu0 %v10698, 32
  %v10955 = vpop.permute.xlu0 %10954
  %10956 = vrot.lane.b32.xlu0 %v10699, 32
  %v10957 = vpop.permute.xlu0 %10956
  %10958 = vrot.lane.b32.xlu0 %v10700, 32
  %v10959 = vpop.permute.xlu0 %10958
  %10960 = vrot.lane.b32.xlu0 %v10701, 32
  %v10961 = vpop.permute.xlu0 %10960
  %10962 = vrot.lane.b32.xlu0 %v10702, 32
  %v10963 = vpop.permute.xlu0 %10962
  %10964 = vrot.lane.b32.xlu0 %v10703, 32
  %v10965 = vpop.permute.xlu0 %10964
  %10966 = vrot.lane.b32.xlu0 %v10704, 32
  %v10967 = vpop.permute.xlu0 %10966
  %10968 = vrot.lane.b32.xlu0 %v10705, 32
  %v10969 = vpop.permute.xlu0 %10968
  %10970 = vrot.lane.b32.xlu0 %v10706, 32
  %v10971 = vpop.permute.xlu0 %10970
  %10972 = vrot.lane.b32.xlu0 %v10707, 32
  %v10973 = vpop.permute.xlu0 %10972
  %10974 = vrot.lane.b32.xlu0 %v10708, 32
  %v10975 = vpop.permute.xlu0 %10974
  %10976 = vrot.lane.b32.xlu0 %v10709, 32
  %v10977 = vpop.permute.xlu0 %10976
  %10978 = vrot.lane.b32.xlu0 %v10710, 32
  %v10979 = vpop.permute.xlu0 %10978
  %10980 = vrot.lane.b32.xlu0 %v10711, 32
  %v10981 = vpop.permute.xlu0 %10980
  %10982 = vrot.lane.b32.xlu0 %v10712, 32
  %v10983 = vpop.permute.xlu0 %10982
  %10984 = vrot.lane.b32.xlu0 %v10713, 32
  %v10985 = vpop.permute.xlu0 %10984
  %10986 = vrot.lane.b32.xlu0 %v10714, 32
  %v10987 = vpop.permute.xlu0 %10986
  %10988 = vrot.lane.b32.xlu0 %v10715, 32
  %v10989 = vpop.permute.xlu0 %10988
  %10990 = vrot.lane.b32.xlu0 %v10716, 32
  %v10991 = vpop.permute.xlu0 %10990
  %10992 = vrot.lane.b32.xlu0 %v10717, 32
  %v10993 = vpop.permute.xlu0 %10992
  %10994 = vrot.lane.b32.xlu0 %v10718, 32
  %v10995 = vpop.permute.xlu0 %10994
  %10996 = vrot.lane.b32.xlu0 %v10719, 32
  %v10997 = vpop.permute.xlu0 %10996
  %10998 = vrot.lane.b32.xlu0 %v10720, 32
  %v10999 = vpop.permute.xlu0 %10998
  %11000 = vrot.lane.b32.xlu0 %v10721, 32
  %v11001 = vpop.permute.xlu0 %11000
  %11002 = vrot.lane.b32.xlu0 %v10722, 32
  %v11003 = vpop.permute.xlu0 %11002
  %11004 = vrot.lane.b32.xlu0 %v10723, 32
  %v11005 = vpop.permute.xlu0 %11004
  %11006 = vrot.lane.b32.xlu0 %v10724, 32
  %v11007 = vpop.permute.xlu0 %11006
  %11008 = vrot.lane.b32.xlu0 %v10725, 32
  %v11009 = vpop.permute.xlu0 %11008
  %11010 = vrot.lane.b32.xlu0 %v10726, 32
  %v11011 = vpop.permute.xlu0 %11010
  %11012 = vrot.lane.b32.xlu0 %v10727, 32
  %v11013 = vpop.permute.xlu0 %11012
  %11014 = vrot.lane.b32.xlu0 %v10728, 32
  %v11015 = vpop.permute.xlu0 %11014
  %11016 = vrot.lane.b32.xlu0 %v10729, 32
  %v11017 = vpop.permute.xlu0 %11016
  %11162 = vrot.lane.b32.xlu0 %v10730, 64
  %v11163 = vpop.permute.xlu0 %11162
  %11164 = vrot.lane.b32.xlu0 %v10731, 64
  %v11165 = vpop.permute.xlu0 %11164
  %11166 = vrot.lane.b32.xlu0 %v10732, 64
  %v11167 = vpop.permute.xlu0 %11166
  %11168 = vrot.lane.b32.xlu0 %v10733, 64
  %v11169 = vpop.permute.xlu0 %11168
  %11170 = vrot.lane.b32.xlu0 %v10734, 64
  %v11171 = vpop.permute.xlu0 %11170
  %11172 = vrot.lane.b32.xlu0 %v10735, 64
  %v11173 = vpop.permute.xlu0 %11172
  %11174 = vrot.lane.b32.xlu0 %v10736, 64
  %v11175 = vpop.permute.xlu0 %11174
  %11176 = vrot.lane.b32.xlu0 %v10737, 64
  %v11177 = vpop.permute.xlu0 %11176
  %11178 = vrot.lane.b32.xlu0 %v10738, 64
  %v11179 = vpop.permute.xlu0 %11178
  %11180 = vrot.lane.b32.xlu0 %v10739, 64
  %v11181 = vpop.permute.xlu0 %11180
  %11182 = vrot.lane.b32.xlu0 %v10740, 64
  %v11183 = vpop.permute.xlu0 %11182
  %11184 = vrot.lane.b32.xlu0 %v10741, 64
  %v11185 = vpop.permute.xlu0 %11184
  %11186 = vrot.lane.b32.xlu0 %v10742, 64
  %v11187 = vpop.permute.xlu0 %11186
  %11188 = vrot.lane.b32.xlu0 %v10743, 64
  %v11189 = vpop.permute.xlu0 %11188
  %11190 = vrot.lane.b32.xlu0 %v10744, 64
  %v11191 = vpop.permute.xlu0 %11190
  %11192 = vrot.lane.b32.xlu0 %v10745, 64
  %v11193 = vpop.permute.xlu0 %11192
  %11194 = vrot.lane.b32.xlu0 %v10746, 64
  %v11195 = vpop.permute.xlu0 %11194
  %11196 = vrot.lane.b32.xlu0 %v10747, 64
  %v11197 = vpop.permute.xlu0 %11196
  %11198 = vrot.lane.b32.xlu0 %v10748, 64
  %v11199 = vpop.permute.xlu0 %11198
  %11200 = vrot.lane.b32.xlu0 %v10749, 64
  %v11201 = vpop.permute.xlu0 %11200
  %11202 = vrot.lane.b32.xlu0 %v10750, 64
  %v11203 = vpop.permute.xlu0 %11202
  %11204 = vrot.lane.b32.xlu0 %v10751, 64
  %v11205 = vpop.permute.xlu0 %11204
  %11206 = vrot.lane.b32.xlu0 %v10752, 64
  %v11207 = vpop.permute.xlu0 %11206
  %11208 = vrot.lane.b32.xlu0 %v10753, 64
  %v11209 = vpop.permute.xlu0 %11208
  %11210 = vrot.lane.b32.xlu0 %v10754, 64
  %v11211 = vpop.permute.xlu0 %11210
  %11212 = vrot.lane.b32.xlu0 %v10755, 64
  %v11213 = vpop.permute.xlu0 %11212
  %11214 = vrot.lane.b32.xlu0 %v10756, 64
  %v11215 = vpop.permute.xlu0 %11214
  %11216 = vrot.lane.b32.xlu0 %v10757, 64
  %v11217 = vpop.permute.xlu0 %11216
  %11218 = vrot.lane.b32.xlu0 %v10758, 64
  %v11219 = vpop.permute.xlu0 %11218
  %11220 = vrot.lane.b32.xlu0 %v10759, 64
  %v11221 = vpop.permute.xlu0 %11220
  %11222 = vrot.lane.b32.xlu0 %v10760, 64
  %v11223 = vpop.permute.xlu0 %11222
  %11224 = vrot.lane.b32.xlu0 %v10761, 64
  %v11225 = vpop.permute.xlu0 %11224
  %11226 = vrot.lane.b32.xlu0 %v10762, 64
  %v11227 = vpop.permute.xlu0 %11226
  %11228 = vrot.lane.b32.xlu0 %v10763, 64
  %v11229 = vpop.permute.xlu0 %11228
  %11230 = vrot.lane.b32.xlu0 %v10764, 64
  %v11231 = vpop.permute.xlu0 %11230
  %11232 = vrot.lane.b32.xlu0 %v10765, 64
  %v11233 = vpop.permute.xlu0 %11232
  %11234 = vrot.lane.b32.xlu0 %v10766, 64
  %v11235 = vpop.permute.xlu0 %11234
  %11236 = vrot.lane.b32.xlu0 %v10767, 64
  %v11237 = vpop.permute.xlu0 %11236
  %11238 = vrot.lane.b32.xlu0 %v10768, 64
  %v11239 = vpop.permute.xlu0 %11238
  %11240 = vrot.lane.b32.xlu0 %v10769, 64
  %v11241 = vpop.permute.xlu0 %11240
  %11242 = vrot.lane.b32.xlu0 %v10770, 64
  %v11243 = vpop.permute.xlu0 %11242
  %11244 = vrot.lane.b32.xlu0 %v10771, 64
  %v11245 = vpop.permute.xlu0 %11244
  %11246 = vrot.lane.b32.xlu0 %v10772, 64
  %v11247 = vpop.permute.xlu0 %11246
  %11248 = vrot.lane.b32.xlu0 %v10773, 64
  %v11249 = vpop.permute.xlu0 %11248
  %11250 = vrot.lane.b32.xlu0 %v10774, 64
  %v11251 = vpop.permute.xlu0 %11250
  %11252 = vrot.lane.b32.xlu0 %v10775, 64
  %v11253 = vpop.permute.xlu0 %11252
  %11254 = vrot.lane.b32.xlu0 %v10776, 64
  %v11255 = vpop.permute.xlu0 %11254
  %11256 = vrot.lane.b32.xlu0 %v10777, 64
  %v11257 = vpop.permute.xlu0 %11256
  %11258 = vrot.lane.b32.xlu0 %v10778, 64
  %v11259 = vpop.permute.xlu0 %11258
  %11260 = vrot.lane.b32.xlu0 %v10779, 64
  %v11261 = vpop.permute.xlu0 %11260
  %11262 = vrot.lane.b32.xlu0 %v10780, 64
  %v11263 = vpop.permute.xlu0 %11262
  %11264 = vrot.lane.b32.xlu0 %v10781, 64
  %v11265 = vpop.permute.xlu0 %11264
  %11266 = vrot.lane.b32.xlu0 %v10782, 64
  %v11267 = vpop.permute.xlu0 %11266
  %11268 = vrot.lane.b32.xlu0 %v10783, 64
  %v11269 = vpop.permute.xlu0 %11268
  %11270 = vrot.lane.b32.xlu0 %v10784, 64
  %v11271 = vpop.permute.xlu0 %11270
  %11272 = vrot.lane.b32.xlu0 %v10785, 64
  %v11273 = vpop.permute.xlu0 %11272
  %11274 = vrot.lane.b32.xlu0 %v10786, 64
  %v11275 = vpop.permute.xlu0 %11274
  %11276 = vrot.lane.b32.xlu0 %v10787, 64
  %v11277 = vpop.permute.xlu0 %11276
  %11278 = vrot.lane.b32.xlu0 %v10788, 64
  %v11279 = vpop.permute.xlu0 %11278
  %11280 = vrot.lane.b32.xlu0 %v10789, 64
  %v11281 = vpop.permute.xlu0 %11280
  %11282 = vrot.lane.b32.xlu0 %v10790, 64
  %v11283 = vpop.permute.xlu0 %11282
  %11284 = vrot.lane.b32.xlu0 %v10791, 64
  %v11285 = vpop.permute.xlu0 %11284
  %11286 = vrot.lane.b32.xlu0 %v10792, 64
  %v11287 = vpop.permute.xlu0 %11286
  %11288 = vrot.lane.b32.xlu0 %v10793, 64
  %v11289 = vpop.permute.xlu0 %11288
  %11290 = vrot.lane.b32.xlu0 %v10794, 64
  %v11291 = vpop.permute.xlu0 %11290
  %11292 = vrot.lane.b32.xlu0 %v10795, 64
  %v11293 = vpop.permute.xlu0 %11292
  %11294 = vrot.lane.b32.xlu0 %v10796, 64
  %v11295 = vpop.permute.xlu0 %11294
  %11296 = vrot.lane.b32.xlu0 %v10797, 64
  %v11297 = vpop.permute.xlu0 %11296
  %11298 = vrot.lane.b32.xlu0 %v10798, 64
  %v11299 = vpop.permute.xlu0 %11298
  %11300 = vrot.lane.b32.xlu0 %v10799, 64
  %v11301 = vpop.permute.xlu0 %11300
  %11302 = vrot.lane.b32.xlu0 %v10800, 64
  %v11303 = vpop.permute.xlu0 %11302
  %11304 = vrot.lane.b32.xlu0 %v10801, 64
  %v11305 = vpop.permute.xlu0 %11304
  %v11378 = vsel %vm141, %v10586, %v10875
  %v11379 = vsel %vm141, %v10587, %v10877
  %v11380 = vsel %vm141, %v10588, %v10879
  %v11381 = vsel %vm141, %v10589, %v10881
  %v11382 = vsel %vm141, %v10590, %v10883
  %v11383 = vsel %vm141, %v10591, %v10885
  %v11384 = vsel %vm141, %v10592, %v10887
  %v11385 = vsel %vm141, %v10593, %v10889
  %v11386 = vsel %vm141, %v10594, %v10891
  %v11387 = vsel %vm141, %v10595, %v10893
  %v11388 = vsel %vm141, %v10596, %v10895
  %v11389 = vsel %vm141, %v10597, %v10897
  %v11390 = vsel %vm141, %v10598, %v10899
  %v11391 = vsel %vm141, %v10599, %v10901
  %v11392 = vsel %vm141, %v10600, %v10903
  %v11393 = vsel %vm141, %v10601, %v10905
  %v11394 = vsel %vm141, %v10602, %v10907
  %v11395 = vsel %vm141, %v10603, %v10909
  %v11396 = vsel %vm141, %v10604, %v10911
  %v11397 = vsel %vm141, %v10605, %v10913
  %v11398 = vsel %vm141, %v10606, %v10915
  %v11399 = vsel %vm141, %v10607, %v10917
  %v11400 = vsel %vm141, %v10608, %v10919
  %v11401 = vsel %vm141, %v10609, %v10921
  %v11402 = vsel %vm141, %v10610, %v10923
  %v11403 = vsel %vm141, %v10611, %v10925
  %v11404 = vsel %vm141, %v10612, %v10927
  %v11405 = vsel %vm141, %v10613, %v10929
  %v11406 = vsel %vm141, %v10614, %v10931
  %v11407 = vsel %vm141, %v10615, %v10933
  %v11408 = vsel %vm141, %v10616, %v10935
  %v11409 = vsel %vm141, %v10617, %v10937
  %v11410 = vsel %vm141, %v10618, %v10939
  %v11411 = vsel %vm141, %v10619, %v10941
  %v11412 = vsel %vm141, %v10620, %v10943
  %v11413 = vsel %vm141, %v10621, %v10945
  %v11414 = vsel %vm141, %v10622, %v10947
  %v11415 = vsel %vm141, %v10623, %v10949
  %v11416 = vsel %vm141, %v10624, %v10951
  %v11417 = vsel %vm141, %v10625, %v10953
  %v11418 = vsel %vm141, %v10626, %v10955
  %v11419 = vsel %vm141, %v10627, %v10957
  %v11420 = vsel %vm141, %v10628, %v10959
  %v11421 = vsel %vm141, %v10629, %v10961
  %v11422 = vsel %vm141, %v10630, %v10963
  %v11423 = vsel %vm141, %v10631, %v10965
  %v11424 = vsel %vm141, %v10632, %v10967
  %v11425 = vsel %vm141, %v10633, %v10969
  %v11426 = vsel %vm141, %v10634, %v10971
  %v11427 = vsel %vm141, %v10635, %v10973
  %v11428 = vsel %vm141, %v10636, %v10975
  %v11429 = vsel %vm141, %v10637, %v10977
  %v11430 = vsel %vm141, %v10638, %v10979
  %v11431 = vsel %vm141, %v10639, %v10981
  %v11432 = vsel %vm141, %v10640, %v10983
  %v11433 = vsel %vm141, %v10641, %v10985
  %v11434 = vsel %vm141, %v10642, %v10987
  %v11435 = vsel %vm141, %v10643, %v10989
  %v11436 = vsel %vm141, %v10644, %v10991
  %v11437 = vsel %vm141, %v10645, %v10993
  %v11438 = vsel %vm141, %v10646, %v10995
  %v11439 = vsel %vm141, %v10647, %v10997
  %v11440 = vsel %vm141, %v10648, %v10999
  %v11441 = vsel %vm141, %v10649, %v11001
  %v11442 = vsel %vm141, %v10650, %v11003
  %v11443 = vsel %vm141, %v10651, %v11005
  %v11444 = vsel %vm141, %v10652, %v11007
  %v11445 = vsel %vm141, %v10653, %v11009
  %v11446 = vsel %vm141, %v10654, %v11011
  %v11447 = vsel %vm141, %v10655, %v11013
  %v11448 = vsel %vm141, %v10656, %v11015
  %v11449 = vsel %vm141, %v10657, %v11017
  %v11450 = vsel %vm4421, %v11378, %v11163
  %v11451 = vsel %vm4421, %v11379, %v11165
  %v11452 = vsel %vm4421, %v11380, %v11167
  %v11453 = vsel %vm4421, %v11381, %v11169
  %v11454 = vsel %vm4421, %v11382, %v11171
  %v11455 = vsel %vm4421, %v11383, %v11173
  %v11456 = vsel %vm4421, %v11384, %v11175
  %v11457 = vsel %vm4421, %v11385, %v11177
  %v11458 = vsel %vm4421, %v11386, %v11179
  %v11459 = vsel %vm4421, %v11387, %v11181
  %v11460 = vsel %vm4421, %v11388, %v11183
  %v11461 = vsel %vm4421, %v11389, %v11185
  %v11462 = vsel %vm4421, %v11390, %v11187
  %v11463 = vsel %vm4421, %v11391, %v11189
  %v11464 = vsel %vm4421, %v11392, %v11191
  %v11465 = vsel %vm4421, %v11393, %v11193
  %v11466 = vsel %vm4421, %v11394, %v11195
  %v11467 = vsel %vm4421, %v11395, %v11197
  %v11468 = vsel %vm4421, %v11396, %v11199
  %v11469 = vsel %vm4421, %v11397, %v11201
  %v11470 = vsel %vm4421, %v11398, %v11203
  %v11471 = vsel %vm4421, %v11399, %v11205
  %v11472 = vsel %vm4421, %v11400, %v11207
  %v11473 = vsel %vm4421, %v11401, %v11209
  %v11474 = vsel %vm4421, %v11402, %v11211
  %v11475 = vsel %vm4421, %v11403, %v11213
  %v11476 = vsel %vm4421, %v11404, %v11215
  %v11477 = vsel %vm4421, %v11405, %v11217
  %v11478 = vsel %vm4421, %v11406, %v11219
  %v11479 = vsel %vm4421, %v11407, %v11221
  %v11480 = vsel %vm4421, %v11408, %v11223
  %v11481 = vsel %vm4421, %v11409, %v11225
  %v11482 = vsel %vm4421, %v11410, %v11227
  %v11483 = vsel %vm4421, %v11411, %v11229
  %v11484 = vsel %vm4421, %v11412, %v11231
  %v11485 = vsel %vm4421, %v11413, %v11233
  %v11486 = vsel %vm4421, %v11414, %v11235
  %v11487 = vsel %vm4421, %v11415, %v11237
  %v11488 = vsel %vm4421, %v11416, %v11239
  %v11489 = vsel %vm4421, %v11417, %v11241
  %v11490 = vsel %vm4421, %v11418, %v11243
  %v11491 = vsel %vm4421, %v11419, %v11245
  %v11492 = vsel %vm4421, %v11420, %v11247
  %v11493 = vsel %vm4421, %v11421, %v11249
  %v11494 = vsel %vm4421, %v11422, %v11251
  %v11495 = vsel %vm4421, %v11423, %v11253
  %v11496 = vsel %vm4421, %v11424, %v11255
  %v11497 = vsel %vm4421, %v11425, %v11257
  %v11498 = vsel %vm4421, %v11426, %v11259
  %v11499 = vsel %vm4421, %v11427, %v11261
  %v11500 = vsel %vm4421, %v11428, %v11263
  %v11501 = vsel %vm4421, %v11429, %v11265
  %v11502 = vsel %vm4421, %v11430, %v11267
  %v11503 = vsel %vm4421, %v11431, %v11269
  %v11504 = vsel %vm4421, %v11432, %v11271
  %v11505 = vsel %vm4421, %v11433, %v11273
  %v11506 = vsel %vm4421, %v11434, %v11275
  %v11507 = vsel %vm4421, %v11435, %v11277
  %v11508 = vsel %vm4421, %v11436, %v11279
  %v11509 = vsel %vm4421, %v11437, %v11281
  %v11510 = vsel %vm4421, %v11438, %v11283
  %v11511 = vsel %vm4421, %v11439, %v11285
  %v11512 = vsel %vm4421, %v11440, %v11287
  %v11513 = vsel %vm4421, %v11441, %v11289
  %v11514 = vsel %vm4421, %v11442, %v11291
  %v11515 = vsel %vm4421, %v11443, %v11293
  %v11516 = vsel %vm4421, %v11444, %v11295
  %v11517 = vsel %vm4421, %v11445, %v11297
  %v11518 = vsel %vm4421, %v11446, %v11299
  %v11519 = vsel %vm4421, %v11447, %v11301
  %v11520 = vsel %vm4421, %v11448, %v11303
  %v11521 = vsel %vm4421, %v11449, %v11305
  %v11522 = vld [vmem:[%s13] sm:$0xff]
  %v11523 = vld [vmem:[%s13 + $0x8] sm:$0xff]
  %v11524 = vld [vmem:[%s13 + $0x10] sm:$0xff]
  %v11525 = vld [vmem:[%s13 + $0x18] sm:$0xff]
  %v11526 = vld [vmem:[%s13 + $0x20] sm:$0xff]
  %v11527 = vld [vmem:[%s13 + $0x28] sm:$0xff]
  %v11528 = vld [vmem:[%s13 + $0x30] sm:$0xff]
  %v11529 = vld [vmem:[%s13 + $0x38] sm:$0xff]
  %v11530 = vld [vmem:[%s13 + $0x40] sm:$0xff]
  %v11531 = vld [vmem:[%s13 + $0x48] sm:$0xff]
  %v11532 = vld [vmem:[%s13 + $0x50] sm:$0xff]
  %v11533 = vld [vmem:[%s13 + $0x58] sm:$0xff]
  %s11534 = scalar_lea.vmem %s13, 96
  %v11535 = vld [vmem:[%s11534] sm:$0xff]
  %v11536 = vld [vmem:[%s11534 + $0x8] sm:$0xff]
  %v11537 = vld [vmem:[%s11534 + $0x10] sm:$0xff]
  %v11538 = vld [vmem:[%s11534 + $0x18] sm:$0xff]
  %v11539 = vld [vmem:[%s11534 + $0x20] sm:$0xff]
  %v11540 = vld [vmem:[%s11534 + $0x28] sm:$0xff]
  %v11541 = vld [vmem:[%s11534 + $0x30] sm:$0xff]
  %v11542 = vld [vmem:[%s11534 + $0x38] sm:$0xff]
  %v11543 = vld [vmem:[%s11534 + $0x40] sm:$0xff]
  %v11544 = vld [vmem:[%s11534 + $0x48] sm:$0xff]
  %v11545 = vld [vmem:[%s11534 + $0x50] sm:$0xff]
  %v11546 = vld [vmem:[%s11534 + $0x58] sm:$0xff]
  %v11548 = vsel %vm4519, %v11452, 0
  %v11551 = vsel %vm4519, %v11453, 0
  %v11554 = vsel %vm4519, %v11454, 0
  %v11557 = vsel %vm4519, %v11455, 0
  %v11560 = vsel %vm4519, %v11456, 0
  %v11563 = vsel %vm4519, %v11457, 0
  %v11566 = vsel %vm4519, %v11458, 0
  %v11569 = vsel %vm4519, %v11459, 0
  %v11572 = vsel %vm4519, %v11460, 0
  %v11575 = vsel %vm4519, %v11461, 0
  %v11578 = vsel %vm4519, %v11462, 0
  %v11581 = vsel %vm4519, %v11463, 0
  %v11584 = vsel %vm4519, %v11464, 0
  %v11587 = vsel %vm4519, %v11465, 0
  %v11590 = vsel %vm4519, %v11466, 0
  %v11593 = vsel %vm4519, %v11467, 0
  %v11596 = vsel %vm4519, %v11468, 0
  %v11599 = vsel %vm4519, %v11469, 0
  %v11602 = vsel %vm4519, %v11470, 0
  %v11605 = vsel %vm4519, %v11471, 0
  %v11608 = vsel %vm4519, %v11472, 0
  %v11611 = vsel %vm4519, %v11473, 0
  %v11614 = vsel %vm4519, %v11474, 0
  %v11617 = vsel %vm4519, %v11475, 0
  %v11620 = vsel %vm4519, %v11476, 0
  %v11623 = vsel %vm4519, %v11477, 0
  %v11626 = vsel %vm4519, %v11478, 0
  %v11629 = vsel %vm4519, %v11479, 0
  %v11632 = vsel %vm4519, %v11480, 0
  %v11635 = vsel %vm4519, %v11481, 0
  %v11638 = vsel %vm4519, %v11482, 0
  %v11641 = vsel %vm4519, %v11483, 0
  %v11644 = vsel %vm4519, %v11488, 0
  %v11647 = vsel %vm4519, %v11489, 0
  %v11650 = vsel %vm4519, %v11490, 0
  %v11653 = vsel %vm4519, %v11491, 0
  %v11656 = vsel %vm4519, %v11492, 0
  %v11659 = vsel %vm4519, %v11493, 0
  %v11662 = vsel %vm4519, %v11494, 0
  %v11665 = vsel %vm4519, %v11495, 0
  %v11668 = vsel %vm4519, %v11496, 0
  %v11671 = vsel %vm4519, %v11497, 0
  %v11674 = vsel %vm4519, %v11498, 0
  %v11677 = vsel %vm4519, %v11499, 0
  %v11680 = vsel %vm4519, %v11500, 0
  %v11683 = vsel %vm4519, %v11501, 0
  %v11686 = vsel %vm4519, %v11502, 0
  %v11689 = vsel %vm4519, %v11503, 0
  %v11692 = vsel %vm4519, %v11504, 0
  %v11695 = vsel %vm4519, %v11505, 0
  %v11698 = vsel %vm4519, %v11506, 0
  %v11701 = vsel %vm4519, %v11507, 0
  %v11704 = vsel %vm4519, %v11508, 0
  %v11707 = vsel %vm4519, %v11509, 0
  %v11710 = vsel %vm4519, %v11510, 0
  %v11713 = vsel %vm4519, %v11511, 0
  %v11716 = vsel %vm4519, %v11512, 0
  %v11719 = vsel %vm4519, %v11513, 0
  %v11722 = vsel %vm4519, %v11514, 0
  %v11725 = vsel %vm4519, %v11515, 0
  %v11728 = vsel %vm4519, %v11516, 0
  %v11731 = vsel %vm4519, %v11517, 0
  %v11734 = vsel %vm4519, %v11518, 0
  %v11737 = vsel %vm4519, %v11519, 0
  %11739 = vmatprep.subr.mxu0 0.0
  %11740 = vmatpush1.msra.mxu0 0.0
  %11741 = vmatprep.subr.mxu0 0.0
  %11742 = vmatpush1.msra.mxu0 0.0
  %11743 = vmatprep.subr.mxu0 0.0
  %11744 = vmatpush1.msra.mxu0 0.0
  %11745 = vmatprep.subr.mxu0 0.0
  %11746 = vmatpush1.msra.mxu0 0.0
  %11747 = vmatprep.subr.mxu0 0.0
  %11748 = vmatpush1.msra.mxu0 %v11546
  %11749 = vmatprep.subr.mxu0 0.0
  %11750 = vmatpush1.msra.mxu0 %v11545
  %11751 = vmatprep.subr.mxu0 0.0
  %11752 = vmatpush1.msra.mxu0 %v11544
  %11753 = vmatprep.subr.mxu0 0.0
  %11754 = vmatpush1.msra.mxu0 %v11543
  %11755 = vmatprep.subr.mxu0 0.0
  %11756 = vmatpush1.msra.mxu0 %v11542
  %11757 = vmatprep.subr.mxu0 0.0
  %11758 = vmatpush1.msra.mxu0 %v11541
  %11759 = vmatprep.subr.mxu0 0.0
  %11760 = vmatpush1.msra.mxu0 %v11540
  %11761 = vmatprep.subr.mxu0 0.0
  %11762 = vmatpush1.msra.mxu0 %v11539
  %11763 = vmatprep.subr.mxu0 0.0
  %11764 = vmatpush1.msra.mxu0 %v11538
  %11765 = vmatprep.subr.mxu0 0.0
  %11766 = vmatpush1.msra.mxu0 %v11537
  %11767 = vmatprep.subr.mxu0 0.0
  %11768 = vmatpush1.msra.mxu0 %v11536
  %11769 = vmatprep.subr.mxu0 0.0
  %11770 = vmatpush1.msra.mxu0 %v11535
  %11771 = vmatprep.subr.mxu0 0.0
  %11772 = vmatpush2.msra.mxu0 0.0
  %11773 = vmatprep.subr.mxu0 0.0
  %11774 = vmatpush2.msra.mxu0 0.0
  %11775 = vmatprep.subr.mxu0 0.0
  %11776 = vmatpush2.msra.mxu0 0.0
  %11777 = vmatprep.subr.mxu0 0.0
  %11778 = vmatpush2.msra.mxu0 0.0
  %11779 = vmatprep.subr.mxu0 0.0
  %11780 = vmatpush2.msra.mxu0 0.0
  %11781 = vmatprep.subr.mxu0 0.0
  %11782 = vmatpush2.msra.mxu0 0.0
  %11783 = vmatprep.subr.mxu0 0.0
  %11784 = vmatpush2.msra.mxu0 0.0
  %11785 = vmatprep.subr.mxu0 0.0
  %11786 = vmatpush2.msra.mxu0 0.0
  %11787 = vmatprep.subr.mxu0 0.0
  %11788 = vmatpush2.msra.mxu0 0.0
  %11789 = vmatprep.subr.mxu0 0.0
  %11790 = vmatpush2.msra.mxu0 0.0
  %11791 = vmatprep.subr.mxu0 0.0
  %11792 = vmatpush2.msra.mxu0 0.0
  %11793 = vmatprep.subr.mxu0 0.0
  %11794 = vmatpush2.msra.mxu0 0.0
  %11795 = vmatprep.subr.mxu0 0.0
  %11796 = vmatpush2.msra.mxu0 0.0
  %11797 = vmatprep.subr.mxu0 0.0
  %11798 = vmatpush2.msra.mxu0 0.0
  %11799 = vmatprep.subr.mxu0 0.0
  %11800 = vmatpush2.msra.mxu0 0.0
  %11801 = vmatprep.subr.mxu0 0.0
  %11802 = vmatpush2.msra.mxu0 0.0
  %11803 = vmatprep.mubr.f32.mxu0 0.0
  %11804 = vmatmul.mubr.f32.gmra.mxu0 %v11548
  %v11805 = vpop.f32.mrf.mxu0
  %v11806 = vadd.f32 0.0, %v11805
  %v11807 = vpop.f32.mrf.mxu0
  %11808 = vmatprep.mubr.f32.mxu0 0.0
  %11809 = vmatmul.mubr.f32.gmra.mxu0 %v11551
  %v11810 = vpop.f32.mrf.mxu0
  %v11811 = vadd.f32 0.0, %v11810
  %v11812 = vpop.f32.mrf.mxu0
  %11813 = vmatprep.mubr.f32.mxu0 0.0
  %11814 = vmatmul.mubr.f32.gmra.mxu0 %v11554
  %v11815 = vpop.f32.mrf.mxu0
  %v11816 = vadd.f32 0.0, %v11815
  %v11817 = vpop.f32.mrf.mxu0
  %11818 = vmatprep.mubr.f32.mxu0 0.0
  %11819 = vmatmul.mubr.f32.gmra.mxu0 %v11557
  %v11820 = vpop.f32.mrf.mxu0
  %v11821 = vadd.f32 0.0, %v11820
  %v11822 = vpop.f32.mrf.mxu0
  %11823 = vmatprep.mubr.f32.mxu0 0.0
  %11824 = vmatmul.mubr.f32.gmra.mxu0 %v11560
  %v11825 = vpop.f32.mrf.mxu0
  %v11826 = vadd.f32 0.0, %v11825
  %v11827 = vpop.f32.mrf.mxu0
  %11828 = vmatprep.mubr.f32.mxu0 0.0
  %11829 = vmatmul.mubr.f32.gmra.mxu0 %v11563
  %v11830 = vpop.f32.mrf.mxu0
  %v11831 = vadd.f32 0.0, %v11830
  %v11832 = vpop.f32.mrf.mxu0
  %11833 = vmatprep.mubr.f32.mxu0 0.0
  %11834 = vmatmul.mubr.f32.gmra.mxu0 %v11566
  %v11835 = vpop.f32.mrf.mxu0
  %v11836 = vadd.f32 0.0, %v11835
  %v11837 = vpop.f32.mrf.mxu0
  %11838 = vmatprep.mubr.f32.mxu0 0.0
  %11839 = vmatmul.mubr.f32.gmra.mxu0 %v11569
  %v11840 = vpop.f32.mrf.mxu0
  %v11841 = vadd.f32 0.0, %v11840
  %v11842 = vpop.f32.mrf.mxu0
  %11843 = vmatprep.mubr.f32.mxu0 0.0
  %11844 = vmatmul.mubr.f32.gmra.mxu0 %v11572
  %v11845 = vpop.f32.mrf.mxu0
  %v11846 = vadd.f32 0.0, %v11845
  %v11847 = vpop.f32.mrf.mxu0
  %11848 = vmatprep.mubr.f32.mxu0 0.0
  %11849 = vmatmul.mubr.f32.gmra.mxu0 %v11575
  %v11850 = vpop.f32.mrf.mxu0
  %v11851 = vadd.f32 0.0, %v11850
  %v11852 = vpop.f32.mrf.mxu0
  %11853 = vmatprep.mubr.f32.mxu0 0.0
  %11854 = vmatmul.mubr.f32.gmra.mxu0 %v11578
  %v11855 = vpop.f32.mrf.mxu0
  %v11856 = vadd.f32 0.0, %v11855
  %v11857 = vpop.f32.mrf.mxu0
  %11858 = vmatprep.mubr.f32.mxu0 0.0
  %11859 = vmatmul.mubr.f32.gmra.mxu0 %v11581
  %v11860 = vpop.f32.mrf.mxu0
  %v11861 = vadd.f32 0.0, %v11860
  %v11862 = vpop.f32.mrf.mxu0
  %11863 = vmatprep.mubr.f32.mxu0 0.0
  %11864 = vmatmul.mubr.f32.gmra.mxu0 %v11584
  %v11865 = vpop.f32.mrf.mxu0
  %v11866 = vadd.f32 0.0, %v11865
  %v11867 = vpop.f32.mrf.mxu0
  %11868 = vmatprep.mubr.f32.mxu0 0.0
  %11869 = vmatmul.mubr.f32.gmra.mxu0 %v11587
  %v11870 = vpop.f32.mrf.mxu0
  %v11871 = vadd.f32 0.0, %v11870
  %v11872 = vpop.f32.mrf.mxu0
  %11873 = vmatprep.mubr.f32.mxu0 0.0
  %11874 = vmatmul.mubr.f32.gmra.mxu0 %v11590
  %v11875 = vpop.f32.mrf.mxu0
  %v11876 = vadd.f32 0.0, %v11875
  %v11877 = vpop.f32.mrf.mxu0
  %11878 = vmatprep.mubr.f32.mxu0 0.0
  %11879 = vmatmul.mubr.f32.gmra.mxu0 %v11593
  %v11880 = vpop.f32.mrf.mxu0
  %v11881 = vadd.f32 0.0, %v11880
  %v11882 = vpop.f32.mrf.mxu0
  %11883 = vmatprep.mubr.f32.mxu0 0.0
  %11884 = vmatmul.mubr.f32.gmra.mxu0 %v11596
  %v11885 = vpop.f32.mrf.mxu0
  %v11886 = vadd.f32 0.0, %v11885
  %v11887 = vpop.f32.mrf.mxu0
  %11888 = vmatprep.mubr.f32.mxu0 0.0
  %11889 = vmatmul.mubr.f32.gmra.mxu0 %v11599
  %v11890 = vpop.f32.mrf.mxu0
  %v11891 = vadd.f32 0.0, %v11890
  %v11892 = vpop.f32.mrf.mxu0
  %11893 = vmatprep.mubr.f32.mxu0 0.0
  %11894 = vmatmul.mubr.f32.gmra.mxu0 %v11602
  %v11895 = vpop.f32.mrf.mxu0
  %v11896 = vadd.f32 0.0, %v11895
  %v11897 = vpop.f32.mrf.mxu0
  %11898 = vmatprep.mubr.f32.mxu0 0.0
  %11899 = vmatmul.mubr.f32.gmra.mxu0 %v11605
  %v11900 = vpop.f32.mrf.mxu0
  %v11901 = vadd.f32 0.0, %v11900
  %v11902 = vpop.f32.mrf.mxu0
  %11903 = vmatprep.mubr.f32.mxu0 0.0
  %11904 = vmatmul.mubr.f32.gmra.mxu0 %v11608
  %v11905 = vpop.f32.mrf.mxu0
  %v11906 = vadd.f32 0.0, %v11905
  %v11907 = vpop.f32.mrf.mxu0
  %11908 = vmatprep.mubr.f32.mxu0 0.0
  %11909 = vmatmul.mubr.f32.gmra.mxu0 %v11611
  %v11910 = vpop.f32.mrf.mxu0
  %v11911 = vadd.f32 0.0, %v11910
  %v11912 = vpop.f32.mrf.mxu0
  %11913 = vmatprep.mubr.f32.mxu0 0.0
  %11914 = vmatmul.mubr.f32.gmra.mxu0 %v11614
  %v11915 = vpop.f32.mrf.mxu0
  %v11916 = vadd.f32 0.0, %v11915
  %v11917 = vpop.f32.mrf.mxu0
  %11918 = vmatprep.mubr.f32.mxu0 0.0
  %11919 = vmatmul.mubr.f32.gmra.mxu0 %v11617
  %v11920 = vpop.f32.mrf.mxu0
  %v11921 = vadd.f32 0.0, %v11920
  %v11922 = vpop.f32.mrf.mxu0
  %11923 = vmatprep.mubr.f32.mxu0 0.0
  %11924 = vmatmul.mubr.f32.gmra.mxu0 %v11620
  %v11925 = vpop.f32.mrf.mxu0
  %v11926 = vadd.f32 0.0, %v11925
  %v11927 = vpop.f32.mrf.mxu0
  %11928 = vmatprep.mubr.f32.mxu0 0.0
  %11929 = vmatmul.mubr.f32.gmra.mxu0 %v11623
  %v11930 = vpop.f32.mrf.mxu0
  %v11931 = vadd.f32 0.0, %v11930
  %v11932 = vpop.f32.mrf.mxu0
  %11933 = vmatprep.mubr.f32.mxu0 0.0
  %11934 = vmatmul.mubr.f32.gmra.mxu0 %v11626
  %v11935 = vpop.f32.mrf.mxu0
  %v11936 = vadd.f32 0.0, %v11935
  %v11937 = vpop.f32.mrf.mxu0
  %11938 = vmatprep.mubr.f32.mxu0 0.0
  %11939 = vmatmul.mubr.f32.gmra.mxu0 %v11629
  %v11940 = vpop.f32.mrf.mxu0
  %v11941 = vadd.f32 0.0, %v11940
  %v11942 = vpop.f32.mrf.mxu0
  %11943 = vmatprep.mubr.f32.mxu0 0.0
  %11944 = vmatmul.mubr.f32.gmra.mxu0 %v11632
  %v11945 = vpop.f32.mrf.mxu0
  %v11946 = vadd.f32 0.0, %v11945
  %v11947 = vpop.f32.mrf.mxu0
  %11948 = vmatprep.mubr.f32.mxu0 0.0
  %11949 = vmatmul.mubr.f32.gmra.mxu0 %v11635
  %v11950 = vpop.f32.mrf.mxu0
  %v11951 = vadd.f32 0.0, %v11950
  %v11952 = vpop.f32.mrf.mxu0
  %11953 = vmatprep.mubr.f32.mxu0 0.0
  %11954 = vmatmul.mubr.f32.gmra.mxu0 %v11638
  %v11955 = vpop.f32.mrf.mxu0
  %v11956 = vadd.f32 0.0, %v11955
  %v11957 = vpop.f32.mrf.mxu0
  %11958 = vmatprep.mubr.f32.mxu0 0.0
  %11959 = vmatmul.mubr.f32.gmra.mxu0 %v11641
  %v11960 = vpop.f32.mrf.mxu0
  %v11961 = vadd.f32 0.0, %v11960
  %v11962 = vpop.f32.mrf.mxu0
  %11963 = vmatprep.mubr.f32.mxu0 0.0
  %11964 = vmatmul.mubr.f32.gmra.mxu0 %v11644
  %v11965 = vpop.f32.mrf.mxu0
  %v11966 = vadd.f32 0.0, %v11965
  %v11967 = vpop.f32.mrf.mxu0
  %11968 = vmatprep.mubr.f32.mxu0 0.0
  %11969 = vmatmul.mubr.f32.gmra.mxu0 %v11647
  %v11970 = vpop.f32.mrf.mxu0
  %v11971 = vadd.f32 0.0, %v11970
  %v11972 = vpop.f32.mrf.mxu0
  %11973 = vmatprep.mubr.f32.mxu0 0.0
  %11974 = vmatmul.mubr.f32.gmra.mxu0 %v11650
  %v11975 = vpop.f32.mrf.mxu0
  %v11976 = vadd.f32 0.0, %v11975
  %v11977 = vpop.f32.mrf.mxu0
  %11978 = vmatprep.mubr.f32.mxu0 0.0
  %11979 = vmatmul.mubr.f32.gmra.mxu0 %v11653
  %v11980 = vpop.f32.mrf.mxu0
  %v11981 = vadd.f32 0.0, %v11980
  %v11982 = vpop.f32.mrf.mxu0
  %11983 = vmatprep.mubr.f32.mxu0 0.0
  %11984 = vmatmul.mubr.f32.gmra.mxu0 %v11656
  %v11985 = vpop.f32.mrf.mxu0
  %v11986 = vadd.f32 0.0, %v11985
  %v11987 = vpop.f32.mrf.mxu0
  %11988 = vmatprep.mubr.f32.mxu0 0.0
  %11989 = vmatmul.mubr.f32.gmra.mxu0 %v11659
  %v11990 = vpop.f32.mrf.mxu0
  %v11991 = vadd.f32 0.0, %v11990
  %v11992 = vpop.f32.mrf.mxu0
  %11993 = vmatprep.mubr.f32.mxu0 0.0
  %11994 = vmatmul.mubr.f32.gmra.mxu0 %v11662
  %v11995 = vpop.f32.mrf.mxu0
  %v11996 = vadd.f32 0.0, %v11995
  %v11997 = vpop.f32.mrf.mxu0
  %11998 = vmatprep.mubr.f32.mxu0 0.0
  %11999 = vmatmul.mubr.f32.gmra.mxu0 %v11665
  %v12000 = vpop.f32.mrf.mxu0
  %v12001 = vadd.f32 0.0, %v12000
  %v12002 = vpop.f32.mrf.mxu0
  %12003 = vmatprep.mubr.f32.mxu0 0.0
  %12004 = vmatmul.mubr.f32.gmra.mxu0 %v11668
  %v12005 = vpop.f32.mrf.mxu0
  %v12006 = vadd.f32 0.0, %v12005
  %v12007 = vpop.f32.mrf.mxu0
  %12008 = vmatprep.mubr.f32.mxu0 0.0
  %12009 = vmatmul.mubr.f32.gmra.mxu0 %v11671
  %v12010 = vpop.f32.mrf.mxu0
  %v12011 = vadd.f32 0.0, %v12010
  %v12012 = vpop.f32.mrf.mxu0
  %12013 = vmatprep.mubr.f32.mxu0 0.0
  %12014 = vmatmul.mubr.f32.gmra.mxu0 %v11674
  %v12015 = vpop.f32.mrf.mxu0
  %v12016 = vadd.f32 0.0, %v12015
  %v12017 = vpop.f32.mrf.mxu0
  %12018 = vmatprep.mubr.f32.mxu0 0.0
  %12019 = vmatmul.mubr.f32.gmra.mxu0 %v11677
  %v12020 = vpop.f32.mrf.mxu0
  %v12021 = vadd.f32 0.0, %v12020
  %v12022 = vpop.f32.mrf.mxu0
  %12023 = vmatprep.mubr.f32.mxu0 0.0
  %12024 = vmatmul.mubr.f32.gmra.mxu0 %v11680
  %v12025 = vpop.f32.mrf.mxu0
  %v12026 = vadd.f32 0.0, %v12025
  %v12027 = vpop.f32.mrf.mxu0
  %12028 = vmatprep.mubr.f32.mxu0 0.0
  %12029 = vmatmul.mubr.f32.gmra.mxu0 %v11683
  %v12030 = vpop.f32.mrf.mxu0
  %v12031 = vadd.f32 0.0, %v12030
  %v12032 = vpop.f32.mrf.mxu0
  %12033 = vmatprep.mubr.f32.mxu0 0.0
  %12034 = vmatmul.mubr.f32.gmra.mxu0 %v11686
  %v12035 = vpop.f32.mrf.mxu0
  %v12036 = vadd.f32 0.0, %v12035
  %v12037 = vpop.f32.mrf.mxu0
  %12038 = vmatprep.mubr.f32.mxu0 0.0
  %12039 = vmatmul.mubr.f32.gmra.mxu0 %v11689
  %v12040 = vpop.f32.mrf.mxu0
  %v12041 = vadd.f32 0.0, %v12040
  %v12042 = vpop.f32.mrf.mxu0
  %12043 = vmatprep.mubr.f32.mxu0 0.0
  %12044 = vmatmul.mubr.f32.gmra.mxu0 %v11692
  %v12045 = vpop.f32.mrf.mxu0
  %v12046 = vadd.f32 0.0, %v12045
  %v12047 = vpop.f32.mrf.mxu0
  %12048 = vmatprep.mubr.f32.mxu0 0.0
  %12049 = vmatmul.mubr.f32.gmra.mxu0 %v11695
  %v12050 = vpop.f32.mrf.mxu0
  %v12051 = vadd.f32 0.0, %v12050
  %v12052 = vpop.f32.mrf.mxu0
  %12053 = vmatprep.mubr.f32.mxu0 0.0
  %12054 = vmatmul.mubr.f32.gmra.mxu0 %v11698
  %v12055 = vpop.f32.mrf.mxu0
  %v12056 = vadd.f32 0.0, %v12055
  %v12057 = vpop.f32.mrf.mxu0
  %12058 = vmatprep.mubr.f32.mxu0 0.0
  %12059 = vmatmul.mubr.f32.gmra.mxu0 %v11701
  %v12060 = vpop.f32.mrf.mxu0
  %v12061 = vadd.f32 0.0, %v12060
  %v12062 = vpop.f32.mrf.mxu0
  %12063 = vmatprep.mubr.f32.mxu0 0.0
  %12064 = vmatmul.mubr.f32.gmra.mxu0 %v11704
  %v12065 = vpop.f32.mrf.mxu0
  %v12066 = vadd.f32 0.0, %v12065
  %v12067 = vpop.f32.mrf.mxu0
  %12068 = vmatprep.mubr.f32.mxu0 0.0
  %12069 = vmatmul.mubr.f32.gmra.mxu0 %v11707
  %v12070 = vpop.f32.mrf.mxu0
  %v12071 = vadd.f32 0.0, %v12070
  %v12072 = vpop.f32.mrf.mxu0
  %12073 = vmatprep.mubr.f32.mxu0 0.0
  %12074 = vmatmul.mubr.f32.gmra.mxu0 %v11710
  %v12075 = vpop.f32.mrf.mxu0
  %v12076 = vadd.f32 0.0, %v12075
  %v12077 = vpop.f32.mrf.mxu0
  %12078 = vmatprep.mubr.f32.mxu0 0.0
  %12079 = vmatmul.mubr.f32.gmra.mxu0 %v11713
  %v12080 = vpop.f32.mrf.mxu0
  %v12081 = vadd.f32 0.0, %v12080
  %v12082 = vpop.f32.mrf.mxu0
  %12083 = vmatprep.mubr.f32.mxu0 0.0
  %12084 = vmatmul.mubr.f32.gmra.mxu0 %v11716
  %v12085 = vpop.f32.mrf.mxu0
  %v12086 = vadd.f32 0.0, %v12085
  %v12087 = vpop.f32.mrf.mxu0
  %12088 = vmatprep.mubr.f32.mxu0 0.0
  %12089 = vmatmul.mubr.f32.gmra.mxu0 %v11719
  %v12090 = vpop.f32.mrf.mxu0
  %v12091 = vadd.f32 0.0, %v12090
  %v12092 = vpop.f32.mrf.mxu0
  %12093 = vmatprep.mubr.f32.mxu0 0.0
  %12094 = vmatmul.mubr.f32.gmra.mxu0 %v11722
  %v12095 = vpop.f32.mrf.mxu0
  %v12096 = vadd.f32 0.0, %v12095
  %v12097 = vpop.f32.mrf.mxu0
  %12098 = vmatprep.mubr.f32.mxu0 0.0
  %12099 = vmatmul.mubr.f32.gmra.mxu0 %v11725
  %v12100 = vpop.f32.mrf.mxu0
  %v12101 = vadd.f32 0.0, %v12100
  %v12102 = vpop.f32.mrf.mxu0
  %12103 = vmatprep.mubr.f32.mxu0 0.0
  %12104 = vmatmul.mubr.f32.gmra.mxu0 %v11728
  %v12105 = vpop.f32.mrf.mxu0
  %v12106 = vadd.f32 0.0, %v12105
  %v12107 = vpop.f32.mrf.mxu0
  %12108 = vmatprep.mubr.f32.mxu0 0.0
  %12109 = vmatmul.mubr.f32.gmra.mxu0 %v11731
  %v12110 = vpop.f32.mrf.mxu0
  %v12111 = vadd.f32 0.0, %v12110
  %v12112 = vpop.f32.mrf.mxu0
  %12113 = vmatprep.mubr.f32.mxu0 0.0
  %12114 = vmatmul.mubr.f32.gmra.mxu0 %v11734
  %v12115 = vpop.f32.mrf.mxu0
  %v12116 = vadd.f32 0.0, %v12115
  %v12117 = vpop.f32.mrf.mxu0
  %12118 = vmatprep.mubr.f32.mxu0 0.0
  %12119 = vmatmul.mubr.f32.gmra.mxu0 %v11737
  %v12120 = vpop.f32.mrf.mxu0
  %v12121 = vadd.f32 0.0, %v12120
  %v12122 = vpop.f32.mrf.mxu0
  %12123 = vdwg.mxu0
  %v12125 = vsel %vm4519, %v11450, 0
  %v12128 = vsel %vm4519, %v11451, 0
  %v12131 = vsel %vm4519, %v11486, 0
  %v12134 = vsel %vm4519, %v11487, 0
  %12136 = vmatprep.subr.mxu0 0.0
  %12137 = vmatpush1.msra.mxu0 0.0
  %12138 = vmatprep.subr.mxu0 0.0
  %12139 = vmatpush1.msra.mxu0 0.0
  %12140 = vmatprep.subr.mxu0 0.0
  %12141 = vmatpush1.msra.mxu0 0.0
  %12142 = vmatprep.subr.mxu0 0.0
  %12143 = vmatpush1.msra.mxu0 0.0
  %12144 = vmatprep.subr.mxu0 0.0
  %12145 = vmatpush1.msra.mxu0 %v11533
  %12146 = vmatprep.subr.mxu0 0.0
  %12147 = vmatpush1.msra.mxu0 %v11532
  %12148 = vmatprep.subr.mxu0 0.0
  %12149 = vmatpush1.msra.mxu0 %v11531
  %12150 = vmatprep.subr.mxu0 0.0
  %12151 = vmatpush1.msra.mxu0 %v11530
  %12152 = vmatprep.subr.mxu0 0.0
  %12153 = vmatpush1.msra.mxu0 %v11529
  %12154 = vmatprep.subr.mxu0 0.0
  %12155 = vmatpush1.msra.mxu0 %v11528
  %12156 = vmatprep.subr.mxu0 0.0
  %12157 = vmatpush1.msra.mxu0 %v11527
  %12158 = vmatprep.subr.mxu0 0.0
  %12159 = vmatpush1.msra.mxu0 %v11526
  %12160 = vmatprep.subr.mxu0 0.0
  %12161 = vmatpush1.msra.mxu0 %v11525
  %12162 = vmatprep.subr.mxu0 0.0
  %12163 = vmatpush1.msra.mxu0 %v11524
  %12164 = vmatprep.subr.mxu0 0.0
  %12165 = vmatpush1.msra.mxu0 %v11523
  %12166 = vmatprep.subr.mxu0 0.0
  %12167 = vmatpush1.msra.mxu0 %v11522
  %12168 = vmatprep.subr.mxu0 0.0
  %12169 = vmatpush2.msra.mxu0 0.0
  %12170 = vmatprep.subr.mxu0 0.0
  %12171 = vmatpush2.msra.mxu0 0.0
  %12172 = vmatprep.subr.mxu0 0.0
  %12173 = vmatpush2.msra.mxu0 0.0
  %12174 = vmatprep.subr.mxu0 0.0
  %12175 = vmatpush2.msra.mxu0 0.0
  %12176 = vmatprep.subr.mxu0 0.0
  %12177 = vmatpush2.msra.mxu0 0.0
  %12178 = vmatprep.subr.mxu0 0.0
  %12179 = vmatpush2.msra.mxu0 0.0
  %12180 = vmatprep.subr.mxu0 0.0
  %12181 = vmatpush2.msra.mxu0 0.0
  %12182 = vmatprep.subr.mxu0 0.0
  %12183 = vmatpush2.msra.mxu0 0.0
  %12184 = vmatprep.subr.mxu0 0.0
  %12185 = vmatpush2.msra.mxu0 0.0
  %12186 = vmatprep.subr.mxu0 0.0
  %12187 = vmatpush2.msra.mxu0 0.0
  %12188 = vmatprep.subr.mxu0 0.0
  %12189 = vmatpush2.msra.mxu0 0.0
  %12190 = vmatprep.subr.mxu0 0.0
  %12191 = vmatpush2.msra.mxu0 0.0
  %12192 = vmatprep.subr.mxu0 0.0
  %12193 = vmatpush2.msra.mxu0 0.0
  %12194 = vmatprep.subr.mxu0 0.0
  %12195 = vmatpush2.msra.mxu0 0.0
  %12196 = vmatprep.subr.mxu0 0.0
  %12197 = vmatpush2.msra.mxu0 0.0
  %12198 = vmatprep.subr.mxu0 0.0
  %12199 = vmatpush2.msra.mxu0 0.0
  %12200 = vmatprep.mubr.f32.mxu0 0.0
  %12201 = vmatmul.mubr.f32.gmra.mxu0 %v12125
  %v12202 = vpop.f32.mrf.mxu0
  %v12203 = vadd.f32 %v11806, %v12202
  %v12204 = vpop.f32.mrf.mxu0
  %12205 = vmatprep.mubr.f32.mxu0 0.0
  %12206 = vmatmul.mubr.f32.gmra.mxu0 %v12128
  %v12207 = vpop.f32.mrf.mxu0
  %v12208 = vadd.f32 %v11811, %v12207
  %v12209 = vpop.f32.mrf.mxu0
  %12210 = vmatprep.mubr.f32.mxu0 0.0
  %12211 = vmatmul.mubr.f32.gmra.mxu0 %v11548
  %v12212 = vpop.f32.mrf.mxu0
  %v12213 = vadd.f32 %v11816, %v12212
  %v12214 = vpop.f32.mrf.mxu0
  %12215 = vmatprep.mubr.f32.mxu0 0.0
  %12216 = vmatmul.mubr.f32.gmra.mxu0 %v11551
  %v12217 = vpop.f32.mrf.mxu0
  %v12218 = vadd.f32 %v11821, %v12217
  %v12219 = vpop.f32.mrf.mxu0
  %12220 = vmatprep.mubr.f32.mxu0 0.0
  %12221 = vmatmul.mubr.f32.gmra.mxu0 %v11554
  %v12222 = vpop.f32.mrf.mxu0
  %v12223 = vadd.f32 %v11826, %v12222
  %v12224 = vpop.f32.mrf.mxu0
  %12225 = vmatprep.mubr.f32.mxu0 0.0
  %12226 = vmatmul.mubr.f32.gmra.mxu0 %v11557
  %v12227 = vpop.f32.mrf.mxu0
  %v12228 = vadd.f32 %v11831, %v12227
  %v12229 = vpop.f32.mrf.mxu0
  %12230 = vmatprep.mubr.f32.mxu0 0.0
  %12231 = vmatmul.mubr.f32.gmra.mxu0 %v11560
  %v12232 = vpop.f32.mrf.mxu0
  %v12233 = vadd.f32 %v11836, %v12232
  %v12234 = vpop.f32.mrf.mxu0
  %12235 = vmatprep.mubr.f32.mxu0 0.0
  %12236 = vmatmul.mubr.f32.gmra.mxu0 %v11563
  %v12237 = vpop.f32.mrf.mxu0
  %v12238 = vadd.f32 %v11841, %v12237
  %v12239 = vpop.f32.mrf.mxu0
  %12240 = vmatprep.mubr.f32.mxu0 0.0
  %12241 = vmatmul.mubr.f32.gmra.mxu0 %v11566
  %v12242 = vpop.f32.mrf.mxu0
  %v12243 = vadd.f32 %v11846, %v12242
  %v12244 = vpop.f32.mrf.mxu0
  %12245 = vmatprep.mubr.f32.mxu0 0.0
  %12246 = vmatmul.mubr.f32.gmra.mxu0 %v11569
  %v12247 = vpop.f32.mrf.mxu0
  %v12248 = vadd.f32 %v11851, %v12247
  %v12249 = vpop.f32.mrf.mxu0
  %12250 = vmatprep.mubr.f32.mxu0 0.0
  %12251 = vmatmul.mubr.f32.gmra.mxu0 %v11572
  %v12252 = vpop.f32.mrf.mxu0
  %v12253 = vadd.f32 %v11856, %v12252
  %v12254 = vpop.f32.mrf.mxu0
  %12255 = vmatprep.mubr.f32.mxu0 0.0
  %12256 = vmatmul.mubr.f32.gmra.mxu0 %v11575
  %v12257 = vpop.f32.mrf.mxu0
  %v12258 = vadd.f32 %v11861, %v12257
  %v12259 = vpop.f32.mrf.mxu0
  %12260 = vmatprep.mubr.f32.mxu0 0.0
  %12261 = vmatmul.mubr.f32.gmra.mxu0 %v11578
  %v12262 = vpop.f32.mrf.mxu0
  %v12263 = vadd.f32 %v11866, %v12262
  %v12264 = vpop.f32.mrf.mxu0
  %12265 = vmatprep.mubr.f32.mxu0 0.0
  %12266 = vmatmul.mubr.f32.gmra.mxu0 %v11581
  %v12267 = vpop.f32.mrf.mxu0
  %v12268 = vadd.f32 %v11871, %v12267
  %v12269 = vpop.f32.mrf.mxu0
  %12270 = vmatprep.mubr.f32.mxu0 0.0
  %12271 = vmatmul.mubr.f32.gmra.mxu0 %v11584
  %v12272 = vpop.f32.mrf.mxu0
  %v12273 = vadd.f32 %v11876, %v12272
  %v12274 = vpop.f32.mrf.mxu0
  %12275 = vmatprep.mubr.f32.mxu0 0.0
  %12276 = vmatmul.mubr.f32.gmra.mxu0 %v11587
  %v12277 = vpop.f32.mrf.mxu0
  %v12278 = vadd.f32 %v11881, %v12277
  %v12279 = vpop.f32.mrf.mxu0
  %12280 = vmatprep.mubr.f32.mxu0 0.0
  %12281 = vmatmul.mubr.f32.gmra.mxu0 %v11590
  %v12282 = vpop.f32.mrf.mxu0
  %v12283 = vadd.f32 %v11886, %v12282
  %v12284 = vpop.f32.mrf.mxu0
  %12285 = vmatprep.mubr.f32.mxu0 0.0
  %12286 = vmatmul.mubr.f32.gmra.mxu0 %v11593
  %v12287 = vpop.f32.mrf.mxu0
  %v12288 = vadd.f32 %v11891, %v12287
  %v12289 = vpop.f32.mrf.mxu0
  %12290 = vmatprep.mubr.f32.mxu0 0.0
  %12291 = vmatmul.mubr.f32.gmra.mxu0 %v11596
  %v12292 = vpop.f32.mrf.mxu0
  %v12293 = vadd.f32 %v11896, %v12292
  %v12294 = vpop.f32.mrf.mxu0
  %12295 = vmatprep.mubr.f32.mxu0 0.0
  %12296 = vmatmul.mubr.f32.gmra.mxu0 %v11599
  %v12297 = vpop.f32.mrf.mxu0
  %v12298 = vadd.f32 %v11901, %v12297
  %v12299 = vpop.f32.mrf.mxu0
  %12300 = vmatprep.mubr.f32.mxu0 0.0
  %12301 = vmatmul.mubr.f32.gmra.mxu0 %v11602
  %v12302 = vpop.f32.mrf.mxu0
  %v12303 = vadd.f32 %v11906, %v12302
  %v12304 = vpop.f32.mrf.mxu0
  %12305 = vmatprep.mubr.f32.mxu0 0.0
  %12306 = vmatmul.mubr.f32.gmra.mxu0 %v11605
  %v12307 = vpop.f32.mrf.mxu0
  %v12308 = vadd.f32 %v11911, %v12307
  %v12309 = vpop.f32.mrf.mxu0
  %12310 = vmatprep.mubr.f32.mxu0 0.0
  %12311 = vmatmul.mubr.f32.gmra.mxu0 %v11608
  %v12312 = vpop.f32.mrf.mxu0
  %v12313 = vadd.f32 %v11916, %v12312
  %v12314 = vpop.f32.mrf.mxu0
  %12315 = vmatprep.mubr.f32.mxu0 0.0
  %12316 = vmatmul.mubr.f32.gmra.mxu0 %v11611
  %v12317 = vpop.f32.mrf.mxu0
  %v12318 = vadd.f32 %v11921, %v12317
  %v12319 = vpop.f32.mrf.mxu0
  %12320 = vmatprep.mubr.f32.mxu0 0.0
  %12321 = vmatmul.mubr.f32.gmra.mxu0 %v11614
  %v12322 = vpop.f32.mrf.mxu0
  %v12323 = vadd.f32 %v11926, %v12322
  %v12324 = vpop.f32.mrf.mxu0
  %12325 = vmatprep.mubr.f32.mxu0 0.0
  %12326 = vmatmul.mubr.f32.gmra.mxu0 %v11617
  %v12327 = vpop.f32.mrf.mxu0
  %v12328 = vadd.f32 %v11931, %v12327
  %v12329 = vpop.f32.mrf.mxu0
  %12330 = vmatprep.mubr.f32.mxu0 0.0
  %12331 = vmatmul.mubr.f32.gmra.mxu0 %v11620
  %v12332 = vpop.f32.mrf.mxu0
  %v12333 = vadd.f32 %v11936, %v12332
  %v12334 = vpop.f32.mrf.mxu0
  %12335 = vmatprep.mubr.f32.mxu0 0.0
  %12336 = vmatmul.mubr.f32.gmra.mxu0 %v11623
  %v12337 = vpop.f32.mrf.mxu0
  %v12338 = vadd.f32 %v11941, %v12337
  %v12339 = vpop.f32.mrf.mxu0
  %12340 = vmatprep.mubr.f32.mxu0 0.0
  %12341 = vmatmul.mubr.f32.gmra.mxu0 %v11626
  %v12342 = vpop.f32.mrf.mxu0
  %v12343 = vadd.f32 %v11946, %v12342
  %v12344 = vpop.f32.mrf.mxu0
  %12345 = vmatprep.mubr.f32.mxu0 0.0
  %12346 = vmatmul.mubr.f32.gmra.mxu0 %v11629
  %v12347 = vpop.f32.mrf.mxu0
  %v12348 = vadd.f32 %v11951, %v12347
  %v12349 = vpop.f32.mrf.mxu0
  %12350 = vmatprep.mubr.f32.mxu0 0.0
  %12351 = vmatmul.mubr.f32.gmra.mxu0 %v11632
  %v12352 = vpop.f32.mrf.mxu0
  %v12353 = vadd.f32 %v11956, %v12352
  %v12354 = vpop.f32.mrf.mxu0
  %12355 = vmatprep.mubr.f32.mxu0 0.0
  %12356 = vmatmul.mubr.f32.gmra.mxu0 %v11635
  %v12357 = vpop.f32.mrf.mxu0
  %v12358 = vadd.f32 %v11961, %v12357
  %v12359 = vpop.f32.mrf.mxu0
  %12360 = vmatprep.mubr.f32.mxu0 0.0
  %12361 = vmatmul.mubr.f32.gmra.mxu0 %v12131
  %v12362 = vpop.f32.mrf.mxu0
  %v12363 = vadd.f32 %v11966, %v12362
  %v12364 = vpop.f32.mrf.mxu0
  %12365 = vmatprep.mubr.f32.mxu0 0.0
  %12366 = vmatmul.mubr.f32.gmra.mxu0 %v12134
  %v12367 = vpop.f32.mrf.mxu0
  %v12368 = vadd.f32 %v11971, %v12367
  %v12369 = vpop.f32.mrf.mxu0
  %12370 = vmatprep.mubr.f32.mxu0 0.0
  %12371 = vmatmul.mubr.f32.gmra.mxu0 %v11644
  %v12372 = vpop.f32.mrf.mxu0
  %v12373 = vadd.f32 %v11976, %v12372
  %v12374 = vpop.f32.mrf.mxu0
  %12375 = vmatprep.mubr.f32.mxu0 0.0
  %12376 = vmatmul.mubr.f32.gmra.mxu0 %v11647
  %v12377 = vpop.f32.mrf.mxu0
  %v12378 = vadd.f32 %v11981, %v12377
  %v12379 = vpop.f32.mrf.mxu0
  %12380 = vmatprep.mubr.f32.mxu0 0.0
  %12381 = vmatmul.mubr.f32.gmra.mxu0 %v11650
  %v12382 = vpop.f32.mrf.mxu0
  %v12383 = vadd.f32 %v11986, %v12382
  %v12384 = vpop.f32.mrf.mxu0
  %12385 = vmatprep.mubr.f32.mxu0 0.0
  %12386 = vmatmul.mubr.f32.gmra.mxu0 %v11653
  %v12387 = vpop.f32.mrf.mxu0
  %v12388 = vadd.f32 %v11991, %v12387
  %v12389 = vpop.f32.mrf.mxu0
  %12390 = vmatprep.mubr.f32.mxu0 0.0
  %12391 = vmatmul.mubr.f32.gmra.mxu0 %v11656
  %v12392 = vpop.f32.mrf.mxu0
  %v12393 = vadd.f32 %v11996, %v12392
  %v12394 = vpop.f32.mrf.mxu0
  %12395 = vmatprep.mubr.f32.mxu0 0.0
  %12396 = vmatmul.mubr.f32.gmra.mxu0 %v11659
  %v12397 = vpop.f32.mrf.mxu0
  %v12398 = vadd.f32 %v12001, %v12397
  %v12399 = vpop.f32.mrf.mxu0
  %12400 = vmatprep.mubr.f32.mxu0 0.0
  %12401 = vmatmul.mubr.f32.gmra.mxu0 %v11662
  %v12402 = vpop.f32.mrf.mxu0
  %v12403 = vadd.f32 %v12006, %v12402
  %v12404 = vpop.f32.mrf.mxu0
  %12405 = vmatprep.mubr.f32.mxu0 0.0
  %12406 = vmatmul.mubr.f32.gmra.mxu0 %v11665
  %v12407 = vpop.f32.mrf.mxu0
  %v12408 = vadd.f32 %v12011, %v12407
  %v12409 = vpop.f32.mrf.mxu0
  %12410 = vmatprep.mubr.f32.mxu0 0.0
  %12411 = vmatmul.mubr.f32.gmra.mxu0 %v11668
  %v12412 = vpop.f32.mrf.mxu0
  %v12413 = vadd.f32 %v12016, %v12412
  %v12414 = vpop.f32.mrf.mxu0
  %12415 = vmatprep.mubr.f32.mxu0 0.0
  %12416 = vmatmul.mubr.f32.gmra.mxu0 %v11671
  %v12417 = vpop.f32.mrf.mxu0
  %v12418 = vadd.f32 %v12021, %v12417
  %v12419 = vpop.f32.mrf.mxu0
  %12420 = vmatprep.mubr.f32.mxu0 0.0
  %12421 = vmatmul.mubr.f32.gmra.mxu0 %v11674
  %v12422 = vpop.f32.mrf.mxu0
  %v12423 = vadd.f32 %v12026, %v12422
  %v12424 = vpop.f32.mrf.mxu0
  %12425 = vmatprep.mubr.f32.mxu0 0.0
  %12426 = vmatmul.mubr.f32.gmra.mxu0 %v11677
  %v12427 = vpop.f32.mrf.mxu0
  %v12428 = vadd.f32 %v12031, %v12427
  %v12429 = vpop.f32.mrf.mxu0
  %12430 = vmatprep.mubr.f32.mxu0 0.0
  %12431 = vmatmul.mubr.f32.gmra.mxu0 %v11680
  %v12432 = vpop.f32.mrf.mxu0
  %v12433 = vadd.f32 %v12036, %v12432
  %v12434 = vpop.f32.mrf.mxu0
  %12435 = vmatprep.mubr.f32.mxu0 0.0
  %12436 = vmatmul.mubr.f32.gmra.mxu0 %v11683
  %v12437 = vpop.f32.mrf.mxu0
  %v12438 = vadd.f32 %v12041, %v12437
  %v12439 = vpop.f32.mrf.mxu0
  %12440 = vmatprep.mubr.f32.mxu0 0.0
  %12441 = vmatmul.mubr.f32.gmra.mxu0 %v11686
  %v12442 = vpop.f32.mrf.mxu0
  %v12443 = vadd.f32 %v12046, %v12442
  %v12444 = vpop.f32.mrf.mxu0
  %12445 = vmatprep.mubr.f32.mxu0 0.0
  %12446 = vmatmul.mubr.f32.gmra.mxu0 %v11689
  %v12447 = vpop.f32.mrf.mxu0
  %v12448 = vadd.f32 %v12051, %v12447
  %v12449 = vpop.f32.mrf.mxu0
  %12450 = vmatprep.mubr.f32.mxu0 0.0
  %12451 = vmatmul.mubr.f32.gmra.mxu0 %v11692
  %v12452 = vpop.f32.mrf.mxu0
  %v12453 = vadd.f32 %v12056, %v12452
  %v12454 = vpop.f32.mrf.mxu0
  %12455 = vmatprep.mubr.f32.mxu0 0.0
  %12456 = vmatmul.mubr.f32.gmra.mxu0 %v11695
  %v12457 = vpop.f32.mrf.mxu0
  %v12458 = vadd.f32 %v12061, %v12457
  %v12459 = vpop.f32.mrf.mxu0
  %12460 = vmatprep.mubr.f32.mxu0 0.0
  %12461 = vmatmul.mubr.f32.gmra.mxu0 %v11698
  %v12462 = vpop.f32.mrf.mxu0
  %v12463 = vadd.f32 %v12066, %v12462
  %v12464 = vpop.f32.mrf.mxu0
  %12465 = vmatprep.mubr.f32.mxu0 0.0
  %12466 = vmatmul.mubr.f32.gmra.mxu0 %v11701
  %v12467 = vpop.f32.mrf.mxu0
  %v12468 = vadd.f32 %v12071, %v12467
  %v12469 = vpop.f32.mrf.mxu0
  %12470 = vmatprep.mubr.f32.mxu0 0.0
  %12471 = vmatmul.mubr.f32.gmra.mxu0 %v11704
  %v12472 = vpop.f32.mrf.mxu0
  %v12473 = vadd.f32 %v12076, %v12472
  %v12474 = vpop.f32.mrf.mxu0
  %12475 = vmatprep.mubr.f32.mxu0 0.0
  %12476 = vmatmul.mubr.f32.gmra.mxu0 %v11707
  %v12477 = vpop.f32.mrf.mxu0
  %v12478 = vadd.f32 %v12081, %v12477
  %v12479 = vpop.f32.mrf.mxu0
  %12480 = vmatprep.mubr.f32.mxu0 0.0
  %12481 = vmatmul.mubr.f32.gmra.mxu0 %v11710
  %v12482 = vpop.f32.mrf.mxu0
  %v12483 = vadd.f32 %v12086, %v12482
  %v12484 = vpop.f32.mrf.mxu0
  %12485 = vmatprep.mubr.f32.mxu0 0.0
  %12486 = vmatmul.mubr.f32.gmra.mxu0 %v11713
  %v12487 = vpop.f32.mrf.mxu0
  %v12488 = vadd.f32 %v12091, %v12487
  %v12489 = vpop.f32.mrf.mxu0
  %12490 = vmatprep.mubr.f32.mxu0 0.0
  %12491 = vmatmul.mubr.f32.gmra.mxu0 %v11716
  %v12492 = vpop.f32.mrf.mxu0
  %v12493 = vadd.f32 %v12096, %v12492
  %v12494 = vpop.f32.mrf.mxu0
  %12495 = vmatprep.mubr.f32.mxu0 0.0
  %12496 = vmatmul.mubr.f32.gmra.mxu0 %v11719
  %v12497 = vpop.f32.mrf.mxu0
  %v12498 = vadd.f32 %v12101, %v12497
  %v12499 = vpop.f32.mrf.mxu0
  %12500 = vmatprep.mubr.f32.mxu0 0.0
  %12501 = vmatmul.mubr.f32.gmra.mxu0 %v11722
  %v12502 = vpop.f32.mrf.mxu0
  %v12503 = vadd.f32 %v12106, %v12502
  %v12504 = vpop.f32.mrf.mxu0
  %12505 = vmatprep.mubr.f32.mxu0 0.0
  %12506 = vmatmul.mubr.f32.gmra.mxu0 %v11725
  %v12507 = vpop.f32.mrf.mxu0
  %v12508 = vadd.f32 %v12111, %v12507
  %v12509 = vpop.f32.mrf.mxu0
  %12510 = vmatprep.mubr.f32.mxu0 0.0
  %12511 = vmatmul.mubr.f32.gmra.mxu0 %v11728
  %v12512 = vpop.f32.mrf.mxu0
  %v12513 = vadd.f32 %v12116, %v12512
  %v12514 = vpop.f32.mrf.mxu0
  %12515 = vmatprep.mubr.f32.mxu0 0.0
  %12516 = vmatmul.mubr.f32.gmra.mxu0 %v11731
  %v12517 = vpop.f32.mrf.mxu0
  %v12518 = vadd.f32 %v12121, %v12517
  %v12519 = vpop.f32.mrf.mxu0
  %12520 = vdwg.mxu0
  %s12521 = scalar_lea.vmem %s13, 192
  %v12522 = vld [vmem:[%s12521] sm:$0xff]
  %v12523 = vld [vmem:[%s12521 + $0x8] sm:$0xff]
  %v12524 = vld [vmem:[%s12521 + $0x10] sm:$0xff]
  %v12525 = vld [vmem:[%s12521 + $0x18] sm:$0xff]
  %v12526 = vld [vmem:[%s12521 + $0x20] sm:$0xff]
  %v12527 = vld [vmem:[%s12521 + $0x28] sm:$0xff]
  %v12528 = vld [vmem:[%s12521 + $0x30] sm:$0xff]
  %v12529 = vld [vmem:[%s12521 + $0x38] sm:$0xff]
  %v12530 = vld [vmem:[%s12521 + $0x40] sm:$0xff]
  %v12531 = vld [vmem:[%s12521 + $0x48] sm:$0xff]
  %v12532 = vld [vmem:[%s12521 + $0x50] sm:$0xff]
  %v12533 = vld [vmem:[%s12521 + $0x58] sm:$0xff]
  %v12535 = vsel %vm4519, %v11484, 0
  %v12538 = vsel %vm4519, %v11485, 0
  %v12541 = vsel %vm4519, %v11520, 0
  %v12544 = vsel %vm4519, %v11521, 0
  %12546 = vmatprep.subr.mxu0 0.0
  %12547 = vmatpush1.msra.mxu0 0.0
  %12548 = vmatprep.subr.mxu0 0.0
  %12549 = vmatpush1.msra.mxu0 0.0
  %12550 = vmatprep.subr.mxu0 0.0
  %12551 = vmatpush1.msra.mxu0 0.0
  %12552 = vmatprep.subr.mxu0 0.0
  %12553 = vmatpush1.msra.mxu0 0.0
  %12554 = vmatprep.subr.mxu0 0.0
  %12555 = vmatpush1.msra.mxu0 %v12533
  %12556 = vmatprep.subr.mxu0 0.0
  %12557 = vmatpush1.msra.mxu0 %v12532
  %12558 = vmatprep.subr.mxu0 0.0
  %12559 = vmatpush1.msra.mxu0 %v12531
  %12560 = vmatprep.subr.mxu0 0.0
  %12561 = vmatpush1.msra.mxu0 %v12530
  %12562 = vmatprep.subr.mxu0 0.0
  %12563 = vmatpush1.msra.mxu0 %v12529
  %12564 = vmatprep.subr.mxu0 0.0
  %12565 = vmatpush1.msra.mxu0 %v12528
  %12566 = vmatprep.subr.mxu0 0.0
  %12567 = vmatpush1.msra.mxu0 %v12527
  %12568 = vmatprep.subr.mxu0 0.0
  %12569 = vmatpush1.msra.mxu0 %v12526
  %12570 = vmatprep.subr.mxu0 0.0
  %12571 = vmatpush1.msra.mxu0 %v12525
  %12572 = vmatprep.subr.mxu0 0.0
  %12573 = vmatpush1.msra.mxu0 %v12524
  %12574 = vmatprep.subr.mxu0 0.0
  %12575 = vmatpush1.msra.mxu0 %v12523
  %12576 = vmatprep.subr.mxu0 0.0
  %12577 = vmatpush1.msra.mxu0 %v12522
  %12578 = vmatprep.subr.mxu0 0.0
  %12579 = vmatpush2.msra.mxu0 0.0
  %12580 = vmatprep.subr.mxu0 0.0
  %12581 = vmatpush2.msra.mxu0 0.0
  %12582 = vmatprep.subr.mxu0 0.0
  %12583 = vmatpush2.msra.mxu0 0.0
  %12584 = vmatprep.subr.mxu0 0.0
  %12585 = vmatpush2.msra.mxu0 0.0
  %12586 = vmatprep.subr.mxu0 0.0
  %12587 = vmatpush2.msra.mxu0 0.0
  %12588 = vmatprep.subr.mxu0 0.0
  %12589 = vmatpush2.msra.mxu0 0.0
  %12590 = vmatprep.subr.mxu0 0.0
  %12591 = vmatpush2.msra.mxu0 0.0
  %12592 = vmatprep.subr.mxu0 0.0
  %12593 = vmatpush2.msra.mxu0 0.0
  %12594 = vmatprep.subr.mxu0 0.0
  %12595 = vmatpush2.msra.mxu0 0.0
  %12596 = vmatprep.subr.mxu0 0.0
  %12597 = vmatpush2.msra.mxu0 0.0
  %12598 = vmatprep.subr.mxu0 0.0
  %12599 = vmatpush2.msra.mxu0 0.0
  %12600 = vmatprep.subr.mxu0 0.0
  %12601 = vmatpush2.msra.mxu0 0.0
  %12602 = vmatprep.subr.mxu0 0.0
  %12603 = vmatpush2.msra.mxu0 0.0
  %12604 = vmatprep.subr.mxu0 0.0
  %12605 = vmatpush2.msra.mxu0 0.0
  %12606 = vmatprep.subr.mxu0 0.0
  %12607 = vmatpush2.msra.mxu0 0.0
  %12608 = vmatprep.subr.mxu0 0.0
  %12609 = vmatpush2.msra.mxu0 0.0
  %12610 = vmatprep.mubr.f32.mxu0 0.0
  %12611 = vmatmul.mubr.f32.gmra.mxu0 %v11554
  %v12612 = vpop.f32.mrf.mxu0
  %v12613 = vadd.f32 0.0, %v12612
  %v12614 = vpop.f32.mrf.mxu0
  %12615 = vmatprep.mubr.f32.mxu0 0.0
  %12616 = vmatmul.mubr.f32.gmra.mxu0 %v11557
  %v12617 = vpop.f32.mrf.mxu0
  %v12618 = vadd.f32 0.0, %v12617
  %v12619 = vpop.f32.mrf.mxu0
  %12620 = vmatprep.mubr.f32.mxu0 0.0
  %12621 = vmatmul.mubr.f32.gmra.mxu0 %v11560
  %v12622 = vpop.f32.mrf.mxu0
  %v12623 = vadd.f32 0.0, %v12622
  %v12624 = vpop.f32.mrf.mxu0
  %12625 = vmatprep.mubr.f32.mxu0 0.0
  %12626 = vmatmul.mubr.f32.gmra.mxu0 %v11563
  %v12627 = vpop.f32.mrf.mxu0
  %v12628 = vadd.f32 0.0, %v12627
  %v12629 = vpop.f32.mrf.mxu0
  %12630 = vmatprep.mubr.f32.mxu0 0.0
  %12631 = vmatmul.mubr.f32.gmra.mxu0 %v11566
  %v12632 = vpop.f32.mrf.mxu0
  %v12633 = vadd.f32 0.0, %v12632
  %v12634 = vpop.f32.mrf.mxu0
  %12635 = vmatprep.mubr.f32.mxu0 0.0
  %12636 = vmatmul.mubr.f32.gmra.mxu0 %v11569
  %v12637 = vpop.f32.mrf.mxu0
  %v12638 = vadd.f32 0.0, %v12637
  %v12639 = vpop.f32.mrf.mxu0
  %12640 = vmatprep.mubr.f32.mxu0 0.0
  %12641 = vmatmul.mubr.f32.gmra.mxu0 %v11572
  %v12642 = vpop.f32.mrf.mxu0
  %v12643 = vadd.f32 0.0, %v12642
  %v12644 = vpop.f32.mrf.mxu0
  %12645 = vmatprep.mubr.f32.mxu0 0.0
  %12646 = vmatmul.mubr.f32.gmra.mxu0 %v11575
  %v12647 = vpop.f32.mrf.mxu0
  %v12648 = vadd.f32 0.0, %v12647
  %v12649 = vpop.f32.mrf.mxu0
  %12650 = vmatprep.mubr.f32.mxu0 0.0
  %12651 = vmatmul.mubr.f32.gmra.mxu0 %v11578
  %v12652 = vpop.f32.mrf.mxu0
  %v12653 = vadd.f32 0.0, %v12652
  %v12654 = vpop.f32.mrf.mxu0
  %12655 = vmatprep.mubr.f32.mxu0 0.0
  %12656 = vmatmul.mubr.f32.gmra.mxu0 %v11581
  %v12657 = vpop.f32.mrf.mxu0
  %v12658 = vadd.f32 0.0, %v12657
  %v12659 = vpop.f32.mrf.mxu0
  %12660 = vmatprep.mubr.f32.mxu0 0.0
  %12661 = vmatmul.mubr.f32.gmra.mxu0 %v11584
  %v12662 = vpop.f32.mrf.mxu0
  %v12663 = vadd.f32 0.0, %v12662
  %v12664 = vpop.f32.mrf.mxu0
  %12665 = vmatprep.mubr.f32.mxu0 0.0
  %12666 = vmatmul.mubr.f32.gmra.mxu0 %v11587
  %v12667 = vpop.f32.mrf.mxu0
  %v12668 = vadd.f32 0.0, %v12667
  %v12669 = vpop.f32.mrf.mxu0
  %12670 = vmatprep.mubr.f32.mxu0 0.0
  %12671 = vmatmul.mubr.f32.gmra.mxu0 %v11590
  %v12672 = vpop.f32.mrf.mxu0
  %v12673 = vadd.f32 0.0, %v12672
  %v12674 = vpop.f32.mrf.mxu0
  %12675 = vmatprep.mubr.f32.mxu0 0.0
  %12676 = vmatmul.mubr.f32.gmra.mxu0 %v11593
  %v12677 = vpop.f32.mrf.mxu0
  %v12678 = vadd.f32 0.0, %v12677
  %v12679 = vpop.f32.mrf.mxu0
  %12680 = vmatprep.mubr.f32.mxu0 0.0
  %12681 = vmatmul.mubr.f32.gmra.mxu0 %v11596
  %v12682 = vpop.f32.mrf.mxu0
  %v12683 = vadd.f32 0.0, %v12682
  %v12684 = vpop.f32.mrf.mxu0
  %12685 = vmatprep.mubr.f32.mxu0 0.0
  %12686 = vmatmul.mubr.f32.gmra.mxu0 %v11599
  %v12687 = vpop.f32.mrf.mxu0
  %v12688 = vadd.f32 0.0, %v12687
  %v12689 = vpop.f32.mrf.mxu0
  %12690 = vmatprep.mubr.f32.mxu0 0.0
  %12691 = vmatmul.mubr.f32.gmra.mxu0 %v11602
  %v12692 = vpop.f32.mrf.mxu0
  %v12693 = vadd.f32 0.0, %v12692
  %v12694 = vpop.f32.mrf.mxu0
  %12695 = vmatprep.mubr.f32.mxu0 0.0
  %12696 = vmatmul.mubr.f32.gmra.mxu0 %v11605
  %v12697 = vpop.f32.mrf.mxu0
  %v12698 = vadd.f32 0.0, %v12697
  %v12699 = vpop.f32.mrf.mxu0
  %12700 = vmatprep.mubr.f32.mxu0 0.0
  %12701 = vmatmul.mubr.f32.gmra.mxu0 %v11608
  %v12702 = vpop.f32.mrf.mxu0
  %v12703 = vadd.f32 0.0, %v12702
  %v12704 = vpop.f32.mrf.mxu0
  %12705 = vmatprep.mubr.f32.mxu0 0.0
  %12706 = vmatmul.mubr.f32.gmra.mxu0 %v11611
  %v12707 = vpop.f32.mrf.mxu0
  %v12708 = vadd.f32 0.0, %v12707
  %v12709 = vpop.f32.mrf.mxu0
  %12710 = vmatprep.mubr.f32.mxu0 0.0
  %12711 = vmatmul.mubr.f32.gmra.mxu0 %v11614
  %v12712 = vpop.f32.mrf.mxu0
  %v12713 = vadd.f32 0.0, %v12712
  %v12714 = vpop.f32.mrf.mxu0
  %12715 = vmatprep.mubr.f32.mxu0 0.0
  %12716 = vmatmul.mubr.f32.gmra.mxu0 %v11617
  %v12717 = vpop.f32.mrf.mxu0
  %v12718 = vadd.f32 0.0, %v12717
  %v12719 = vpop.f32.mrf.mxu0
  %12720 = vmatprep.mubr.f32.mxu0 0.0
  %12721 = vmatmul.mubr.f32.gmra.mxu0 %v11620
  %v12722 = vpop.f32.mrf.mxu0
  %v12723 = vadd.f32 0.0, %v12722
  %v12724 = vpop.f32.mrf.mxu0
  %12725 = vmatprep.mubr.f32.mxu0 0.0
  %12726 = vmatmul.mubr.f32.gmra.mxu0 %v11623
  %v12727 = vpop.f32.mrf.mxu0
  %v12728 = vadd.f32 0.0, %v12727
  %v12729 = vpop.f32.mrf.mxu0
  %12730 = vmatprep.mubr.f32.mxu0 0.0
  %12731 = vmatmul.mubr.f32.gmra.mxu0 %v11626
  %v12732 = vpop.f32.mrf.mxu0
  %v12733 = vadd.f32 0.0, %v12732
  %v12734 = vpop.f32.mrf.mxu0
  %12735 = vmatprep.mubr.f32.mxu0 0.0
  %12736 = vmatmul.mubr.f32.gmra.mxu0 %v11629
  %v12737 = vpop.f32.mrf.mxu0
  %v12738 = vadd.f32 0.0, %v12737
  %v12739 = vpop.f32.mrf.mxu0
  %12740 = vmatprep.mubr.f32.mxu0 0.0
  %12741 = vmatmul.mubr.f32.gmra.mxu0 %v11632
  %v12742 = vpop.f32.mrf.mxu0
  %v12743 = vadd.f32 0.0, %v12742
  %v12744 = vpop.f32.mrf.mxu0
  %12745 = vmatprep.mubr.f32.mxu0 0.0
  %12746 = vmatmul.mubr.f32.gmra.mxu0 %v11635
  %v12747 = vpop.f32.mrf.mxu0
  %v12748 = vadd.f32 0.0, %v12747
  %v12749 = vpop.f32.mrf.mxu0
  %12750 = vmatprep.mubr.f32.mxu0 0.0
  %12751 = vmatmul.mubr.f32.gmra.mxu0 %v11638
  %v12752 = vpop.f32.mrf.mxu0
  %v12753 = vadd.f32 0.0, %v12752
  %v12754 = vpop.f32.mrf.mxu0
  %12755 = vmatprep.mubr.f32.mxu0 0.0
  %12756 = vmatmul.mubr.f32.gmra.mxu0 %v11641
  %v12757 = vpop.f32.mrf.mxu0
  %v12758 = vadd.f32 0.0, %v12757
  %v12759 = vpop.f32.mrf.mxu0
  %12760 = vmatprep.mubr.f32.mxu0 0.0
  %12761 = vmatmul.mubr.f32.gmra.mxu0 %v12535
  %v12762 = vpop.f32.mrf.mxu0
  %v12763 = vadd.f32 0.0, %v12762
  %v12764 = vpop.f32.mrf.mxu0
  %12765 = vmatprep.mubr.f32.mxu0 0.0
  %12766 = vmatmul.mubr.f32.gmra.mxu0 %v12538
  %v12767 = vpop.f32.mrf.mxu0
  %v12768 = vadd.f32 0.0, %v12767
  %v12769 = vpop.f32.mrf.mxu0
  %12770 = vmatprep.mubr.f32.mxu0 0.0
  %12771 = vmatmul.mubr.f32.gmra.mxu0 %v11650
  %v12772 = vpop.f32.mrf.mxu0
  %v12773 = vadd.f32 0.0, %v12772
  %v12774 = vpop.f32.mrf.mxu0
  %12775 = vmatprep.mubr.f32.mxu0 0.0
  %12776 = vmatmul.mubr.f32.gmra.mxu0 %v11653
  %v12777 = vpop.f32.mrf.mxu0
  %v12778 = vadd.f32 0.0, %v12777
  %v12779 = vpop.f32.mrf.mxu0
  %12780 = vmatprep.mubr.f32.mxu0 0.0
  %12781 = vmatmul.mubr.f32.gmra.mxu0 %v11656
  %v12782 = vpop.f32.mrf.mxu0
  %v12783 = vadd.f32 0.0, %v12782
  %v12784 = vpop.f32.mrf.mxu0
  %12785 = vmatprep.mubr.f32.mxu0 0.0
  %12786 = vmatmul.mubr.f32.gmra.mxu0 %v11659
  %v12787 = vpop.f32.mrf.mxu0
  %v12788 = vadd.f32 0.0, %v12787
  %v12789 = vpop.f32.mrf.mxu0
  %12790 = vmatprep.mubr.f32.mxu0 0.0
  %12791 = vmatmul.mubr.f32.gmra.mxu0 %v11662
  %v12792 = vpop.f32.mrf.mxu0
  %v12793 = vadd.f32 0.0, %v12792
  %v12794 = vpop.f32.mrf.mxu0
  %12795 = vmatprep.mubr.f32.mxu0 0.0
  %12796 = vmatmul.mubr.f32.gmra.mxu0 %v11665
  %v12797 = vpop.f32.mrf.mxu0
  %v12798 = vadd.f32 0.0, %v12797
  %v12799 = vpop.f32.mrf.mxu0
  %12800 = vmatprep.mubr.f32.mxu0 0.0
  %12801 = vmatmul.mubr.f32.gmra.mxu0 %v11668
  %v12802 = vpop.f32.mrf.mxu0
  %v12803 = vadd.f32 0.0, %v12802
  %v12804 = vpop.f32.mrf.mxu0
  %12805 = vmatprep.mubr.f32.mxu0 0.0
  %12806 = vmatmul.mubr.f32.gmra.mxu0 %v11671
  %v12807 = vpop.f32.mrf.mxu0
  %v12808 = vadd.f32 0.0, %v12807
  %v12809 = vpop.f32.mrf.mxu0
  %12810 = vmatprep.mubr.f32.mxu0 0.0
  %12811 = vmatmul.mubr.f32.gmra.mxu0 %v11674
  %v12812 = vpop.f32.mrf.mxu0
  %v12813 = vadd.f32 0.0, %v12812
  %v12814 = vpop.f32.mrf.mxu0
  %12815 = vmatprep.mubr.f32.mxu0 0.0
  %12816 = vmatmul.mubr.f32.gmra.mxu0 %v11677
  %v12817 = vpop.f32.mrf.mxu0
  %v12818 = vadd.f32 0.0, %v12817
  %v12819 = vpop.f32.mrf.mxu0
  %12820 = vmatprep.mubr.f32.mxu0 0.0
  %12821 = vmatmul.mubr.f32.gmra.mxu0 %v11680
  %v12822 = vpop.f32.mrf.mxu0
  %v12823 = vadd.f32 0.0, %v12822
  %v12824 = vpop.f32.mrf.mxu0
  %12825 = vmatprep.mubr.f32.mxu0 0.0
  %12826 = vmatmul.mubr.f32.gmra.mxu0 %v11683
  %v12827 = vpop.f32.mrf.mxu0
  %v12828 = vadd.f32 0.0, %v12827
  %v12829 = vpop.f32.mrf.mxu0
  %12830 = vmatprep.mubr.f32.mxu0 0.0
  %12831 = vmatmul.mubr.f32.gmra.mxu0 %v11686
  %v12832 = vpop.f32.mrf.mxu0
  %v12833 = vadd.f32 0.0, %v12832
  %v12834 = vpop.f32.mrf.mxu0
  %12835 = vmatprep.mubr.f32.mxu0 0.0
  %12836 = vmatmul.mubr.f32.gmra.mxu0 %v11689
  %v12837 = vpop.f32.mrf.mxu0
  %v12838 = vadd.f32 0.0, %v12837
  %v12839 = vpop.f32.mrf.mxu0
  %12840 = vmatprep.mubr.f32.mxu0 0.0
  %12841 = vmatmul.mubr.f32.gmra.mxu0 %v11692
  %v12842 = vpop.f32.mrf.mxu0
  %v12843 = vadd.f32 0.0, %v12842
  %v12844 = vpop.f32.mrf.mxu0
  %12845 = vmatprep.mubr.f32.mxu0 0.0
  %12846 = vmatmul.mubr.f32.gmra.mxu0 %v11695
  %v12847 = vpop.f32.mrf.mxu0
  %v12848 = vadd.f32 0.0, %v12847
  %v12849 = vpop.f32.mrf.mxu0
  %12850 = vmatprep.mubr.f32.mxu0 0.0
  %12851 = vmatmul.mubr.f32.gmra.mxu0 %v11698
  %v12852 = vpop.f32.mrf.mxu0
  %v12853 = vadd.f32 0.0, %v12852
  %v12854 = vpop.f32.mrf.mxu0
  %12855 = vmatprep.mubr.f32.mxu0 0.0
  %12856 = vmatmul.mubr.f32.gmra.mxu0 %v11701
  %v12857 = vpop.f32.mrf.mxu0
  %v12858 = vadd.f32 0.0, %v12857
  %v12859 = vpop.f32.mrf.mxu0
  %12860 = vmatprep.mubr.f32.mxu0 0.0
  %12861 = vmatmul.mubr.f32.gmra.mxu0 %v11704
  %v12862 = vpop.f32.mrf.mxu0
  %v12863 = vadd.f32 0.0, %v12862
  %v12864 = vpop.f32.mrf.mxu0
  %12865 = vmatprep.mubr.f32.mxu0 0.0
  %12866 = vmatmul.mubr.f32.gmra.mxu0 %v11707
  %v12867 = vpop.f32.mrf.mxu0
  %v12868 = vadd.f32 0.0, %v12867
  %v12869 = vpop.f32.mrf.mxu0
  %12870 = vmatprep.mubr.f32.mxu0 0.0
  %12871 = vmatmul.mubr.f32.gmra.mxu0 %v11710
  %v12872 = vpop.f32.mrf.mxu0
  %v12873 = vadd.f32 0.0, %v12872
  %v12874 = vpop.f32.mrf.mxu0
  %12875 = vmatprep.mubr.f32.mxu0 0.0
  %12876 = vmatmul.mubr.f32.gmra.mxu0 %v11713
  %v12877 = vpop.f32.mrf.mxu0
  %v12878 = vadd.f32 0.0, %v12877
  %v12879 = vpop.f32.mrf.mxu0
  %12880 = vmatprep.mubr.f32.mxu0 0.0
  %12881 = vmatmul.mubr.f32.gmra.mxu0 %v11716
  %v12882 = vpop.f32.mrf.mxu0
  %v12883 = vadd.f32 0.0, %v12882
  %v12884 = vpop.f32.mrf.mxu0
  %12885 = vmatprep.mubr.f32.mxu0 0.0
  %12886 = vmatmul.mubr.f32.gmra.mxu0 %v11719
  %v12887 = vpop.f32.mrf.mxu0
  %v12888 = vadd.f32 0.0, %v12887
  %v12889 = vpop.f32.mrf.mxu0
  %12890 = vmatprep.mubr.f32.mxu0 0.0
  %12891 = vmatmul.mubr.f32.gmra.mxu0 %v11722
  %v12892 = vpop.f32.mrf.mxu0
  %v12893 = vadd.f32 0.0, %v12892
  %v12894 = vpop.f32.mrf.mxu0
  %12895 = vmatprep.mubr.f32.mxu0 0.0
  %12896 = vmatmul.mubr.f32.gmra.mxu0 %v11725
  %v12897 = vpop.f32.mrf.mxu0
  %v12898 = vadd.f32 0.0, %v12897
  %v12899 = vpop.f32.mrf.mxu0
  %12900 = vmatprep.mubr.f32.mxu0 0.0
  %12901 = vmatmul.mubr.f32.gmra.mxu0 %v11728
  %v12902 = vpop.f32.mrf.mxu0
  %v12903 = vadd.f32 0.0, %v12902
  %v12904 = vpop.f32.mrf.mxu0
  %12905 = vmatprep.mubr.f32.mxu0 0.0
  %12906 = vmatmul.mubr.f32.gmra.mxu0 %v11731
  %v12907 = vpop.f32.mrf.mxu0
  %v12908 = vadd.f32 0.0, %v12907
  %v12909 = vpop.f32.mrf.mxu0
  %12910 = vmatprep.mubr.f32.mxu0 0.0
  %12911 = vmatmul.mubr.f32.gmra.mxu0 %v11734
  %v12912 = vpop.f32.mrf.mxu0
  %v12913 = vadd.f32 0.0, %v12912
  %v12914 = vpop.f32.mrf.mxu0
  %12915 = vmatprep.mubr.f32.mxu0 0.0
  %12916 = vmatmul.mubr.f32.gmra.mxu0 %v11737
  %v12917 = vpop.f32.mrf.mxu0
  %v12918 = vadd.f32 0.0, %v12917
  %v12919 = vpop.f32.mrf.mxu0
  %12920 = vmatprep.mubr.f32.mxu0 0.0
  %12921 = vmatmul.mubr.f32.gmra.mxu0 %v12541
  %v12922 = vpop.f32.mrf.mxu0
  %v12923 = vadd.f32 0.0, %v12922
  %v12924 = vpop.f32.mrf.mxu0
  %12925 = vmatprep.mubr.f32.mxu0 0.0
  %12926 = vmatmul.mubr.f32.gmra.mxu0 %v12544
  %v12927 = vpop.f32.mrf.mxu0
  %v12928 = vadd.f32 0.0, %v12927
  %v12929 = vpop.f32.mrf.mxu0
  %12930 = vdwg.mxu0
  %v12931 = vadd.f32 %v12203, %v12613
  %v12932 = vadd.f32 %v12208, %v12618
  %v12933 = vadd.f32 %v12213, %v12623
  %v12934 = vadd.f32 %v12218, %v12628
  %v12935 = vadd.f32 %v12223, %v12633
  %v12936 = vadd.f32 %v12228, %v12638
  %v12937 = vadd.f32 %v12233, %v12643
  %v12938 = vadd.f32 %v12238, %v12648
  %v12939 = vadd.f32 %v12243, %v12653
  %v12940 = vadd.f32 %v12248, %v12658
  %v12941 = vadd.f32 %v12253, %v12663
  %v12942 = vadd.f32 %v12258, %v12668
  %v12943 = vadd.f32 %v12263, %v12673
  %v12944 = vadd.f32 %v12268, %v12678
  %v12945 = vadd.f32 %v12273, %v12683
  %v12946 = vadd.f32 %v12278, %v12688
  %v12947 = vadd.f32 %v12283, %v12693
  %v12948 = vadd.f32 %v12288, %v12698
  %v12949 = vadd.f32 %v12293, %v12703
  %v12950 = vadd.f32 %v12298, %v12708
  %v12951 = vadd.f32 %v12303, %v12713
  %v12952 = vadd.f32 %v12308, %v12718
  %v12953 = vadd.f32 %v12313, %v12723
  %v12954 = vadd.f32 %v12318, %v12728
  %v12955 = vadd.f32 %v12323, %v12733
  %v12956 = vadd.f32 %v12328, %v12738
  %v12957 = vadd.f32 %v12333, %v12743
  %v12958 = vadd.f32 %v12338, %v12748
  %v12959 = vadd.f32 %v12343, %v12753
  %v12960 = vadd.f32 %v12348, %v12758
  %v12961 = vadd.f32 %v12353, %v12763
  %v12962 = vadd.f32 %v12358, %v12768
  %v12963 = vadd.f32 %v12363, %v12773
  %v12964 = vadd.f32 %v12368, %v12778
  %v12965 = vadd.f32 %v12373, %v12783
  %v12966 = vadd.f32 %v12378, %v12788
  %v12967 = vadd.f32 %v12383, %v12793
  %v12968 = vadd.f32 %v12388, %v12798
  %v12969 = vadd.f32 %v12393, %v12803
  %v12970 = vadd.f32 %v12398, %v12808
  %v12971 = vadd.f32 %v12403, %v12813
  %v12972 = vadd.f32 %v12408, %v12818
  %v12973 = vadd.f32 %v12413, %v12823
  %v12974 = vadd.f32 %v12418, %v12828
  %v12975 = vadd.f32 %v12423, %v12833
  %v12976 = vadd.f32 %v12428, %v12838
  %v12977 = vadd.f32 %v12433, %v12843
  %v12978 = vadd.f32 %v12438, %v12848
  %v12979 = vadd.f32 %v12443, %v12853
  %v12980 = vadd.f32 %v12448, %v12858
  %v12981 = vadd.f32 %v12453, %v12863
  %v12982 = vadd.f32 %v12458, %v12868
  %v12983 = vadd.f32 %v12463, %v12873
  %v12984 = vadd.f32 %v12468, %v12878
  %v12985 = vadd.f32 %v12473, %v12883
  %v12986 = vadd.f32 %v12478, %v12888
  %v12987 = vadd.f32 %v12483, %v12893
  %v12988 = vadd.f32 %v12488, %v12898
  %v12989 = vadd.f32 %v12493, %v12903
  %v12990 = vadd.f32 %v12498, %v12908
  %v12991 = vadd.f32 %v12503, %v12913
  %v12992 = vadd.f32 %v12508, %v12918
  %v12993 = vadd.f32 %v12513, %v12923
  %v12994 = vadd.f32 %v12518, %v12928
  %13059 = vrot.lane.b32.xlu0 %v12931, 64
  %v13060 = vpop.permute.xlu0 %13059
  %13061 = vrot.lane.b32.xlu0 %v12932, 64
  %v13062 = vpop.permute.xlu0 %13061
  %13063 = vrot.lane.b32.xlu0 %v12933, 64
  %v13064 = vpop.permute.xlu0 %13063
  %13065 = vrot.lane.b32.xlu0 %v12934, 64
  %v13066 = vpop.permute.xlu0 %13065
  %13067 = vrot.lane.b32.xlu0 %v12935, 64
  %v13068 = vpop.permute.xlu0 %13067
  %13069 = vrot.lane.b32.xlu0 %v12936, 64
  %v13070 = vpop.permute.xlu0 %13069
  %13071 = vrot.lane.b32.xlu0 %v12937, 64
  %v13072 = vpop.permute.xlu0 %13071
  %13073 = vrot.lane.b32.xlu0 %v12938, 64
  %v13074 = vpop.permute.xlu0 %13073
  %13075 = vrot.lane.b32.xlu0 %v12939, 64
  %v13076 = vpop.permute.xlu0 %13075
  %13077 = vrot.lane.b32.xlu0 %v12940, 64
  %v13078 = vpop.permute.xlu0 %13077
  %13079 = vrot.lane.b32.xlu0 %v12941, 64
  %v13080 = vpop.permute.xlu0 %13079
  %13081 = vrot.lane.b32.xlu0 %v12942, 64
  %v13082 = vpop.permute.xlu0 %13081
  %13083 = vrot.lane.b32.xlu0 %v12943, 64
  %v13084 = vpop.permute.xlu0 %13083
  %13085 = vrot.lane.b32.xlu0 %v12944, 64
  %v13086 = vpop.permute.xlu0 %13085
  %13087 = vrot.lane.b32.xlu0 %v12945, 64
  %v13088 = vpop.permute.xlu0 %13087
  %13089 = vrot.lane.b32.xlu0 %v12946, 64
  %v13090 = vpop.permute.xlu0 %13089
  %13091 = vrot.lane.b32.xlu0 %v12947, 64
  %v13092 = vpop.permute.xlu0 %13091
  %13093 = vrot.lane.b32.xlu0 %v12948, 64
  %v13094 = vpop.permute.xlu0 %13093
  %13095 = vrot.lane.b32.xlu0 %v12949, 64
  %v13096 = vpop.permute.xlu0 %13095
  %13097 = vrot.lane.b32.xlu0 %v12950, 64
  %v13098 = vpop.permute.xlu0 %13097
  %13099 = vrot.lane.b32.xlu0 %v12951, 64
  %v13100 = vpop.permute.xlu0 %13099
  %13101 = vrot.lane.b32.xlu0 %v12952, 64
  %v13102 = vpop.permute.xlu0 %13101
  %13103 = vrot.lane.b32.xlu0 %v12953, 64
  %v13104 = vpop.permute.xlu0 %13103
  %13105 = vrot.lane.b32.xlu0 %v12954, 64
  %v13106 = vpop.permute.xlu0 %13105
  %13107 = vrot.lane.b32.xlu0 %v12955, 64
  %v13108 = vpop.permute.xlu0 %13107
  %13109 = vrot.lane.b32.xlu0 %v12956, 64
  %v13110 = vpop.permute.xlu0 %13109
  %13111 = vrot.lane.b32.xlu0 %v12957, 64
  %v13112 = vpop.permute.xlu0 %13111
  %13113 = vrot.lane.b32.xlu0 %v12958, 64
  %v13114 = vpop.permute.xlu0 %13113
  %13115 = vrot.lane.b32.xlu0 %v12959, 64
  %v13116 = vpop.permute.xlu0 %13115
  %13117 = vrot.lane.b32.xlu0 %v12960, 64
  %v13118 = vpop.permute.xlu0 %13117
  %13119 = vrot.lane.b32.xlu0 %v12961, 64
  %v13120 = vpop.permute.xlu0 %13119
  %13121 = vrot.lane.b32.xlu0 %v12962, 64
  %v13122 = vpop.permute.xlu0 %13121
  %13123 = vrot.lane.b32.xlu0 %v12963, 64
  %v13124 = vpop.permute.xlu0 %13123
  %13125 = vrot.lane.b32.xlu0 %v12964, 64
  %v13126 = vpop.permute.xlu0 %13125
  %13127 = vrot.lane.b32.xlu0 %v12965, 64
  %v13128 = vpop.permute.xlu0 %13127
  %13129 = vrot.lane.b32.xlu0 %v12966, 64
  %v13130 = vpop.permute.xlu0 %13129
  %13131 = vrot.lane.b32.xlu0 %v12967, 64
  %v13132 = vpop.permute.xlu0 %13131
  %13133 = vrot.lane.b32.xlu0 %v12968, 64
  %v13134 = vpop.permute.xlu0 %13133
  %13135 = vrot.lane.b32.xlu0 %v12969, 64
  %v13136 = vpop.permute.xlu0 %13135
  %13137 = vrot.lane.b32.xlu0 %v12970, 64
  %v13138 = vpop.permute.xlu0 %13137
  %13139 = vrot.lane.b32.xlu0 %v12971, 64
  %v13140 = vpop.permute.xlu0 %13139
  %13141 = vrot.lane.b32.xlu0 %v12972, 64
  %v13142 = vpop.permute.xlu0 %13141
  %13143 = vrot.lane.b32.xlu0 %v12973, 64
  %v13144 = vpop.permute.xlu0 %13143
  %13145 = vrot.lane.b32.xlu0 %v12974, 64
  %v13146 = vpop.permute.xlu0 %13145
  %13147 = vrot.lane.b32.xlu0 %v12975, 64
  %v13148 = vpop.permute.xlu0 %13147
  %13149 = vrot.lane.b32.xlu0 %v12976, 64
  %v13150 = vpop.permute.xlu0 %13149
  %13151 = vrot.lane.b32.xlu0 %v12977, 64
  %v13152 = vpop.permute.xlu0 %13151
  %13153 = vrot.lane.b32.xlu0 %v12978, 64
  %v13154 = vpop.permute.xlu0 %13153
  %13155 = vrot.lane.b32.xlu0 %v12979, 64
  %v13156 = vpop.permute.xlu0 %13155
  %13157 = vrot.lane.b32.xlu0 %v12980, 64
  %v13158 = vpop.permute.xlu0 %13157
  %13159 = vrot.lane.b32.xlu0 %v12981, 64
  %v13160 = vpop.permute.xlu0 %13159
  %13161 = vrot.lane.b32.xlu0 %v12982, 64
  %v13162 = vpop.permute.xlu0 %13161
  %13163 = vrot.lane.b32.xlu0 %v12983, 64
  %v13164 = vpop.permute.xlu0 %13163
  %13165 = vrot.lane.b32.xlu0 %v12984, 64
  %v13166 = vpop.permute.xlu0 %13165
  %13167 = vrot.lane.b32.xlu0 %v12985, 64
  %v13168 = vpop.permute.xlu0 %13167
  %13169 = vrot.lane.b32.xlu0 %v12986, 64
  %v13170 = vpop.permute.xlu0 %13169
  %13171 = vrot.lane.b32.xlu0 %v12987, 64
  %v13172 = vpop.permute.xlu0 %13171
  %13173 = vrot.lane.b32.xlu0 %v12988, 64
  %v13174 = vpop.permute.xlu0 %13173
  %13175 = vrot.lane.b32.xlu0 %v12989, 64
  %v13176 = vpop.permute.xlu0 %13175
  %13177 = vrot.lane.b32.xlu0 %v12990, 64
  %v13178 = vpop.permute.xlu0 %13177
  %13179 = vrot.lane.b32.xlu0 %v12991, 64
  %v13180 = vpop.permute.xlu0 %13179
  %13181 = vrot.lane.b32.xlu0 %v12992, 64
  %v13182 = vpop.permute.xlu0 %13181
  %13183 = vrot.lane.b32.xlu0 %v12993, 64
  %v13184 = vpop.permute.xlu0 %13183
  %13185 = vrot.lane.b32.xlu0 %v12994, 64
  %v13186 = vpop.permute.xlu0 %13185
  %v13251 = vadd.f32 %v9437, %v13060
  %v13252 = vadd.f32 %v9438, %v13062
  %v13253 = vadd.f32 %v9439, %v13064
  %v13254 = vadd.f32 %v9440, %v13066
  %v13255 = vadd.f32 %v9441, %v13068
  %v13256 = vadd.f32 %v9442, %v13070
  %v13257 = vadd.f32 %v9443, %v13072
  %v13258 = vadd.f32 %v9444, %v13074
  %v13259 = vadd.f32 %v9445, %v13076
  %v13260 = vadd.f32 %v9446, %v13078
  %v13261 = vadd.f32 %v9447, %v13080
  %v13262 = vadd.f32 %v9448, %v13082
  %v13263 = vadd.f32 %v9449, %v13084
  %v13264 = vadd.f32 %v9450, %v13086
  %v13265 = vadd.f32 %v9451, %v13088
  %v13266 = vadd.f32 %v9452, %v13090
  %v13267 = vadd.f32 %v9453, %v13092
  %v13268 = vadd.f32 %v9454, %v13094
  %v13269 = vadd.f32 %v9455, %v13096
  %v13270 = vadd.f32 %v9456, %v13098
  %v13271 = vadd.f32 %v9457, %v13100
  %v13272 = vadd.f32 %v9458, %v13102
  %v13273 = vadd.f32 %v9459, %v13104
  %v13274 = vadd.f32 %v9460, %v13106
  %v13275 = vadd.f32 %v9461, %v13108
  %v13276 = vadd.f32 %v9462, %v13110
  %v13277 = vadd.f32 %v9463, %v13112
  %v13278 = vadd.f32 %v9464, %v13114
  %v13279 = vadd.f32 %v9465, %v13116
  %v13280 = vadd.f32 %v9466, %v13118
  %v13281 = vadd.f32 %v9467, %v13120
  %v13282 = vadd.f32 %v9468, %v13122
  %v13283 = vadd.f32 %v9469, %v13124
  %v13284 = vadd.f32 %v9470, %v13126
  %v13285 = vadd.f32 %v9471, %v13128
  %v13286 = vadd.f32 %v9472, %v13130
  %v13287 = vadd.f32 %v9473, %v13132
  %v13288 = vadd.f32 %v9474, %v13134
  %v13289 = vadd.f32 %v9475, %v13136
  %v13290 = vadd.f32 %v9476, %v13138
  %v13291 = vadd.f32 %v9477, %v13140
  %v13292 = vadd.f32 %v9478, %v13142
  %v13293 = vadd.f32 %v9479, %v13144
  %v13294 = vadd.f32 %v9480, %v13146
  %v13295 = vadd.f32 %v9481, %v13148
  %v13296 = vadd.f32 %v9482, %v13150
  %v13297 = vadd.f32 %v9483, %v13152
  %v13298 = vadd.f32 %v9484, %v13154
  %v13299 = vadd.f32 %v9485, %v13156
  %v13300 = vadd.f32 %v9486, %v13158
  %v13301 = vadd.f32 %v9487, %v13160
  %v13302 = vadd.f32 %v9488, %v13162
  %v13303 = vadd.f32 %v9489, %v13164
  %v13304 = vadd.f32 %v9490, %v13166
  %v13305 = vadd.f32 %v9491, %v13168
  %v13306 = vadd.f32 %v9492, %v13170
  %v13307 = vadd.f32 %v9493, %v13172
  %v13308 = vadd.f32 %v9494, %v13174
  %v13309 = vadd.f32 %v9495, %v13176
  %v13310 = vadd.f32 %v9496, %v13178
  %v13311 = vadd.f32 %v9497, %v13180
  %v13312 = vadd.f32 %v9498, %v13182
  %v13313 = vadd.f32 %v9499, %v13184
  %v13314 = vadd.f32 %v9500, %v13186
  %v13315 = vld [vmem:[%s14] sm:$0x1]
  %v13317 = vlaneseq
  %v13318 = vshrl.u32 %v13317, 7
  %v13319 = vsub.s32 0, %v13318
  %v13320 = vrot.slane %v13315, %v13319
  %13321 = vrot.lane.b32.xlu0 %v13320, 64
  %v13322 = vpop.permute.xlu0 %13321
  %v13324 = vadd.f32 %v13251, %v13322
  %v13325 = vadd.f32 %v13252, %v13322
  %v13326 = vadd.f32 %v13253, %v13322
  %v13327 = vadd.f32 %v13254, %v13322
  %v13328 = vadd.f32 %v13255, %v13322
  %v13329 = vadd.f32 %v13256, %v13322
  %v13330 = vadd.f32 %v13257, %v13322
  %v13331 = vadd.f32 %v13258, %v13322
  %v13332 = vadd.f32 %v13259, %v13322
  %v13333 = vadd.f32 %v13260, %v13322
  %v13334 = vadd.f32 %v13261, %v13322
  %v13335 = vadd.f32 %v13262, %v13322
  %v13336 = vadd.f32 %v13263, %v13322
  %v13337 = vadd.f32 %v13264, %v13322
  %v13338 = vadd.f32 %v13265, %v13322
  %v13339 = vadd.f32 %v13266, %v13322
  %v13340 = vadd.f32 %v13267, %v13322
  %v13341 = vadd.f32 %v13268, %v13322
  %v13342 = vadd.f32 %v13269, %v13322
  %v13343 = vadd.f32 %v13270, %v13322
  %v13344 = vadd.f32 %v13271, %v13322
  %v13345 = vadd.f32 %v13272, %v13322
  %v13346 = vadd.f32 %v13273, %v13322
  %v13347 = vadd.f32 %v13274, %v13322
  %v13348 = vadd.f32 %v13275, %v13322
  %v13349 = vadd.f32 %v13276, %v13322
  %v13350 = vadd.f32 %v13277, %v13322
  %v13351 = vadd.f32 %v13278, %v13322
  %v13352 = vadd.f32 %v13279, %v13322
  %v13353 = vadd.f32 %v13280, %v13322
  %v13354 = vadd.f32 %v13281, %v13322
  %v13355 = vadd.f32 %v13282, %v13322
  %v13356 = vadd.f32 %v13283, %v13322
  %v13357 = vadd.f32 %v13284, %v13322
  %v13358 = vadd.f32 %v13285, %v13322
  %v13359 = vadd.f32 %v13286, %v13322
  %v13360 = vadd.f32 %v13287, %v13322
  %v13361 = vadd.f32 %v13288, %v13322
  %v13362 = vadd.f32 %v13289, %v13322
  %v13363 = vadd.f32 %v13290, %v13322
  %v13364 = vadd.f32 %v13291, %v13322
  %v13365 = vadd.f32 %v13292, %v13322
  %v13366 = vadd.f32 %v13293, %v13322
  %v13367 = vadd.f32 %v13294, %v13322
  %v13368 = vadd.f32 %v13295, %v13322
  %v13369 = vadd.f32 %v13296, %v13322
  %v13370 = vadd.f32 %v13297, %v13322
  %v13371 = vadd.f32 %v13298, %v13322
  %v13372 = vadd.f32 %v13299, %v13322
  %v13373 = vadd.f32 %v13300, %v13322
  %v13374 = vadd.f32 %v13301, %v13322
  %v13375 = vadd.f32 %v13302, %v13322
  %v13376 = vadd.f32 %v13303, %v13322
  %v13377 = vadd.f32 %v13304, %v13322
  %v13378 = vadd.f32 %v13305, %v13322
  %v13379 = vadd.f32 %v13306, %v13322
  %v13380 = vadd.f32 %v13307, %v13322
  %v13381 = vadd.f32 %v13308, %v13322
  %v13382 = vadd.f32 %v13309, %v13322
  %v13383 = vadd.f32 %v13310, %v13322
  %v13384 = vadd.f32 %v13311, %v13322
  %v13385 = vadd.f32 %v13312, %v13322
  %v13386 = vadd.f32 %v13313, %v13322
  %v13387 = vadd.f32 %v13314, %v13322
  %13452 = vrot.lane.b32.xlu0 %v13324, 64
  %v13453 = vpop.permute.xlu0 %13452
  %13454 = vrot.lane.b32.xlu0 %v13325, 64
  %v13455 = vpop.permute.xlu0 %13454
  %13456 = vrot.lane.b32.xlu0 %v13326, 64
  %v13457 = vpop.permute.xlu0 %13456
  %13458 = vrot.lane.b32.xlu0 %v13327, 64
  %v13459 = vpop.permute.xlu0 %13458
  %13460 = vrot.lane.b32.xlu0 %v13328, 64
  %v13461 = vpop.permute.xlu0 %13460
  %13462 = vrot.lane.b32.xlu0 %v13329, 64
  %v13463 = vpop.permute.xlu0 %13462
  %13464 = vrot.lane.b32.xlu0 %v13330, 64
  %v13465 = vpop.permute.xlu0 %13464
  %13466 = vrot.lane.b32.xlu0 %v13331, 64
  %v13467 = vpop.permute.xlu0 %13466
  %13468 = vrot.lane.b32.xlu0 %v13332, 64
  %v13469 = vpop.permute.xlu0 %13468
  %13470 = vrot.lane.b32.xlu0 %v13333, 64
  %v13471 = vpop.permute.xlu0 %13470
  %13472 = vrot.lane.b32.xlu0 %v13334, 64
  %v13473 = vpop.permute.xlu0 %13472
  %13474 = vrot.lane.b32.xlu0 %v13335, 64
  %v13475 = vpop.permute.xlu0 %13474
  %13476 = vrot.lane.b32.xlu0 %v13336, 64
  %v13477 = vpop.permute.xlu0 %13476
  %13478 = vrot.lane.b32.xlu0 %v13337, 64
  %v13479 = vpop.permute.xlu0 %13478
  %13480 = vrot.lane.b32.xlu0 %v13338, 64
  %v13481 = vpop.permute.xlu0 %13480
  %13482 = vrot.lane.b32.xlu0 %v13339, 64
  %v13483 = vpop.permute.xlu0 %13482
  %13484 = vrot.lane.b32.xlu0 %v13340, 64
  %v13485 = vpop.permute.xlu0 %13484
  %13486 = vrot.lane.b32.xlu0 %v13341, 64
  %v13487 = vpop.permute.xlu0 %13486
  %13488 = vrot.lane.b32.xlu0 %v13342, 64
  %v13489 = vpop.permute.xlu0 %13488
  %13490 = vrot.lane.b32.xlu0 %v13343, 64
  %v13491 = vpop.permute.xlu0 %13490
  %13492 = vrot.lane.b32.xlu0 %v13344, 64
  %v13493 = vpop.permute.xlu0 %13492
  %13494 = vrot.lane.b32.xlu0 %v13345, 64
  %v13495 = vpop.permute.xlu0 %13494
  %13496 = vrot.lane.b32.xlu0 %v13346, 64
  %v13497 = vpop.permute.xlu0 %13496
  %13498 = vrot.lane.b32.xlu0 %v13347, 64
  %v13499 = vpop.permute.xlu0 %13498
  %13500 = vrot.lane.b32.xlu0 %v13348, 64
  %v13501 = vpop.permute.xlu0 %13500
  %13502 = vrot.lane.b32.xlu0 %v13349, 64
  %v13503 = vpop.permute.xlu0 %13502
  %13504 = vrot.lane.b32.xlu0 %v13350, 64
  %v13505 = vpop.permute.xlu0 %13504
  %13506 = vrot.lane.b32.xlu0 %v13351, 64
  %v13507 = vpop.permute.xlu0 %13506
  %13508 = vrot.lane.b32.xlu0 %v13352, 64
  %v13509 = vpop.permute.xlu0 %13508
  %13510 = vrot.lane.b32.xlu0 %v13353, 64
  %v13511 = vpop.permute.xlu0 %13510
  %13512 = vrot.lane.b32.xlu0 %v13354, 64
  %v13513 = vpop.permute.xlu0 %13512
  %13514 = vrot.lane.b32.xlu0 %v13355, 64
  %v13515 = vpop.permute.xlu0 %13514
  %13516 = vrot.lane.b32.xlu0 %v13356, 64
  %v13517 = vpop.permute.xlu0 %13516
  %13518 = vrot.lane.b32.xlu0 %v13357, 64
  %v13519 = vpop.permute.xlu0 %13518
  %13520 = vrot.lane.b32.xlu0 %v13358, 64
  %v13521 = vpop.permute.xlu0 %13520
  %13522 = vrot.lane.b32.xlu0 %v13359, 64
  %v13523 = vpop.permute.xlu0 %13522
  %13524 = vrot.lane.b32.xlu0 %v13360, 64
  %v13525 = vpop.permute.xlu0 %13524
  %13526 = vrot.lane.b32.xlu0 %v13361, 64
  %v13527 = vpop.permute.xlu0 %13526
  %13528 = vrot.lane.b32.xlu0 %v13362, 64
  %v13529 = vpop.permute.xlu0 %13528
  %13530 = vrot.lane.b32.xlu0 %v13363, 64
  %v13531 = vpop.permute.xlu0 %13530
  %13532 = vrot.lane.b32.xlu0 %v13364, 64
  %v13533 = vpop.permute.xlu0 %13532
  %13534 = vrot.lane.b32.xlu0 %v13365, 64
  %v13535 = vpop.permute.xlu0 %13534
  %13536 = vrot.lane.b32.xlu0 %v13366, 64
  %v13537 = vpop.permute.xlu0 %13536
  %13538 = vrot.lane.b32.xlu0 %v13367, 64
  %v13539 = vpop.permute.xlu0 %13538
  %13540 = vrot.lane.b32.xlu0 %v13368, 64
  %v13541 = vpop.permute.xlu0 %13540
  %13542 = vrot.lane.b32.xlu0 %v13369, 64
  %v13543 = vpop.permute.xlu0 %13542
  %13544 = vrot.lane.b32.xlu0 %v13370, 64
  %v13545 = vpop.permute.xlu0 %13544
  %13546 = vrot.lane.b32.xlu0 %v13371, 64
  %v13547 = vpop.permute.xlu0 %13546
  %13548 = vrot.lane.b32.xlu0 %v13372, 64
  %v13549 = vpop.permute.xlu0 %13548
  %13550 = vrot.lane.b32.xlu0 %v13373, 64
  %v13551 = vpop.permute.xlu0 %13550
  %13552 = vrot.lane.b32.xlu0 %v13374, 64
  %v13553 = vpop.permute.xlu0 %13552
  %13554 = vrot.lane.b32.xlu0 %v13375, 64
  %v13555 = vpop.permute.xlu0 %13554
  %13556 = vrot.lane.b32.xlu0 %v13376, 64
  %v13557 = vpop.permute.xlu0 %13556
  %13558 = vrot.lane.b32.xlu0 %v13377, 64
  %v13559 = vpop.permute.xlu0 %13558
  %13560 = vrot.lane.b32.xlu0 %v13378, 64
  %v13561 = vpop.permute.xlu0 %13560
  %13562 = vrot.lane.b32.xlu0 %v13379, 64
  %v13563 = vpop.permute.xlu0 %13562
  %13564 = vrot.lane.b32.xlu0 %v13380, 64
  %v13565 = vpop.permute.xlu0 %13564
  %13566 = vrot.lane.b32.xlu0 %v13381, 64
  %v13567 = vpop.permute.xlu0 %13566
  %13568 = vrot.lane.b32.xlu0 %v13382, 64
  %v13569 = vpop.permute.xlu0 %13568
  %13570 = vrot.lane.b32.xlu0 %v13383, 64
  %v13571 = vpop.permute.xlu0 %13570
  %13572 = vrot.lane.b32.xlu0 %v13384, 64
  %v13573 = vpop.permute.xlu0 %13572
  %13574 = vrot.lane.b32.xlu0 %v13385, 64
  %v13575 = vpop.permute.xlu0 %13574
  %13576 = vrot.lane.b32.xlu0 %v13386, 64
  %v13577 = vpop.permute.xlu0 %13576
  %13578 = vrot.lane.b32.xlu0 %v13387, 64
  %v13579 = vpop.permute.xlu0 %13578
  %vm13644 = vcmask 31744
  %13645 = vst.msk [vmem:[%s15] sm:$0xff] %vm13644, %v13453
  %13646 = vst.msk [vmem:[%s15 + $0x8] sm:$0xff] %vm13644, %v13455
  %13647 = vst.msk [vmem:[%s15 + $0x10] sm:$0xff] %vm13644, %v13457
  %13648 = vst.msk [vmem:[%s15 + $0x18] sm:$0xff] %vm13644, %v13459
  %13649 = vst.msk [vmem:[%s15 + $0x20] sm:$0xff] %vm13644, %v13461
  %13650 = vst.msk [vmem:[%s15 + $0x28] sm:$0xff] %vm13644, %v13463
  %13651 = vst.msk [vmem:[%s15 + $0x30] sm:$0xff] %vm13644, %v13465
  %13652 = vst.msk [vmem:[%s15 + $0x38] sm:$0xff] %vm13644, %v13467
  %13653 = vst.msk [vmem:[%s15 + $0x40] sm:$0xff] %vm13644, %v13469
  %13654 = vst.msk [vmem:[%s15 + $0x48] sm:$0xff] %vm13644, %v13471
  %13655 = vst.msk [vmem:[%s15 + $0x50] sm:$0xff] %vm13644, %v13473
  %13656 = vst.msk [vmem:[%s15 + $0x58] sm:$0xff] %vm13644, %v13475
  %13657 = vst.msk [vmem:[%s15 + $0x60] sm:$0xff] %vm13644, %v13477
  %13658 = vst.msk [vmem:[%s15 + $0x68] sm:$0xff] %vm13644, %v13479
  %13659 = vst.msk [vmem:[%s15 + $0x70] sm:$0xff] %vm13644, %v13481
  %13660 = vst.msk [vmem:[%s15 + $0x78] sm:$0xff] %vm13644, %v13483
  %13661 = vst.msk [vmem:[%s15 + $0x80] sm:$0xff] %vm13644, %v13485
  %13662 = vst.msk [vmem:[%s15 + $0x88] sm:$0xff] %vm13644, %v13487
  %13663 = vst.msk [vmem:[%s15 + $0x90] sm:$0xff] %vm13644, %v13489
  %13664 = vst.msk [vmem:[%s15 + $0x98] sm:$0xff] %vm13644, %v13491
  %13665 = vst.msk [vmem:[%s15 + $0xa0] sm:$0xff] %vm13644, %v13493
  %13666 = vst.msk [vmem:[%s15 + $0xa8] sm:$0xff] %vm13644, %v13495
  %13667 = vst.msk [vmem:[%s15 + $0xb0] sm:$0xff] %vm13644, %v13497
  %13668 = vst.msk [vmem:[%s15 + $0xb8] sm:$0xff] %vm13644, %v13499
  %13669 = vst.msk [vmem:[%s15 + $0xc0] sm:$0xff] %vm13644, %v13501
  %13670 = vst.msk [vmem:[%s15 + $0xc8] sm:$0xff] %vm13644, %v13503
  %13671 = vst.msk [vmem:[%s15 + $0xd0] sm:$0xff] %vm13644, %v13505
  %13672 = vst.msk [vmem:[%s15 + $0xd8] sm:$0xff] %vm13644, %v13507
  %13673 = vst.msk [vmem:[%s15 + $0xe0] sm:$0xff] %vm13644, %v13509
  %13674 = vst.msk [vmem:[%s15 + $0xe8] sm:$0xff] %vm13644, %v13511
  %13675 = vst.msk [vmem:[%s15 + $0xf0] sm:$0xff] %vm13644, %v13513
  %13676 = vst.msk [vmem:[%s15 + $0xf8] sm:$0xff] %vm13644, %v13515
  %13677 = vst.msk [vmem:[%s15 + $0x100] sm:$0xff] %vm13644, %v13517
  %13678 = vst.msk [vmem:[%s15 + $0x108] sm:$0xff] %vm13644, %v13519
  %13679 = vst.msk [vmem:[%s15 + $0x110] sm:$0xff] %vm13644, %v13521
  %13680 = vst.msk [vmem:[%s15 + $0x118] sm:$0xff] %vm13644, %v13523
  %13681 = vst.msk [vmem:[%s15 + $0x120] sm:$0xff] %vm13644, %v13525
  %13682 = vst.msk [vmem:[%s15 + $0x128] sm:$0xff] %vm13644, %v13527
  %13683 = vst.msk [vmem:[%s15 + $0x130] sm:$0xff] %vm13644, %v13529
  %13684 = vst.msk [vmem:[%s15 + $0x138] sm:$0xff] %vm13644, %v13531
  %13685 = vst.msk [vmem:[%s15 + $0x140] sm:$0xff] %vm13644, %v13533
  %13686 = vst.msk [vmem:[%s15 + $0x148] sm:$0xff] %vm13644, %v13535
  %13687 = vst.msk [vmem:[%s15 + $0x150] sm:$0xff] %vm13644, %v13537
  %13688 = vst.msk [vmem:[%s15 + $0x158] sm:$0xff] %vm13644, %v13539
  %13689 = vst.msk [vmem:[%s15 + $0x160] sm:$0xff] %vm13644, %v13541
  %13690 = vst.msk [vmem:[%s15 + $0x168] sm:$0xff] %vm13644, %v13543
  %13691 = vst.msk [vmem:[%s15 + $0x170] sm:$0xff] %vm13644, %v13545
  %13692 = vst.msk [vmem:[%s15 + $0x178] sm:$0xff] %vm13644, %v13547
  %13693 = vst.msk [vmem:[%s15 + $0x180] sm:$0xff] %vm13644, %v13549
  %13694 = vst.msk [vmem:[%s15 + $0x188] sm:$0xff] %vm13644, %v13551
  %13695 = vst.msk [vmem:[%s15 + $0x190] sm:$0xff] %vm13644, %v13553
  %13696 = vst.msk [vmem:[%s15 + $0x198] sm:$0xff] %vm13644, %v13555
  %13697 = vst.msk [vmem:[%s15 + $0x1a0] sm:$0xff] %vm13644, %v13557
  %13698 = vst.msk [vmem:[%s15 + $0x1a8] sm:$0xff] %vm13644, %v13559
  %13699 = vst.msk [vmem:[%s15 + $0x1b0] sm:$0xff] %vm13644, %v13561
  %13700 = vst.msk [vmem:[%s15 + $0x1b8] sm:$0xff] %vm13644, %v13563
  %13701 = vst.msk [vmem:[%s15 + $0x1c0] sm:$0xff] %vm13644, %v13565
  %13702 = vst.msk [vmem:[%s15 + $0x1c8] sm:$0xff] %vm13644, %v13567
  %13703 = vst.msk [vmem:[%s15 + $0x1d0] sm:$0xff] %vm13644, %v13569
  %13704 = vst.msk [vmem:[%s15 + $0x1d8] sm:$0xff] %vm13644, %v13571
  %13705 = vst.msk [vmem:[%s15 + $0x1e0] sm:$0xff] %vm13644, %v13573
  %13706 = vst.msk [vmem:[%s15 + $0x1e8] sm:$0xff] %vm13644, %v13575
  %13707 = vst.msk [vmem:[%s15 + $0x1f0] sm:$0xff] %vm13644, %v13577
  %13708 = vst.msk [vmem:[%s15 + $0x1f8] sm:$0xff] %vm13644, %v13579
  // Predicated region
  $region62: #{tpu_custom_call.1} parent=0 // pred_check
    _
  $region63: #{tpu_custom_call.1} parent=0 // pred_check_branch
    %13710 = sbr.rel (0) target = $region65
  $region64: #{tpu_custom_call.1} parent=0 // pred_region
    _
  $region65: #{tpu_custom_call.1} parent=0 // pred_fallthru
    _
  // Predicated region
  $region66: #{tpu_custom_call.1} parent=0 // pred_check
    _
  $region67: #{tpu_custom_call.1} parent=0 // pred_check_branch
    %13712 = sbr.rel (0) target = $region69
  $region68: #{tpu_custom_call.1} parent=0 // pred_region
    _
  $region69: #{tpu_custom_call.1} parent=0 // pred_fallthru
    _

</llo_original>
